<compile_context>
chip_gen: v5e
topology: v5e:2x2
jax: 0.10.0
libtpu: 0.0.40
codegen_flags: <defaults>
</compile_context>

<pallas_src>
import jax
import jax.numpy as jnp
import numpy as np
from jax.experimental import pallas as pl
from jax.experimental.pallas import tpu as pltpu

MATMUL_DTYPE = jnp.bfloat16   # MXU operand dtype; accumulation stays float32


# ----------------------------- Pallas kernel ------------------------------ #
def bilstm_kernel(lens_ref,       # (Bp, 1)       int32
                  emb_ref,        # (T*Bp, E)     bf16  (time-major, flattened)
                  wih_ref,        # (E, 8*Hp)     bf16  [fwd 4Hp | bwd 4Hp], gate-padded
                  whh_ref,        # (2*Hp, 8*Hp)  bf16  block-diag [W_hh_f ; W_hh_b]
                  b_ref,          # (1, 8*Hp)     f32   combined b_ih+b_hh, gate-padded
                  out_f_ref,      # (T*Bp, Hp)    f32   forward-direction outputs
                  out_b_ref,      # (T*Bp, Hp)    f32   backward-direction outputs
                  h_out_ref,      # (Bp, 2*Hp)    f32   final h  [fwd | bwd]
                  c_out_ref,      # (Bp, 2*Hp)    f32   final c  [fwd | bwd]
                  gx_ref):        # (T*Bp, 8*Hp)  f32   scratch: hoisted input projection
    TB, _ = emb_ref.shape
    B = lens_ref.shape[0]
    T = TB // B
    Hp = out_f_ref.shape[1]
    G = 4 * Hp

    # ---- Phase 1: hoisted input projection, one big MXU matmul, bias folded
    #      in here (no per-step broadcast inside the recurrence). ----
    gx_ref[...] = (jnp.dot(emb_ref[...], wih_ref[...],
                           preferred_element_type=jnp.float32) + b_ref[...])

    lens = lens_ref[...]                                  # (B, 1) int32
    zeros = jnp.zeros((B, Hp), jnp.float32)

    def gates_to_state(pre, c):
        # PyTorch gate order i|f|g|o; each gate Hp(=128)-wide => lane-aligned.
        i = jax.nn.sigmoid(pre[:, 0 * Hp:1 * Hp])
        f = jax.nn.sigmoid(pre[:, 1 * Hp:2 * Hp])
        g = jnp.tanh(pre[:, 2 * Hp:3 * Hp])
        o = jax.nn.sigmoid(pre[:, 3 * Hp:4 * Hp])
        c_new = f * c + i * g
        h_new = o * jnp.tanh(c_new)
        return h_new, c_new

    # ---- Phase 2: fused forward/backward recurrence. Forward processes time
    #      t while backward processes T-1-t in the same iteration; one
    #      block-diagonal matmul produces both directions' recurrent gates. ----
    def body(t, carry):
        h_f, c_f, h_b, c_b = carry
        tb = T - 1 - t
        row_f = pl.multiple_of(t * B, B)
        row_b = pl.multiple_of(tb * B, B)

        hcat = jnp.concatenate([h_f, h_b], axis=-1).astype(MATMUL_DTYPE)
        rec = jnp.dot(hcat, whh_ref[...],
                      preferred_element_type=jnp.float32)        # (B, 8Hp)

        pre_f = gx_ref[pl.ds(row_f, B), pl.ds(0, G)] + rec[:, :G]
        pre_b = gx_ref[pl.ds(row_b, B), pl.ds(G, G)] + rec[:, G:]

        hf_new, cf_new = gates_to_state(pre_f, c_f)
        hb_new, cb_new = gates_to_state(pre_b, c_b)

        # packed-sequence masks (one explicit broadcast per direction)
        vf = jnp.broadcast_to(t < lens, (B, Hp))
        vb = jnp.broadcast_to(tb < lens, (B, Hp))

        # lane-dense, full-(8,128)-tile stores
        out_f_ref[pl.ds(row_f, B), :] = jnp.where(vf, hf_new, 0.0)
        out_b_ref[pl.ds(row_b, B), :] = jnp.where(vb, hb_new, 0.0)

        h_f = jnp.where(vf, hf_new, h_f)
        c_f = jnp.where(vf, cf_new, c_f)
        h_b = jnp.where(vb, hb_new, h_b)
        c_b = jnp.where(vb, cb_new, c_b)
        return h_f, c_f, h_b, c_b

    h_f, c_f, h_b, c_b = jax.lax.fori_loop(
        0, T, body, (zeros, zeros, zeros, zeros), unroll=(T <= 16))

    # final hidden / cell states, directions concatenated (_cat_directions)
    h_out_ref[:, :Hp] = h_f
    h_out_ref[:, Hp:] = h_b
    c_out_ref[:, :Hp] = c_f
    c_out_ref[:, Hp:] = c_b


# ------------------------------- wrapper ----------------------------------- #
def _pad_gate_cols(w, H, Hp):
    """(..., 4H) -> (..., 4Hp): PyTorch gate blocks [i|f|g|o] placed at k*Hp."""
    out = jnp.zeros(w.shape[:-1] + (4 * Hp,), w.dtype)
    for k in range(4):
        out = out.at[..., k * Hp:k * Hp + H].set(w[..., k * H:(k + 1) * H])
    return out


def encoder_rnn_forward(params, src_seqs, src_lens):
    """src_seqs: (T, B) int32; src_lens: (B,) int32."""
    emb_tbl = params["embedding"]
    E = emb_tbl.shape[1]
    H = params["whh_f"].shape[0]
    Hp = ((H + 127) // 128) * 128            # per-direction hidden, lane-padded
    T, B = src_seqs.shape
    Bp = ((B + 7) // 8) * 8                  # batch, sublane-padded

    # glue: embedding gather + batch padding; bf16 operands for the MXU
    emb = emb_tbl[src_seqs]                                       # (T, B, E) f32
    emb = jnp.pad(emb, ((0, 0), (0, Bp - B), (0, 0)))
    emb2d = emb.reshape(T * Bp, E).astype(MATMUL_DTYPE)           # (T*Bp, E)

    lens = jnp.pad(src_lens.astype(jnp.int32), (0, Bp - B)).reshape(Bp, 1)

    # gate-pad weights to Hp, concat directions; recurrent weights block-diag
    wih = jnp.concatenate([_pad_gate_cols(params["wih_f"], H, Hp),
                           _pad_gate_cols(params["wih_b"], H, Hp)],
                          axis=1).astype(MATMUL_DTYPE)            # (E, 8Hp)
    whh_f = _pad_gate_cols(jnp.pad(params["whh_f"], ((0, Hp - H), (0, 0))), H, Hp)
    whh_b = _pad_gate_cols(jnp.pad(params["whh_b"], ((0, Hp - H), (0, 0))), H, Hp)
    whh = jnp.zeros((2 * Hp, 8 * Hp), jnp.float32)
    whh = whh.at[:Hp, :4 * Hp].set(whh_f).at[Hp:, 4 * Hp:].set(whh_b)
    whh = whh.astype(MATMUL_DTYPE)                                # (2Hp, 8Hp)
    bias = jnp.concatenate([_pad_gate_cols(params["b_f"], H, Hp),
                            _pad_gate_cols(params["b_b"], H, Hp)],
                           axis=1)                                # (1, 8Hp) f32

    vmem = pl.BlockSpec(memory_space=pltpu.MemorySpace.VMEM)
    out_f, out_b, h_fin, c_fin = pl.pallas_call(
        bilstm_kernel,
        out_shape=(
            jax.ShapeDtypeStruct((T * Bp, Hp), jnp.float32),
            jax.ShapeDtypeStruct((T * Bp, Hp), jnp.float32),
            jax.ShapeDtypeStruct((Bp, 2 * Hp), jnp.float32),
            jax.ShapeDtypeStruct((Bp, 2 * Hp), jnp.float32),
        ),
        in_specs=[vmem] * 5,
        out_specs=(vmem, vmem, vmem, vmem),
        scratch_shapes=[pltpu.VMEM((T * Bp, 8 * Hp), jnp.float32)],
    )(lens, emb2d, wih, whh, bias)

    # strip padding and assemble the PyTorch-shaped results
    out_f = out_f.reshape(T, Bp, Hp)[:, :B, :H]
    out_b = out_b.reshape(T, Bp, Hp)[:, :B, :H]
    outputs = jnp.concatenate([out_f, out_b], axis=-1)            # (T, B, 2H)
    h_n = jnp.concatenate([h_fin[:B, :H], h_fin[:B, Hp:Hp + H]], axis=-1)[None]
    c_n = jnp.concatenate([c_fin[:B, :H], c_fin[:B, Hp:Hp + H]], axis=-1)[None]
    return outputs, (h_n, c_n)


# --------------------------- pure-JAX reference ----------------------------- #
def _ref_dir(emb, lens, wih, whh, b, reverse):
    T, B, _ = emb.shape
    H = whh.shape[0]
    h = jnp.zeros((B, H)); c = jnp.zeros((B, H))
    outs = [None] * T
    order = range(T - 1, -1, -1) if reverse else range(T)
    for t in order:
        gates = emb[t] @ wih + h @ whh + b
        i = jax.nn.sigmoid(gates[:, :H]); f = jax.nn.sigmoid(gates[:, H:2 * H])
        g = jnp.tanh(gates[:, 2 * H:3 * H]); o = jax.nn.sigmoid(gates[:, 3 * H:])
        c_new = f * c + i * g
        h_new = o * jnp.tanh(c_new)
        valid = (t < lens)[:, None]
        h = jnp.where(valid, h_new, h); c = jnp.where(valid, c_new, c)
        outs[t] = jnp.where(valid, h_new, 0.0)
    return jnp.stack(outs, 0), h, c


def reference_forward(params, src_seqs, src_lens):
    emb = params["embedding"][src_seqs]
    o_f, h_f, c_f = _ref_dir(emb, src_lens, params["wih_f"], params["whh_f"],
                             params["b_f"], reverse=False)
    o_b, h_b, c_b = _ref_dir(emb, src_lens, params["wih_b"], params["whh_b"],
                             params["b_b"], reverse=True)
    outputs = jnp.concatenate([o_f, o_b], axis=-1)
    hidden = (jnp.concatenate([h_f, h_b], -1)[None],
              jnp.concatenate([c_f, c_b], -1)[None])
    return outputs, hidden


# --------------------------------- main ------------------------------------- #
if __name__ == "__main__":
    T, B = 8, 4            # max_src_len, batch_size
    VOCAB, E = 50, 32      # vocab size, word_vec_size (embedding_dim)
    HIDDEN = 64            # module hidden_size; per-direction H = HIDDEN // 2
    H = HIDDEN // 2

    key = jax.random.PRNGKey(0)
    ks = jax.random.split(key, 10)
    kinit = 1.0 / np.sqrt(H)

    def uni(k, shape):
        return jax.random.uniform(k, shape, jnp.float32, -kinit, kinit)

    params = {
        "embedding": jax.random.normal(ks[0], (VOCAB, E), jnp.float32),
        # stored transposed vs PyTorch: weight_ih (4H,E)->(E,4H), weight_hh (4H,H)->(H,4H)
        "wih_f": uni(ks[1], (E, 4 * H)),
        "whh_f": uni(ks[2], (H, 4 * H)),
        "b_f":   uni(ks[3], (1, 4 * H)) + uni(ks[4], (1, 4 * H)),  # b_ih + b_hh
        "wih_b": uni(ks[5], (E, 4 * H)),
        "whh_b": uni(ks[6], (H, 4 * H)),
        "b_b":   uni(ks[7], (1, 4 * H)) + uni(ks[8], (1, 4 * H)),
    }

    src_seqs = jax.random.randint(ks[9], (T, B), 0, VOCAB, dtype=jnp.int32)
    src_lens = jnp.array([8, 6, 5, 3], dtype=jnp.int32)  # sorted descending

    fwd = jax.jit(encoder_rnn_forward)
    outputs, (h_n, c_n) = fwd(params, src_seqs, src_lens)
    jax.block_until_ready((outputs, h_n, c_n))

    assert outputs.shape == (T, B, HIDDEN)
    assert h_n.shape == (1, B, HIDDEN) and c_n.shape == (1, B, HIDDEN)

    ref_out, (ref_h, ref_c) = reference_forward(params, src_seqs, src_lens)
    np.testing.assert_allclose(np.asarray(outputs), np.asarray(ref_out),
                               rtol=2e-2, atol=2e-2)
    np.testing.assert_allclose(np.asarray(h_n), np.asarray(ref_h),
                               rtol=2e-2, atol=2e-2)
    np.testing.assert_allclose(np.asarray(c_n), np.asarray(ref_c),
                               rtol=2e-2, atol=2e-2)

    print("KERNEL_OK")
</pallas_src>

<mosaic_0001>
module attributes {stable_mosaic.version = 11 : i64} {
  func.func @bilstm_kernel(%arg0: memref<8x1xi32, #tpu.memory_space<vmem>>, %arg1: memref<64x32xbf16, #tpu.memory_space<vmem>>, %arg2: memref<32x1024xbf16, #tpu.memory_space<vmem>>, %arg3: memref<256x1024xbf16, #tpu.memory_space<vmem>>, %arg4: memref<1x1024xf32, #tpu.memory_space<vmem>>, %arg5: memref<64x128xf32, #tpu.memory_space<vmem>>, %arg6: memref<64x128xf32, #tpu.memory_space<vmem>>, %arg7: memref<8x256xf32, #tpu.memory_space<vmem>>, %arg8: memref<8x256xf32, #tpu.memory_space<vmem>>, %arg9: memref<64x1024xf32, #tpu.memory_space<vmem>>) attributes {dimension_semantics = [], scalar_prefetch = 0 : i64, scratch_operands = 1 : i64, tpu.core_type = #tpu.core_type<tc>} {
    %c0 = arith.constant 0 : index
    %c0_0 = arith.constant 0 : index
    %0 = vector.load %arg1[%c0, %c0_0] : memref<64x32xbf16, #tpu.memory_space<vmem>>, vector<64x32xbf16>
    %c0_1 = arith.constant 0 : index
    %c0_2 = arith.constant 0 : index
    %1 = vector.load %arg2[%c0_1, %c0_2] : memref<32x1024xbf16, #tpu.memory_space<vmem>>, vector<32x1024xbf16>
    %cst = arith.constant dense<0.000000e+00> : vector<64x1024xf32>
    %2 = tpu.matmul %0, %1, %cst {dimension_numbers = #tpu.dot_dimension_numbers<[1], [0], [0], [1], [0, 0, 1, 1], [], []>} : vector<64x32xbf16>, vector<32x1024xbf16>, vector<64x1024xf32> -> vector<64x1024xf32>
    %c0_3 = arith.constant 0 : index
    %c0_4 = arith.constant 0 : index
    %3 = vector.load %arg4[%c0_3, %c0_4] : memref<1x1024xf32, #tpu.memory_space<vmem>>, vector<1x1024xf32>
    %4 = vector.broadcast %3 : vector<1x1024xf32> to vector<64x1024xf32>
    %5 = arith.addf %2, %4 : vector<64x1024xf32>
    %c0_5 = arith.constant 0 : index
    %c0_6 = arith.constant 0 : index
    %6 = vector.load %arg9[%c0_5, %c0_6] : memref<64x1024xf32, #tpu.memory_space<vmem>>, vector<64x1024xf32>
    tpu.vector_store %arg9[%c0_5, %c0_6], %5 {strides = array<i32>} : memref<64x1024xf32, #tpu.memory_space<vmem>>, vector<64x1024xf32>,
    %c0_7 = arith.constant 0 : index
    %c0_8 = arith.constant 0 : index
    %7 = vector.load %arg0[%c0_7, %c0_8] : memref<8x1xi32, #tpu.memory_space<vmem>>, vector<8x1xi32>
    %cst_9 = arith.constant 0.000000e+00 : f32
    %8 = vector.broadcast %cst_9 : f32 to vector<8x128xf32>
    %c0_i32 = arith.constant 0 : i32
    %c7_i32 = arith.constant 7 : i32
    %9 = arith.subi %c7_i32, %c0_i32 : i32
    %c8_i32 = arith.constant 8 : i32
    %10 = arith.muli %c0_i32, %c8_i32 : i32
    %11 = tpu.assume_multiple %10, 8 : i32
    %c8_i32_10 = arith.constant 8 : i32
    %12 = arith.muli %9, %c8_i32_10 : i32
    %13 = tpu.assume_multiple %12, 8 : i32
    %14 = tpu.concatenate %8, %8 in 1 : vector<8x128xf32>, vector<8x128xf32> -> vector<8x256xf32>
    %15 = arith.truncf %14 : vector<8x256xf32> to vector<8x256xbf16>
    %c0_11 = arith.constant 0 : index
    %c0_12 = arith.constant 0 : index
    %16 = vector.load %arg3[%c0_11, %c0_12] : memref<256x1024xbf16, #tpu.memory_space<vmem>>, vector<256x1024xbf16>
    %cst_13 = arith.constant dense<0.000000e+00> : vector<8x1024xf32>
    %17 = tpu.matmul %15, %16, %cst_13 {dimension_numbers = #tpu.dot_dimension_numbers<[1], [0], [0], [1], [0, 0, 1, 1], [], []>} : vector<8x256xbf16>, vector<256x1024xbf16>, vector<8x1024xf32> -> vector<8x1024xf32>
    %18 = arith.index_cast %11 : i32 to index
    %c0_14 = arith.constant 0 : index
    %19 = vector.load %arg9[%18, %c0_14] : memref<64x1024xf32, #tpu.memory_space<vmem>>, vector<8x512xf32>
    %20 = vector.extract_strided_slice %17 {offsets = [0, 0], sizes = [8, 512], strides = [1, 1]} : vector<8x1024xf32> to vector<8x512xf32>
    %21 = arith.addf %19, %20 : vector<8x512xf32>
    %22 = arith.index_cast %13 : i32 to index
    %c512 = arith.constant 512 : index
    %23 = vector.load %arg9[%22, %c512] : memref<64x1024xf32, #tpu.memory_space<vmem>>, vector<8x512xf32>
    %24 = vector.extract_strided_slice %17 {offsets = [0, 512], sizes = [8, 512], strides = [1, 1]} : vector<8x1024xf32> to vector<8x512xf32>
    %25 = arith.addf %23, %24 : vector<8x512xf32>
    %26 = vector.extract_strided_slice %21 {offsets = [0, 0], sizes = [8, 128], strides = [1, 1]} : vector<8x512xf32> to vector<8x128xf32>
    %27 = arith.negf %26 : vector<8x128xf32>
    %28 = math.exp %27 : vector<8x128xf32>
    %cst_15 = arith.constant 1.000000e+00 : f32
    %29 = vector.broadcast %cst_15 : f32 to vector<8x128xf32>
    %30 = arith.addf %29, %28 : vector<8x128xf32>
    %31 = arith.divf %29, %30 : vector<8x128xf32>
    %32 = vector.extract_strided_slice %21 {offsets = [0, 128], sizes = [8, 128], strides = [1, 1]} : vector<8x512xf32> to vector<8x128xf32>
    %33 = arith.negf %32 : vector<8x128xf32>
    %34 = math.exp %33 : vector<8x128xf32>
    %cst_16 = arith.constant 1.000000e+00 : f32
    %35 = vector.broadcast %cst_16 : f32 to vector<8x128xf32>
    %36 = arith.addf %35, %34 : vector<8x128xf32>
    %37 = arith.divf %35, %36 : vector<8x128xf32>
    %38 = vector.extract_strided_slice %21 {offsets = [0, 256], sizes = [8, 128], strides = [1, 1]} : vector<8x512xf32> to vector<8x128xf32>
    %39 = math.tanh %38 : vector<8x128xf32>
    %40 = vector.extract_strided_slice %21 {offsets = [0, 384], sizes = [8, 128], strides = [1, 1]} : vector<8x512xf32> to vector<8x128xf32>
    %41 = arith.negf %40 : vector<8x128xf32>
    %42 = math.exp %41 : vector<8x128xf32>
    %cst_17 = arith.constant 1.000000e+00 : f32
    %43 = vector.broadcast %cst_17 : f32 to vector<8x128xf32>
    %44 = arith.addf %43, %42 : vector<8x128xf32>
    %45 = arith.divf %43, %44 : vector<8x128xf32>
    %46 = arith.mulf %37, %8 : vector<8x128xf32>
    %47 = arith.mulf %31, %39 : vector<8x128xf32>
    %48 = arith.addf %46, %47 : vector<8x128xf32>
    %49 = math.tanh %48 : vector<8x128xf32>
    %50 = arith.mulf %45, %49 : vector<8x128xf32>
    %51 = vector.extract_strided_slice %25 {offsets = [0, 0], sizes = [8, 128], strides = [1, 1]} : vector<8x512xf32> to vector<8x128xf32>
    %52 = arith.negf %51 : vector<8x128xf32>
    %53 = math.exp %52 : vector<8x128xf32>
    %cst_18 = arith.constant 1.000000e+00 : f32
    %54 = vector.broadcast %cst_18 : f32 to vector<8x128xf32>
    %55 = arith.addf %54, %53 : vector<8x128xf32>
    %56 = arith.divf %54, %55 : vector<8x128xf32>
    %57 = vector.extract_strided_slice %25 {offsets = [0, 128], sizes = [8, 128], strides = [1, 1]} : vector<8x512xf32> to vector<8x128xf32>
    %58 = arith.negf %57 : vector<8x128xf32>
    %59 = math.exp %58 : vector<8x128xf32>
    %cst_19 = arith.constant 1.000000e+00 : f32
    %60 = vector.broadcast %cst_19 : f32 to vector<8x128xf32>
    %61 = arith.addf %60, %59 : vector<8x128xf32>
    %62 = arith.divf %60, %61 : vector<8x128xf32>
    %63 = vector.extract_strided_slice %25 {offsets = [0, 256], sizes = [8, 128], strides = [1, 1]} : vector<8x512xf32> to vector<8x128xf32>
    %64 = math.tanh %63 : vector<8x128xf32>
    %65 = vector.extract_strided_slice %25 {offsets = [0, 384], sizes = [8, 128], strides = [1, 1]} : vector<8x512xf32> to vector<8x128xf32>
    %66 = arith.negf %65 : vector<8x128xf32>
    %67 = math.exp %66 : vector<8x128xf32>
    %cst_20 = arith.constant 1.000000e+00 : f32
    %68 = vector.broadcast %cst_20 : f32 to vector<8x128xf32>
    %69 = arith.addf %68, %67 : vector<8x128xf32>
    %70 = arith.divf %68, %69 : vector<8x128xf32>
    %71 = arith.mulf %62, %8 : vector<8x128xf32>
    %72 = arith.mulf %56, %64 : vector<8x128xf32>
    %73 = arith.addf %71, %72 : vector<8x128xf32>
    %74 = math.tanh %73 : vector<8x128xf32>
    %75 = arith.mulf %70, %74 : vector<8x128xf32>
    %76 = vector.broadcast %c0_i32 : i32 to vector<8x1xi32>
    %77 = arith.cmpi slt, %76, %7 : vector<8x1xi32>
    %78 = vector.shape_cast %77 : vector<8x1xi1> to vector<8x1xi1>
    %79 = vector.broadcast %78 : vector<8x1xi1> to vector<8x128xi1>
    %80 = vector.broadcast %9 : i32 to vector<8x1xi32>
    %81 = arith.cmpi slt, %80, %7 : vector<8x1xi32>
    %82 = vector.shape_cast %81 : vector<8x1xi1> to vector<8x1xi1>
    %83 = vector.broadcast %82 : vector<8x1xi1> to vector<8x128xi1>
    %cst_21 = arith.constant 0.000000e+00 : f32
    %84 = vector.broadcast %cst_21 : f32 to vector<8x128xf32>
    %85 = arith.select %79, %50, %84 : vector<8x128xi1>, vector<8x128xf32>
    %86 = arith.index_cast %11 : i32 to index
    %c0_22 = arith.constant 0 : index
    %87 = vector.load %arg5[%86, %c0_22] : memref<64x128xf32, #tpu.memory_space<vmem>>, vector<8x128xf32>
    tpu.vector_store %arg5[%86, %c0_22], %85 {strides = array<i32>} : memref<64x128xf32, #tpu.memory_space<vmem>>, vector<8x128xf32>,
    %cst_23 = arith.constant 0.000000e+00 : f32
    %88 = vector.broadcast %cst_23 : f32 to vector<8x128xf32>
    %89 = arith.select %83, %75, %88 : vector<8x128xi1>, vector<8x128xf32>
    %90 = arith.index_cast %13 : i32 to index
    %c0_24 = arith.constant 0 : index
    %91 = vector.load %arg6[%90, %c0_24] : memref<64x128xf32, #tpu.memory_space<vmem>>, vector<8x128xf32>
    tpu.vector_store %arg6[%90, %c0_24], %89 {strides = array<i32>} : memref<64x128xf32, #tpu.memory_space<vmem>>, vector<8x128xf32>,
    %92 = arith.select %79, %50, %8 : vector<8x128xi1>, vector<8x128xf32>
    %93 = arith.select %79, %48, %8 : vector<8x128xi1>, vector<8x128xf32>
    %94 = arith.select %83, %75, %8 : vector<8x128xi1>, vector<8x128xf32>
    %95 = arith.select %83, %73, %8 : vector<8x128xi1>, vector<8x128xf32>
    %c1_i32 = arith.constant 1 : i32
    %c7_i32_25 = arith.constant 7 : i32
    %96 = arith.subi %c7_i32_25, %c1_i32 : i32
    %c8_i32_26 = arith.constant 8 : i32
    %97 = arith.muli %c1_i32, %c8_i32_26 : i32
    %98 = tpu.assume_multiple %97, 8 : i32
    %c8_i32_27 = arith.constant 8 : i32
    %99 = arith.muli %96, %c8_i32_27 : i32
    %100 = tpu.assume_multiple %99, 8 : i32
    %101 = tpu.concatenate %92, %94 in 1 : vector<8x128xf32>, vector<8x128xf32> -> vector<8x256xf32>
    %102 = arith.truncf %101 : vector<8x256xf32> to vector<8x256xbf16>
    %c0_28 = arith.constant 0 : index
    %c0_29 = arith.constant 0 : index
    %103 = vector.load %arg3[%c0_28, %c0_29] : memref<256x1024xbf16, #tpu.memory_space<vmem>>, vector<256x1024xbf16>
    %cst_30 = arith.constant dense<0.000000e+00> : vector<8x1024xf32>
    %104 = tpu.matmul %102, %103, %cst_30 {dimension_numbers = #tpu.dot_dimension_numbers<[1], [0], [0], [1], [0, 0, 1, 1], [], []>} : vector<8x256xbf16>, vector<256x1024xbf16>, vector<8x1024xf32> -> vector<8x1024xf32>
    %105 = arith.index_cast %98 : i32 to index
    %c0_31 = arith.constant 0 : index
    %106 = vector.load %arg9[%105, %c0_31] : memref<64x1024xf32, #tpu.memory_space<vmem>>, vector<8x512xf32>
    %107 = vector.extract_strided_slice %104 {offsets = [0, 0], sizes = [8, 512], strides = [1, 1]} : vector<8x1024xf32> to vector<8x512xf32>
    %108 = arith.addf %106, %107 : vector<8x512xf32>
    %109 = arith.index_cast %100 : i32 to index
    %c512_32 = arith.constant 512 : index
    %110 = vector.load %arg9[%109, %c512_32] : memref<64x1024xf32, #tpu.memory_space<vmem>>, vector<8x512xf32>
    %111 = vector.extract_strided_slice %104 {offsets = [0, 512], sizes = [8, 512], strides = [1, 1]} : vector<8x1024xf32> to vector<8x512xf32>
    %112 = arith.addf %110, %111 : vector<8x512xf32>
    %113 = vector.extract_strided_slice %108 {offsets = [0, 0], sizes = [8, 128], strides = [1, 1]} : vector<8x512xf32> to vector<8x128xf32>
    %114 = arith.negf %113 : vector<8x128xf32>
    %115 = math.exp %114 : vector<8x128xf32>
    %cst_33 = arith.constant 1.000000e+00 : f32
    %116 = vector.broadcast %cst_33 : f32 to vector<8x128xf32>
    %117 = arith.addf %116, %115 : vector<8x128xf32>
    %118 = arith.divf %116, %117 : vector<8x128xf32>
    %119 = vector.extract_strided_slice %108 {offsets = [0, 128], sizes = [8, 128], strides = [1, 1]} : vector<8x512xf32> to vector<8x128xf32>
    %120 = arith.negf %119 : vector<8x128xf32>
    %121 = math.exp %120 : vector<8x128xf32>
    %cst_34 = arith.constant 1.000000e+00 : f32
    %122 = vector.broadcast %cst_34 : f32 to vector<8x128xf32>
    %123 = arith.addf %122, %121 : vector<8x128xf32>
    %124 = arith.divf %122, %123 : vector<8x128xf32>
    %125 = vector.extract_strided_slice %108 {offsets = [0, 256], sizes = [8, 128], strides = [1, 1]} : vector<8x512xf32> to vector<8x128xf32>
    %126 = math.tanh %125 : vector<8x128xf32>
    %127 = vector.extract_strided_slice %108 {offsets = [0, 384], sizes = [8, 128], strides = [1, 1]} : vector<8x512xf32> to vector<8x128xf32>
    %128 = arith.negf %127 : vector<8x128xf32>
    %129 = math.exp %128 : vector<8x128xf32>
    %cst_35 = arith.constant 1.000000e+00 : f32
    %130 = vector.broadcast %cst_35 : f32 to vector<8x128xf32>
    %131 = arith.addf %130, %129 : vector<8x128xf32>
    %132 = arith.divf %130, %131 : vector<8x128xf32>
    %133 = arith.mulf %124, %93 : vector<8x128xf32>
    %134 = arith.mulf %118, %126 : vector<8x128xf32>
    %135 = arith.addf %133, %134 : vector<8x128xf32>
    %136 = math.tanh %135 : vector<8x128xf32>
    %137 = arith.mulf %132, %136 : vector<8x128xf32>
    %138 = vector.extract_strided_slice %112 {offsets = [0, 0], sizes = [8, 128], strides = [1, 1]} : vector<8x512xf32> to vector<8x128xf32>
    %139 = arith.negf %138 : vector<8x128xf32>
    %140 = math.exp %139 : vector<8x128xf32>
    %cst_36 = arith.constant 1.000000e+00 : f32
    %141 = vector.broadcast %cst_36 : f32 to vector<8x128xf32>
    %142 = arith.addf %141, %140 : vector<8x128xf32>
    %143 = arith.divf %141, %142 : vector<8x128xf32>
    %144 = vector.extract_strided_slice %112 {offsets = [0, 128], sizes = [8, 128], strides = [1, 1]} : vector<8x512xf32> to vector<8x128xf32>
    %145 = arith.negf %144 : vector<8x128xf32>
    %146 = math.exp %145 : vector<8x128xf32>
    %cst_37 = arith.constant 1.000000e+00 : f32
    %147 = vector.broadcast %cst_37 : f32 to vector<8x128xf32>
    %148 = arith.addf %147, %146 : vector<8x128xf32>
    %149 = arith.divf %147, %148 : vector<8x128xf32>
    %150 = vector.extract_strided_slice %112 {offsets = [0, 256], sizes = [8, 128], strides = [1, 1]} : vector<8x512xf32> to vector<8x128xf32>
    %151 = math.tanh %150 : vector<8x128xf32>
    %152 = vector.extract_strided_slice %112 {offsets = [0, 384], sizes = [8, 128], strides = [1, 1]} : vector<8x512xf32> to vector<8x128xf32>
    %153 = arith.negf %152 : vector<8x128xf32>
    %154 = math.exp %153 : vector<8x128xf32>
    %cst_38 = arith.constant 1.000000e+00 : f32
    %155 = vector.broadcast %cst_38 : f32 to vector<8x128xf32>
    %156 = arith.addf %155, %154 : vector<8x128xf32>
    %157 = arith.divf %155, %156 : vector<8x128xf32>
    %158 = arith.mulf %149, %95 : vector<8x128xf32>
    %159 = arith.mulf %143, %151 : vector<8x128xf32>
    %160 = arith.addf %158, %159 : vector<8x128xf32>
    %161 = math.tanh %160 : vector<8x128xf32>
    %162 = arith.mulf %157, %161 : vector<8x128xf32>
    %163 = vector.broadcast %c1_i32 : i32 to vector<8x1xi32>
    %164 = arith.cmpi slt, %163, %7 : vector<8x1xi32>
    %165 = vector.shape_cast %164 : vector<8x1xi1> to vector<8x1xi1>
    %166 = vector.broadcast %165 : vector<8x1xi1> to vector<8x128xi1>
    %167 = vector.broadcast %96 : i32 to vector<8x1xi32>
    %168 = arith.cmpi slt, %167, %7 : vector<8x1xi32>
    %169 = vector.shape_cast %168 : vector<8x1xi1> to vector<8x1xi1>
    %170 = vector.broadcast %169 : vector<8x1xi1> to vector<8x128xi1>
    %cst_39 = arith.constant 0.000000e+00 : f32
    %171 = vector.broadcast %cst_39 : f32 to vector<8x128xf32>
    %172 = arith.select %166, %137, %171 : vector<8x128xi1>, vector<8x128xf32>
    %173 = arith.index_cast %98 : i32 to index
    %c0_40 = arith.constant 0 : index
    %174 = vector.load %arg5[%173, %c0_40] : memref<64x128xf32, #tpu.memory_space<vmem>>, vector<8x128xf32>
    tpu.vector_store %arg5[%173, %c0_40], %172 {strides = array<i32>} : memref<64x128xf32, #tpu.memory_space<vmem>>, vector<8x128xf32>,
    %cst_41 = arith.constant 0.000000e+00 : f32
    %175 = vector.broadcast %cst_41 : f32 to vector<8x128xf32>
    %176 = arith.select %170, %162, %175 : vector<8x128xi1>, vector<8x128xf32>
    %177 = arith.index_cast %100 : i32 to index
    %c0_42 = arith.constant 0 : index
    %178 = vector.load %arg6[%177, %c0_42] : memref<64x128xf32, #tpu.memory_space<vmem>>, vector<8x128xf32>
    tpu.vector_store %arg6[%177, %c0_42], %176 {strides = array<i32>} : memref<64x128xf32, #tpu.memory_space<vmem>>, vector<8x128xf32>,
    %179 = arith.select %166, %137, %92 : vector<8x128xi1>, vector<8x128xf32>
    %180 = arith.select %166, %135, %93 : vector<8x128xi1>, vector<8x128xf32>
    %181 = arith.select %170, %162, %94 : vector<8x128xi1>, vector<8x128xf32>
    %182 = arith.select %170, %160, %95 : vector<8x128xi1>, vector<8x128xf32>
    %c2_i32 = arith.constant 2 : i32
    %c7_i32_43 = arith.constant 7 : i32
    %183 = arith.subi %c7_i32_43, %c2_i32 : i32
    %c8_i32_44 = arith.constant 8 : i32
    %184 = arith.muli %c2_i32, %c8_i32_44 : i32
    %185 = tpu.assume_multiple %184, 8 : i32
    %c8_i32_45 = arith.constant 8 : i32
    %186 = arith.muli %183, %c8_i32_45 : i32
    %187 = tpu.assume_multiple %186, 8 : i32
    %188 = tpu.concatenate %179, %181 in 1 : vector<8x128xf32>, vector<8x128xf32> -> vector<8x256xf32>
    %189 = arith.truncf %188 : vector<8x256xf32> to vector<8x256xbf16>
    %c0_46 = arith.constant 0 : index
    %c0_47 = arith.constant 0 : index
    %190 = vector.load %arg3[%c0_46, %c0_47] : memref<256x1024xbf16, #tpu.memory_space<vmem>>, vector<256x1024xbf16>
    %cst_48 = arith.constant dense<0.000000e+00> : vector<8x1024xf32>
    %191 = tpu.matmul %189, %190, %cst_48 {dimension_numbers = #tpu.dot_dimension_numbers<[1], [0], [0], [1], [0, 0, 1, 1], [], []>} : vector<8x256xbf16>, vector<256x1024xbf16>, vector<8x1024xf32> -> vector<8x1024xf32>
    %192 = arith.index_cast %185 : i32 to index
    %c0_49 = arith.constant 0 : index
    %193 = vector.load %arg9[%192, %c0_49] : memref<64x1024xf32, #tpu.memory_space<vmem>>, vector<8x512xf32>
    %194 = vector.extract_strided_slice %191 {offsets = [0, 0], sizes = [8, 512], strides = [1, 1]} : vector<8x1024xf32> to vector<8x512xf32>
    %195 = arith.addf %193, %194 : vector<8x512xf32>
    %196 = arith.index_cast %187 : i32 to index
    %c512_50 = arith.constant 512 : index
    %197 = vector.load %arg9[%196, %c512_50] : memref<64x1024xf32, #tpu.memory_space<vmem>>, vector<8x512xf32>
    %198 = vector.extract_strided_slice %191 {offsets = [0, 512], sizes = [8, 512], strides = [1, 1]} : vector<8x1024xf32> to vector<8x512xf32>
    %199 = arith.addf %197, %198 : vector<8x512xf32>
    %200 = vector.extract_strided_slice %195 {offsets = [0, 0], sizes = [8, 128], strides = [1, 1]} : vector<8x512xf32> to vector<8x128xf32>
    %201 = arith.negf %200 : vector<8x128xf32>
    %202 = math.exp %201 : vector<8x128xf32>
    %cst_51 = arith.constant 1.000000e+00 : f32
    %203 = vector.broadcast %cst_51 : f32 to vector<8x128xf32>
    %204 = arith.addf %203, %202 : vector<8x128xf32>
    %205 = arith.divf %203, %204 : vector<8x128xf32>
    %206 = vector.extract_strided_slice %195 {offsets = [0, 128], sizes = [8, 128], strides = [1, 1]} : vector<8x512xf32> to vector<8x128xf32>
    %207 = arith.negf %206 : vector<8x128xf32>
    %208 = math.exp %207 : vector<8x128xf32>
    %cst_52 = arith.constant 1.000000e+00 : f32
    %209 = vector.broadcast %cst_52 : f32 to vector<8x128xf32>
    %210 = arith.addf %209, %208 : vector<8x128xf32>
    %211 = arith.divf %209, %210 : vector<8x128xf32>
    %212 = vector.extract_strided_slice %195 {offsets = [0, 256], sizes = [8, 128], strides = [1, 1]} : vector<8x512xf32> to vector<8x128xf32>
    %213 = math.tanh %212 : vector<8x128xf32>
    %214 = vector.extract_strided_slice %195 {offsets = [0, 384], sizes = [8, 128], strides = [1, 1]} : vector<8x512xf32> to vector<8x128xf32>
    %215 = arith.negf %214 : vector<8x128xf32>
    %216 = math.exp %215 : vector<8x128xf32>
    %cst_53 = arith.constant 1.000000e+00 : f32
    %217 = vector.broadcast %cst_53 : f32 to vector<8x128xf32>
    %218 = arith.addf %217, %216 : vector<8x128xf32>
    %219 = arith.divf %217, %218 : vector<8x128xf32>
    %220 = arith.mulf %211, %180 : vector<8x128xf32>
    %221 = arith.mulf %205, %213 : vector<8x128xf32>
    %222 = arith.addf %220, %221 : vector<8x128xf32>
    %223 = math.tanh %222 : vector<8x128xf32>
    %224 = arith.mulf %219, %223 : vector<8x128xf32>
    %225 = vector.extract_strided_slice %199 {offsets = [0, 0], sizes = [8, 128], strides = [1, 1]} : vector<8x512xf32> to vector<8x128xf32>
    %226 = arith.negf %225 : vector<8x128xf32>
    %227 = math.exp %226 : vector<8x128xf32>
    %cst_54 = arith.constant 1.000000e+00 : f32
    %228 = vector.broadcast %cst_54 : f32 to vector<8x128xf32>
    %229 = arith.addf %228, %227 : vector<8x128xf32>
    %230 = arith.divf %228, %229 : vector<8x128xf32>
    %231 = vector.extract_strided_slice %199 {offsets = [0, 128], sizes = [8, 128], strides = [1, 1]} : vector<8x512xf32> to vector<8x128xf32>
    %232 = arith.negf %231 : vector<8x128xf32>
    %233 = math.exp %232 : vector<8x128xf32>
    %cst_55 = arith.constant 1.000000e+00 : f32
    %234 = vector.broadcast %cst_55 : f32 to vector<8x128xf32>
    %235 = arith.addf %234, %233 : vector<8x128xf32>
    %236 = arith.divf %234, %235 : vector<8x128xf32>
    %237 = vector.extract_strided_slice %199 {offsets = [0, 256], sizes = [8, 128], strides = [1, 1]} : vector<8x512xf32> to vector<8x128xf32>
    %238 = math.tanh %237 : vector<8x128xf32>
    %239 = vector.extract_strided_slice %199 {offsets = [0, 384], sizes = [8, 128], strides = [1, 1]} : vector<8x512xf32> to vector<8x128xf32>
    %240 = arith.negf %239 : vector<8x128xf32>
    %241 = math.exp %240 : vector<8x128xf32>
    %cst_56 = arith.constant 1.000000e+00 : f32
    %242 = vector.broadcast %cst_56 : f32 to vector<8x128xf32>
    %243 = arith.addf %242, %241 : vector<8x128xf32>
    %244 = arith.divf %242, %243 : vector<8x128xf32>
    %245 = arith.mulf %236, %182 : vector<8x128xf32>
    %246 = arith.mulf %230, %238 : vector<8x128xf32>
    %247 = arith.addf %245, %246 : vector<8x128xf32>
    %248 = math.tanh %247 : vector<8x128xf32>
    %249 = arith.mulf %244, %248 : vector<8x128xf32>
    %250 = vector.broadcast %c2_i32 : i32 to vector<8x1xi32>
    %251 = arith.cmpi slt, %250, %7 : vector<8x1xi32>
    %252 = vector.shape_cast %251 : vector<8x1xi1> to vector<8x1xi1>
    %253 = vector.broadcast %252 : vector<8x1xi1> to vector<8x128xi1>
    %254 = vector.broadcast %183 : i32 to vector<8x1xi32>
    %255 = arith.cmpi slt, %254, %7 : vector<8x1xi32>
    %256 = vector.shape_cast %255 : vector<8x1xi1> to vector<8x1xi1>
    %257 = vector.broadcast %256 : vector<8x1xi1> to vector<8x128xi1>
    %cst_57 = arith.constant 0.000000e+00 : f32
    %258 = vector.broadcast %cst_57 : f32 to vector<8x128xf32>
    %259 = arith.select %253, %224, %258 : vector<8x128xi1>, vector<8x128xf32>
    %260 = arith.index_cast %185 : i32 to index
    %c0_58 = arith.constant 0 : index
    %261 = vector.load %arg5[%260, %c0_58] : memref<64x128xf32, #tpu.memory_space<vmem>>, vector<8x128xf32>
    tpu.vector_store %arg5[%260, %c0_58], %259 {strides = array<i32>} : memref<64x128xf32, #tpu.memory_space<vmem>>, vector<8x128xf32>,
    %cst_59 = arith.constant 0.000000e+00 : f32
    %262 = vector.broadcast %cst_59 : f32 to vector<8x128xf32>
    %263 = arith.select %257, %249, %262 : vector<8x128xi1>, vector<8x128xf32>
    %264 = arith.index_cast %187 : i32 to index
    %c0_60 = arith.constant 0 : index
    %265 = vector.load %arg6[%264, %c0_60] : memref<64x128xf32, #tpu.memory_space<vmem>>, vector<8x128xf32>
    tpu.vector_store %arg6[%264, %c0_60], %263 {strides = array<i32>} : memref<64x128xf32, #tpu.memory_space<vmem>>, vector<8x128xf32>,
    %266 = arith.select %253, %224, %179 : vector<8x128xi1>, vector<8x128xf32>
    %267 = arith.select %253, %222, %180 : vector<8x128xi1>, vector<8x128xf32>
    %268 = arith.select %257, %249, %181 : vector<8x128xi1>, vector<8x128xf32>
    %269 = arith.select %257, %247, %182 : vector<8x128xi1>, vector<8x128xf32>
    %c3_i32 = arith.constant 3 : i32
    %c7_i32_61 = arith.constant 7 : i32
    %270 = arith.subi %c7_i32_61, %c3_i32 : i32
    %c8_i32_62 = arith.constant 8 : i32
    %271 = arith.muli %c3_i32, %c8_i32_62 : i32
    %272 = tpu.assume_multiple %271, 8 : i32
    %c8_i32_63 = arith.constant 8 : i32
    %273 = arith.muli %270, %c8_i32_63 : i32
    %274 = tpu.assume_multiple %273, 8 : i32
    %275 = tpu.concatenate %266, %268 in 1 : vector<8x128xf32>, vector<8x128xf32> -> vector<8x256xf32>
    %276 = arith.truncf %275 : vector<8x256xf32> to vector<8x256xbf16>
    %c0_64 = arith.constant 0 : index
    %c0_65 = arith.constant 0 : index
    %277 = vector.load %arg3[%c0_64, %c0_65] : memref<256x1024xbf16, #tpu.memory_space<vmem>>, vector<256x1024xbf16>
    %cst_66 = arith.constant dense<0.000000e+00> : vector<8x1024xf32>
    %278 = tpu.matmul %276, %277, %cst_66 {dimension_numbers = #tpu.dot_dimension_numbers<[1], [0], [0], [1], [0, 0, 1, 1], [], []>} : vector<8x256xbf16>, vector<256x1024xbf16>, vector<8x1024xf32> -> vector<8x1024xf32>
    %279 = arith.index_cast %272 : i32 to index
    %c0_67 = arith.constant 0 : index
    %280 = vector.load %arg9[%279, %c0_67] : memref<64x1024xf32, #tpu.memory_space<vmem>>, vector<8x512xf32>
    %281 = vector.extract_strided_slice %278 {offsets = [0, 0], sizes = [8, 512], strides = [1, 1]} : vector<8x1024xf32> to vector<8x512xf32>
    %282 = arith.addf %280, %281 : vector<8x512xf32>
    %283 = arith.index_cast %274 : i32 to index
    %c512_68 = arith.constant 512 : index
    %284 = vector.load %arg9[%283, %c512_68] : memref<64x1024xf32, #tpu.memory_space<vmem>>, vector<8x512xf32>
    %285 = vector.extract_strided_slice %278 {offsets = [0, 512], sizes = [8, 512], strides = [1, 1]} : vector<8x1024xf32> to vector<8x512xf32>
    %286 = arith.addf %284, %285 : vector<8x512xf32>
    %287 = vector.extract_strided_slice %282 {offsets = [0, 0], sizes = [8, 128], strides = [1, 1]} : vector<8x512xf32> to vector<8x128xf32>
    %288 = arith.negf %287 : vector<8x128xf32>
    %289 = math.exp %288 : vector<8x128xf32>
    %cst_69 = arith.constant 1.000000e+00 : f32
    %290 = vector.broadcast %cst_69 : f32 to vector<8x128xf32>
    %291 = arith.addf %290, %289 : vector<8x128xf32>
    %292 = arith.divf %290, %291 : vector<8x128xf32>
    %293 = vector.extract_strided_slice %282 {offsets = [0, 128], sizes = [8, 128], strides = [1, 1]} : vector<8x512xf32> to vector<8x128xf32>
    %294 = arith.negf %293 : vector<8x128xf32>
    %295 = math.exp %294 : vector<8x128xf32>
    %cst_70 = arith.constant 1.000000e+00 : f32
    %296 = vector.broadcast %cst_70 : f32 to vector<8x128xf32>
    %297 = arith.addf %296, %295 : vector<8x128xf32>
    %298 = arith.divf %296, %297 : vector<8x128xf32>
    %299 = vector.extract_strided_slice %282 {offsets = [0, 256], sizes = [8, 128], strides = [1, 1]} : vector<8x512xf32> to vector<8x128xf32>
    %300 = math.tanh %299 : vector<8x128xf32>
    %301 = vector.extract_strided_slice %282 {offsets = [0, 384], sizes = [8, 128], strides = [1, 1]} : vector<8x512xf32> to vector<8x128xf32>
    %302 = arith.negf %301 : vector<8x128xf32>
    %303 = math.exp %302 : vector<8x128xf32>
    %cst_71 = arith.constant 1.000000e+00 : f32
    %304 = vector.broadcast %cst_71 : f32 to vector<8x128xf32>
    %305 = arith.addf %304, %303 : vector<8x128xf32>
    %306 = arith.divf %304, %305 : vector<8x128xf32>
    %307 = arith.mulf %298, %267 : vector<8x128xf32>
    %308 = arith.mulf %292, %300 : vector<8x128xf32>
    %309 = arith.addf %307, %308 : vector<8x128xf32>
    %310 = math.tanh %309 : vector<8x128xf32>
    %311 = arith.mulf %306, %310 : vector<8x128xf32>
    %312 = vector.extract_strided_slice %286 {offsets = [0, 0], sizes = [8, 128], strides = [1, 1]} : vector<8x512xf32> to vector<8x128xf32>
    %313 = arith.negf %312 : vector<8x128xf32>
    %314 = math.exp %313 : vector<8x128xf32>
    %cst_72 = arith.constant 1.000000e+00 : f32
    %315 = vector.broadcast %cst_72 : f32 to vector<8x128xf32>
    %316 = arith.addf %315, %314 : vector<8x128xf32>
    %317 = arith.divf %315, %316 : vector<8x128xf32>
    %318 = vector.extract_strided_slice %286 {offsets = [0, 128], sizes = [8, 128], strides = [1, 1]} : vector<8x512xf32> to vector<8x128xf32>
    %319 = arith.negf %318 : vector<8x128xf32>
    %320 = math.exp %319 : vector<8x128xf32>
    %cst_73 = arith.constant 1.000000e+00 : f32
    %321 = vector.broadcast %cst_73 : f32 to vector<8x128xf32>
    %322 = arith.addf %321, %320 : vector<8x128xf32>
    %323 = arith.divf %321, %322 : vector<8x128xf32>
    %324 = vector.extract_strided_slice %286 {offsets = [0, 256], sizes = [8, 128], strides = [1, 1]} : vector<8x512xf32> to vector<8x128xf32>
    %325 = math.tanh %324 : vector<8x128xf32>
    %326 = vector.extract_strided_slice %286 {offsets = [0, 384], sizes = [8, 128], strides = [1, 1]} : vector<8x512xf32> to vector<8x128xf32>
    %327 = arith.negf %326 : vector<8x128xf32>
    %328 = math.exp %327 : vector<8x128xf32>
    %cst_74 = arith.constant 1.000000e+00 : f32
    %329 = vector.broadcast %cst_74 : f32 to vector<8x128xf32>
    %330 = arith.addf %329, %328 : vector<8x128xf32>
    %331 = arith.divf %329, %330 : vector<8x128xf32>
    %332 = arith.mulf %323, %269 : vector<8x128xf32>
    %333 = arith.mulf %317, %325 : vector<8x128xf32>
    %334 = arith.addf %332, %333 : vector<8x128xf32>
    %335 = math.tanh %334 : vector<8x128xf32>
    %336 = arith.mulf %331, %335 : vector<8x128xf32>
    %337 = vector.broadcast %c3_i32 : i32 to vector<8x1xi32>
    %338 = arith.cmpi slt, %337, %7 : vector<8x1xi32>
    %339 = vector.shape_cast %338 : vector<8x1xi1> to vector<8x1xi1>
    %340 = vector.broadcast %339 : vector<8x1xi1> to vector<8x128xi1>
    %341 = vector.broadcast %270 : i32 to vector<8x1xi32>
    %342 = arith.cmpi slt, %341, %7 : vector<8x1xi32>
    %343 = vector.shape_cast %342 : vector<8x1xi1> to vector<8x1xi1>
    %344 = vector.broadcast %343 : vector<8x1xi1> to vector<8x128xi1>
    %cst_75 = arith.constant 0.000000e+00 : f32
    %345 = vector.broadcast %cst_75 : f32 to vector<8x128xf32>
    %346 = arith.select %340, %311, %345 : vector<8x128xi1>, vector<8x128xf32>
    %347 = arith.index_cast %272 : i32 to index
    %c0_76 = arith.constant 0 : index
    %348 = vector.load %arg5[%347, %c0_76] : memref<64x128xf32, #tpu.memory_space<vmem>>, vector<8x128xf32>
    tpu.vector_store %arg5[%347, %c0_76], %346 {strides = array<i32>} : memref<64x128xf32, #tpu.memory_space<vmem>>, vector<8x128xf32>,
    %cst_77 = arith.constant 0.000000e+00 : f32
    %349 = vector.broadcast %cst_77 : f32 to vector<8x128xf32>
    %350 = arith.select %344, %336, %349 : vector<8x128xi1>, vector<8x128xf32>
    %351 = arith.index_cast %274 : i32 to index
    %c0_78 = arith.constant 0 : index
    %352 = vector.load %arg6[%351, %c0_78] : memref<64x128xf32, #tpu.memory_space<vmem>>, vector<8x128xf32>
    tpu.vector_store %arg6[%351, %c0_78], %350 {strides = array<i32>} : memref<64x128xf32, #tpu.memory_space<vmem>>, vector<8x128xf32>,
    %353 = arith.select %340, %311, %266 : vector<8x128xi1>, vector<8x128xf32>
    %354 = arith.select %340, %309, %267 : vector<8x128xi1>, vector<8x128xf32>
    %355 = arith.select %344, %336, %268 : vector<8x128xi1>, vector<8x128xf32>
    %356 = arith.select %344, %334, %269 : vector<8x128xi1>, vector<8x128xf32>
    %c4_i32 = arith.constant 4 : i32
    %c7_i32_79 = arith.constant 7 : i32
    %357 = arith.subi %c7_i32_79, %c4_i32 : i32
    %c8_i32_80 = arith.constant 8 : i32
    %358 = arith.muli %c4_i32, %c8_i32_80 : i32
    %359 = tpu.assume_multiple %358, 8 : i32
    %c8_i32_81 = arith.constant 8 : i32
    %360 = arith.muli %357, %c8_i32_81 : i32
    %361 = tpu.assume_multiple %360, 8 : i32
    %362 = tpu.concatenate %353, %355 in 1 : vector<8x128xf32>, vector<8x128xf32> -> vector<8x256xf32>
    %363 = arith.truncf %362 : vector<8x256xf32> to vector<8x256xbf16>
    %c0_82 = arith.constant 0 : index
    %c0_83 = arith.constant 0 : index
    %364 = vector.load %arg3[%c0_82, %c0_83] : memref<256x1024xbf16, #tpu.memory_space<vmem>>, vector<256x1024xbf16>
    %cst_84 = arith.constant dense<0.000000e+00> : vector<8x1024xf32>
    %365 = tpu.matmul %363, %364, %cst_84 {dimension_numbers = #tpu.dot_dimension_numbers<[1], [0], [0], [1], [0, 0, 1, 1], [], []>} : vector<8x256xbf16>, vector<256x1024xbf16>, vector<8x1024xf32> -> vector<8x1024xf32>
    %366 = arith.index_cast %359 : i32 to index
    %c0_85 = arith.constant 0 : index
    %367 = vector.load %arg9[%366, %c0_85] : memref<64x1024xf32, #tpu.memory_space<vmem>>, vector<8x512xf32>
    %368 = vector.extract_strided_slice %365 {offsets = [0, 0], sizes = [8, 512], strides = [1, 1]} : vector<8x1024xf32> to vector<8x512xf32>
    %369 = arith.addf %367, %368 : vector<8x512xf32>
    %370 = arith.index_cast %361 : i32 to index
    %c512_86 = arith.constant 512 : index
    %371 = vector.load %arg9[%370, %c512_86] : memref<64x1024xf32, #tpu.memory_space<vmem>>, vector<8x512xf32>
    %372 = vector.extract_strided_slice %365 {offsets = [0, 512], sizes = [8, 512], strides = [1, 1]} : vector<8x1024xf32> to vector<8x512xf32>
    %373 = arith.addf %371, %372 : vector<8x512xf32>
    %374 = vector.extract_strided_slice %369 {offsets = [0, 0], sizes = [8, 128], strides = [1, 1]} : vector<8x512xf32> to vector<8x128xf32>
    %375 = arith.negf %374 : vector<8x128xf32>
    %376 = math.exp %375 : vector<8x128xf32>
    %cst_87 = arith.constant 1.000000e+00 : f32
    %377 = vector.broadcast %cst_87 : f32 to vector<8x128xf32>
    %378 = arith.addf %377, %376 : vector<8x128xf32>
    %379 = arith.divf %377, %378 : vector<8x128xf32>
    %380 = vector.extract_strided_slice %369 {offsets = [0, 128], sizes = [8, 128], strides = [1, 1]} : vector<8x512xf32> to vector<8x128xf32>
    %381 = arith.negf %380 : vector<8x128xf32>
    %382 = math.exp %381 : vector<8x128xf32>
    %cst_88 = arith.constant 1.000000e+00 : f32
    %383 = vector.broadcast %cst_88 : f32 to vector<8x128xf32>
    %384 = arith.addf %383, %382 : vector<8x128xf32>
    %385 = arith.divf %383, %384 : vector<8x128xf32>
    %386 = vector.extract_strided_slice %369 {offsets = [0, 256], sizes = [8, 128], strides = [1, 1]} : vector<8x512xf32> to vector<8x128xf32>
    %387 = math.tanh %386 : vector<8x128xf32>
    %388 = vector.extract_strided_slice %369 {offsets = [0, 384], sizes = [8, 128], strides = [1, 1]} : vector<8x512xf32> to vector<8x128xf32>
    %389 = arith.negf %388 : vector<8x128xf32>
    %390 = math.exp %389 : vector<8x128xf32>
    %cst_89 = arith.constant 1.000000e+00 : f32
    %391 = vector.broadcast %cst_89 : f32 to vector<8x128xf32>
    %392 = arith.addf %391, %390 : vector<8x128xf32>
    %393 = arith.divf %391, %392 : vector<8x128xf32>
    %394 = arith.mulf %385, %354 : vector<8x128xf32>
    %395 = arith.mulf %379, %387 : vector<8x128xf32>
    %396 = arith.addf %394, %395 : vector<8x128xf32>
    %397 = math.tanh %396 : vector<8x128xf32>
    %398 = arith.mulf %393, %397 : vector<8x128xf32>
    %399 = vector.extract_strided_slice %373 {offsets = [0, 0], sizes = [8, 128], strides = [1, 1]} : vector<8x512xf32> to vector<8x128xf32>
    %400 = arith.negf %399 : vector<8x128xf32>
    %401 = math.exp %400 : vector<8x128xf32>
    %cst_90 = arith.constant 1.000000e+00 : f32
    %402 = vector.broadcast %cst_90 : f32 to vector<8x128xf32>
    %403 = arith.addf %402, %401 : vector<8x128xf32>
    %404 = arith.divf %402, %403 : vector<8x128xf32>
    %405 = vector.extract_strided_slice %373 {offsets = [0, 128], sizes = [8, 128], strides = [1, 1]} : vector<8x512xf32> to vector<8x128xf32>
    %406 = arith.negf %405 : vector<8x128xf32>
    %407 = math.exp %406 : vector<8x128xf32>
    %cst_91 = arith.constant 1.000000e+00 : f32
    %408 = vector.broadcast %cst_91 : f32 to vector<8x128xf32>
    %409 = arith.addf %408, %407 : vector<8x128xf32>
    %410 = arith.divf %408, %409 : vector<8x128xf32>
    %411 = vector.extract_strided_slice %373 {offsets = [0, 256], sizes = [8, 128], strides = [1, 1]} : vector<8x512xf32> to vector<8x128xf32>
    %412 = math.tanh %411 : vector<8x128xf32>
    %413 = vector.extract_strided_slice %373 {offsets = [0, 384], sizes = [8, 128], strides = [1, 1]} : vector<8x512xf32> to vector<8x128xf32>
    %414 = arith.negf %413 : vector<8x128xf32>
    %415 = math.exp %414 : vector<8x128xf32>
    %cst_92 = arith.constant 1.000000e+00 : f32
    %416 = vector.broadcast %cst_92 : f32 to vector<8x128xf32>
    %417 = arith.addf %416, %415 : vector<8x128xf32>
    %418 = arith.divf %416, %417 : vector<8x128xf32>
    %419 = arith.mulf %410, %356 : vector<8x128xf32>
    %420 = arith.mulf %404, %412 : vector<8x128xf32>
    %421 = arith.addf %419, %420 : vector<8x128xf32>
    %422 = math.tanh %421 : vector<8x128xf32>
    %423 = arith.mulf %418, %422 : vector<8x128xf32>
    %424 = vector.broadcast %c4_i32 : i32 to vector<8x1xi32>
    %425 = arith.cmpi slt, %424, %7 : vector<8x1xi32>
    %426 = vector.shape_cast %425 : vector<8x1xi1> to vector<8x1xi1>
    %427 = vector.broadcast %426 : vector<8x1xi1> to vector<8x128xi1>
    %428 = vector.broadcast %357 : i32 to vector<8x1xi32>
    %429 = arith.cmpi slt, %428, %7 : vector<8x1xi32>
    %430 = vector.shape_cast %429 : vector<8x1xi1> to vector<8x1xi1>
    %431 = vector.broadcast %430 : vector<8x1xi1> to vector<8x128xi1>
    %cst_93 = arith.constant 0.000000e+00 : f32
    %432 = vector.broadcast %cst_93 : f32 to vector<8x128xf32>
    %433 = arith.select %427, %398, %432 : vector<8x128xi1>, vector<8x128xf32>
    %434 = arith.index_cast %359 : i32 to index
    %c0_94 = arith.constant 0 : index
    %435 = vector.load %arg5[%434, %c0_94] : memref<64x128xf32, #tpu.memory_space<vmem>>, vector<8x128xf32>
    tpu.vector_store %arg5[%434, %c0_94], %433 {strides = array<i32>} : memref<64x128xf32, #tpu.memory_space<vmem>>, vector<8x128xf32>,
    %cst_95 = arith.constant 0.000000e+00 : f32
    %436 = vector.broadcast %cst_95 : f32 to vector<8x128xf32>
    %437 = arith.select %431, %423, %436 : vector<8x128xi1>, vector<8x128xf32>
    %438 = arith.index_cast %361 : i32 to index
    %c0_96 = arith.constant 0 : index
    %439 = vector.load %arg6[%438, %c0_96] : memref<64x128xf32, #tpu.memory_space<vmem>>, vector<8x128xf32>
    tpu.vector_store %arg6[%438, %c0_96], %437 {strides = array<i32>} : memref<64x128xf32, #tpu.memory_space<vmem>>, vector<8x128xf32>,
    %440 = arith.select %427, %398, %353 : vector<8x128xi1>, vector<8x128xf32>
    %441 = arith.select %427, %396, %354 : vector<8x128xi1>, vector<8x128xf32>
    %442 = arith.select %431, %423, %355 : vector<8x128xi1>, vector<8x128xf32>
    %443 = arith.select %431, %421, %356 : vector<8x128xi1>, vector<8x128xf32>
    %c5_i32 = arith.constant 5 : i32
    %c7_i32_97 = arith.constant 7 : i32
    %444 = arith.subi %c7_i32_97, %c5_i32 : i32
    %c8_i32_98 = arith.constant 8 : i32
    %445 = arith.muli %c5_i32, %c8_i32_98 : i32
    %446 = tpu.assume_multiple %445, 8 : i32
    %c8_i32_99 = arith.constant 8 : i32
    %447 = arith.muli %444, %c8_i32_99 : i32
    %448 = tpu.assume_multiple %447, 8 : i32
    %449 = tpu.concatenate %440, %442 in 1 : vector<8x128xf32>, vector<8x128xf32> -> vector<8x256xf32>
    %450 = arith.truncf %449 : vector<8x256xf32> to vector<8x256xbf16>
    %c0_100 = arith.constant 0 : index
    %c0_101 = arith.constant 0 : index
    %451 = vector.load %arg3[%c0_100, %c0_101] : memref<256x1024xbf16, #tpu.memory_space<vmem>>, vector<256x1024xbf16>
    %cst_102 = arith.constant dense<0.000000e+00> : vector<8x1024xf32>
    %452 = tpu.matmul %450, %451, %cst_102 {dimension_numbers = #tpu.dot_dimension_numbers<[1], [0], [0], [1], [0, 0, 1, 1], [], []>} : vector<8x256xbf16>, vector<256x1024xbf16>, vector<8x1024xf32> -> vector<8x1024xf32>
    %453 = arith.index_cast %446 : i32 to index
    %c0_103 = arith.constant 0 : index
    %454 = vector.load %arg9[%453, %c0_103] : memref<64x1024xf32, #tpu.memory_space<vmem>>, vector<8x512xf32>
    %455 = vector.extract_strided_slice %452 {offsets = [0, 0], sizes = [8, 512], strides = [1, 1]} : vector<8x1024xf32> to vector<8x512xf32>
    %456 = arith.addf %454, %455 : vector<8x512xf32>
    %457 = arith.index_cast %448 : i32 to index
    %c512_104 = arith.constant 512 : index
    %458 = vector.load %arg9[%457, %c512_104] : memref<64x1024xf32, #tpu.memory_space<vmem>>, vector<8x512xf32>
    %459 = vector.extract_strided_slice %452 {offsets = [0, 512], sizes = [8, 512], strides = [1, 1]} : vector<8x1024xf32> to vector<8x512xf32>
    %460 = arith.addf %458, %459 : vector<8x512xf32>
    %461 = vector.extract_strided_slice %456 {offsets = [0, 0], sizes = [8, 128], strides = [1, 1]} : vector<8x512xf32> to vector<8x128xf32>
    %462 = arith.negf %461 : vector<8x128xf32>
    %463 = math.exp %462 : vector<8x128xf32>
    %cst_105 = arith.constant 1.000000e+00 : f32
    %464 = vector.broadcast %cst_105 : f32 to vector<8x128xf32>
    %465 = arith.addf %464, %463 : vector<8x128xf32>
    %466 = arith.divf %464, %465 : vector<8x128xf32>
    %467 = vector.extract_strided_slice %456 {offsets = [0, 128], sizes = [8, 128], strides = [1, 1]} : vector<8x512xf32> to vector<8x128xf32>
    %468 = arith.negf %467 : vector<8x128xf32>
    %469 = math.exp %468 : vector<8x128xf32>
    %cst_106 = arith.constant 1.000000e+00 : f32
    %470 = vector.broadcast %cst_106 : f32 to vector<8x128xf32>
    %471 = arith.addf %470, %469 : vector<8x128xf32>
    %472 = arith.divf %470, %471 : vector<8x128xf32>
    %473 = vector.extract_strided_slice %456 {offsets = [0, 256], sizes = [8, 128], strides = [1, 1]} : vector<8x512xf32> to vector<8x128xf32>
    %474 = math.tanh %473 : vector<8x128xf32>
    %475 = vector.extract_strided_slice %456 {offsets = [0, 384], sizes = [8, 128], strides = [1, 1]} : vector<8x512xf32> to vector<8x128xf32>
    %476 = arith.negf %475 : vector<8x128xf32>
    %477 = math.exp %476 : vector<8x128xf32>
    %cst_107 = arith.constant 1.000000e+00 : f32
    %478 = vector.broadcast %cst_107 : f32 to vector<8x128xf32>
    %479 = arith.addf %478, %477 : vector<8x128xf32>
    %480 = arith.divf %478, %479 : vector<8x128xf32>
    %481 = arith.mulf %472, %441 : vector<8x128xf32>
    %482 = arith.mulf %466, %474 : vector<8x128xf32>
    %483 = arith.addf %481, %482 : vector<8x128xf32>
    %484 = math.tanh %483 : vector<8x128xf32>
    %485 = arith.mulf %480, %484 : vector<8x128xf32>
    %486 = vector.extract_strided_slice %460 {offsets = [0, 0], sizes = [8, 128], strides = [1, 1]} : vector<8x512xf32> to vector<8x128xf32>
    %487 = arith.negf %486 : vector<8x128xf32>
    %488 = math.exp %487 : vector<8x128xf32>
    %cst_108 = arith.constant 1.000000e+00 : f32
    %489 = vector.broadcast %cst_108 : f32 to vector<8x128xf32>
    %490 = arith.addf %489, %488 : vector<8x128xf32>
    %491 = arith.divf %489, %490 : vector<8x128xf32>
    %492 = vector.extract_strided_slice %460 {offsets = [0, 128], sizes = [8, 128], strides = [1, 1]} : vector<8x512xf32> to vector<8x128xf32>
    %493 = arith.negf %492 : vector<8x128xf32>
    %494 = math.exp %493 : vector<8x128xf32>
    %cst_109 = arith.constant 1.000000e+00 : f32
    %495 = vector.broadcast %cst_109 : f32 to vector<8x128xf32>
    %496 = arith.addf %495, %494 : vector<8x128xf32>
    %497 = arith.divf %495, %496 : vector<8x128xf32>
    %498 = vector.extract_strided_slice %460 {offsets = [0, 256], sizes = [8, 128], strides = [1, 1]} : vector<8x512xf32> to vector<8x128xf32>
    %499 = math.tanh %498 : vector<8x128xf32>
    %500 = vector.extract_strided_slice %460 {offsets = [0, 384], sizes = [8, 128], strides = [1, 1]} : vector<8x512xf32> to vector<8x128xf32>
    %501 = arith.negf %500 : vector<8x128xf32>
    %502 = math.exp %501 : vector<8x128xf32>
    %cst_110 = arith.constant 1.000000e+00 : f32
    %503 = vector.broadcast %cst_110 : f32 to vector<8x128xf32>
    %504 = arith.addf %503, %502 : vector<8x128xf32>
    %505 = arith.divf %503, %504 : vector<8x128xf32>
    %506 = arith.mulf %497, %443 : vector<8x128xf32>
    %507 = arith.mulf %491, %499 : vector<8x128xf32>
    %508 = arith.addf %506, %507 : vector<8x128xf32>
    %509 = math.tanh %508 : vector<8x128xf32>
    %510 = arith.mulf %505, %509 : vector<8x128xf32>
    %511 = vector.broadcast %c5_i32 : i32 to vector<8x1xi32>
    %512 = arith.cmpi slt, %511, %7 : vector<8x1xi32>
    %513 = vector.shape_cast %512 : vector<8x1xi1> to vector<8x1xi1>
    %514 = vector.broadcast %513 : vector<8x1xi1> to vector<8x128xi1>
    %515 = vector.broadcast %444 : i32 to vector<8x1xi32>
    %516 = arith.cmpi slt, %515, %7 : vector<8x1xi32>
    %517 = vector.shape_cast %516 : vector<8x1xi1> to vector<8x1xi1>
    %518 = vector.broadcast %517 : vector<8x1xi1> to vector<8x128xi1>
    %cst_111 = arith.constant 0.000000e+00 : f32
    %519 = vector.broadcast %cst_111 : f32 to vector<8x128xf32>
    %520 = arith.select %514, %485, %519 : vector<8x128xi1>, vector<8x128xf32>
    %521 = arith.index_cast %446 : i32 to index
    %c0_112 = arith.constant 0 : index
    %522 = vector.load %arg5[%521, %c0_112] : memref<64x128xf32, #tpu.memory_space<vmem>>, vector<8x128xf32>
    tpu.vector_store %arg5[%521, %c0_112], %520 {strides = array<i32>} : memref<64x128xf32, #tpu.memory_space<vmem>>, vector<8x128xf32>,
    %cst_113 = arith.constant 0.000000e+00 : f32
    %523 = vector.broadcast %cst_113 : f32 to vector<8x128xf32>
    %524 = arith.select %518, %510, %523 : vector<8x128xi1>, vector<8x128xf32>
    %525 = arith.index_cast %448 : i32 to index
    %c0_114 = arith.constant 0 : index
    %526 = vector.load %arg6[%525, %c0_114] : memref<64x128xf32, #tpu.memory_space<vmem>>, vector<8x128xf32>
    tpu.vector_store %arg6[%525, %c0_114], %524 {strides = array<i32>} : memref<64x128xf32, #tpu.memory_space<vmem>>, vector<8x128xf32>,
    %527 = arith.select %514, %485, %440 : vector<8x128xi1>, vector<8x128xf32>
    %528 = arith.select %514, %483, %441 : vector<8x128xi1>, vector<8x128xf32>
    %529 = arith.select %518, %510, %442 : vector<8x128xi1>, vector<8x128xf32>
    %530 = arith.select %518, %508, %443 : vector<8x128xi1>, vector<8x128xf32>
    %c6_i32 = arith.constant 6 : i32
    %c7_i32_115 = arith.constant 7 : i32
    %531 = arith.subi %c7_i32_115, %c6_i32 : i32
    %c8_i32_116 = arith.constant 8 : i32
    %532 = arith.muli %c6_i32, %c8_i32_116 : i32
    %533 = tpu.assume_multiple %532, 8 : i32
    %c8_i32_117 = arith.constant 8 : i32
    %534 = arith.muli %531, %c8_i32_117 : i32
    %535 = tpu.assume_multiple %534, 8 : i32
    %536 = tpu.concatenate %527, %529 in 1 : vector<8x128xf32>, vector<8x128xf32> -> vector<8x256xf32>
    %537 = arith.truncf %536 : vector<8x256xf32> to vector<8x256xbf16>
    %c0_118 = arith.constant 0 : index
    %c0_119 = arith.constant 0 : index
    %538 = vector.load %arg3[%c0_118, %c0_119] : memref<256x1024xbf16, #tpu.memory_space<vmem>>, vector<256x1024xbf16>
    %cst_120 = arith.constant dense<0.000000e+00> : vector<8x1024xf32>
    %539 = tpu.matmul %537, %538, %cst_120 {dimension_numbers = #tpu.dot_dimension_numbers<[1], [0], [0], [1], [0, 0, 1, 1], [], []>} : vector<8x256xbf16>, vector<256x1024xbf16>, vector<8x1024xf32> -> vector<8x1024xf32>
    %540 = arith.index_cast %533 : i32 to index
    %c0_121 = arith.constant 0 : index
    %541 = vector.load %arg9[%540, %c0_121] : memref<64x1024xf32, #tpu.memory_space<vmem>>, vector<8x512xf32>
    %542 = vector.extract_strided_slice %539 {offsets = [0, 0], sizes = [8, 512], strides = [1, 1]} : vector<8x1024xf32> to vector<8x512xf32>
    %543 = arith.addf %541, %542 : vector<8x512xf32>
    %544 = arith.index_cast %535 : i32 to index
    %c512_122 = arith.constant 512 : index
    %545 = vector.load %arg9[%544, %c512_122] : memref<64x1024xf32, #tpu.memory_space<vmem>>, vector<8x512xf32>
    %546 = vector.extract_strided_slice %539 {offsets = [0, 512], sizes = [8, 512], strides = [1, 1]} : vector<8x1024xf32> to vector<8x512xf32>
    %547 = arith.addf %545, %546 : vector<8x512xf32>
    %548 = vector.extract_strided_slice %543 {offsets = [0, 0], sizes = [8, 128], strides = [1, 1]} : vector<8x512xf32> to vector<8x128xf32>
    %549 = arith.negf %548 : vector<8x128xf32>
    %550 = math.exp %549 : vector<8x128xf32>
    %cst_123 = arith.constant 1.000000e+00 : f32
    %551 = vector.broadcast %cst_123 : f32 to vector<8x128xf32>
    %552 = arith.addf %551, %550 : vector<8x128xf32>
    %553 = arith.divf %551, %552 : vector<8x128xf32>
    %554 = vector.extract_strided_slice %543 {offsets = [0, 128], sizes = [8, 128], strides = [1, 1]} : vector<8x512xf32> to vector<8x128xf32>
    %555 = arith.negf %554 : vector<8x128xf32>
    %556 = math.exp %555 : vector<8x128xf32>
    %cst_124 = arith.constant 1.000000e+00 : f32
    %557 = vector.broadcast %cst_124 : f32 to vector<8x128xf32>
    %558 = arith.addf %557, %556 : vector<8x128xf32>
    %559 = arith.divf %557, %558 : vector<8x128xf32>
    %560 = vector.extract_strided_slice %543 {offsets = [0, 256], sizes = [8, 128], strides = [1, 1]} : vector<8x512xf32> to vector<8x128xf32>
    %561 = math.tanh %560 : vector<8x128xf32>
    %562 = vector.extract_strided_slice %543 {offsets = [0, 384], sizes = [8, 128], strides = [1, 1]} : vector<8x512xf32> to vector<8x128xf32>
    %563 = arith.negf %562 : vector<8x128xf32>
    %564 = math.exp %563 : vector<8x128xf32>
    %cst_125 = arith.constant 1.000000e+00 : f32
    %565 = vector.broadcast %cst_125 : f32 to vector<8x128xf32>
    %566 = arith.addf %565, %564 : vector<8x128xf32>
    %567 = arith.divf %565, %566 : vector<8x128xf32>
    %568 = arith.mulf %559, %528 : vector<8x128xf32>
    %569 = arith.mulf %553, %561 : vector<8x128xf32>
    %570 = arith.addf %568, %569 : vector<8x128xf32>
    %571 = math.tanh %570 : vector<8x128xf32>
    %572 = arith.mulf %567, %571 : vector<8x128xf32>
    %573 = vector.extract_strided_slice %547 {offsets = [0, 0], sizes = [8, 128], strides = [1, 1]} : vector<8x512xf32> to vector<8x128xf32>
    %574 = arith.negf %573 : vector<8x128xf32>
    %575 = math.exp %574 : vector<8x128xf32>
    %cst_126 = arith.constant 1.000000e+00 : f32
    %576 = vector.broadcast %cst_126 : f32 to vector<8x128xf32>
    %577 = arith.addf %576, %575 : vector<8x128xf32>
    %578 = arith.divf %576, %577 : vector<8x128xf32>
    %579 = vector.extract_strided_slice %547 {offsets = [0, 128], sizes = [8, 128], strides = [1, 1]} : vector<8x512xf32> to vector<8x128xf32>
    %580 = arith.negf %579 : vector<8x128xf32>
    %581 = math.exp %580 : vector<8x128xf32>
    %cst_127 = arith.constant 1.000000e+00 : f32
    %582 = vector.broadcast %cst_127 : f32 to vector<8x128xf32>
    %583 = arith.addf %582, %581 : vector<8x128xf32>
    %584 = arith.divf %582, %583 : vector<8x128xf32>
    %585 = vector.extract_strided_slice %547 {offsets = [0, 256], sizes = [8, 128], strides = [1, 1]} : vector<8x512xf32> to vector<8x128xf32>
    %586 = math.tanh %585 : vector<8x128xf32>
    %587 = vector.extract_strided_slice %547 {offsets = [0, 384], sizes = [8, 128], strides = [1, 1]} : vector<8x512xf32> to vector<8x128xf32>
    %588 = arith.negf %587 : vector<8x128xf32>
    %589 = math.exp %588 : vector<8x128xf32>
    %cst_128 = arith.constant 1.000000e+00 : f32
    %590 = vector.broadcast %cst_128 : f32 to vector<8x128xf32>
    %591 = arith.addf %590, %589 : vector<8x128xf32>
    %592 = arith.divf %590, %591 : vector<8x128xf32>
    %593 = arith.mulf %584, %530 : vector<8x128xf32>
    %594 = arith.mulf %578, %586 : vector<8x128xf32>
    %595 = arith.addf %593, %594 : vector<8x128xf32>
    %596 = math.tanh %595 : vector<8x128xf32>
    %597 = arith.mulf %592, %596 : vector<8x128xf32>
    %598 = vector.broadcast %c6_i32 : i32 to vector<8x1xi32>
    %599 = arith.cmpi slt, %598, %7 : vector<8x1xi32>
    %600 = vector.shape_cast %599 : vector<8x1xi1> to vector<8x1xi1>
    %601 = vector.broadcast %600 : vector<8x1xi1> to vector<8x128xi1>
    %602 = vector.broadcast %531 : i32 to vector<8x1xi32>
    %603 = arith.cmpi slt, %602, %7 : vector<8x1xi32>
    %604 = vector.shape_cast %603 : vector<8x1xi1> to vector<8x1xi1>
    %605 = vector.broadcast %604 : vector<8x1xi1> to vector<8x128xi1>
    %cst_129 = arith.constant 0.000000e+00 : f32
    %606 = vector.broadcast %cst_129 : f32 to vector<8x128xf32>
    %607 = arith.select %601, %572, %606 : vector<8x128xi1>, vector<8x128xf32>
    %608 = arith.index_cast %533 : i32 to index
    %c0_130 = arith.constant 0 : index
    %609 = vector.load %arg5[%608, %c0_130] : memref<64x128xf32, #tpu.memory_space<vmem>>, vector<8x128xf32>
    tpu.vector_store %arg5[%608, %c0_130], %607 {strides = array<i32>} : memref<64x128xf32, #tpu.memory_space<vmem>>, vector<8x128xf32>,
    %cst_131 = arith.constant 0.000000e+00 : f32
    %610 = vector.broadcast %cst_131 : f32 to vector<8x128xf32>
    %611 = arith.select %605, %597, %610 : vector<8x128xi1>, vector<8x128xf32>
    %612 = arith.index_cast %535 : i32 to index
    %c0_132 = arith.constant 0 : index
    %613 = vector.load %arg6[%612, %c0_132] : memref<64x128xf32, #tpu.memory_space<vmem>>, vector<8x128xf32>
    tpu.vector_store %arg6[%612, %c0_132], %611 {strides = array<i32>} : memref<64x128xf32, #tpu.memory_space<vmem>>, vector<8x128xf32>,
    %614 = arith.select %601, %572, %527 : vector<8x128xi1>, vector<8x128xf32>
    %615 = arith.select %601, %570, %528 : vector<8x128xi1>, vector<8x128xf32>
    %616 = arith.select %605, %597, %529 : vector<8x128xi1>, vector<8x128xf32>
    %617 = arith.select %605, %595, %530 : vector<8x128xi1>, vector<8x128xf32>
    %c7_i32_133 = arith.constant 7 : i32
    %c7_i32_134 = arith.constant 7 : i32
    %618 = arith.subi %c7_i32_134, %c7_i32_133 : i32
    %c8_i32_135 = arith.constant 8 : i32
    %619 = arith.muli %c7_i32_133, %c8_i32_135 : i32
    %620 = tpu.assume_multiple %619, 8 : i32
    %c8_i32_136 = arith.constant 8 : i32
    %621 = arith.muli %618, %c8_i32_136 : i32
    %622 = tpu.assume_multiple %621, 8 : i32
    %623 = tpu.concatenate %614, %616 in 1 : vector<8x128xf32>, vector<8x128xf32> -> vector<8x256xf32>
    %624 = arith.truncf %623 : vector<8x256xf32> to vector<8x256xbf16>
    %c0_137 = arith.constant 0 : index
    %c0_138 = arith.constant 0 : index
    %625 = vector.load %arg3[%c0_137, %c0_138] : memref<256x1024xbf16, #tpu.memory_space<vmem>>, vector<256x1024xbf16>
    %cst_139 = arith.constant dense<0.000000e+00> : vector<8x1024xf32>
    %626 = tpu.matmul %624, %625, %cst_139 {dimension_numbers = #tpu.dot_dimension_numbers<[1], [0], [0], [1], [0, 0, 1, 1], [], []>} : vector<8x256xbf16>, vector<256x1024xbf16>, vector<8x1024xf32> -> vector<8x1024xf32>
    %627 = arith.index_cast %620 : i32 to index
    %c0_140 = arith.constant 0 : index
    %628 = vector.load %arg9[%627, %c0_140] : memref<64x1024xf32, #tpu.memory_space<vmem>>, vector<8x512xf32>
    %629 = vector.extract_strided_slice %626 {offsets = [0, 0], sizes = [8, 512], strides = [1, 1]} : vector<8x1024xf32> to vector<8x512xf32>
    %630 = arith.addf %628, %629 : vector<8x512xf32>
    %631 = arith.index_cast %622 : i32 to index
    %c512_141 = arith.constant 512 : index
    %632 = vector.load %arg9[%631, %c512_141] : memref<64x1024xf32, #tpu.memory_space<vmem>>, vector<8x512xf32>
    %633 = vector.extract_strided_slice %626 {offsets = [0, 512], sizes = [8, 512], strides = [1, 1]} : vector<8x1024xf32> to vector<8x512xf32>
    %634 = arith.addf %632, %633 : vector<8x512xf32>
    %635 = vector.extract_strided_slice %630 {offsets = [0, 0], sizes = [8, 128], strides = [1, 1]} : vector<8x512xf32> to vector<8x128xf32>
    %636 = arith.negf %635 : vector<8x128xf32>
    %637 = math.exp %636 : vector<8x128xf32>
    %cst_142 = arith.constant 1.000000e+00 : f32
    %638 = vector.broadcast %cst_142 : f32 to vector<8x128xf32>
    %639 = arith.addf %638, %637 : vector<8x128xf32>
    %640 = arith.divf %638, %639 : vector<8x128xf32>
    %641 = vector.extract_strided_slice %630 {offsets = [0, 128], sizes = [8, 128], strides = [1, 1]} : vector<8x512xf32> to vector<8x128xf32>
    %642 = arith.negf %641 : vector<8x128xf32>
    %643 = math.exp %642 : vector<8x128xf32>
    %cst_143 = arith.constant 1.000000e+00 : f32
    %644 = vector.broadcast %cst_143 : f32 to vector<8x128xf32>
    %645 = arith.addf %644, %643 : vector<8x128xf32>
    %646 = arith.divf %644, %645 : vector<8x128xf32>
    %647 = vector.extract_strided_slice %630 {offsets = [0, 256], sizes = [8, 128], strides = [1, 1]} : vector<8x512xf32> to vector<8x128xf32>
    %648 = math.tanh %647 : vector<8x128xf32>
    %649 = vector.extract_strided_slice %630 {offsets = [0, 384], sizes = [8, 128], strides = [1, 1]} : vector<8x512xf32> to vector<8x128xf32>
    %650 = arith.negf %649 : vector<8x128xf32>
    %651 = math.exp %650 : vector<8x128xf32>
    %cst_144 = arith.constant 1.000000e+00 : f32
    %652 = vector.broadcast %cst_144 : f32 to vector<8x128xf32>
    %653 = arith.addf %652, %651 : vector<8x128xf32>
    %654 = arith.divf %652, %653 : vector<8x128xf32>
    %655 = arith.mulf %646, %615 : vector<8x128xf32>
    %656 = arith.mulf %640, %648 : vector<8x128xf32>
    %657 = arith.addf %655, %656 : vector<8x128xf32>
    %658 = math.tanh %657 : vector<8x128xf32>
    %659 = arith.mulf %654, %658 : vector<8x128xf32>
    %660 = vector.extract_strided_slice %634 {offsets = [0, 0], sizes = [8, 128], strides = [1, 1]} : vector<8x512xf32> to vector<8x128xf32>
    %661 = arith.negf %660 : vector<8x128xf32>
    %662 = math.exp %661 : vector<8x128xf32>
    %cst_145 = arith.constant 1.000000e+00 : f32
    %663 = vector.broadcast %cst_145 : f32 to vector<8x128xf32>
    %664 = arith.addf %663, %662 : vector<8x128xf32>
    %665 = arith.divf %663, %664 : vector<8x128xf32>
    %666 = vector.extract_strided_slice %634 {offsets = [0, 128], sizes = [8, 128], strides = [1, 1]} : vector<8x512xf32> to vector<8x128xf32>
    %667 = arith.negf %666 : vector<8x128xf32>
    %668 = math.exp %667 : vector<8x128xf32>
    %cst_146 = arith.constant 1.000000e+00 : f32
    %669 = vector.broadcast %cst_146 : f32 to vector<8x128xf32>
    %670 = arith.addf %669, %668 : vector<8x128xf32>
    %671 = arith.divf %669, %670 : vector<8x128xf32>
    %672 = vector.extract_strided_slice %634 {offsets = [0, 256], sizes = [8, 128], strides = [1, 1]} : vector<8x512xf32> to vector<8x128xf32>
    %673 = math.tanh %672 : vector<8x128xf32>
    %674 = vector.extract_strided_slice %634 {offsets = [0, 384], sizes = [8, 128], strides = [1, 1]} : vector<8x512xf32> to vector<8x128xf32>
    %675 = arith.negf %674 : vector<8x128xf32>
    %676 = math.exp %675 : vector<8x128xf32>
    %cst_147 = arith.constant 1.000000e+00 : f32
    %677 = vector.broadcast %cst_147 : f32 to vector<8x128xf32>
    %678 = arith.addf %677, %676 : vector<8x128xf32>
    %679 = arith.divf %677, %678 : vector<8x128xf32>
    %680 = arith.mulf %671, %617 : vector<8x128xf32>
    %681 = arith.mulf %665, %673 : vector<8x128xf32>
    %682 = arith.addf %680, %681 : vector<8x128xf32>
    %683 = math.tanh %682 : vector<8x128xf32>
    %684 = arith.mulf %679, %683 : vector<8x128xf32>
    %685 = vector.broadcast %c7_i32_133 : i32 to vector<8x1xi32>
    %686 = arith.cmpi slt, %685, %7 : vector<8x1xi32>
    %687 = vector.shape_cast %686 : vector<8x1xi1> to vector<8x1xi1>
    %688 = vector.broadcast %687 : vector<8x1xi1> to vector<8x128xi1>
    %689 = vector.broadcast %618 : i32 to vector<8x1xi32>
    %690 = arith.cmpi slt, %689, %7 : vector<8x1xi32>
    %691 = vector.shape_cast %690 : vector<8x1xi1> to vector<8x1xi1>
    %692 = vector.broadcast %691 : vector<8x1xi1> to vector<8x128xi1>
    %cst_148 = arith.constant 0.000000e+00 : f32
    %693 = vector.broadcast %cst_148 : f32 to vector<8x128xf32>
    %694 = arith.select %688, %659, %693 : vector<8x128xi1>, vector<8x128xf32>
    %695 = arith.index_cast %620 : i32 to index
    %c0_149 = arith.constant 0 : index
    %696 = vector.load %arg5[%695, %c0_149] : memref<64x128xf32, #tpu.memory_space<vmem>>, vector<8x128xf32>
    tpu.vector_store %arg5[%695, %c0_149], %694 {strides = array<i32>} : memref<64x128xf32, #tpu.memory_space<vmem>>, vector<8x128xf32>,
    %cst_150 = arith.constant 0.000000e+00 : f32
    %697 = vector.broadcast %cst_150 : f32 to vector<8x128xf32>
    %698 = arith.select %692, %684, %697 : vector<8x128xi1>, vector<8x128xf32>
    %699 = arith.index_cast %622 : i32 to index
    %c0_151 = arith.constant 0 : index
    %700 = vector.load %arg6[%699, %c0_151] : memref<64x128xf32, #tpu.memory_space<vmem>>, vector<8x128xf32>
    tpu.vector_store %arg6[%699, %c0_151], %698 {strides = array<i32>} : memref<64x128xf32, #tpu.memory_space<vmem>>, vector<8x128xf32>,
    %701 = arith.select %688, %659, %614 : vector<8x128xi1>, vector<8x128xf32>
    %702 = arith.select %688, %657, %615 : vector<8x128xi1>, vector<8x128xf32>
    %703 = arith.select %692, %684, %616 : vector<8x128xi1>, vector<8x128xf32>
    %704 = arith.select %692, %682, %617 : vector<8x128xi1>, vector<8x128xf32>
    %c8_i32_152 = arith.constant 8 : i32
    %c0_153 = arith.constant 0 : index
    %c0_154 = arith.constant 0 : index
    %705 = vector.load %arg7[%c0_153, %c0_154] : memref<8x256xf32, #tpu.memory_space<vmem>>, vector<8x128xf32>
    tpu.vector_store %arg7[%c0_153, %c0_154], %701 {strides = array<i32>} : memref<8x256xf32, #tpu.memory_space<vmem>>, vector<8x128xf32>,
    %c0_155 = arith.constant 0 : index
    %c128 = arith.constant 128 : index
    %706 = vector.load %arg7[%c0_155, %c128] : memref<8x256xf32, #tpu.memory_space<vmem>>, vector<8x128xf32>
    tpu.vector_store %arg7[%c0_155, %c128], %703 {strides = array<i32>} : memref<8x256xf32, #tpu.memory_space<vmem>>, vector<8x128xf32>,
    %c0_156 = arith.constant 0 : index
    %c0_157 = arith.constant 0 : index
    %707 = vector.load %arg8[%c0_156, %c0_157] : memref<8x256xf32, #tpu.memory_space<vmem>>, vector<8x128xf32>
    tpu.vector_store %arg8[%c0_156, %c0_157], %702 {strides = array<i32>} : memref<8x256xf32, #tpu.memory_space<vmem>>, vector<8x128xf32>,
    %c0_158 = arith.constant 0 : index
    %c128_159 = arith.constant 128 : index
    %708 = vector.load %arg8[%c0_158, %c128_159] : memref<8x256xf32, #tpu.memory_space<vmem>>, vector<8x128xf32>
    tpu.vector_store %arg8[%c0_158, %c128_159], %704 {strides = array<i32>} : memref<8x256xf32, #tpu.memory_space<vmem>>, vector<8x128xf32>,
    return
  }
}

</mosaic_0001>

<llo_original>
// kernel: encoder_rnn_forward.1
$region0: #{encoder_rnn_forward.1}
  #allocation0 [shape = 'u32[]', space=smem, size = 0x4, offset = 0x4, fixed_abs, tag = 'smem constant byte address 0x4 - core index']
  #allocation1 [shape = 'u32[72,128]{1,0:T(1,128)}', space=vmem, size = 0x9000, scoped, tag = 'internal scratch']
  #allocation2 [shape = 'f32[64,1024]{1,0:T(8,128)}', space=vmem, size = 0x40000, scoped, tag = 'scratch operand']
  %s0 = inlined_call_operand.vmem [shape: s32[8,1], index: 0, kind: input, shape index: {}]
  %s1 = inlined_call_operand.vmem [shape: bf16[64,32], index: 1, kind: input, shape index: {}]
  %s2 = inlined_call_operand.vmem [shape: bf16[32,1024], index: 2, kind: input, shape index: {}]
  %s3 = inlined_call_operand.vmem [shape: bf16[256,1024], index: 3, kind: input, shape index: {}]
  %s4 = inlined_call_operand.vmem [shape: f32[1,1024], index: 4, kind: input, shape index: {}]
  %s5 = inlined_call_operand.vmem [shape: f32[64,128], index: 5, kind: output, shape index: {0}]
  %s6 = inlined_call_operand.vmem [shape: f32[64,128], index: 6, kind: output, shape index: {1}]
  %s7 = inlined_call_operand.vmem [shape: f32[8,256], index: 7, kind: output, shape index: {2}]
  %s8 = inlined_call_operand.vmem [shape: f32[8,256], index: 8, kind: output, shape index: {3}]
  %9 = xla_tuple %s5, %s6, %s7, %s8
  %s10 = sld [smem:[#allocation0]]
  $region54: #{encoder_rnn_forward.1} parent=0
    _
  %s12 = ssub.s32 1, %s10
  %s13 = scalar_select 0, %s12, %s10
  // Predicated region
  $region2: #{encoder_rnn_forward.1} parent=0 // pred_check
    _
  $region3: #{encoder_rnn_forward.1} parent=0 // pred_check_branch
    %15 = sbr.rel (0) target = $region5
  $region4: #{encoder_rnn_forward.1} parent=0 // pred_region
    _
  $region5: #{encoder_rnn_forward.1} parent=0 // pred_fallthru
    _
  // Predicated region
  $region6: #{encoder_rnn_forward.1} parent=0 // pred_check
    _
  $region7: #{encoder_rnn_forward.1} parent=0 // pred_check_branch
    %17 = sbr.rel (0) target = $region9
  $region8: #{encoder_rnn_forward.1} parent=0 // pred_region
    _
  $region9: #{encoder_rnn_forward.1} parent=0 // pred_fallthru
    _
  // Predicated region
  $region10: #{encoder_rnn_forward.1} parent=0 // pred_check
    _
  $region11: #{encoder_rnn_forward.1} parent=0 // pred_check_branch
    %19 = sbr.rel (0) target = $region13
  $region12: #{encoder_rnn_forward.1} parent=0 // pred_region
    _
  $region13: #{encoder_rnn_forward.1} parent=0 // pred_fallthru
    _
  // Predicated region
  $region14: #{encoder_rnn_forward.1} parent=0 // pred_check
    _
  $region15: #{encoder_rnn_forward.1} parent=0 // pred_check_branch
    %21 = sbr.rel (0) target = $region17
  $region16: #{encoder_rnn_forward.1} parent=0 // pred_region
    _
  $region17: #{encoder_rnn_forward.1} parent=0 // pred_fallthru
    _
  // Predicated region
  $region18: #{encoder_rnn_forward.1} parent=0 // pred_check
    _
  $region19: #{encoder_rnn_forward.1} parent=0 // pred_check_branch
    %23 = sbr.rel (0) target = $region21
  $region20: #{encoder_rnn_forward.1} parent=0 // pred_region
    _
  $region21: #{encoder_rnn_forward.1} parent=0 // pred_fallthru
    _
  %v25 = vld [vmem:[%s1] sm:$0xf]
  %v26 = vld [vmem:[%s1 + $0x4] sm:$0xf]
  %v27 = vld [vmem:[%s1 + $0x8] sm:$0xf]
  %v28 = vld [vmem:[%s1 + $0xc] sm:$0xf]
  %v29 = vld [vmem:[%s1 + $0x10] sm:$0xf]
  %v30 = vld [vmem:[%s1 + $0x14] sm:$0xf]
  %v31 = vld [vmem:[%s1 + $0x18] sm:$0xf]
  %v32 = vld [vmem:[%s1 + $0x1c] sm:$0xf]
  %v33 = vld [vmem:[%s2] sm:$0xff]
  %v34 = vld [vmem:[%s2 + $0x8] sm:$0xff]
  %v35 = vld [vmem:[%s2 + $0x10] sm:$0xff]
  %v36 = vld [vmem:[%s2 + $0x18] sm:$0xff]
  %v37 = vld [vmem:[%s2 + $0x20] sm:$0xff]
  %v38 = vld [vmem:[%s2 + $0x28] sm:$0xff]
  %v39 = vld [vmem:[%s2 + $0x30] sm:$0xff]
  %v40 = vld [vmem:[%s2 + $0x38] sm:$0xff]
  %v41 = vld [vmem:[%s2 + $0x40] sm:$0xff]
  %v42 = vld [vmem:[%s2 + $0x48] sm:$0xff]
  %v43 = vld [vmem:[%s2 + $0x50] sm:$0xff]
  %v44 = vld [vmem:[%s2 + $0x58] sm:$0xff]
  %v45 = vld [vmem:[%s2 + $0x60] sm:$0xff]
  %v46 = vld [vmem:[%s2 + $0x68] sm:$0xff]
  %v47 = vld [vmem:[%s2 + $0x70] sm:$0xff]
  %v48 = vld [vmem:[%s2 + $0x78] sm:$0xff]
  %v49 = vld [vmem:[%s4] sm:$0xff]
  %v51 = vperm.slane %v49, 0
  %v52 = vperm.slane %v49, 1
  %v53 = vperm.slane %v49, 2
  %v54 = vperm.slane %v49, 3
  %v55 = vperm.slane %v49, 4
  %v56 = vperm.slane %v49, 5
  %v57 = vperm.slane %v49, 6
  %v58 = vperm.slane %v49, 7
  %v75 = vunpack.c.l.b16 %v25
  %v76 = vunpack.c.l.b16 %v26
  %v77 = vunpack.c.l.b16 %v27
  %v78 = vunpack.c.l.b16 %v28
  %v79 = vunpack.c.l.b16 %v29
  %v80 = vunpack.c.l.b16 %v30
  %v81 = vunpack.c.l.b16 %v31
  %v82 = vunpack.c.l.b16 %v32
  %v83 = vpack.c.b16 %v76, %v75
  %v84 = vpack.c.b16 %v78, %v77
  %v85 = vpack.c.b16 %v80, %v79
  %v86 = vpack.c.b16 %v82, %v81
  %v103 = vunpack.c.l.b16 %v33
  %v104 = vunpack.c.h.b16 %v33
  %v105 = vunpack.c.l.b16 %v34
  %v106 = vunpack.c.h.b16 %v34
  %v107 = vunpack.c.l.b16 %v35
  %v108 = vunpack.c.h.b16 %v35
  %v109 = vunpack.c.l.b16 %v36
  %v110 = vunpack.c.h.b16 %v36
  %v111 = vunpack.c.l.b16 %v37
  %v112 = vunpack.c.h.b16 %v37
  %v113 = vunpack.c.l.b16 %v38
  %v114 = vunpack.c.h.b16 %v38
  %v115 = vunpack.c.l.b16 %v39
  %v116 = vunpack.c.h.b16 %v39
  %v117 = vunpack.c.l.b16 %v40
  %v118 = vunpack.c.h.b16 %v40
  %v119 = vunpack.c.l.b16 %v41
  %v120 = vunpack.c.h.b16 %v41
  %v121 = vunpack.c.l.b16 %v42
  %v122 = vunpack.c.h.b16 %v42
  %v123 = vunpack.c.l.b16 %v43
  %v124 = vunpack.c.h.b16 %v43
  %v125 = vunpack.c.l.b16 %v44
  %v126 = vunpack.c.h.b16 %v44
  %v127 = vunpack.c.l.b16 %v45
  %v128 = vunpack.c.h.b16 %v45
  %v129 = vunpack.c.l.b16 %v46
  %v130 = vunpack.c.h.b16 %v46
  %v131 = vunpack.c.l.b16 %v47
  %v132 = vunpack.c.h.b16 %v47
  %v133 = vunpack.c.l.b16 %v48
  %v134 = vunpack.c.h.b16 %v48
  %v135 = vpack.c.b16 %v111, %v103
  %v136 = vpack.c.b16 %v112, %v104
  %v137 = vpack.c.b16 %v113, %v105
  %v138 = vpack.c.b16 %v114, %v106
  %v139 = vpack.c.b16 %v115, %v107
  %v140 = vpack.c.b16 %v116, %v108
  %v141 = vpack.c.b16 %v117, %v109
  %v142 = vpack.c.b16 %v118, %v110
  %v143 = vpack.c.b16 %v127, %v119
  %v144 = vpack.c.b16 %v128, %v120
  %v145 = vpack.c.b16 %v129, %v121
  %v146 = vpack.c.b16 %v130, %v122
  %v147 = vpack.c.b16 %v131, %v123
  %v148 = vpack.c.b16 %v132, %v124
  %v149 = vpack.c.b16 %v133, %v125
  %v150 = vpack.c.b16 %v134, %v126
  %vm167 = vcmask 261120
  %v169 = vsel %vm167, %v83, 0
  %v172 = vsel %vm167, %v84, 0
  %v175 = vsel %vm167, %v85, 0
  %v178 = vsel %vm167, %v86, 0
  %180 = vmatpush.bf16.msra.mxu0 0
  %181 = vmatpush.bf16.msra.mxu0 0
  %182 = vmatpush.bf16.msra.mxu0 0
  %183 = vmatpush.bf16.msra.mxu0 0
  %184 = vmatpush.bf16.msra.mxu0 0
  %185 = vmatpush.bf16.msra.mxu0 0
  %186 = vmatpush.bf16.msra.mxu0 %v143
  %187 = vmatpush.bf16.msra.mxu0 %v135
  %188 = vmatmul.bf16.gmra.mxu0 %v169
  %v189 = vpop.f32.mrf.mxu0
  %v190 = vadd.f32 %v51, %v189
  %v191 = vpop.f32.mrf.mxu0
  %v192 = vadd.f32 %v51, %v191
  %193 = vmatmul.bf16.gmra.mxu0 %v172
  %v194 = vpop.f32.mrf.mxu0
  %v195 = vadd.f32 %v51, %v194
  %v196 = vpop.f32.mrf.mxu0
  %v197 = vadd.f32 %v51, %v196
  %198 = vmatmul.bf16.gmra.mxu0 %v175
  %v199 = vpop.f32.mrf.mxu0
  %v200 = vadd.f32 %v51, %v199
  %v201 = vpop.f32.mrf.mxu0
  %v202 = vadd.f32 %v51, %v201
  %203 = vmatmul.bf16.gmra.mxu0 %v178
  %v204 = vpop.f32.mrf.mxu0
  %v205 = vadd.f32 %v51, %v204
  %v206 = vpop.f32.mrf.mxu0
  %v207 = vadd.f32 %v51, %v206
  %208 = vdwg.mxu0
  %209 = vmatpush.bf16.msra.mxu0 0
  %210 = vmatpush.bf16.msra.mxu0 0
  %211 = vmatpush.bf16.msra.mxu0 0
  %212 = vmatpush.bf16.msra.mxu0 0
  %213 = vmatpush.bf16.msra.mxu0 0
  %214 = vmatpush.bf16.msra.mxu0 0
  %215 = vmatpush.bf16.msra.mxu0 %v144
  %216 = vmatpush.bf16.msra.mxu0 %v136
  %217 = vmatmul.bf16.gmra.mxu0 %v169
  %v218 = vpop.f32.mrf.mxu0
  %v219 = vadd.f32 %v52, %v218
  %v220 = vpop.f32.mrf.mxu0
  %v221 = vadd.f32 %v52, %v220
  %222 = vmatmul.bf16.gmra.mxu0 %v172
  %v223 = vpop.f32.mrf.mxu0
  %v224 = vadd.f32 %v52, %v223
  %v225 = vpop.f32.mrf.mxu0
  %v226 = vadd.f32 %v52, %v225
  %227 = vmatmul.bf16.gmra.mxu0 %v175
  %v228 = vpop.f32.mrf.mxu0
  %v229 = vadd.f32 %v52, %v228
  %v230 = vpop.f32.mrf.mxu0
  %v231 = vadd.f32 %v52, %v230
  %232 = vmatmul.bf16.gmra.mxu0 %v178
  %v233 = vpop.f32.mrf.mxu0
  %v234 = vadd.f32 %v52, %v233
  %v235 = vpop.f32.mrf.mxu0
  %v236 = vadd.f32 %v52, %v235
  %237 = vdwg.mxu0
  %238 = vmatpush.bf16.msra.mxu0 0
  %239 = vmatpush.bf16.msra.mxu0 0
  %240 = vmatpush.bf16.msra.mxu0 0
  %241 = vmatpush.bf16.msra.mxu0 0
  %242 = vmatpush.bf16.msra.mxu0 0
  %243 = vmatpush.bf16.msra.mxu0 0
  %244 = vmatpush.bf16.msra.mxu0 %v145
  %245 = vmatpush.bf16.msra.mxu0 %v137
  %246 = vmatmul.bf16.gmra.mxu0 %v169
  %v247 = vpop.f32.mrf.mxu0
  %v248 = vadd.f32 %v53, %v247
  %v249 = vpop.f32.mrf.mxu0
  %v250 = vadd.f32 %v53, %v249
  %251 = vmatmul.bf16.gmra.mxu0 %v172
  %v252 = vpop.f32.mrf.mxu0
  %v253 = vadd.f32 %v53, %v252
  %v254 = vpop.f32.mrf.mxu0
  %v255 = vadd.f32 %v53, %v254
  %256 = vmatmul.bf16.gmra.mxu0 %v175
  %v257 = vpop.f32.mrf.mxu0
  %v258 = vadd.f32 %v53, %v257
  %v259 = vpop.f32.mrf.mxu0
  %v260 = vadd.f32 %v53, %v259
  %261 = vmatmul.bf16.gmra.mxu0 %v178
  %v262 = vpop.f32.mrf.mxu0
  %v263 = vadd.f32 %v53, %v262
  %v264 = vpop.f32.mrf.mxu0
  %v265 = vadd.f32 %v53, %v264
  %266 = vdwg.mxu0
  %267 = vmatpush.bf16.msra.mxu0 0
  %268 = vmatpush.bf16.msra.mxu0 0
  %269 = vmatpush.bf16.msra.mxu0 0
  %270 = vmatpush.bf16.msra.mxu0 0
  %271 = vmatpush.bf16.msra.mxu0 0
  %272 = vmatpush.bf16.msra.mxu0 0
  %273 = vmatpush.bf16.msra.mxu0 %v146
  %274 = vmatpush.bf16.msra.mxu0 %v138
  %275 = vmatmul.bf16.gmra.mxu0 %v169
  %v276 = vpop.f32.mrf.mxu0
  %v277 = vadd.f32 %v54, %v276
  %v278 = vpop.f32.mrf.mxu0
  %v279 = vadd.f32 %v54, %v278
  %280 = vmatmul.bf16.gmra.mxu0 %v172
  %v281 = vpop.f32.mrf.mxu0
  %v282 = vadd.f32 %v54, %v281
  %v283 = vpop.f32.mrf.mxu0
  %v284 = vadd.f32 %v54, %v283
  %285 = vmatmul.bf16.gmra.mxu0 %v175
  %v286 = vpop.f32.mrf.mxu0
  %v287 = vadd.f32 %v54, %v286
  %v288 = vpop.f32.mrf.mxu0
  %v289 = vadd.f32 %v54, %v288
  %290 = vmatmul.bf16.gmra.mxu0 %v178
  %v291 = vpop.f32.mrf.mxu0
  %v292 = vadd.f32 %v54, %v291
  %v293 = vpop.f32.mrf.mxu0
  %v294 = vadd.f32 %v54, %v293
  %295 = vdwg.mxu0
  %296 = vmatpush.bf16.msra.mxu0 0
  %297 = vmatpush.bf16.msra.mxu0 0
  %298 = vmatpush.bf16.msra.mxu0 0
  %299 = vmatpush.bf16.msra.mxu0 0
  %300 = vmatpush.bf16.msra.mxu0 0
  %301 = vmatpush.bf16.msra.mxu0 0
  %302 = vmatpush.bf16.msra.mxu0 %v147
  %303 = vmatpush.bf16.msra.mxu0 %v139
  %304 = vmatmul.bf16.gmra.mxu0 %v169
  %v305 = vpop.f32.mrf.mxu0
  %v306 = vadd.f32 %v55, %v305
  %v307 = vpop.f32.mrf.mxu0
  %v308 = vadd.f32 %v55, %v307
  %309 = vmatmul.bf16.gmra.mxu0 %v172
  %v310 = vpop.f32.mrf.mxu0
  %v311 = vadd.f32 %v55, %v310
  %v312 = vpop.f32.mrf.mxu0
  %v313 = vadd.f32 %v55, %v312
  %314 = vmatmul.bf16.gmra.mxu0 %v175
  %v315 = vpop.f32.mrf.mxu0
  %v316 = vadd.f32 %v55, %v315
  %v317 = vpop.f32.mrf.mxu0
  %v318 = vadd.f32 %v55, %v317
  %319 = vmatmul.bf16.gmra.mxu0 %v178
  %v320 = vpop.f32.mrf.mxu0
  %v321 = vadd.f32 %v55, %v320
  %v322 = vpop.f32.mrf.mxu0
  %v323 = vadd.f32 %v55, %v322
  %324 = vdwg.mxu0
  %325 = vmatpush.bf16.msra.mxu0 0
  %326 = vmatpush.bf16.msra.mxu0 0
  %327 = vmatpush.bf16.msra.mxu0 0
  %328 = vmatpush.bf16.msra.mxu0 0
  %329 = vmatpush.bf16.msra.mxu0 0
  %330 = vmatpush.bf16.msra.mxu0 0
  %331 = vmatpush.bf16.msra.mxu0 %v148
  %332 = vmatpush.bf16.msra.mxu0 %v140
  %333 = vmatmul.bf16.gmra.mxu0 %v169
  %v334 = vpop.f32.mrf.mxu0
  %v335 = vadd.f32 %v56, %v334
  %v336 = vpop.f32.mrf.mxu0
  %v337 = vadd.f32 %v56, %v336
  %338 = vmatmul.bf16.gmra.mxu0 %v172
  %v339 = vpop.f32.mrf.mxu0
  %v340 = vadd.f32 %v56, %v339
  %v341 = vpop.f32.mrf.mxu0
  %v342 = vadd.f32 %v56, %v341
  %343 = vmatmul.bf16.gmra.mxu0 %v175
  %v344 = vpop.f32.mrf.mxu0
  %v345 = vadd.f32 %v56, %v344
  %v346 = vpop.f32.mrf.mxu0
  %v347 = vadd.f32 %v56, %v346
  %348 = vmatmul.bf16.gmra.mxu0 %v178
  %v349 = vpop.f32.mrf.mxu0
  %v350 = vadd.f32 %v56, %v349
  %v351 = vpop.f32.mrf.mxu0
  %v352 = vadd.f32 %v56, %v351
  %353 = vdwg.mxu0
  %354 = vmatpush.bf16.msra.mxu0 0
  %355 = vmatpush.bf16.msra.mxu0 0
  %356 = vmatpush.bf16.msra.mxu0 0
  %357 = vmatpush.bf16.msra.mxu0 0
  %358 = vmatpush.bf16.msra.mxu0 0
  %359 = vmatpush.bf16.msra.mxu0 0
  %360 = vmatpush.bf16.msra.mxu0 %v149
  %361 = vmatpush.bf16.msra.mxu0 %v141
  %362 = vmatmul.bf16.gmra.mxu0 %v169
  %v363 = vpop.f32.mrf.mxu0
  %v364 = vadd.f32 %v57, %v363
  %v365 = vpop.f32.mrf.mxu0
  %v366 = vadd.f32 %v57, %v365
  %367 = vmatmul.bf16.gmra.mxu0 %v172
  %v368 = vpop.f32.mrf.mxu0
  %v369 = vadd.f32 %v57, %v368
  %v370 = vpop.f32.mrf.mxu0
  %v371 = vadd.f32 %v57, %v370
  %372 = vmatmul.bf16.gmra.mxu0 %v175
  %v373 = vpop.f32.mrf.mxu0
  %v374 = vadd.f32 %v57, %v373
  %v375 = vpop.f32.mrf.mxu0
  %v376 = vadd.f32 %v57, %v375
  %377 = vmatmul.bf16.gmra.mxu0 %v178
  %v378 = vpop.f32.mrf.mxu0
  %v379 = vadd.f32 %v57, %v378
  %v380 = vpop.f32.mrf.mxu0
  %v381 = vadd.f32 %v57, %v380
  %382 = vdwg.mxu0
  %383 = vmatpush.bf16.msra.mxu0 0
  %384 = vmatpush.bf16.msra.mxu0 0
  %385 = vmatpush.bf16.msra.mxu0 0
  %386 = vmatpush.bf16.msra.mxu0 0
  %387 = vmatpush.bf16.msra.mxu0 0
  %388 = vmatpush.bf16.msra.mxu0 0
  %389 = vmatpush.bf16.msra.mxu0 %v150
  %390 = vmatpush.bf16.msra.mxu0 %v142
  %391 = vmatmul.bf16.gmra.mxu0 %v169
  %v392 = vpop.f32.mrf.mxu0
  %v393 = vadd.f32 %v58, %v392
  %v394 = vpop.f32.mrf.mxu0
  %v395 = vadd.f32 %v58, %v394
  %396 = vmatmul.bf16.gmra.mxu0 %v172
  %v397 = vpop.f32.mrf.mxu0
  %v398 = vadd.f32 %v58, %v397
  %v399 = vpop.f32.mrf.mxu0
  %v400 = vadd.f32 %v58, %v399
  %401 = vmatmul.bf16.gmra.mxu0 %v175
  %v402 = vpop.f32.mrf.mxu0
  %v403 = vadd.f32 %v58, %v402
  %v404 = vpop.f32.mrf.mxu0
  %v405 = vadd.f32 %v58, %v404
  %406 = vmatmul.bf16.gmra.mxu0 %v178
  %v407 = vpop.f32.mrf.mxu0
  %v408 = vadd.f32 %v58, %v407
  %v409 = vpop.f32.mrf.mxu0
  %v410 = vadd.f32 %v58, %v409
  %411 = vdwg.mxu0
  %412 = vst [vmem:[#allocation2] sm:$0xff] %v190
  %413 = vst [vmem:[#allocation2 + $0x8] sm:$0xff] %v219
  %414 = vst [vmem:[#allocation2 + $0x10] sm:$0xff] %v248
  %415 = vst [vmem:[#allocation2 + $0x18] sm:$0xff] %v277
  %416 = vst [vmem:[#allocation2 + $0x20] sm:$0xff] %v306
  %417 = vst [vmem:[#allocation2 + $0x28] sm:$0xff] %v335
  %418 = vst [vmem:[#allocation2 + $0x30] sm:$0xff] %v364
  %419 = vst [vmem:[#allocation2 + $0x38] sm:$0xff] %v393
  %420 = vst [vmem:[#allocation2 + $0x40] sm:$0xff] %v192
  %421 = vst [vmem:[#allocation2 + $0x48] sm:$0xff] %v221
  %422 = vst [vmem:[#allocation2 + $0x50] sm:$0xff] %v250
  %423 = vst [vmem:[#allocation2 + $0x58] sm:$0xff] %v279
  %424 = vst [vmem:[#allocation2 + $0x60] sm:$0xff] %v308
  %425 = vst [vmem:[#allocation2 + $0x68] sm:$0xff] %v337
  %426 = vst [vmem:[#allocation2 + $0x70] sm:$0xff] %v366
  %427 = vst [vmem:[#allocation2 + $0x78] sm:$0xff] %v395
  %428 = vst [vmem:[#allocation2 + $0x80] sm:$0xff] %v195
  %429 = vst [vmem:[#allocation2 + $0x88] sm:$0xff] %v224
  %430 = vst [vmem:[#allocation2 + $0x90] sm:$0xff] %v253
  %431 = vst [vmem:[#allocation2 + $0x98] sm:$0xff] %v282
  %432 = vst [vmem:[#allocation2 + $0xa0] sm:$0xff] %v311
  %433 = vst [vmem:[#allocation2 + $0xa8] sm:$0xff] %v340
  %434 = vst [vmem:[#allocation2 + $0xb0] sm:$0xff] %v369
  %435 = vst [vmem:[#allocation2 + $0xb8] sm:$0xff] %v398
  %436 = vst [vmem:[#allocation2 + $0xc0] sm:$0xff] %v197
  %437 = vst [vmem:[#allocation2 + $0xc8] sm:$0xff] %v226
  %438 = vst [vmem:[#allocation2 + $0xd0] sm:$0xff] %v255
  %439 = vst [vmem:[#allocation2 + $0xd8] sm:$0xff] %v284
  %440 = vst [vmem:[#allocation2 + $0xe0] sm:$0xff] %v313
  %441 = vst [vmem:[#allocation2 + $0xe8] sm:$0xff] %v342
  %442 = vst [vmem:[#allocation2 + $0xf0] sm:$0xff] %v371
  %443 = vst [vmem:[#allocation2 + $0xf8] sm:$0xff] %v400
  %444 = vst [vmem:[#allocation2 + $0x100] sm:$0xff] %v200
  %445 = vst [vmem:[#allocation2 + $0x108] sm:$0xff] %v229
  %446 = vst [vmem:[#allocation2 + $0x110] sm:$0xff] %v258
  %447 = vst [vmem:[#allocation2 + $0x118] sm:$0xff] %v287
  %448 = vst [vmem:[#allocation2 + $0x120] sm:$0xff] %v316
  %449 = vst [vmem:[#allocation2 + $0x128] sm:$0xff] %v345
  %450 = vst [vmem:[#allocation2 + $0x130] sm:$0xff] %v374
  %451 = vst [vmem:[#allocation2 + $0x138] sm:$0xff] %v403
  %452 = vst [vmem:[#allocation2 + $0x140] sm:$0xff] %v202
  %453 = vst [vmem:[#allocation2 + $0x148] sm:$0xff] %v231
  %454 = vst [vmem:[#allocation2 + $0x150] sm:$0xff] %v260
  %455 = vst [vmem:[#allocation2 + $0x158] sm:$0xff] %v289
  %456 = vst [vmem:[#allocation2 + $0x160] sm:$0xff] %v318
  %457 = vst [vmem:[#allocation2 + $0x168] sm:$0xff] %v347
  %458 = vst [vmem:[#allocation2 + $0x170] sm:$0xff] %v376
  %459 = vst [vmem:[#allocation2 + $0x178] sm:$0xff] %v405
  %460 = vst [vmem:[#allocation2 + $0x180] sm:$0xff] %v205
  %461 = vst [vmem:[#allocation2 + $0x188] sm:$0xff] %v234
  %462 = vst [vmem:[#allocation2 + $0x190] sm:$0xff] %v263
  %463 = vst [vmem:[#allocation2 + $0x198] sm:$0xff] %v292
  %464 = vst [vmem:[#allocation2 + $0x1a0] sm:$0xff] %v321
  %465 = vst [vmem:[#allocation2 + $0x1a8] sm:$0xff] %v350
  %466 = vst [vmem:[#allocation2 + $0x1b0] sm:$0xff] %v379
  %467 = vst [vmem:[#allocation2 + $0x1b8] sm:$0xff] %v408
  %468 = vst [vmem:[#allocation2 + $0x1c0] sm:$0xff] %v207
  %469 = vst [vmem:[#allocation2 + $0x1c8] sm:$0xff] %v236
  %470 = vst [vmem:[#allocation2 + $0x1d0] sm:$0xff] %v265
  %471 = vst [vmem:[#allocation2 + $0x1d8] sm:$0xff] %v294
  %472 = vst [vmem:[#allocation2 + $0x1e0] sm:$0xff] %v323
  %473 = vst [vmem:[#allocation2 + $0x1e8] sm:$0xff] %v352
  %474 = vst [vmem:[#allocation2 + $0x1f0] sm:$0xff] %v381
  %475 = vst [vmem:[#allocation2 + $0x1f8] sm:$0xff] %v410
  %v476 = vld [vmem:[%s0] sm:$0xff]
  %v477 = vpack.c.bf16 0.0, 0.0
  %v478 = vld [vmem:[%s3] sm:$0xff]
  %v479 = vld [vmem:[%s3 + $0x8] sm:$0xff]
  %v480 = vld [vmem:[%s3 + $0x10] sm:$0xff]
  %v481 = vld [vmem:[%s3 + $0x18] sm:$0xff]
  %v482 = vld [vmem:[%s3 + $0x20] sm:$0xff]
  %v483 = vld [vmem:[%s3 + $0x28] sm:$0xff]
  %v484 = vld [vmem:[%s3 + $0x30] sm:$0xff]
  %v485 = vld [vmem:[%s3 + $0x38] sm:$0xff]
  %v486 = vld [vmem:[%s3 + $0x40] sm:$0xff]
  %v487 = vld [vmem:[%s3 + $0x48] sm:$0xff]
  %v488 = vld [vmem:[%s3 + $0x50] sm:$0xff]
  %v489 = vld [vmem:[%s3 + $0x58] sm:$0xff]
  %v490 = vld [vmem:[%s3 + $0x60] sm:$0xff]
  %v491 = vld [vmem:[%s3 + $0x68] sm:$0xff]
  %v492 = vld [vmem:[%s3 + $0x70] sm:$0xff]
  %v493 = vld [vmem:[%s3 + $0x78] sm:$0xff]
  %v494 = vld [vmem:[%s3 + $0x80] sm:$0xff]
  %v495 = vld [vmem:[%s3 + $0x88] sm:$0xff]
  %v496 = vld [vmem:[%s3 + $0x90] sm:$0xff]
  %v497 = vld [vmem:[%s3 + $0x98] sm:$0xff]
  %v498 = vld [vmem:[%s3 + $0xa0] sm:$0xff]
  %v499 = vld [vmem:[%s3 + $0xa8] sm:$0xff]
  %v500 = vld [vmem:[%s3 + $0xb0] sm:$0xff]
  %v501 = vld [vmem:[%s3 + $0xb8] sm:$0xff]
  %v502 = vld [vmem:[%s3 + $0xc0] sm:$0xff]
  %v503 = vld [vmem:[%s3 + $0xc8] sm:$0xff]
  %v504 = vld [vmem:[%s3 + $0xd0] sm:$0xff]
  %v505 = vld [vmem:[%s3 + $0xd8] sm:$0xff]
  %v506 = vld [vmem:[%s3 + $0xe0] sm:$0xff]
  %v507 = vld [vmem:[%s3 + $0xe8] sm:$0xff]
  %v508 = vld [vmem:[%s3 + $0xf0] sm:$0xff]
  %v509 = vld [vmem:[%s3 + $0xf8] sm:$0xff]
  %v510 = vld [vmem:[%s3 + $0x100] sm:$0xff]
  %v511 = vld [vmem:[%s3 + $0x108] sm:$0xff]
  %v512 = vld [vmem:[%s3 + $0x110] sm:$0xff]
  %v513 = vld [vmem:[%s3 + $0x118] sm:$0xff]
  %v514 = vld [vmem:[%s3 + $0x120] sm:$0xff]
  %v515 = vld [vmem:[%s3 + $0x128] sm:$0xff]
  %v516 = vld [vmem:[%s3 + $0x130] sm:$0xff]
  %v517 = vld [vmem:[%s3 + $0x138] sm:$0xff]
  %v518 = vld [vmem:[%s3 + $0x140] sm:$0xff]
  %v519 = vld [vmem:[%s3 + $0x148] sm:$0xff]
  %v520 = vld [vmem:[%s3 + $0x150] sm:$0xff]
  %v521 = vld [vmem:[%s3 + $0x158] sm:$0xff]
  %v522 = vld [vmem:[%s3 + $0x160] sm:$0xff]
  %v523 = vld [vmem:[%s3 + $0x168] sm:$0xff]
  %v524 = vld [vmem:[%s3 + $0x170] sm:$0xff]
  %v525 = vld [vmem:[%s3 + $0x178] sm:$0xff]
  %v526 = vld [vmem:[%s3 + $0x180] sm:$0xff]
  %v527 = vld [vmem:[%s3 + $0x188] sm:$0xff]
  %v528 = vld [vmem:[%s3 + $0x190] sm:$0xff]
  %v529 = vld [vmem:[%s3 + $0x198] sm:$0xff]
  %v530 = vld [vmem:[%s3 + $0x1a0] sm:$0xff]
  %v531 = vld [vmem:[%s3 + $0x1a8] sm:$0xff]
  %v532 = vld [vmem:[%s3 + $0x1b0] sm:$0xff]
  %v533 = vld [vmem:[%s3 + $0x1b8] sm:$0xff]
  %v534 = vld [vmem:[%s3 + $0x1c0] sm:$0xff]
  %v535 = vld [vmem:[%s3 + $0x1c8] sm:$0xff]
  %v536 = vld [vmem:[%s3 + $0x1d0] sm:$0xff]
  %v537 = vld [vmem:[%s3 + $0x1d8] sm:$0xff]
  %v538 = vld [vmem:[%s3 + $0x1e0] sm:$0xff]
  %v539 = vld [vmem:[%s3 + $0x1e8] sm:$0xff]
  %v540 = vld [vmem:[%s3 + $0x1f0] sm:$0xff]
  %v541 = vld [vmem:[%s3 + $0x1f8] sm:$0xff]
  %v542 = vld [vmem:[%s3 + $0x200] sm:$0xff]
  %v543 = vld [vmem:[%s3 + $0x208] sm:$0xff]
  %v544 = vld [vmem:[%s3 + $0x210] sm:$0xff]
  %v545 = vld [vmem:[%s3 + $0x218] sm:$0xff]
  %v546 = vld [vmem:[%s3 + $0x220] sm:$0xff]
  %v547 = vld [vmem:[%s3 + $0x228] sm:$0xff]
  %v548 = vld [vmem:[%s3 + $0x230] sm:$0xff]
  %v549 = vld [vmem:[%s3 + $0x238] sm:$0xff]
  %v550 = vld [vmem:[%s3 + $0x240] sm:$0xff]
  %v551 = vld [vmem:[%s3 + $0x248] sm:$0xff]
  %v552 = vld [vmem:[%s3 + $0x250] sm:$0xff]
  %v553 = vld [vmem:[%s3 + $0x258] sm:$0xff]
  %v554 = vld [vmem:[%s3 + $0x260] sm:$0xff]
  %v555 = vld [vmem:[%s3 + $0x268] sm:$0xff]
  %v556 = vld [vmem:[%s3 + $0x270] sm:$0xff]
  %v557 = vld [vmem:[%s3 + $0x278] sm:$0xff]
  %v558 = vld [vmem:[%s3 + $0x280] sm:$0xff]
  %v559 = vld [vmem:[%s3 + $0x288] sm:$0xff]
  %v560 = vld [vmem:[%s3 + $0x290] sm:$0xff]
  %v561 = vld [vmem:[%s3 + $0x298] sm:$0xff]
  %v562 = vld [vmem:[%s3 + $0x2a0] sm:$0xff]
  %v563 = vld [vmem:[%s3 + $0x2a8] sm:$0xff]
  %v564 = vld [vmem:[%s3 + $0x2b0] sm:$0xff]
  %v565 = vld [vmem:[%s3 + $0x2b8] sm:$0xff]
  %v566 = vld [vmem:[%s3 + $0x2c0] sm:$0xff]
  %v567 = vld [vmem:[%s3 + $0x2c8] sm:$0xff]
  %v568 = vld [vmem:[%s3 + $0x2d0] sm:$0xff]
  %v569 = vld [vmem:[%s3 + $0x2d8] sm:$0xff]
  %v570 = vld [vmem:[%s3 + $0x2e0] sm:$0xff]
  %v571 = vld [vmem:[%s3 + $0x2e8] sm:$0xff]
  %v572 = vld [vmem:[%s3 + $0x2f0] sm:$0xff]
  %v573 = vld [vmem:[%s3 + $0x2f8] sm:$0xff]
  %v574 = vld [vmem:[%s3 + $0x300] sm:$0xff]
  %v575 = vld [vmem:[%s3 + $0x308] sm:$0xff]
  %v576 = vld [vmem:[%s3 + $0x310] sm:$0xff]
  %v577 = vld [vmem:[%s3 + $0x318] sm:$0xff]
  %v578 = vld [vmem:[%s3 + $0x320] sm:$0xff]
  %v579 = vld [vmem:[%s3 + $0x328] sm:$0xff]
  %v580 = vld [vmem:[%s3 + $0x330] sm:$0xff]
  %v581 = vld [vmem:[%s3 + $0x338] sm:$0xff]
  %v582 = vld [vmem:[%s3 + $0x340] sm:$0xff]
  %v583 = vld [vmem:[%s3 + $0x348] sm:$0xff]
  %v584 = vld [vmem:[%s3 + $0x350] sm:$0xff]
  %v585 = vld [vmem:[%s3 + $0x358] sm:$0xff]
  %v586 = vld [vmem:[%s3 + $0x360] sm:$0xff]
  %v587 = vld [vmem:[%s3 + $0x368] sm:$0xff]
  %v588 = vld [vmem:[%s3 + $0x370] sm:$0xff]
  %v589 = vld [vmem:[%s3 + $0x378] sm:$0xff]
  %v590 = vld [vmem:[%s3 + $0x380] sm:$0xff]
  %v591 = vld [vmem:[%s3 + $0x388] sm:$0xff]
  %v592 = vld [vmem:[%s3 + $0x390] sm:$0xff]
  %v593 = vld [vmem:[%s3 + $0x398] sm:$0xff]
  %v594 = vld [vmem:[%s3 + $0x3a0] sm:$0xff]
  %v595 = vld [vmem:[%s3 + $0x3a8] sm:$0xff]
  %v596 = vld [vmem:[%s3 + $0x3b0] sm:$0xff]
  %v597 = vld [vmem:[%s3 + $0x3b8] sm:$0xff]
  %v598 = vld [vmem:[%s3 + $0x3c0] sm:$0xff]
  %v599 = vld [vmem:[%s3 + $0x3c8] sm:$0xff]
  %v600 = vld [vmem:[%s3 + $0x3d0] sm:$0xff]
  %v601 = vld [vmem:[%s3 + $0x3d8] sm:$0xff]
  %v602 = vld [vmem:[%s3 + $0x3e0] sm:$0xff]
  %v603 = vld [vmem:[%s3 + $0x3e8] sm:$0xff]
  %v604 = vld [vmem:[%s3 + $0x3f0] sm:$0xff]
  %v605 = vld [vmem:[%s3 + $0x3f8] sm:$0xff]
  %v734 = vunpack.c.l.b16 %v478
  %v735 = vunpack.c.h.b16 %v478
  %v736 = vunpack.c.l.b16 %v479
  %v737 = vunpack.c.h.b16 %v479
  %v738 = vunpack.c.l.b16 %v480
  %v739 = vunpack.c.h.b16 %v480
  %v740 = vunpack.c.l.b16 %v481
  %v741 = vunpack.c.h.b16 %v481
  %v742 = vunpack.c.l.b16 %v482
  %v743 = vunpack.c.h.b16 %v482
  %v744 = vunpack.c.l.b16 %v483
  %v745 = vunpack.c.h.b16 %v483
  %v746 = vunpack.c.l.b16 %v484
  %v747 = vunpack.c.h.b16 %v484
  %v748 = vunpack.c.l.b16 %v485
  %v749 = vunpack.c.h.b16 %v485
  %v750 = vunpack.c.l.b16 %v486
  %v751 = vunpack.c.h.b16 %v486
  %v752 = vunpack.c.l.b16 %v487
  %v753 = vunpack.c.h.b16 %v487
  %v754 = vunpack.c.l.b16 %v488
  %v755 = vunpack.c.h.b16 %v488
  %v756 = vunpack.c.l.b16 %v489
  %v757 = vunpack.c.h.b16 %v489
  %v758 = vunpack.c.l.b16 %v490
  %v759 = vunpack.c.h.b16 %v490
  %v760 = vunpack.c.l.b16 %v491
  %v761 = vunpack.c.h.b16 %v491
  %v762 = vunpack.c.l.b16 %v492
  %v763 = vunpack.c.h.b16 %v492
  %v764 = vunpack.c.l.b16 %v493
  %v765 = vunpack.c.h.b16 %v493
  %v766 = vunpack.c.l.b16 %v494
  %v767 = vunpack.c.h.b16 %v494
  %v768 = vunpack.c.l.b16 %v495
  %v769 = vunpack.c.h.b16 %v495
  %v770 = vunpack.c.l.b16 %v496
  %v771 = vunpack.c.h.b16 %v496
  %v772 = vunpack.c.l.b16 %v497
  %v773 = vunpack.c.h.b16 %v497
  %v774 = vunpack.c.l.b16 %v498
  %v775 = vunpack.c.h.b16 %v498
  %v776 = vunpack.c.l.b16 %v499
  %v777 = vunpack.c.h.b16 %v499
  %v778 = vunpack.c.l.b16 %v500
  %v779 = vunpack.c.h.b16 %v500
  %v780 = vunpack.c.l.b16 %v501
  %v781 = vunpack.c.h.b16 %v501
  %v782 = vunpack.c.l.b16 %v502
  %v783 = vunpack.c.h.b16 %v502
  %v784 = vunpack.c.l.b16 %v503
  %v785 = vunpack.c.h.b16 %v503
  %v786 = vunpack.c.l.b16 %v504
  %v787 = vunpack.c.h.b16 %v504
  %v788 = vunpack.c.l.b16 %v505
  %v789 = vunpack.c.h.b16 %v505
  %v790 = vunpack.c.l.b16 %v506
  %v791 = vunpack.c.h.b16 %v506
  %v792 = vunpack.c.l.b16 %v507
  %v793 = vunpack.c.h.b16 %v507
  %v794 = vunpack.c.l.b16 %v508
  %v795 = vunpack.c.h.b16 %v508
  %v796 = vunpack.c.l.b16 %v509
  %v797 = vunpack.c.h.b16 %v509
  %v798 = vunpack.c.l.b16 %v510
  %v799 = vunpack.c.h.b16 %v510
  %v800 = vunpack.c.l.b16 %v511
  %v801 = vunpack.c.h.b16 %v511
  %v802 = vunpack.c.l.b16 %v512
  %v803 = vunpack.c.h.b16 %v512
  %v804 = vunpack.c.l.b16 %v513
  %v805 = vunpack.c.h.b16 %v513
  %v806 = vunpack.c.l.b16 %v514
  %v807 = vunpack.c.h.b16 %v514
  %v808 = vunpack.c.l.b16 %v515
  %v809 = vunpack.c.h.b16 %v515
  %v810 = vunpack.c.l.b16 %v516
  %v811 = vunpack.c.h.b16 %v516
  %v812 = vunpack.c.l.b16 %v517
  %v813 = vunpack.c.h.b16 %v517
  %v814 = vunpack.c.l.b16 %v518
  %v815 = vunpack.c.h.b16 %v518
  %v816 = vunpack.c.l.b16 %v519
  %v817 = vunpack.c.h.b16 %v519
  %v818 = vunpack.c.l.b16 %v520
  %v819 = vunpack.c.h.b16 %v520
  %v820 = vunpack.c.l.b16 %v521
  %v821 = vunpack.c.h.b16 %v521
  %v822 = vunpack.c.l.b16 %v522
  %v823 = vunpack.c.h.b16 %v522
  %v824 = vunpack.c.l.b16 %v523
  %v825 = vunpack.c.h.b16 %v523
  %v826 = vunpack.c.l.b16 %v524
  %v827 = vunpack.c.h.b16 %v524
  %v828 = vunpack.c.l.b16 %v525
  %v829 = vunpack.c.h.b16 %v525
  %v830 = vunpack.c.l.b16 %v526
  %v831 = vunpack.c.h.b16 %v526
  %v832 = vunpack.c.l.b16 %v527
  %v833 = vunpack.c.h.b16 %v527
  %v834 = vunpack.c.l.b16 %v528
  %v835 = vunpack.c.h.b16 %v528
  %v836 = vunpack.c.l.b16 %v529
  %v837 = vunpack.c.h.b16 %v529
  %v838 = vunpack.c.l.b16 %v530
  %v839 = vunpack.c.h.b16 %v530
  %v840 = vunpack.c.l.b16 %v531
  %v841 = vunpack.c.h.b16 %v531
  %v842 = vunpack.c.l.b16 %v532
  %v843 = vunpack.c.h.b16 %v532
  %v844 = vunpack.c.l.b16 %v533
  %v845 = vunpack.c.h.b16 %v533
  %v846 = vunpack.c.l.b16 %v534
  %v847 = vunpack.c.h.b16 %v534
  %v848 = vunpack.c.l.b16 %v535
  %v849 = vunpack.c.h.b16 %v535
  %v850 = vunpack.c.l.b16 %v536
  %v851 = vunpack.c.h.b16 %v536
  %v852 = vunpack.c.l.b16 %v537
  %v853 = vunpack.c.h.b16 %v537
  %v854 = vunpack.c.l.b16 %v538
  %v855 = vunpack.c.h.b16 %v538
  %v856 = vunpack.c.l.b16 %v539
  %v857 = vunpack.c.h.b16 %v539
  %v858 = vunpack.c.l.b16 %v540
  %v859 = vunpack.c.h.b16 %v540
  %v860 = vunpack.c.l.b16 %v541
  %v861 = vunpack.c.h.b16 %v541
  %v862 = vunpack.c.l.b16 %v542
  %v863 = vunpack.c.h.b16 %v542
  %v864 = vunpack.c.l.b16 %v543
  %v865 = vunpack.c.h.b16 %v543
  %v866 = vunpack.c.l.b16 %v544
  %v867 = vunpack.c.h.b16 %v544
  %v868 = vunpack.c.l.b16 %v545
  %v869 = vunpack.c.h.b16 %v545
  %v870 = vunpack.c.l.b16 %v546
  %v871 = vunpack.c.h.b16 %v546
  %v872 = vunpack.c.l.b16 %v547
  %v873 = vunpack.c.h.b16 %v547
  %v874 = vunpack.c.l.b16 %v548
  %v875 = vunpack.c.h.b16 %v548
  %v876 = vunpack.c.l.b16 %v549
  %v877 = vunpack.c.h.b16 %v549
  %v878 = vunpack.c.l.b16 %v550
  %v879 = vunpack.c.h.b16 %v550
  %v880 = vunpack.c.l.b16 %v551
  %v881 = vunpack.c.h.b16 %v551
  %v882 = vunpack.c.l.b16 %v552
  %v883 = vunpack.c.h.b16 %v552
  %v884 = vunpack.c.l.b16 %v553
  %v885 = vunpack.c.h.b16 %v553
  %v886 = vunpack.c.l.b16 %v554
  %v887 = vunpack.c.h.b16 %v554
  %v888 = vunpack.c.l.b16 %v555
  %v889 = vunpack.c.h.b16 %v555
  %v890 = vunpack.c.l.b16 %v556
  %v891 = vunpack.c.h.b16 %v556
  %v892 = vunpack.c.l.b16 %v557
  %v893 = vunpack.c.h.b16 %v557
  %v894 = vunpack.c.l.b16 %v558
  %v895 = vunpack.c.h.b16 %v558
  %v896 = vunpack.c.l.b16 %v559
  %v897 = vunpack.c.h.b16 %v559
  %v898 = vunpack.c.l.b16 %v560
  %v899 = vunpack.c.h.b16 %v560
  %v900 = vunpack.c.l.b16 %v561
  %v901 = vunpack.c.h.b16 %v561
  %v902 = vunpack.c.l.b16 %v562
  %v903 = vunpack.c.h.b16 %v562
  %v904 = vunpack.c.l.b16 %v563
  %v905 = vunpack.c.h.b16 %v563
  %v906 = vunpack.c.l.b16 %v564
  %v907 = vunpack.c.h.b16 %v564
  %v908 = vunpack.c.l.b16 %v565
  %v909 = vunpack.c.h.b16 %v565
  %v910 = vunpack.c.l.b16 %v566
  %v911 = vunpack.c.h.b16 %v566
  %v912 = vunpack.c.l.b16 %v567
  %v913 = vunpack.c.h.b16 %v567
  %v914 = vunpack.c.l.b16 %v568
  %v915 = vunpack.c.h.b16 %v568
  %v916 = vunpack.c.l.b16 %v569
  %v917 = vunpack.c.h.b16 %v569
  %v918 = vunpack.c.l.b16 %v570
  %v919 = vunpack.c.h.b16 %v570
  %v920 = vunpack.c.l.b16 %v571
  %v921 = vunpack.c.h.b16 %v571
  %v922 = vunpack.c.l.b16 %v572
  %v923 = vunpack.c.h.b16 %v572
  %v924 = vunpack.c.l.b16 %v573
  %v925 = vunpack.c.h.b16 %v573
  %v926 = vunpack.c.l.b16 %v574
  %v927 = vunpack.c.h.b16 %v574
  %v928 = vunpack.c.l.b16 %v575
  %v929 = vunpack.c.h.b16 %v575
  %v930 = vunpack.c.l.b16 %v576
  %v931 = vunpack.c.h.b16 %v576
  %v932 = vunpack.c.l.b16 %v577
  %v933 = vunpack.c.h.b16 %v577
  %v934 = vunpack.c.l.b16 %v578
  %v935 = vunpack.c.h.b16 %v578
  %v936 = vunpack.c.l.b16 %v579
  %v937 = vunpack.c.h.b16 %v579
  %v938 = vunpack.c.l.b16 %v580
  %v939 = vunpack.c.h.b16 %v580
  %v940 = vunpack.c.l.b16 %v581
  %v941 = vunpack.c.h.b16 %v581
  %v942 = vunpack.c.l.b16 %v582
  %v943 = vunpack.c.h.b16 %v582
  %v944 = vunpack.c.l.b16 %v583
  %v945 = vunpack.c.h.b16 %v583
  %v946 = vunpack.c.l.b16 %v584
  %v947 = vunpack.c.h.b16 %v584
  %v948 = vunpack.c.l.b16 %v585
  %v949 = vunpack.c.h.b16 %v585
  %v950 = vunpack.c.l.b16 %v586
  %v951 = vunpack.c.h.b16 %v586
  %v952 = vunpack.c.l.b16 %v587
  %v953 = vunpack.c.h.b16 %v587
  %v954 = vunpack.c.l.b16 %v588
  %v955 = vunpack.c.h.b16 %v588
  %v956 = vunpack.c.l.b16 %v589
  %v957 = vunpack.c.h.b16 %v589
  %v958 = vunpack.c.l.b16 %v590
  %v959 = vunpack.c.h.b16 %v590
  %v960 = vunpack.c.l.b16 %v591
  %v961 = vunpack.c.h.b16 %v591
  %v962 = vunpack.c.l.b16 %v592
  %v963 = vunpack.c.h.b16 %v592
  %v964 = vunpack.c.l.b16 %v593
  %v965 = vunpack.c.h.b16 %v593
  %v966 = vunpack.c.l.b16 %v594
  %v967 = vunpack.c.h.b16 %v594
  %v968 = vunpack.c.l.b16 %v595
  %v969 = vunpack.c.h.b16 %v595
  %v970 = vunpack.c.l.b16 %v596
  %v971 = vunpack.c.h.b16 %v596
  %v972 = vunpack.c.l.b16 %v597
  %v973 = vunpack.c.h.b16 %v597
  %v974 = vunpack.c.l.b16 %v598
  %v975 = vunpack.c.h.b16 %v598
  %v976 = vunpack.c.l.b16 %v599
  %v977 = vunpack.c.h.b16 %v599
  %v978 = vunpack.c.l.b16 %v600
  %v979 = vunpack.c.h.b16 %v600
  %v980 = vunpack.c.l.b16 %v601
  %v981 = vunpack.c.h.b16 %v601
  %v982 = vunpack.c.l.b16 %v602
  %v983 = vunpack.c.h.b16 %v602
  %v984 = vunpack.c.l.b16 %v603
  %v985 = vunpack.c.h.b16 %v603
  %v986 = vunpack.c.l.b16 %v604
  %v987 = vunpack.c.h.b16 %v604
  %v988 = vunpack.c.l.b16 %v605
  %v989 = vunpack.c.h.b16 %v605
  %v990 = vpack.c.b16 %v742, %v734
  %v991 = vpack.c.b16 %v743, %v735
  %v992 = vpack.c.b16 %v744, %v736
  %v993 = vpack.c.b16 %v745, %v737
  %v994 = vpack.c.b16 %v746, %v738
  %v995 = vpack.c.b16 %v747, %v739
  %v996 = vpack.c.b16 %v748, %v740
  %v997 = vpack.c.b16 %v749, %v741
  %v998 = vpack.c.b16 %v758, %v750
  %v999 = vpack.c.b16 %v759, %v751
  %v1000 = vpack.c.b16 %v760, %v752
  %v1001 = vpack.c.b16 %v761, %v753
  %v1002 = vpack.c.b16 %v762, %v754
  %v1003 = vpack.c.b16 %v763, %v755
  %v1004 = vpack.c.b16 %v764, %v756
  %v1005 = vpack.c.b16 %v765, %v757
  %v1006 = vpack.c.b16 %v774, %v766
  %v1007 = vpack.c.b16 %v775, %v767
  %v1008 = vpack.c.b16 %v776, %v768
  %v1009 = vpack.c.b16 %v777, %v769
  %v1010 = vpack.c.b16 %v778, %v770
  %v1011 = vpack.c.b16 %v779, %v771
  %v1012 = vpack.c.b16 %v780, %v772
  %v1013 = vpack.c.b16 %v781, %v773
  %v1014 = vpack.c.b16 %v790, %v782
  %v1015 = vpack.c.b16 %v791, %v783
  %v1016 = vpack.c.b16 %v792, %v784
  %v1017 = vpack.c.b16 %v793, %v785
  %v1018 = vpack.c.b16 %v794, %v786
  %v1019 = vpack.c.b16 %v795, %v787
  %v1020 = vpack.c.b16 %v796, %v788
  %v1021 = vpack.c.b16 %v797, %v789
  %v1022 = vpack.c.b16 %v806, %v798
  %v1023 = vpack.c.b16 %v807, %v799
  %v1024 = vpack.c.b16 %v808, %v800
  %v1025 = vpack.c.b16 %v809, %v801
  %v1026 = vpack.c.b16 %v810, %v802
  %v1027 = vpack.c.b16 %v811, %v803
  %v1028 = vpack.c.b16 %v812, %v804
  %v1029 = vpack.c.b16 %v813, %v805
  %v1030 = vpack.c.b16 %v822, %v814
  %v1031 = vpack.c.b16 %v823, %v815
  %v1032 = vpack.c.b16 %v824, %v816
  %v1033 = vpack.c.b16 %v825, %v817
  %v1034 = vpack.c.b16 %v826, %v818
  %v1035 = vpack.c.b16 %v827, %v819
  %v1036 = vpack.c.b16 %v828, %v820
  %v1037 = vpack.c.b16 %v829, %v821
  %v1038 = vpack.c.b16 %v838, %v830
  %v1039 = vpack.c.b16 %v839, %v831
  %v1040 = vpack.c.b16 %v840, %v832
  %v1041 = vpack.c.b16 %v841, %v833
  %v1042 = vpack.c.b16 %v842, %v834
  %v1043 = vpack.c.b16 %v843, %v835
  %v1044 = vpack.c.b16 %v844, %v836
  %v1045 = vpack.c.b16 %v845, %v837
  %v1046 = vpack.c.b16 %v854, %v846
  %v1047 = vpack.c.b16 %v855, %v847
  %v1048 = vpack.c.b16 %v856, %v848
  %v1049 = vpack.c.b16 %v857, %v849
  %v1050 = vpack.c.b16 %v858, %v850
  %v1051 = vpack.c.b16 %v859, %v851
  %v1052 = vpack.c.b16 %v860, %v852
  %v1053 = vpack.c.b16 %v861, %v853
  %v1054 = vpack.c.b16 %v870, %v862
  %v1055 = vpack.c.b16 %v871, %v863
  %v1056 = vpack.c.b16 %v872, %v864
  %v1057 = vpack.c.b16 %v873, %v865
  %v1058 = vpack.c.b16 %v874, %v866
  %v1059 = vpack.c.b16 %v875, %v867
  %v1060 = vpack.c.b16 %v876, %v868
  %v1061 = vpack.c.b16 %v877, %v869
  %v1062 = vpack.c.b16 %v886, %v878
  %v1063 = vpack.c.b16 %v887, %v879
  %v1064 = vpack.c.b16 %v888, %v880
  %v1065 = vpack.c.b16 %v889, %v881
  %v1066 = vpack.c.b16 %v890, %v882
  %v1067 = vpack.c.b16 %v891, %v883
  %v1068 = vpack.c.b16 %v892, %v884
  %v1069 = vpack.c.b16 %v893, %v885
  %v1070 = vpack.c.b16 %v902, %v894
  %v1071 = vpack.c.b16 %v903, %v895
  %v1072 = vpack.c.b16 %v904, %v896
  %v1073 = vpack.c.b16 %v905, %v897
  %v1074 = vpack.c.b16 %v906, %v898
  %v1075 = vpack.c.b16 %v907, %v899
  %v1076 = vpack.c.b16 %v908, %v900
  %v1077 = vpack.c.b16 %v909, %v901
  %v1078 = vpack.c.b16 %v918, %v910
  %v1079 = vpack.c.b16 %v919, %v911
  %v1080 = vpack.c.b16 %v920, %v912
  %v1081 = vpack.c.b16 %v921, %v913
  %v1082 = vpack.c.b16 %v922, %v914
  %v1083 = vpack.c.b16 %v923, %v915
  %v1084 = vpack.c.b16 %v924, %v916
  %v1085 = vpack.c.b16 %v925, %v917
  %v1086 = vpack.c.b16 %v934, %v926
  %v1087 = vpack.c.b16 %v935, %v927
  %v1088 = vpack.c.b16 %v936, %v928
  %v1089 = vpack.c.b16 %v937, %v929
  %v1090 = vpack.c.b16 %v938, %v930
  %v1091 = vpack.c.b16 %v939, %v931
  %v1092 = vpack.c.b16 %v940, %v932
  %v1093 = vpack.c.b16 %v941, %v933
  %v1094 = vpack.c.b16 %v950, %v942
  %v1095 = vpack.c.b16 %v951, %v943
  %v1096 = vpack.c.b16 %v952, %v944
  %v1097 = vpack.c.b16 %v953, %v945
  %v1098 = vpack.c.b16 %v954, %v946
  %v1099 = vpack.c.b16 %v955, %v947
  %v1100 = vpack.c.b16 %v956, %v948
  %v1101 = vpack.c.b16 %v957, %v949
  %v1102 = vpack.c.b16 %v966, %v958
  %v1103 = vpack.c.b16 %v967, %v959
  %v1104 = vpack.c.b16 %v968, %v960
  %v1105 = vpack.c.b16 %v969, %v961
  %v1106 = vpack.c.b16 %v970, %v962
  %v1107 = vpack.c.b16 %v971, %v963
  %v1108 = vpack.c.b16 %v972, %v964
  %v1109 = vpack.c.b16 %v973, %v965
  %v1110 = vpack.c.b16 %v982, %v974
  %v1111 = vpack.c.b16 %v983, %v975
  %v1112 = vpack.c.b16 %v984, %v976
  %v1113 = vpack.c.b16 %v985, %v977
  %v1114 = vpack.c.b16 %v986, %v978
  %v1115 = vpack.c.b16 %v987, %v979
  %v1116 = vpack.c.b16 %v988, %v980
  %v1117 = vpack.c.b16 %v989, %v981
  %1246 = vmatpush.bf16.msra.mxu0 %v1046
  %1247 = vmatpush.bf16.msra.mxu0 %v1038
  %1248 = vmatpush.bf16.msra.mxu0 %v1030
  %1249 = vmatpush.bf16.msra.mxu0 %v1022
  %1250 = vmatpush.bf16.msra.mxu0 %v1014
  %1251 = vmatpush.bf16.msra.mxu0 %v1006
  %1252 = vmatpush.bf16.msra.mxu0 %v998
  %1253 = vmatpush.bf16.msra.mxu0 %v990
  %1254 = vmatmul.bf16.gmra.mxu0 %v477
  %v1255 = vpop.f32.mrf.mxu0
  %v1256 = vadd.f32 0.0, %v1255
  %v1257 = vpop.f32.mrf.mxu0
  %1258 = vdwg.mxu0
  %1259 = vmatpush.bf16.msra.mxu0 %v1110
  %1260 = vmatpush.bf16.msra.mxu0 %v1102
  %1261 = vmatpush.bf16.msra.mxu0 %v1094
  %1262 = vmatpush.bf16.msra.mxu0 %v1086
  %1263 = vmatpush.bf16.msra.mxu0 %v1078
  %1264 = vmatpush.bf16.msra.mxu0 %v1070
  %1265 = vmatpush.bf16.msra.mxu0 %v1062
  %1266 = vmatpush.bf16.msra.mxu0 %v1054
  %1267 = vmatmul.bf16.gmra.mxu0 %v477
  %v1268 = vpop.f32.mrf.mxu0
  %v1269 = vadd.f32 %v1256, %v1268
  %v1270 = vpop.f32.mrf.mxu0
  %1271 = vdwg.mxu0
  %1272 = vmatpush.bf16.msra.mxu0 %v1047
  %1273 = vmatpush.bf16.msra.mxu0 %v1039
  %1274 = vmatpush.bf16.msra.mxu0 %v1031
  %1275 = vmatpush.bf16.msra.mxu0 %v1023
  %1276 = vmatpush.bf16.msra.mxu0 %v1015
  %1277 = vmatpush.bf16.msra.mxu0 %v1007
  %1278 = vmatpush.bf16.msra.mxu0 %v999
  %1279 = vmatpush.bf16.msra.mxu0 %v991
  %1280 = vmatmul.bf16.gmra.mxu0 %v477
  %v1281 = vpop.f32.mrf.mxu0
  %v1282 = vadd.f32 0.0, %v1281
  %v1283 = vpop.f32.mrf.mxu0
  %1284 = vdwg.mxu0
  %1285 = vmatpush.bf16.msra.mxu0 %v1111
  %1286 = vmatpush.bf16.msra.mxu0 %v1103
  %1287 = vmatpush.bf16.msra.mxu0 %v1095
  %1288 = vmatpush.bf16.msra.mxu0 %v1087
  %1289 = vmatpush.bf16.msra.mxu0 %v1079
  %1290 = vmatpush.bf16.msra.mxu0 %v1071
  %1291 = vmatpush.bf16.msra.mxu0 %v1063
  %1292 = vmatpush.bf16.msra.mxu0 %v1055
  %1293 = vmatmul.bf16.gmra.mxu0 %v477
  %v1294 = vpop.f32.mrf.mxu0
  %v1295 = vadd.f32 %v1282, %v1294
  %v1296 = vpop.f32.mrf.mxu0
  %1297 = vdwg.mxu0
  %1298 = vmatpush.bf16.msra.mxu0 %v1048
  %1299 = vmatpush.bf16.msra.mxu0 %v1040
  %1300 = vmatpush.bf16.msra.mxu0 %v1032
  %1301 = vmatpush.bf16.msra.mxu0 %v1024
  %1302 = vmatpush.bf16.msra.mxu0 %v1016
  %1303 = vmatpush.bf16.msra.mxu0 %v1008
  %1304 = vmatpush.bf16.msra.mxu0 %v1000
  %1305 = vmatpush.bf16.msra.mxu0 %v992
  %1306 = vmatmul.bf16.gmra.mxu0 %v477
  %v1307 = vpop.f32.mrf.mxu0
  %v1308 = vadd.f32 0.0, %v1307
  %v1309 = vpop.f32.mrf.mxu0
  %1310 = vdwg.mxu0
  %1311 = vmatpush.bf16.msra.mxu0 %v1112
  %1312 = vmatpush.bf16.msra.mxu0 %v1104
  %1313 = vmatpush.bf16.msra.mxu0 %v1096
  %1314 = vmatpush.bf16.msra.mxu0 %v1088
  %1315 = vmatpush.bf16.msra.mxu0 %v1080
  %1316 = vmatpush.bf16.msra.mxu0 %v1072
  %1317 = vmatpush.bf16.msra.mxu0 %v1064
  %1318 = vmatpush.bf16.msra.mxu0 %v1056
  %1319 = vmatmul.bf16.gmra.mxu0 %v477
  %v1320 = vpop.f32.mrf.mxu0
  %v1321 = vadd.f32 %v1308, %v1320
  %v1322 = vpop.f32.mrf.mxu0
  %1323 = vdwg.mxu0
  %1324 = vmatpush.bf16.msra.mxu0 %v1049
  %1325 = vmatpush.bf16.msra.mxu0 %v1041
  %1326 = vmatpush.bf16.msra.mxu0 %v1033
  %1327 = vmatpush.bf16.msra.mxu0 %v1025
  %1328 = vmatpush.bf16.msra.mxu0 %v1017
  %1329 = vmatpush.bf16.msra.mxu0 %v1009
  %1330 = vmatpush.bf16.msra.mxu0 %v1001
  %1331 = vmatpush.bf16.msra.mxu0 %v993
  %1332 = vmatmul.bf16.gmra.mxu0 %v477
  %v1333 = vpop.f32.mrf.mxu0
  %v1334 = vadd.f32 0.0, %v1333
  %v1335 = vpop.f32.mrf.mxu0
  %1336 = vdwg.mxu0
  %1337 = vmatpush.bf16.msra.mxu0 %v1113
  %1338 = vmatpush.bf16.msra.mxu0 %v1105
  %1339 = vmatpush.bf16.msra.mxu0 %v1097
  %1340 = vmatpush.bf16.msra.mxu0 %v1089
  %1341 = vmatpush.bf16.msra.mxu0 %v1081
  %1342 = vmatpush.bf16.msra.mxu0 %v1073
  %1343 = vmatpush.bf16.msra.mxu0 %v1065
  %1344 = vmatpush.bf16.msra.mxu0 %v1057
  %1345 = vmatmul.bf16.gmra.mxu0 %v477
  %v1346 = vpop.f32.mrf.mxu0
  %v1347 = vadd.f32 %v1334, %v1346
  %v1348 = vpop.f32.mrf.mxu0
  %1349 = vdwg.mxu0
  %1350 = vmatpush.bf16.msra.mxu0 %v1050
  %1351 = vmatpush.bf16.msra.mxu0 %v1042
  %1352 = vmatpush.bf16.msra.mxu0 %v1034
  %1353 = vmatpush.bf16.msra.mxu0 %v1026
  %1354 = vmatpush.bf16.msra.mxu0 %v1018
  %1355 = vmatpush.bf16.msra.mxu0 %v1010
  %1356 = vmatpush.bf16.msra.mxu0 %v1002
  %1357 = vmatpush.bf16.msra.mxu0 %v994
  %1358 = vmatmul.bf16.gmra.mxu0 %v477
  %v1359 = vpop.f32.mrf.mxu0
  %v1360 = vadd.f32 0.0, %v1359
  %v1361 = vpop.f32.mrf.mxu0
  %1362 = vdwg.mxu0
  %1363 = vmatpush.bf16.msra.mxu0 %v1114
  %1364 = vmatpush.bf16.msra.mxu0 %v1106
  %1365 = vmatpush.bf16.msra.mxu0 %v1098
  %1366 = vmatpush.bf16.msra.mxu0 %v1090
  %1367 = vmatpush.bf16.msra.mxu0 %v1082
  %1368 = vmatpush.bf16.msra.mxu0 %v1074
  %1369 = vmatpush.bf16.msra.mxu0 %v1066
  %1370 = vmatpush.bf16.msra.mxu0 %v1058
  %1371 = vmatmul.bf16.gmra.mxu0 %v477
  %v1372 = vpop.f32.mrf.mxu0
  %v1373 = vadd.f32 %v1360, %v1372
  %v1374 = vpop.f32.mrf.mxu0
  %1375 = vdwg.mxu0
  %1376 = vmatpush.bf16.msra.mxu0 %v1051
  %1377 = vmatpush.bf16.msra.mxu0 %v1043
  %1378 = vmatpush.bf16.msra.mxu0 %v1035
  %1379 = vmatpush.bf16.msra.mxu0 %v1027
  %1380 = vmatpush.bf16.msra.mxu0 %v1019
  %1381 = vmatpush.bf16.msra.mxu0 %v1011
  %1382 = vmatpush.bf16.msra.mxu0 %v1003
  %1383 = vmatpush.bf16.msra.mxu0 %v995
  %1384 = vmatmul.bf16.gmra.mxu0 %v477
  %v1385 = vpop.f32.mrf.mxu0
  %v1386 = vadd.f32 0.0, %v1385
  %v1387 = vpop.f32.mrf.mxu0
  %1388 = vdwg.mxu0
  %1389 = vmatpush.bf16.msra.mxu0 %v1115
  %1390 = vmatpush.bf16.msra.mxu0 %v1107
  %1391 = vmatpush.bf16.msra.mxu0 %v1099
  %1392 = vmatpush.bf16.msra.mxu0 %v1091
  %1393 = vmatpush.bf16.msra.mxu0 %v1083
  %1394 = vmatpush.bf16.msra.mxu0 %v1075
  %1395 = vmatpush.bf16.msra.mxu0 %v1067
  %1396 = vmatpush.bf16.msra.mxu0 %v1059
  %1397 = vmatmul.bf16.gmra.mxu0 %v477
  %v1398 = vpop.f32.mrf.mxu0
  %v1399 = vadd.f32 %v1386, %v1398
  %v1400 = vpop.f32.mrf.mxu0
  %1401 = vdwg.mxu0
  %1402 = vmatpush.bf16.msra.mxu0 %v1052
  %1403 = vmatpush.bf16.msra.mxu0 %v1044
  %1404 = vmatpush.bf16.msra.mxu0 %v1036
  %1405 = vmatpush.bf16.msra.mxu0 %v1028
  %1406 = vmatpush.bf16.msra.mxu0 %v1020
  %1407 = vmatpush.bf16.msra.mxu0 %v1012
  %1408 = vmatpush.bf16.msra.mxu0 %v1004
  %1409 = vmatpush.bf16.msra.mxu0 %v996
  %1410 = vmatmul.bf16.gmra.mxu0 %v477
  %v1411 = vpop.f32.mrf.mxu0
  %v1412 = vadd.f32 0.0, %v1411
  %v1413 = vpop.f32.mrf.mxu0
  %1414 = vdwg.mxu0
  %1415 = vmatpush.bf16.msra.mxu0 %v1116
  %1416 = vmatpush.bf16.msra.mxu0 %v1108
  %1417 = vmatpush.bf16.msra.mxu0 %v1100
  %1418 = vmatpush.bf16.msra.mxu0 %v1092
  %1419 = vmatpush.bf16.msra.mxu0 %v1084
  %1420 = vmatpush.bf16.msra.mxu0 %v1076
  %1421 = vmatpush.bf16.msra.mxu0 %v1068
  %1422 = vmatpush.bf16.msra.mxu0 %v1060
  %1423 = vmatmul.bf16.gmra.mxu0 %v477
  %v1424 = vpop.f32.mrf.mxu0
  %v1425 = vadd.f32 %v1412, %v1424
  %v1426 = vpop.f32.mrf.mxu0
  %1427 = vdwg.mxu0
  %1428 = vmatpush.bf16.msra.mxu0 %v1053
  %1429 = vmatpush.bf16.msra.mxu0 %v1045
  %1430 = vmatpush.bf16.msra.mxu0 %v1037
  %1431 = vmatpush.bf16.msra.mxu0 %v1029
  %1432 = vmatpush.bf16.msra.mxu0 %v1021
  %1433 = vmatpush.bf16.msra.mxu0 %v1013
  %1434 = vmatpush.bf16.msra.mxu0 %v1005
  %1435 = vmatpush.bf16.msra.mxu0 %v997
  %1436 = vmatmul.bf16.gmra.mxu0 %v477
  %v1437 = vpop.f32.mrf.mxu0
  %v1438 = vadd.f32 0.0, %v1437
  %v1439 = vpop.f32.mrf.mxu0
  %1440 = vdwg.mxu0
  %1441 = vmatpush.bf16.msra.mxu0 %v1117
  %1442 = vmatpush.bf16.msra.mxu0 %v1109
  %1443 = vmatpush.bf16.msra.mxu0 %v1101
  %1444 = vmatpush.bf16.msra.mxu0 %v1093
  %1445 = vmatpush.bf16.msra.mxu0 %v1085
  %1446 = vmatpush.bf16.msra.mxu0 %v1077
  %1447 = vmatpush.bf16.msra.mxu0 %v1069
  %1448 = vmatpush.bf16.msra.mxu0 %v1061
  %1449 = vmatmul.bf16.gmra.mxu0 %v477
  %v1450 = vpop.f32.mrf.mxu0
  %v1451 = vadd.f32 %v1438, %v1450
  %v1452 = vpop.f32.mrf.mxu0
  %1453 = vdwg.mxu0
  %s1454 = smul.u32 0, 8
  %s1455 = smul.addr %s1454, 8
  %s1456 = scalar_lea.vmem [#allocation2], %s1455
  %v1457 = vld [vmem:[%s1456] sm:$0xff]
  %v1458 = vld [vmem:[%s1456 + $0x8] sm:$0xff]
  %v1459 = vld [vmem:[%s1456 + $0x10] sm:$0xff]
  %v1460 = vld [vmem:[%s1456 + $0x18] sm:$0xff]
  %v1461 = vadd.f32 %v1457, %v1269
  %v1462 = vadd.f32 %v1458, %v1295
  %v1463 = vadd.f32 %v1459, %v1321
  %v1464 = vadd.f32 %v1460, %v1347
  %s1465 = smul.u32 7, 8
  %s1466 = smul.addr %s1465, 8
  %s1467 = scalar_lea.vmem [#allocation2], %s1466
  %v1468 = vld [vmem:[%s1467 + $0x20] sm:$0xff]
  %v1469 = vld [vmem:[%s1467 + $0x28] sm:$0xff]
  %v1470 = vld [vmem:[%s1467 + $0x30] sm:$0xff]
  %v1471 = vld [vmem:[%s1467 + $0x38] sm:$0xff]
  %v1472 = vadd.f32 %v1468, %v1373
  %v1473 = vadd.f32 %v1469, %v1399
  %v1474 = vadd.f32 %v1470, %v1425
  %v1475 = vadd.f32 %v1471, %v1451
  %v1476 = vxor.u32 %v1461, 2147483648
  %v1477 = vmul.f32 %v1476, 1.442695
  %v1478 = vpow.pop %v1477
  %v1479 = vadd.f32 %v1478, 1.0
  %v1480 = vrcp.pop %v1479
  %v1481 = vmul.f32 %v1479, %v1480
  %v1482 = vsub.f32 1.0, %v1481
  %v1483 = vmul.f32 %v1480, %v1482
  %v1484 = vadd.f32 %v1480, %v1483
  %vm1485 = vweird.f32 %v1479
  %vm1486 = vweird.f32 %v1480
  %vm1487 = vmor %vm1485, %vm1486
  %v1488 = vsel %vm1487, %v1480, %v1484
  %v1489 = vand.u32 2147483647, %v1479
  %vm1490 = vcmp.eq.f32.partialorder %v1489, 8.507059e+37
  %v1491 = vand.u32 %v1479, 2147483648
  %v1492 = vor.u32 1.1754944e-38, %v1491
  %v1493 = vsel %vm1490, %v1492, %v1488
  %v1494 = vmul.f32 1.0, %v1493
  %v1495 = vxor.u32 %v1462, 2147483648
  %v1496 = vmul.f32 %v1495, 1.442695
  %v1497 = vpow.pop %v1496
  %v1498 = vadd.f32 %v1497, 1.0
  %v1499 = vrcp.pop %v1498
  %v1500 = vmul.f32 %v1498, %v1499
  %v1501 = vsub.f32 1.0, %v1500
  %v1502 = vmul.f32 %v1499, %v1501
  %v1503 = vadd.f32 %v1499, %v1502
  %vm1504 = vweird.f32 %v1498
  %vm1505 = vweird.f32 %v1499
  %vm1506 = vmor %vm1504, %vm1505
  %v1507 = vsel %vm1506, %v1499, %v1503
  %v1508 = vand.u32 2147483647, %v1498
  %vm1509 = vcmp.eq.f32.partialorder %v1508, 8.507059e+37
  %v1510 = vand.u32 %v1498, 2147483648
  %v1511 = vor.u32 1.1754944e-38, %v1510
  %v1512 = vsel %vm1509, %v1511, %v1507
  %v1513 = vmul.f32 1.0, %v1512
  %v1514 = vtanh.pop %v1463
  %v1515 = vxor.u32 %v1464, 2147483648
  %v1516 = vmul.f32 %v1515, 1.442695
  %v1517 = vpow.pop %v1516
  %v1518 = vadd.f32 %v1517, 1.0
  %v1519 = vrcp.pop %v1518
  %v1520 = vmul.f32 %v1518, %v1519
  %v1521 = vsub.f32 1.0, %v1520
  %v1522 = vmul.f32 %v1519, %v1521
  %v1523 = vadd.f32 %v1519, %v1522
  %vm1524 = vweird.f32 %v1518
  %vm1525 = vweird.f32 %v1519
  %vm1526 = vmor %vm1524, %vm1525
  %v1527 = vsel %vm1526, %v1519, %v1523
  %v1528 = vand.u32 2147483647, %v1518
  %vm1529 = vcmp.eq.f32.partialorder %v1528, 8.507059e+37
  %v1530 = vand.u32 %v1518, 2147483648
  %v1531 = vor.u32 1.1754944e-38, %v1530
  %v1532 = vsel %vm1529, %v1531, %v1527
  %v1533 = vmul.f32 1.0, %v1532
  %v1534 = vmul.f32 %v1513, 0.0
  %v1535 = vmul.f32 %v1494, %v1514
  %v1536 = vadd.f32 %v1534, %v1535
  %v1537 = vtanh.pop %v1536
  %v1538 = vmul.f32 %v1533, %v1537
  %v1539 = vxor.u32 %v1472, 2147483648
  %v1540 = vmul.f32 %v1539, 1.442695
  %v1541 = vpow.pop %v1540
  %v1542 = vadd.f32 %v1541, 1.0
  %v1543 = vrcp.pop %v1542
  %v1544 = vmul.f32 %v1542, %v1543
  %v1545 = vsub.f32 1.0, %v1544
  %v1546 = vmul.f32 %v1543, %v1545
  %v1547 = vadd.f32 %v1543, %v1546
  %vm1548 = vweird.f32 %v1542
  %vm1549 = vweird.f32 %v1543
  %vm1550 = vmor %vm1548, %vm1549
  %v1551 = vsel %vm1550, %v1543, %v1547
  %v1552 = vand.u32 2147483647, %v1542
  %vm1553 = vcmp.eq.f32.partialorder %v1552, 8.507059e+37
  %v1554 = vand.u32 %v1542, 2147483648
  %v1555 = vor.u32 1.1754944e-38, %v1554
  %v1556 = vsel %vm1553, %v1555, %v1551
  %v1557 = vmul.f32 1.0, %v1556
  %v1558 = vxor.u32 %v1473, 2147483648
  %v1559 = vmul.f32 %v1558, 1.442695
  %v1560 = vpow.pop %v1559
  %v1561 = vadd.f32 %v1560, 1.0
  %v1562 = vrcp.pop %v1561
  %v1563 = vmul.f32 %v1561, %v1562
  %v1564 = vsub.f32 1.0, %v1563
  %v1565 = vmul.f32 %v1562, %v1564
  %v1566 = vadd.f32 %v1562, %v1565
  %vm1567 = vweird.f32 %v1561
  %vm1568 = vweird.f32 %v1562
  %vm1569 = vmor %vm1567, %vm1568
  %v1570 = vsel %vm1569, %v1562, %v1566
  %v1571 = vand.u32 2147483647, %v1561
  %vm1572 = vcmp.eq.f32.partialorder %v1571, 8.507059e+37
  %v1573 = vand.u32 %v1561, 2147483648
  %v1574 = vor.u32 1.1754944e-38, %v1573
  %v1575 = vsel %vm1572, %v1574, %v1570
  %v1576 = vmul.f32 1.0, %v1575
  %v1577 = vtanh.pop %v1474
  %v1578 = vxor.u32 %v1475, 2147483648
  %v1579 = vmul.f32 %v1578, 1.442695
  %v1580 = vpow.pop %v1579
  %v1581 = vadd.f32 %v1580, 1.0
  %v1582 = vrcp.pop %v1581
  %v1583 = vmul.f32 %v1581, %v1582
  %v1584 = vsub.f32 1.0, %v1583
  %v1585 = vmul.f32 %v1582, %v1584
  %v1586 = vadd.f32 %v1582, %v1585
  %vm1587 = vweird.f32 %v1581
  %vm1588 = vweird.f32 %v1582
  %vm1589 = vmor %vm1587, %vm1588
  %v1590 = vsel %vm1589, %v1582, %v1586
  %v1591 = vand.u32 2147483647, %v1581
  %vm1592 = vcmp.eq.f32.partialorder %v1591, 8.507059e+37
  %v1593 = vand.u32 %v1581, 2147483648
  %v1594 = vor.u32 1.1754944e-38, %v1593
  %v1595 = vsel %vm1592, %v1594, %v1590
  %v1596 = vmul.f32 1.0, %v1595
  %v1597 = vmul.f32 %v1576, 0.0
  %v1598 = vmul.f32 %v1557, %v1577
  %v1599 = vadd.f32 %v1597, %v1598
  %v1600 = vtanh.pop %v1599
  %v1601 = vmul.f32 %v1596, %v1600
  %vm1602 = vcmp.gt.s32.totalorder %v476, 0
  %v1603 = vsel %vm1602, 1, 0
  %1604 = vset.pattern.permute.xlu0 0
  %1605 = vperm.xlu0 %1604, %v1603
  %v1606 = vpop.permute.xlu0 %1605
  %vm1607 = vcmp.eq.s32.totalorder %v1606, 1
  %vm1608 = vcmp.gt.s32.totalorder %v476, 7
  %v1609 = vsel %vm1608, 1, 0
  %1610 = vset.pattern.permute.xlu0 0
  %1611 = vperm.xlu0 %1610, %v1609
  %v1612 = vpop.permute.xlu0 %1611
  %vm1613 = vcmp.eq.s32.totalorder %v1612, 1
  %v1614 = vsel %vm1607, %v1538, 0.0
  %1615 = vst [vmem:[%s5] sm:$0xff] %v1614
  %v1616 = vsel %vm1613, %v1601, 0.0
  %s1617 = scalar_lea.vmem %s6, 56
  %1618 = vst [vmem:[%s1617] sm:$0xff] %v1616
  %v1619 = vsel %vm1607, %v1536, 0.0
  %v1620 = vsel %vm1613, %v1599, 0.0
  %v1621 = vpack.c.bf16 %v1614, %v1614
  %v1622 = vpack.c.bf16 %v1616, %v1616
  %v1623 = vld [vmem:[%s3] sm:$0xff]
  %v1624 = vld [vmem:[%s3 + $0x8] sm:$0xff]
  %v1625 = vld [vmem:[%s3 + $0x10] sm:$0xff]
  %v1626 = vld [vmem:[%s3 + $0x18] sm:$0xff]
  %v1627 = vld [vmem:[%s3 + $0x20] sm:$0xff]
  %v1628 = vld [vmem:[%s3 + $0x28] sm:$0xff]
  %v1629 = vld [vmem:[%s3 + $0x30] sm:$0xff]
  %v1630 = vld [vmem:[%s3 + $0x38] sm:$0xff]
  %v1631 = vld [vmem:[%s3 + $0x40] sm:$0xff]
  %v1632 = vld [vmem:[%s3 + $0x48] sm:$0xff]
  %v1633 = vld [vmem:[%s3 + $0x50] sm:$0xff]
  %v1634 = vld [vmem:[%s3 + $0x58] sm:$0xff]
  %v1635 = vld [vmem:[%s3 + $0x60] sm:$0xff]
  %v1636 = vld [vmem:[%s3 + $0x68] sm:$0xff]
  %v1637 = vld [vmem:[%s3 + $0x70] sm:$0xff]
  %v1638 = vld [vmem:[%s3 + $0x78] sm:$0xff]
  %v1639 = vld [vmem:[%s3 + $0x80] sm:$0xff]
  %v1640 = vld [vmem:[%s3 + $0x88] sm:$0xff]
  %v1641 = vld [vmem:[%s3 + $0x90] sm:$0xff]
  %v1642 = vld [vmem:[%s3 + $0x98] sm:$0xff]
  %v1643 = vld [vmem:[%s3 + $0xa0] sm:$0xff]
  %v1644 = vld [vmem:[%s3 + $0xa8] sm:$0xff]
  %v1645 = vld [vmem:[%s3 + $0xb0] sm:$0xff]
  %v1646 = vld [vmem:[%s3 + $0xb8] sm:$0xff]
  %v1647 = vld [vmem:[%s3 + $0xc0] sm:$0xff]
  %v1648 = vld [vmem:[%s3 + $0xc8] sm:$0xff]
  %v1649 = vld [vmem:[%s3 + $0xd0] sm:$0xff]
  %v1650 = vld [vmem:[%s3 + $0xd8] sm:$0xff]
  %v1651 = vld [vmem:[%s3 + $0xe0] sm:$0xff]
  %v1652 = vld [vmem:[%s3 + $0xe8] sm:$0xff]
  %v1653 = vld [vmem:[%s3 + $0xf0] sm:$0xff]
  %v1654 = vld [vmem:[%s3 + $0xf8] sm:$0xff]
  %v1655 = vld [vmem:[%s3 + $0x100] sm:$0xff]
  %v1656 = vld [vmem:[%s3 + $0x108] sm:$0xff]
  %v1657 = vld [vmem:[%s3 + $0x110] sm:$0xff]
  %v1658 = vld [vmem:[%s3 + $0x118] sm:$0xff]
  %v1659 = vld [vmem:[%s3 + $0x120] sm:$0xff]
  %v1660 = vld [vmem:[%s3 + $0x128] sm:$0xff]
  %v1661 = vld [vmem:[%s3 + $0x130] sm:$0xff]
  %v1662 = vld [vmem:[%s3 + $0x138] sm:$0xff]
  %v1663 = vld [vmem:[%s3 + $0x140] sm:$0xff]
  %v1664 = vld [vmem:[%s3 + $0x148] sm:$0xff]
  %v1665 = vld [vmem:[%s3 + $0x150] sm:$0xff]
  %v1666 = vld [vmem:[%s3 + $0x158] sm:$0xff]
  %v1667 = vld [vmem:[%s3 + $0x160] sm:$0xff]
  %v1668 = vld [vmem:[%s3 + $0x168] sm:$0xff]
  %v1669 = vld [vmem:[%s3 + $0x170] sm:$0xff]
  %v1670 = vld [vmem:[%s3 + $0x178] sm:$0xff]
  %v1671 = vld [vmem:[%s3 + $0x180] sm:$0xff]
  %v1672 = vld [vmem:[%s3 + $0x188] sm:$0xff]
  %v1673 = vld [vmem:[%s3 + $0x190] sm:$0xff]
  %v1674 = vld [vmem:[%s3 + $0x198] sm:$0xff]
  %v1675 = vld [vmem:[%s3 + $0x1a0] sm:$0xff]
  %v1676 = vld [vmem:[%s3 + $0x1a8] sm:$0xff]
  %v1677 = vld [vmem:[%s3 + $0x1b0] sm:$0xff]
  %v1678 = vld [vmem:[%s3 + $0x1b8] sm:$0xff]
  %v1679 = vld [vmem:[%s3 + $0x1c0] sm:$0xff]
  %v1680 = vld [vmem:[%s3 + $0x1c8] sm:$0xff]
  %v1681 = vld [vmem:[%s3 + $0x1d0] sm:$0xff]
  %v1682 = vld [vmem:[%s3 + $0x1d8] sm:$0xff]
  %v1683 = vld [vmem:[%s3 + $0x1e0] sm:$0xff]
  %v1684 = vld [vmem:[%s3 + $0x1e8] sm:$0xff]
  %v1685 = vld [vmem:[%s3 + $0x1f0] sm:$0xff]
  %v1686 = vld [vmem:[%s3 + $0x1f8] sm:$0xff]
  %v1687 = vld [vmem:[%s3 + $0x200] sm:$0xff]
  %v1688 = vld [vmem:[%s3 + $0x208] sm:$0xff]
  %v1689 = vld [vmem:[%s3 + $0x210] sm:$0xff]
  %v1690 = vld [vmem:[%s3 + $0x218] sm:$0xff]
  %v1691 = vld [vmem:[%s3 + $0x220] sm:$0xff]
  %v1692 = vld [vmem:[%s3 + $0x228] sm:$0xff]
  %v1693 = vld [vmem:[%s3 + $0x230] sm:$0xff]
  %v1694 = vld [vmem:[%s3 + $0x238] sm:$0xff]
  %v1695 = vld [vmem:[%s3 + $0x240] sm:$0xff]
  %v1696 = vld [vmem:[%s3 + $0x248] sm:$0xff]
  %v1697 = vld [vmem:[%s3 + $0x250] sm:$0xff]
  %v1698 = vld [vmem:[%s3 + $0x258] sm:$0xff]
  %v1699 = vld [vmem:[%s3 + $0x260] sm:$0xff]
  %v1700 = vld [vmem:[%s3 + $0x268] sm:$0xff]
  %v1701 = vld [vmem:[%s3 + $0x270] sm:$0xff]
  %v1702 = vld [vmem:[%s3 + $0x278] sm:$0xff]
  %v1703 = vld [vmem:[%s3 + $0x280] sm:$0xff]
  %v1704 = vld [vmem:[%s3 + $0x288] sm:$0xff]
  %v1705 = vld [vmem:[%s3 + $0x290] sm:$0xff]
  %v1706 = vld [vmem:[%s3 + $0x298] sm:$0xff]
  %v1707 = vld [vmem:[%s3 + $0x2a0] sm:$0xff]
  %v1708 = vld [vmem:[%s3 + $0x2a8] sm:$0xff]
  %v1709 = vld [vmem:[%s3 + $0x2b0] sm:$0xff]
  %v1710 = vld [vmem:[%s3 + $0x2b8] sm:$0xff]
  %v1711 = vld [vmem:[%s3 + $0x2c0] sm:$0xff]
  %v1712 = vld [vmem:[%s3 + $0x2c8] sm:$0xff]
  %v1713 = vld [vmem:[%s3 + $0x2d0] sm:$0xff]
  %v1714 = vld [vmem:[%s3 + $0x2d8] sm:$0xff]
  %v1715 = vld [vmem:[%s3 + $0x2e0] sm:$0xff]
  %v1716 = vld [vmem:[%s3 + $0x2e8] sm:$0xff]
  %v1717 = vld [vmem:[%s3 + $0x2f0] sm:$0xff]
  %v1718 = vld [vmem:[%s3 + $0x2f8] sm:$0xff]
  %v1719 = vld [vmem:[%s3 + $0x300] sm:$0xff]
  %v1720 = vld [vmem:[%s3 + $0x308] sm:$0xff]
  %v1721 = vld [vmem:[%s3 + $0x310] sm:$0xff]
  %v1722 = vld [vmem:[%s3 + $0x318] sm:$0xff]
  %v1723 = vld [vmem:[%s3 + $0x320] sm:$0xff]
  %v1724 = vld [vmem:[%s3 + $0x328] sm:$0xff]
  %v1725 = vld [vmem:[%s3 + $0x330] sm:$0xff]
  %v1726 = vld [vmem:[%s3 + $0x338] sm:$0xff]
  %v1727 = vld [vmem:[%s3 + $0x340] sm:$0xff]
  %v1728 = vld [vmem:[%s3 + $0x348] sm:$0xff]
  %v1729 = vld [vmem:[%s3 + $0x350] sm:$0xff]
  %v1730 = vld [vmem:[%s3 + $0x358] sm:$0xff]
  %v1731 = vld [vmem:[%s3 + $0x360] sm:$0xff]
  %v1732 = vld [vmem:[%s3 + $0x368] sm:$0xff]
  %v1733 = vld [vmem:[%s3 + $0x370] sm:$0xff]
  %v1734 = vld [vmem:[%s3 + $0x378] sm:$0xff]
  %v1735 = vld [vmem:[%s3 + $0x380] sm:$0xff]
  %v1736 = vld [vmem:[%s3 + $0x388] sm:$0xff]
  %v1737 = vld [vmem:[%s3 + $0x390] sm:$0xff]
  %v1738 = vld [vmem:[%s3 + $0x398] sm:$0xff]
  %v1739 = vld [vmem:[%s3 + $0x3a0] sm:$0xff]
  %v1740 = vld [vmem:[%s3 + $0x3a8] sm:$0xff]
  %v1741 = vld [vmem:[%s3 + $0x3b0] sm:$0xff]
  %v1742 = vld [vmem:[%s3 + $0x3b8] sm:$0xff]
  %v1743 = vld [vmem:[%s3 + $0x3c0] sm:$0xff]
  %v1744 = vld [vmem:[%s3 + $0x3c8] sm:$0xff]
  %v1745 = vld [vmem:[%s3 + $0x3d0] sm:$0xff]
  %v1746 = vld [vmem:[%s3 + $0x3d8] sm:$0xff]
  %v1747 = vld [vmem:[%s3 + $0x3e0] sm:$0xff]
  %v1748 = vld [vmem:[%s3 + $0x3e8] sm:$0xff]
  %v1749 = vld [vmem:[%s3 + $0x3f0] sm:$0xff]
  %v1750 = vld [vmem:[%s3 + $0x3f8] sm:$0xff]
  %v1879 = vunpack.c.l.b16 %v1623
  %v1880 = vunpack.c.h.b16 %v1623
  %v1881 = vunpack.c.l.b16 %v1624
  %v1882 = vunpack.c.h.b16 %v1624
  %v1883 = vunpack.c.l.b16 %v1625
  %v1884 = vunpack.c.h.b16 %v1625
  %v1885 = vunpack.c.l.b16 %v1626
  %v1886 = vunpack.c.h.b16 %v1626
  %v1887 = vunpack.c.l.b16 %v1627
  %v1888 = vunpack.c.h.b16 %v1627
  %v1889 = vunpack.c.l.b16 %v1628
  %v1890 = vunpack.c.h.b16 %v1628
  %v1891 = vunpack.c.l.b16 %v1629
  %v1892 = vunpack.c.h.b16 %v1629
  %v1893 = vunpack.c.l.b16 %v1630
  %v1894 = vunpack.c.h.b16 %v1630
  %v1895 = vunpack.c.l.b16 %v1631
  %v1896 = vunpack.c.h.b16 %v1631
  %v1897 = vunpack.c.l.b16 %v1632
  %v1898 = vunpack.c.h.b16 %v1632
  %v1899 = vunpack.c.l.b16 %v1633
  %v1900 = vunpack.c.h.b16 %v1633
  %v1901 = vunpack.c.l.b16 %v1634
  %v1902 = vunpack.c.h.b16 %v1634
  %v1903 = vunpack.c.l.b16 %v1635
  %v1904 = vunpack.c.h.b16 %v1635
  %v1905 = vunpack.c.l.b16 %v1636
  %v1906 = vunpack.c.h.b16 %v1636
  %v1907 = vunpack.c.l.b16 %v1637
  %v1908 = vunpack.c.h.b16 %v1637
  %v1909 = vunpack.c.l.b16 %v1638
  %v1910 = vunpack.c.h.b16 %v1638
  %v1911 = vunpack.c.l.b16 %v1639
  %v1912 = vunpack.c.h.b16 %v1639
  %v1913 = vunpack.c.l.b16 %v1640
  %v1914 = vunpack.c.h.b16 %v1640
  %v1915 = vunpack.c.l.b16 %v1641
  %v1916 = vunpack.c.h.b16 %v1641
  %v1917 = vunpack.c.l.b16 %v1642
  %v1918 = vunpack.c.h.b16 %v1642
  %v1919 = vunpack.c.l.b16 %v1643
  %v1920 = vunpack.c.h.b16 %v1643
  %v1921 = vunpack.c.l.b16 %v1644
  %v1922 = vunpack.c.h.b16 %v1644
  %v1923 = vunpack.c.l.b16 %v1645
  %v1924 = vunpack.c.h.b16 %v1645
  %v1925 = vunpack.c.l.b16 %v1646
  %v1926 = vunpack.c.h.b16 %v1646
  %v1927 = vunpack.c.l.b16 %v1647
  %v1928 = vunpack.c.h.b16 %v1647
  %v1929 = vunpack.c.l.b16 %v1648
  %v1930 = vunpack.c.h.b16 %v1648
  %v1931 = vunpack.c.l.b16 %v1649
  %v1932 = vunpack.c.h.b16 %v1649
  %v1933 = vunpack.c.l.b16 %v1650
  %v1934 = vunpack.c.h.b16 %v1650
  %v1935 = vunpack.c.l.b16 %v1651
  %v1936 = vunpack.c.h.b16 %v1651
  %v1937 = vunpack.c.l.b16 %v1652
  %v1938 = vunpack.c.h.b16 %v1652
  %v1939 = vunpack.c.l.b16 %v1653
  %v1940 = vunpack.c.h.b16 %v1653
  %v1941 = vunpack.c.l.b16 %v1654
  %v1942 = vunpack.c.h.b16 %v1654
  %v1943 = vunpack.c.l.b16 %v1655
  %v1944 = vunpack.c.h.b16 %v1655
  %v1945 = vunpack.c.l.b16 %v1656
  %v1946 = vunpack.c.h.b16 %v1656
  %v1947 = vunpack.c.l.b16 %v1657
  %v1948 = vunpack.c.h.b16 %v1657
  %v1949 = vunpack.c.l.b16 %v1658
  %v1950 = vunpack.c.h.b16 %v1658
  %v1951 = vunpack.c.l.b16 %v1659
  %v1952 = vunpack.c.h.b16 %v1659
  %v1953 = vunpack.c.l.b16 %v1660
  %v1954 = vunpack.c.h.b16 %v1660
  %v1955 = vunpack.c.l.b16 %v1661
  %v1956 = vunpack.c.h.b16 %v1661
  %v1957 = vunpack.c.l.b16 %v1662
  %v1958 = vunpack.c.h.b16 %v1662
  %v1959 = vunpack.c.l.b16 %v1663
  %v1960 = vunpack.c.h.b16 %v1663
  %v1961 = vunpack.c.l.b16 %v1664
  %v1962 = vunpack.c.h.b16 %v1664
  %v1963 = vunpack.c.l.b16 %v1665
  %v1964 = vunpack.c.h.b16 %v1665
  %v1965 = vunpack.c.l.b16 %v1666
  %v1966 = vunpack.c.h.b16 %v1666
  %v1967 = vunpack.c.l.b16 %v1667
  %v1968 = vunpack.c.h.b16 %v1667
  %v1969 = vunpack.c.l.b16 %v1668
  %v1970 = vunpack.c.h.b16 %v1668
  %v1971 = vunpack.c.l.b16 %v1669
  %v1972 = vunpack.c.h.b16 %v1669
  %v1973 = vunpack.c.l.b16 %v1670
  %v1974 = vunpack.c.h.b16 %v1670
  %v1975 = vunpack.c.l.b16 %v1671
  %v1976 = vunpack.c.h.b16 %v1671
  %v1977 = vunpack.c.l.b16 %v1672
  %v1978 = vunpack.c.h.b16 %v1672
  %v1979 = vunpack.c.l.b16 %v1673
  %v1980 = vunpack.c.h.b16 %v1673
  %v1981 = vunpack.c.l.b16 %v1674
  %v1982 = vunpack.c.h.b16 %v1674
  %v1983 = vunpack.c.l.b16 %v1675
  %v1984 = vunpack.c.h.b16 %v1675
  %v1985 = vunpack.c.l.b16 %v1676
  %v1986 = vunpack.c.h.b16 %v1676
  %v1987 = vunpack.c.l.b16 %v1677
  %v1988 = vunpack.c.h.b16 %v1677
  %v1989 = vunpack.c.l.b16 %v1678
  %v1990 = vunpack.c.h.b16 %v1678
  %v1991 = vunpack.c.l.b16 %v1679
  %v1992 = vunpack.c.h.b16 %v1679
  %v1993 = vunpack.c.l.b16 %v1680
  %v1994 = vunpack.c.h.b16 %v1680
  %v1995 = vunpack.c.l.b16 %v1681
  %v1996 = vunpack.c.h.b16 %v1681
  %v1997 = vunpack.c.l.b16 %v1682
  %v1998 = vunpack.c.h.b16 %v1682
  %v1999 = vunpack.c.l.b16 %v1683
  %v2000 = vunpack.c.h.b16 %v1683
  %v2001 = vunpack.c.l.b16 %v1684
  %v2002 = vunpack.c.h.b16 %v1684
  %v2003 = vunpack.c.l.b16 %v1685
  %v2004 = vunpack.c.h.b16 %v1685
  %v2005 = vunpack.c.l.b16 %v1686
  %v2006 = vunpack.c.h.b16 %v1686
  %v2007 = vunpack.c.l.b16 %v1687
  %v2008 = vunpack.c.h.b16 %v1687
  %v2009 = vunpack.c.l.b16 %v1688
  %v2010 = vunpack.c.h.b16 %v1688
  %v2011 = vunpack.c.l.b16 %v1689
  %v2012 = vunpack.c.h.b16 %v1689
  %v2013 = vunpack.c.l.b16 %v1690
  %v2014 = vunpack.c.h.b16 %v1690
  %v2015 = vunpack.c.l.b16 %v1691
  %v2016 = vunpack.c.h.b16 %v1691
  %v2017 = vunpack.c.l.b16 %v1692
  %v2018 = vunpack.c.h.b16 %v1692
  %v2019 = vunpack.c.l.b16 %v1693
  %v2020 = vunpack.c.h.b16 %v1693
  %v2021 = vunpack.c.l.b16 %v1694
  %v2022 = vunpack.c.h.b16 %v1694
  %v2023 = vunpack.c.l.b16 %v1695
  %v2024 = vunpack.c.h.b16 %v1695
  %v2025 = vunpack.c.l.b16 %v1696
  %v2026 = vunpack.c.h.b16 %v1696
  %v2027 = vunpack.c.l.b16 %v1697
  %v2028 = vunpack.c.h.b16 %v1697
  %v2029 = vunpack.c.l.b16 %v1698
  %v2030 = vunpack.c.h.b16 %v1698
  %v2031 = vunpack.c.l.b16 %v1699
  %v2032 = vunpack.c.h.b16 %v1699
  %v2033 = vunpack.c.l.b16 %v1700
  %v2034 = vunpack.c.h.b16 %v1700
  %v2035 = vunpack.c.l.b16 %v1701
  %v2036 = vunpack.c.h.b16 %v1701
  %v2037 = vunpack.c.l.b16 %v1702
  %v2038 = vunpack.c.h.b16 %v1702
  %v2039 = vunpack.c.l.b16 %v1703
  %v2040 = vunpack.c.h.b16 %v1703
  %v2041 = vunpack.c.l.b16 %v1704
  %v2042 = vunpack.c.h.b16 %v1704
  %v2043 = vunpack.c.l.b16 %v1705
  %v2044 = vunpack.c.h.b16 %v1705
  %v2045 = vunpack.c.l.b16 %v1706
  %v2046 = vunpack.c.h.b16 %v1706
  %v2047 = vunpack.c.l.b16 %v1707
  %v2048 = vunpack.c.h.b16 %v1707
  %v2049 = vunpack.c.l.b16 %v1708
  %v2050 = vunpack.c.h.b16 %v1708
  %v2051 = vunpack.c.l.b16 %v1709
  %v2052 = vunpack.c.h.b16 %v1709
  %v2053 = vunpack.c.l.b16 %v1710
  %v2054 = vunpack.c.h.b16 %v1710
  %v2055 = vunpack.c.l.b16 %v1711
  %v2056 = vunpack.c.h.b16 %v1711
  %v2057 = vunpack.c.l.b16 %v1712
  %v2058 = vunpack.c.h.b16 %v1712
  %v2059 = vunpack.c.l.b16 %v1713
  %v2060 = vunpack.c.h.b16 %v1713
  %v2061 = vunpack.c.l.b16 %v1714
  %v2062 = vunpack.c.h.b16 %v1714
  %v2063 = vunpack.c.l.b16 %v1715
  %v2064 = vunpack.c.h.b16 %v1715
  %v2065 = vunpack.c.l.b16 %v1716
  %v2066 = vunpack.c.h.b16 %v1716
  %v2067 = vunpack.c.l.b16 %v1717
  %v2068 = vunpack.c.h.b16 %v1717
  %v2069 = vunpack.c.l.b16 %v1718
  %v2070 = vunpack.c.h.b16 %v1718
  %v2071 = vunpack.c.l.b16 %v1719
  %v2072 = vunpack.c.h.b16 %v1719
  %v2073 = vunpack.c.l.b16 %v1720
  %v2074 = vunpack.c.h.b16 %v1720
  %v2075 = vunpack.c.l.b16 %v1721
  %v2076 = vunpack.c.h.b16 %v1721
  %v2077 = vunpack.c.l.b16 %v1722
  %v2078 = vunpack.c.h.b16 %v1722
  %v2079 = vunpack.c.l.b16 %v1723
  %v2080 = vunpack.c.h.b16 %v1723
  %v2081 = vunpack.c.l.b16 %v1724
  %v2082 = vunpack.c.h.b16 %v1724
  %v2083 = vunpack.c.l.b16 %v1725
  %v2084 = vunpack.c.h.b16 %v1725
  %v2085 = vunpack.c.l.b16 %v1726
  %v2086 = vunpack.c.h.b16 %v1726
  %v2087 = vunpack.c.l.b16 %v1727
  %v2088 = vunpack.c.h.b16 %v1727
  %v2089 = vunpack.c.l.b16 %v1728
  %v2090 = vunpack.c.h.b16 %v1728
  %v2091 = vunpack.c.l.b16 %v1729
  %v2092 = vunpack.c.h.b16 %v1729
  %v2093 = vunpack.c.l.b16 %v1730
  %v2094 = vunpack.c.h.b16 %v1730
  %v2095 = vunpack.c.l.b16 %v1731
  %v2096 = vunpack.c.h.b16 %v1731
  %v2097 = vunpack.c.l.b16 %v1732
  %v2098 = vunpack.c.h.b16 %v1732
  %v2099 = vunpack.c.l.b16 %v1733
  %v2100 = vunpack.c.h.b16 %v1733
  %v2101 = vunpack.c.l.b16 %v1734
  %v2102 = vunpack.c.h.b16 %v1734
  %v2103 = vunpack.c.l.b16 %v1735
  %v2104 = vunpack.c.h.b16 %v1735
  %v2105 = vunpack.c.l.b16 %v1736
  %v2106 = vunpack.c.h.b16 %v1736
  %v2107 = vunpack.c.l.b16 %v1737
  %v2108 = vunpack.c.h.b16 %v1737
  %v2109 = vunpack.c.l.b16 %v1738
  %v2110 = vunpack.c.h.b16 %v1738
  %v2111 = vunpack.c.l.b16 %v1739
  %v2112 = vunpack.c.h.b16 %v1739
  %v2113 = vunpack.c.l.b16 %v1740
  %v2114 = vunpack.c.h.b16 %v1740
  %v2115 = vunpack.c.l.b16 %v1741
  %v2116 = vunpack.c.h.b16 %v1741
  %v2117 = vunpack.c.l.b16 %v1742
  %v2118 = vunpack.c.h.b16 %v1742
  %v2119 = vunpack.c.l.b16 %v1743
  %v2120 = vunpack.c.h.b16 %v1743
  %v2121 = vunpack.c.l.b16 %v1744
  %v2122 = vunpack.c.h.b16 %v1744
  %v2123 = vunpack.c.l.b16 %v1745
  %v2124 = vunpack.c.h.b16 %v1745
  %v2125 = vunpack.c.l.b16 %v1746
  %v2126 = vunpack.c.h.b16 %v1746
  %v2127 = vunpack.c.l.b16 %v1747
  %v2128 = vunpack.c.h.b16 %v1747
  %v2129 = vunpack.c.l.b16 %v1748
  %v2130 = vunpack.c.h.b16 %v1748
  %v2131 = vunpack.c.l.b16 %v1749
  %v2132 = vunpack.c.h.b16 %v1749
  %v2133 = vunpack.c.l.b16 %v1750
  %v2134 = vunpack.c.h.b16 %v1750
  %v2135 = vpack.c.b16 %v1887, %v1879
  %v2136 = vpack.c.b16 %v1888, %v1880
  %v2137 = vpack.c.b16 %v1889, %v1881
  %v2138 = vpack.c.b16 %v1890, %v1882
  %v2139 = vpack.c.b16 %v1891, %v1883
  %v2140 = vpack.c.b16 %v1892, %v1884
  %v2141 = vpack.c.b16 %v1893, %v1885
  %v2142 = vpack.c.b16 %v1894, %v1886
  %v2143 = vpack.c.b16 %v1903, %v1895
  %v2144 = vpack.c.b16 %v1904, %v1896
  %v2145 = vpack.c.b16 %v1905, %v1897
  %v2146 = vpack.c.b16 %v1906, %v1898
  %v2147 = vpack.c.b16 %v1907, %v1899
  %v2148 = vpack.c.b16 %v1908, %v1900
  %v2149 = vpack.c.b16 %v1909, %v1901
  %v2150 = vpack.c.b16 %v1910, %v1902
  %v2151 = vpack.c.b16 %v1919, %v1911
  %v2152 = vpack.c.b16 %v1920, %v1912
  %v2153 = vpack.c.b16 %v1921, %v1913
  %v2154 = vpack.c.b16 %v1922, %v1914
  %v2155 = vpack.c.b16 %v1923, %v1915
  %v2156 = vpack.c.b16 %v1924, %v1916
  %v2157 = vpack.c.b16 %v1925, %v1917
  %v2158 = vpack.c.b16 %v1926, %v1918
  %v2159 = vpack.c.b16 %v1935, %v1927
  %v2160 = vpack.c.b16 %v1936, %v1928
  %v2161 = vpack.c.b16 %v1937, %v1929
  %v2162 = vpack.c.b16 %v1938, %v1930
  %v2163 = vpack.c.b16 %v1939, %v1931
  %v2164 = vpack.c.b16 %v1940, %v1932
  %v2165 = vpack.c.b16 %v1941, %v1933
  %v2166 = vpack.c.b16 %v1942, %v1934
  %v2167 = vpack.c.b16 %v1951, %v1943
  %v2168 = vpack.c.b16 %v1952, %v1944
  %v2169 = vpack.c.b16 %v1953, %v1945
  %v2170 = vpack.c.b16 %v1954, %v1946
  %v2171 = vpack.c.b16 %v1955, %v1947
  %v2172 = vpack.c.b16 %v1956, %v1948
  %v2173 = vpack.c.b16 %v1957, %v1949
  %v2174 = vpack.c.b16 %v1958, %v1950
  %v2175 = vpack.c.b16 %v1967, %v1959
  %v2176 = vpack.c.b16 %v1968, %v1960
  %v2177 = vpack.c.b16 %v1969, %v1961
  %v2178 = vpack.c.b16 %v1970, %v1962
  %v2179 = vpack.c.b16 %v1971, %v1963
  %v2180 = vpack.c.b16 %v1972, %v1964
  %v2181 = vpack.c.b16 %v1973, %v1965
  %v2182 = vpack.c.b16 %v1974, %v1966
  %v2183 = vpack.c.b16 %v1983, %v1975
  %v2184 = vpack.c.b16 %v1984, %v1976
  %v2185 = vpack.c.b16 %v1985, %v1977
  %v2186 = vpack.c.b16 %v1986, %v1978
  %v2187 = vpack.c.b16 %v1987, %v1979
  %v2188 = vpack.c.b16 %v1988, %v1980
  %v2189 = vpack.c.b16 %v1989, %v1981
  %v2190 = vpack.c.b16 %v1990, %v1982
  %v2191 = vpack.c.b16 %v1999, %v1991
  %v2192 = vpack.c.b16 %v2000, %v1992
  %v2193 = vpack.c.b16 %v2001, %v1993
  %v2194 = vpack.c.b16 %v2002, %v1994
  %v2195 = vpack.c.b16 %v2003, %v1995
  %v2196 = vpack.c.b16 %v2004, %v1996
  %v2197 = vpack.c.b16 %v2005, %v1997
  %v2198 = vpack.c.b16 %v2006, %v1998
  %v2199 = vpack.c.b16 %v2015, %v2007
  %v2200 = vpack.c.b16 %v2016, %v2008
  %v2201 = vpack.c.b16 %v2017, %v2009
  %v2202 = vpack.c.b16 %v2018, %v2010
  %v2203 = vpack.c.b16 %v2019, %v2011
  %v2204 = vpack.c.b16 %v2020, %v2012
  %v2205 = vpack.c.b16 %v2021, %v2013
  %v2206 = vpack.c.b16 %v2022, %v2014
  %v2207 = vpack.c.b16 %v2031, %v2023
  %v2208 = vpack.c.b16 %v2032, %v2024
  %v2209 = vpack.c.b16 %v2033, %v2025
  %v2210 = vpack.c.b16 %v2034, %v2026
  %v2211 = vpack.c.b16 %v2035, %v2027
  %v2212 = vpack.c.b16 %v2036, %v2028
  %v2213 = vpack.c.b16 %v2037, %v2029
  %v2214 = vpack.c.b16 %v2038, %v2030
  %v2215 = vpack.c.b16 %v2047, %v2039
  %v2216 = vpack.c.b16 %v2048, %v2040
  %v2217 = vpack.c.b16 %v2049, %v2041
  %v2218 = vpack.c.b16 %v2050, %v2042
  %v2219 = vpack.c.b16 %v2051, %v2043
  %v2220 = vpack.c.b16 %v2052, %v2044
  %v2221 = vpack.c.b16 %v2053, %v2045
  %v2222 = vpack.c.b16 %v2054, %v2046
  %v2223 = vpack.c.b16 %v2063, %v2055
  %v2224 = vpack.c.b16 %v2064, %v2056
  %v2225 = vpack.c.b16 %v2065, %v2057
  %v2226 = vpack.c.b16 %v2066, %v2058
  %v2227 = vpack.c.b16 %v2067, %v2059
  %v2228 = vpack.c.b16 %v2068, %v2060
  %v2229 = vpack.c.b16 %v2069, %v2061
  %v2230 = vpack.c.b16 %v2070, %v2062
  %v2231 = vpack.c.b16 %v2079, %v2071
  %v2232 = vpack.c.b16 %v2080, %v2072
  %v2233 = vpack.c.b16 %v2081, %v2073
  %v2234 = vpack.c.b16 %v2082, %v2074
  %v2235 = vpack.c.b16 %v2083, %v2075
  %v2236 = vpack.c.b16 %v2084, %v2076
  %v2237 = vpack.c.b16 %v2085, %v2077
  %v2238 = vpack.c.b16 %v2086, %v2078
  %v2239 = vpack.c.b16 %v2095, %v2087
  %v2240 = vpack.c.b16 %v2096, %v2088
  %v2241 = vpack.c.b16 %v2097, %v2089
  %v2242 = vpack.c.b16 %v2098, %v2090
  %v2243 = vpack.c.b16 %v2099, %v2091
  %v2244 = vpack.c.b16 %v2100, %v2092
  %v2245 = vpack.c.b16 %v2101, %v2093
  %v2246 = vpack.c.b16 %v2102, %v2094
  %v2247 = vpack.c.b16 %v2111, %v2103
  %v2248 = vpack.c.b16 %v2112, %v2104
  %v2249 = vpack.c.b16 %v2113, %v2105
  %v2250 = vpack.c.b16 %v2114, %v2106
  %v2251 = vpack.c.b16 %v2115, %v2107
  %v2252 = vpack.c.b16 %v2116, %v2108
  %v2253 = vpack.c.b16 %v2117, %v2109
  %v2254 = vpack.c.b16 %v2118, %v2110
  %v2255 = vpack.c.b16 %v2127, %v2119
  %v2256 = vpack.c.b16 %v2128, %v2120
  %v2257 = vpack.c.b16 %v2129, %v2121
  %v2258 = vpack.c.b16 %v2130, %v2122
  %v2259 = vpack.c.b16 %v2131, %v2123
  %v2260 = vpack.c.b16 %v2132, %v2124
  %v2261 = vpack.c.b16 %v2133, %v2125
  %v2262 = vpack.c.b16 %v2134, %v2126
  %2391 = vmatpush.bf16.msra.mxu0 %v2191
  %2392 = vmatpush.bf16.msra.mxu0 %v2183
  %2393 = vmatpush.bf16.msra.mxu0 %v2175
  %2394 = vmatpush.bf16.msra.mxu0 %v2167
  %2395 = vmatpush.bf16.msra.mxu0 %v2159
  %2396 = vmatpush.bf16.msra.mxu0 %v2151
  %2397 = vmatpush.bf16.msra.mxu0 %v2143
  %2398 = vmatpush.bf16.msra.mxu0 %v2135
  %2399 = vmatmul.bf16.gmra.mxu0 %v1621
  %v2400 = vpop.f32.mrf.mxu0
  %v2401 = vadd.f32 0.0, %v2400
  %v2402 = vpop.f32.mrf.mxu0
  %2403 = vdwg.mxu0
  %2404 = vmatpush.bf16.msra.mxu0 %v2255
  %2405 = vmatpush.bf16.msra.mxu0 %v2247
  %2406 = vmatpush.bf16.msra.mxu0 %v2239
  %2407 = vmatpush.bf16.msra.mxu0 %v2231
  %2408 = vmatpush.bf16.msra.mxu0 %v2223
  %2409 = vmatpush.bf16.msra.mxu0 %v2215
  %2410 = vmatpush.bf16.msra.mxu0 %v2207
  %2411 = vmatpush.bf16.msra.mxu0 %v2199
  %2412 = vmatmul.bf16.gmra.mxu0 %v1622
  %v2413 = vpop.f32.mrf.mxu0
  %v2414 = vadd.f32 %v2401, %v2413
  %v2415 = vpop.f32.mrf.mxu0
  %2416 = vdwg.mxu0
  %2417 = vmatpush.bf16.msra.mxu0 %v2192
  %2418 = vmatpush.bf16.msra.mxu0 %v2184
  %2419 = vmatpush.bf16.msra.mxu0 %v2176
  %2420 = vmatpush.bf16.msra.mxu0 %v2168
  %2421 = vmatpush.bf16.msra.mxu0 %v2160
  %2422 = vmatpush.bf16.msra.mxu0 %v2152
  %2423 = vmatpush.bf16.msra.mxu0 %v2144
  %2424 = vmatpush.bf16.msra.mxu0 %v2136
  %2425 = vmatmul.bf16.gmra.mxu0 %v1621
  %v2426 = vpop.f32.mrf.mxu0
  %v2427 = vadd.f32 0.0, %v2426
  %v2428 = vpop.f32.mrf.mxu0
  %2429 = vdwg.mxu0
  %2430 = vmatpush.bf16.msra.mxu0 %v2256
  %2431 = vmatpush.bf16.msra.mxu0 %v2248
  %2432 = vmatpush.bf16.msra.mxu0 %v2240
  %2433 = vmatpush.bf16.msra.mxu0 %v2232
  %2434 = vmatpush.bf16.msra.mxu0 %v2224
  %2435 = vmatpush.bf16.msra.mxu0 %v2216
  %2436 = vmatpush.bf16.msra.mxu0 %v2208
  %2437 = vmatpush.bf16.msra.mxu0 %v2200
  %2438 = vmatmul.bf16.gmra.mxu0 %v1622
  %v2439 = vpop.f32.mrf.mxu0
  %v2440 = vadd.f32 %v2427, %v2439
  %v2441 = vpop.f32.mrf.mxu0
  %2442 = vdwg.mxu0
  %2443 = vmatpush.bf16.msra.mxu0 %v2193
  %2444 = vmatpush.bf16.msra.mxu0 %v2185
  %2445 = vmatpush.bf16.msra.mxu0 %v2177
  %2446 = vmatpush.bf16.msra.mxu0 %v2169
  %2447 = vmatpush.bf16.msra.mxu0 %v2161
  %2448 = vmatpush.bf16.msra.mxu0 %v2153
  %2449 = vmatpush.bf16.msra.mxu0 %v2145
  %2450 = vmatpush.bf16.msra.mxu0 %v2137
  %2451 = vmatmul.bf16.gmra.mxu0 %v1621
  %v2452 = vpop.f32.mrf.mxu0
  %v2453 = vadd.f32 0.0, %v2452
  %v2454 = vpop.f32.mrf.mxu0
  %2455 = vdwg.mxu0
  %2456 = vmatpush.bf16.msra.mxu0 %v2257
  %2457 = vmatpush.bf16.msra.mxu0 %v2249
  %2458 = vmatpush.bf16.msra.mxu0 %v2241
  %2459 = vmatpush.bf16.msra.mxu0 %v2233
  %2460 = vmatpush.bf16.msra.mxu0 %v2225
  %2461 = vmatpush.bf16.msra.mxu0 %v2217
  %2462 = vmatpush.bf16.msra.mxu0 %v2209
  %2463 = vmatpush.bf16.msra.mxu0 %v2201
  %2464 = vmatmul.bf16.gmra.mxu0 %v1622
  %v2465 = vpop.f32.mrf.mxu0
  %v2466 = vadd.f32 %v2453, %v2465
  %v2467 = vpop.f32.mrf.mxu0
  %2468 = vdwg.mxu0
  %2469 = vmatpush.bf16.msra.mxu0 %v2194
  %2470 = vmatpush.bf16.msra.mxu0 %v2186
  %2471 = vmatpush.bf16.msra.mxu0 %v2178
  %2472 = vmatpush.bf16.msra.mxu0 %v2170
  %2473 = vmatpush.bf16.msra.mxu0 %v2162
  %2474 = vmatpush.bf16.msra.mxu0 %v2154
  %2475 = vmatpush.bf16.msra.mxu0 %v2146
  %2476 = vmatpush.bf16.msra.mxu0 %v2138
  %2477 = vmatmul.bf16.gmra.mxu0 %v1621
  %v2478 = vpop.f32.mrf.mxu0
  %v2479 = vadd.f32 0.0, %v2478
  %v2480 = vpop.f32.mrf.mxu0
  %2481 = vdwg.mxu0
  %2482 = vmatpush.bf16.msra.mxu0 %v2258
  %2483 = vmatpush.bf16.msra.mxu0 %v2250
  %2484 = vmatpush.bf16.msra.mxu0 %v2242
  %2485 = vmatpush.bf16.msra.mxu0 %v2234
  %2486 = vmatpush.bf16.msra.mxu0 %v2226
  %2487 = vmatpush.bf16.msra.mxu0 %v2218
  %2488 = vmatpush.bf16.msra.mxu0 %v2210
  %2489 = vmatpush.bf16.msra.mxu0 %v2202
  %2490 = vmatmul.bf16.gmra.mxu0 %v1622
  %v2491 = vpop.f32.mrf.mxu0
  %v2492 = vadd.f32 %v2479, %v2491
  %v2493 = vpop.f32.mrf.mxu0
  %2494 = vdwg.mxu0
  %2495 = vmatpush.bf16.msra.mxu0 %v2195
  %2496 = vmatpush.bf16.msra.mxu0 %v2187
  %2497 = vmatpush.bf16.msra.mxu0 %v2179
  %2498 = vmatpush.bf16.msra.mxu0 %v2171
  %2499 = vmatpush.bf16.msra.mxu0 %v2163
  %2500 = vmatpush.bf16.msra.mxu0 %v2155
  %2501 = vmatpush.bf16.msra.mxu0 %v2147
  %2502 = vmatpush.bf16.msra.mxu0 %v2139
  %2503 = vmatmul.bf16.gmra.mxu0 %v1621
  %v2504 = vpop.f32.mrf.mxu0
  %v2505 = vadd.f32 0.0, %v2504
  %v2506 = vpop.f32.mrf.mxu0
  %2507 = vdwg.mxu0
  %2508 = vmatpush.bf16.msra.mxu0 %v2259
  %2509 = vmatpush.bf16.msra.mxu0 %v2251
  %2510 = vmatpush.bf16.msra.mxu0 %v2243
  %2511 = vmatpush.bf16.msra.mxu0 %v2235
  %2512 = vmatpush.bf16.msra.mxu0 %v2227
  %2513 = vmatpush.bf16.msra.mxu0 %v2219
  %2514 = vmatpush.bf16.msra.mxu0 %v2211
  %2515 = vmatpush.bf16.msra.mxu0 %v2203
  %2516 = vmatmul.bf16.gmra.mxu0 %v1622
  %v2517 = vpop.f32.mrf.mxu0
  %v2518 = vadd.f32 %v2505, %v2517
  %v2519 = vpop.f32.mrf.mxu0
  %2520 = vdwg.mxu0
  %2521 = vmatpush.bf16.msra.mxu0 %v2196
  %2522 = vmatpush.bf16.msra.mxu0 %v2188
  %2523 = vmatpush.bf16.msra.mxu0 %v2180
  %2524 = vmatpush.bf16.msra.mxu0 %v2172
  %2525 = vmatpush.bf16.msra.mxu0 %v2164
  %2526 = vmatpush.bf16.msra.mxu0 %v2156
  %2527 = vmatpush.bf16.msra.mxu0 %v2148
  %2528 = vmatpush.bf16.msra.mxu0 %v2140
  %2529 = vmatmul.bf16.gmra.mxu0 %v1621
  %v2530 = vpop.f32.mrf.mxu0
  %v2531 = vadd.f32 0.0, %v2530
  %v2532 = vpop.f32.mrf.mxu0
  %2533 = vdwg.mxu0
  %2534 = vmatpush.bf16.msra.mxu0 %v2260
  %2535 = vmatpush.bf16.msra.mxu0 %v2252
  %2536 = vmatpush.bf16.msra.mxu0 %v2244
  %2537 = vmatpush.bf16.msra.mxu0 %v2236
  %2538 = vmatpush.bf16.msra.mxu0 %v2228
  %2539 = vmatpush.bf16.msra.mxu0 %v2220
  %2540 = vmatpush.bf16.msra.mxu0 %v2212
  %2541 = vmatpush.bf16.msra.mxu0 %v2204
  %2542 = vmatmul.bf16.gmra.mxu0 %v1622
  %v2543 = vpop.f32.mrf.mxu0
  %v2544 = vadd.f32 %v2531, %v2543
  %v2545 = vpop.f32.mrf.mxu0
  %2546 = vdwg.mxu0
  %2547 = vmatpush.bf16.msra.mxu0 %v2197
  %2548 = vmatpush.bf16.msra.mxu0 %v2189
  %2549 = vmatpush.bf16.msra.mxu0 %v2181
  %2550 = vmatpush.bf16.msra.mxu0 %v2173
  %2551 = vmatpush.bf16.msra.mxu0 %v2165
  %2552 = vmatpush.bf16.msra.mxu0 %v2157
  %2553 = vmatpush.bf16.msra.mxu0 %v2149
  %2554 = vmatpush.bf16.msra.mxu0 %v2141
  %2555 = vmatmul.bf16.gmra.mxu0 %v1621
  %v2556 = vpop.f32.mrf.mxu0
  %v2557 = vadd.f32 0.0, %v2556
  %v2558 = vpop.f32.mrf.mxu0
  %2559 = vdwg.mxu0
  %2560 = vmatpush.bf16.msra.mxu0 %v2261
  %2561 = vmatpush.bf16.msra.mxu0 %v2253
  %2562 = vmatpush.bf16.msra.mxu0 %v2245
  %2563 = vmatpush.bf16.msra.mxu0 %v2237
  %2564 = vmatpush.bf16.msra.mxu0 %v2229
  %2565 = vmatpush.bf16.msra.mxu0 %v2221
  %2566 = vmatpush.bf16.msra.mxu0 %v2213
  %2567 = vmatpush.bf16.msra.mxu0 %v2205
  %2568 = vmatmul.bf16.gmra.mxu0 %v1622
  %v2569 = vpop.f32.mrf.mxu0
  %v2570 = vadd.f32 %v2557, %v2569
  %v2571 = vpop.f32.mrf.mxu0
  %2572 = vdwg.mxu0
  %2573 = vmatpush.bf16.msra.mxu0 %v2198
  %2574 = vmatpush.bf16.msra.mxu0 %v2190
  %2575 = vmatpush.bf16.msra.mxu0 %v2182
  %2576 = vmatpush.bf16.msra.mxu0 %v2174
  %2577 = vmatpush.bf16.msra.mxu0 %v2166
  %2578 = vmatpush.bf16.msra.mxu0 %v2158
  %2579 = vmatpush.bf16.msra.mxu0 %v2150
  %2580 = vmatpush.bf16.msra.mxu0 %v2142
  %2581 = vmatmul.bf16.gmra.mxu0 %v1621
  %v2582 = vpop.f32.mrf.mxu0
  %v2583 = vadd.f32 0.0, %v2582
  %v2584 = vpop.f32.mrf.mxu0
  %2585 = vdwg.mxu0
  %2586 = vmatpush.bf16.msra.mxu0 %v2262
  %2587 = vmatpush.bf16.msra.mxu0 %v2254
  %2588 = vmatpush.bf16.msra.mxu0 %v2246
  %2589 = vmatpush.bf16.msra.mxu0 %v2238
  %2590 = vmatpush.bf16.msra.mxu0 %v2230
  %2591 = vmatpush.bf16.msra.mxu0 %v2222
  %2592 = vmatpush.bf16.msra.mxu0 %v2214
  %2593 = vmatpush.bf16.msra.mxu0 %v2206
  %2594 = vmatmul.bf16.gmra.mxu0 %v1622
  %v2595 = vpop.f32.mrf.mxu0
  %v2596 = vadd.f32 %v2583, %v2595
  %v2597 = vpop.f32.mrf.mxu0
  %2598 = vdwg.mxu0
  %s2599 = smul.u32 1, 8
  %s2600 = smul.addr %s2599, 8
  %s2601 = scalar_lea.vmem [#allocation2], %s2600
  %v2602 = vld [vmem:[%s2601] sm:$0xff]
  %v2603 = vld [vmem:[%s2601 + $0x8] sm:$0xff]
  %v2604 = vld [vmem:[%s2601 + $0x10] sm:$0xff]
  %v2605 = vld [vmem:[%s2601 + $0x18] sm:$0xff]
  %v2606 = vadd.f32 %v2602, %v2414
  %v2607 = vadd.f32 %v2603, %v2440
  %v2608 = vadd.f32 %v2604, %v2466
  %v2609 = vadd.f32 %v2605, %v2492
  %s2610 = smul.u32 6, 8
  %s2611 = smul.addr %s2610, 8
  %s2612 = scalar_lea.vmem [#allocation2], %s2611
  %v2613 = vld [vmem:[%s2612 + $0x20] sm:$0xff]
  %v2614 = vld [vmem:[%s2612 + $0x28] sm:$0xff]
  %v2615 = vld [vmem:[%s2612 + $0x30] sm:$0xff]
  %v2616 = vld [vmem:[%s2612 + $0x38] sm:$0xff]
  %v2617 = vadd.f32 %v2613, %v2518
  %v2618 = vadd.f32 %v2614, %v2544
  %v2619 = vadd.f32 %v2615, %v2570
  %v2620 = vadd.f32 %v2616, %v2596
  %v2621 = vxor.u32 %v2606, 2147483648
  %v2622 = vmul.f32 %v2621, 1.442695
  %v2623 = vpow.pop %v2622
  %v2624 = vadd.f32 %v2623, 1.0
  %v2625 = vrcp.pop %v2624
  %v2626 = vmul.f32 %v2624, %v2625
  %v2627 = vsub.f32 1.0, %v2626
  %v2628 = vmul.f32 %v2625, %v2627
  %v2629 = vadd.f32 %v2625, %v2628
  %vm2630 = vweird.f32 %v2624
  %vm2631 = vweird.f32 %v2625
  %vm2632 = vmor %vm2630, %vm2631
  %v2633 = vsel %vm2632, %v2625, %v2629
  %v2634 = vand.u32 2147483647, %v2624
  %vm2635 = vcmp.eq.f32.partialorder %v2634, 8.507059e+37
  %v2636 = vand.u32 %v2624, 2147483648
  %v2637 = vor.u32 1.1754944e-38, %v2636
  %v2638 = vsel %vm2635, %v2637, %v2633
  %v2639 = vmul.f32 1.0, %v2638
  %v2640 = vxor.u32 %v2607, 2147483648
  %v2641 = vmul.f32 %v2640, 1.442695
  %v2642 = vpow.pop %v2641
  %v2643 = vadd.f32 %v2642, 1.0
  %v2644 = vrcp.pop %v2643
  %v2645 = vmul.f32 %v2643, %v2644
  %v2646 = vsub.f32 1.0, %v2645
  %v2647 = vmul.f32 %v2644, %v2646
  %v2648 = vadd.f32 %v2644, %v2647
  %vm2649 = vweird.f32 %v2643
  %vm2650 = vweird.f32 %v2644
  %vm2651 = vmor %vm2649, %vm2650
  %v2652 = vsel %vm2651, %v2644, %v2648
  %v2653 = vand.u32 2147483647, %v2643
  %vm2654 = vcmp.eq.f32.partialorder %v2653, 8.507059e+37
  %v2655 = vand.u32 %v2643, 2147483648
  %v2656 = vor.u32 1.1754944e-38, %v2655
  %v2657 = vsel %vm2654, %v2656, %v2652
  %v2658 = vmul.f32 1.0, %v2657
  %v2659 = vtanh.pop %v2608
  %v2660 = vxor.u32 %v2609, 2147483648
  %v2661 = vmul.f32 %v2660, 1.442695
  %v2662 = vpow.pop %v2661
  %v2663 = vadd.f32 %v2662, 1.0
  %v2664 = vrcp.pop %v2663
  %v2665 = vmul.f32 %v2663, %v2664
  %v2666 = vsub.f32 1.0, %v2665
  %v2667 = vmul.f32 %v2664, %v2666
  %v2668 = vadd.f32 %v2664, %v2667
  %vm2669 = vweird.f32 %v2663
  %vm2670 = vweird.f32 %v2664
  %vm2671 = vmor %vm2669, %vm2670
  %v2672 = vsel %vm2671, %v2664, %v2668
  %v2673 = vand.u32 2147483647, %v2663
  %vm2674 = vcmp.eq.f32.partialorder %v2673, 8.507059e+37
  %v2675 = vand.u32 %v2663, 2147483648
  %v2676 = vor.u32 1.1754944e-38, %v2675
  %v2677 = vsel %vm2674, %v2676, %v2672
  %v2678 = vmul.f32 1.0, %v2677
  %v2679 = vmul.f32 %v2658, %v1619
  %v2680 = vmul.f32 %v2639, %v2659
  %v2681 = vadd.f32 %v2679, %v2680
  %v2682 = vtanh.pop %v2681
  %v2683 = vmul.f32 %v2678, %v2682
  %v2684 = vxor.u32 %v2617, 2147483648
  %v2685 = vmul.f32 %v2684, 1.442695
  %v2686 = vpow.pop %v2685
  %v2687 = vadd.f32 %v2686, 1.0
  %v2688 = vrcp.pop %v2687
  %v2689 = vmul.f32 %v2687, %v2688
  %v2690 = vsub.f32 1.0, %v2689
  %v2691 = vmul.f32 %v2688, %v2690
  %v2692 = vadd.f32 %v2688, %v2691
  %vm2693 = vweird.f32 %v2687
  %vm2694 = vweird.f32 %v2688
  %vm2695 = vmor %vm2693, %vm2694
  %v2696 = vsel %vm2695, %v2688, %v2692
  %v2697 = vand.u32 2147483647, %v2687
  %vm2698 = vcmp.eq.f32.partialorder %v2697, 8.507059e+37
  %v2699 = vand.u32 %v2687, 2147483648
  %v2700 = vor.u32 1.1754944e-38, %v2699
  %v2701 = vsel %vm2698, %v2700, %v2696
  %v2702 = vmul.f32 1.0, %v2701
  %v2703 = vxor.u32 %v2618, 2147483648
  %v2704 = vmul.f32 %v2703, 1.442695
  %v2705 = vpow.pop %v2704
  %v2706 = vadd.f32 %v2705, 1.0
  %v2707 = vrcp.pop %v2706
  %v2708 = vmul.f32 %v2706, %v2707
  %v2709 = vsub.f32 1.0, %v2708
  %v2710 = vmul.f32 %v2707, %v2709
  %v2711 = vadd.f32 %v2707, %v2710
  %vm2712 = vweird.f32 %v2706
  %vm2713 = vweird.f32 %v2707
  %vm2714 = vmor %vm2712, %vm2713
  %v2715 = vsel %vm2714, %v2707, %v2711
  %v2716 = vand.u32 2147483647, %v2706
  %vm2717 = vcmp.eq.f32.partialorder %v2716, 8.507059e+37
  %v2718 = vand.u32 %v2706, 2147483648
  %v2719 = vor.u32 1.1754944e-38, %v2718
  %v2720 = vsel %vm2717, %v2719, %v2715
  %v2721 = vmul.f32 1.0, %v2720
  %v2722 = vtanh.pop %v2619
  %v2723 = vxor.u32 %v2620, 2147483648
  %v2724 = vmul.f32 %v2723, 1.442695
  %v2725 = vpow.pop %v2724
  %v2726 = vadd.f32 %v2725, 1.0
  %v2727 = vrcp.pop %v2726
  %v2728 = vmul.f32 %v2726, %v2727
  %v2729 = vsub.f32 1.0, %v2728
  %v2730 = vmul.f32 %v2727, %v2729
  %v2731 = vadd.f32 %v2727, %v2730
  %vm2732 = vweird.f32 %v2726
  %vm2733 = vweird.f32 %v2727
  %vm2734 = vmor %vm2732, %vm2733
  %v2735 = vsel %vm2734, %v2727, %v2731
  %v2736 = vand.u32 2147483647, %v2726
  %vm2737 = vcmp.eq.f32.partialorder %v2736, 8.507059e+37
  %v2738 = vand.u32 %v2726, 2147483648
  %v2739 = vor.u32 1.1754944e-38, %v2738
  %v2740 = vsel %vm2737, %v2739, %v2735
  %v2741 = vmul.f32 1.0, %v2740
  %v2742 = vmul.f32 %v2721, %v1620
  %v2743 = vmul.f32 %v2702, %v2722
  %v2744 = vadd.f32 %v2742, %v2743
  %v2745 = vtanh.pop %v2744
  %v2746 = vmul.f32 %v2741, %v2745
  %vm2747 = vcmp.gt.s32.totalorder %v476, 1
  %v2748 = vsel %vm2747, 1, 0
  %2749 = vset.pattern.permute.xlu0 0
  %2750 = vperm.xlu0 %2749, %v2748
  %v2751 = vpop.permute.xlu0 %2750
  %vm2752 = vcmp.eq.s32.totalorder %v2751, 1
  %vm2753 = vcmp.gt.s32.totalorder %v476, 6
  %v2754 = vsel %vm2753, 1, 0
  %2755 = vset.pattern.permute.xlu0 0
  %2756 = vperm.xlu0 %2755, %v2754
  %v2757 = vpop.permute.xlu0 %2756
  %vm2758 = vcmp.eq.s32.totalorder %v2757, 1
  %v2759 = vsel %vm2752, %v2683, 0.0
  %s2760 = scalar_lea.vmem %s5, 8
  %2761 = vst [vmem:[%s2760] sm:$0xff] %v2759
  %v2762 = vsel %vm2758, %v2746, 0.0
  %s2763 = scalar_lea.vmem %s6, 48
  %2764 = vst [vmem:[%s2763] sm:$0xff] %v2762
  %v2765 = vsel %vm2752, %v2683, %v1614
  %v2766 = vsel %vm2752, %v2681, %v1619
  %v2767 = vsel %vm2758, %v2746, %v1616
  %v2768 = vsel %vm2758, %v2744, %v1620
  %v2769 = vpack.c.bf16 %v2765, %v2765
  %v2770 = vpack.c.bf16 %v2767, %v2767
  %v2771 = vld [vmem:[%s3] sm:$0xff]
  %v2772 = vld [vmem:[%s3 + $0x8] sm:$0xff]
  %v2773 = vld [vmem:[%s3 + $0x10] sm:$0xff]
  %v2774 = vld [vmem:[%s3 + $0x18] sm:$0xff]
  %v2775 = vld [vmem:[%s3 + $0x20] sm:$0xff]
  %v2776 = vld [vmem:[%s3 + $0x28] sm:$0xff]
  %v2777 = vld [vmem:[%s3 + $0x30] sm:$0xff]
  %v2778 = vld [vmem:[%s3 + $0x38] sm:$0xff]
  %v2779 = vld [vmem:[%s3 + $0x40] sm:$0xff]
  %v2780 = vld [vmem:[%s3 + $0x48] sm:$0xff]
  %v2781 = vld [vmem:[%s3 + $0x50] sm:$0xff]
  %v2782 = vld [vmem:[%s3 + $0x58] sm:$0xff]
  %v2783 = vld [vmem:[%s3 + $0x60] sm:$0xff]
  %v2784 = vld [vmem:[%s3 + $0x68] sm:$0xff]
  %v2785 = vld [vmem:[%s3 + $0x70] sm:$0xff]
  %v2786 = vld [vmem:[%s3 + $0x78] sm:$0xff]
  %v2787 = vld [vmem:[%s3 + $0x80] sm:$0xff]
  %v2788 = vld [vmem:[%s3 + $0x88] sm:$0xff]
  %v2789 = vld [vmem:[%s3 + $0x90] sm:$0xff]
  %v2790 = vld [vmem:[%s3 + $0x98] sm:$0xff]
  %v2791 = vld [vmem:[%s3 + $0xa0] sm:$0xff]
  %v2792 = vld [vmem:[%s3 + $0xa8] sm:$0xff]
  %v2793 = vld [vmem:[%s3 + $0xb0] sm:$0xff]
  %v2794 = vld [vmem:[%s3 + $0xb8] sm:$0xff]
  %v2795 = vld [vmem:[%s3 + $0xc0] sm:$0xff]
  %v2796 = vld [vmem:[%s3 + $0xc8] sm:$0xff]
  %v2797 = vld [vmem:[%s3 + $0xd0] sm:$0xff]
  %v2798 = vld [vmem:[%s3 + $0xd8] sm:$0xff]
  %v2799 = vld [vmem:[%s3 + $0xe0] sm:$0xff]
  %v2800 = vld [vmem:[%s3 + $0xe8] sm:$0xff]
  %v2801 = vld [vmem:[%s3 + $0xf0] sm:$0xff]
  %v2802 = vld [vmem:[%s3 + $0xf8] sm:$0xff]
  %v2803 = vld [vmem:[%s3 + $0x100] sm:$0xff]
  %v2804 = vld [vmem:[%s3 + $0x108] sm:$0xff]
  %v2805 = vld [vmem:[%s3 + $0x110] sm:$0xff]
  %v2806 = vld [vmem:[%s3 + $0x118] sm:$0xff]
  %v2807 = vld [vmem:[%s3 + $0x120] sm:$0xff]
  %v2808 = vld [vmem:[%s3 + $0x128] sm:$0xff]
  %v2809 = vld [vmem:[%s3 + $0x130] sm:$0xff]
  %v2810 = vld [vmem:[%s3 + $0x138] sm:$0xff]
  %v2811 = vld [vmem:[%s3 + $0x140] sm:$0xff]
  %v2812 = vld [vmem:[%s3 + $0x148] sm:$0xff]
  %v2813 = vld [vmem:[%s3 + $0x150] sm:$0xff]
  %v2814 = vld [vmem:[%s3 + $0x158] sm:$0xff]
  %v2815 = vld [vmem:[%s3 + $0x160] sm:$0xff]
  %v2816 = vld [vmem:[%s3 + $0x168] sm:$0xff]
  %v2817 = vld [vmem:[%s3 + $0x170] sm:$0xff]
  %v2818 = vld [vmem:[%s3 + $0x178] sm:$0xff]
  %v2819 = vld [vmem:[%s3 + $0x180] sm:$0xff]
  %v2820 = vld [vmem:[%s3 + $0x188] sm:$0xff]
  %v2821 = vld [vmem:[%s3 + $0x190] sm:$0xff]
  %v2822 = vld [vmem:[%s3 + $0x198] sm:$0xff]
  %v2823 = vld [vmem:[%s3 + $0x1a0] sm:$0xff]
  %v2824 = vld [vmem:[%s3 + $0x1a8] sm:$0xff]
  %v2825 = vld [vmem:[%s3 + $0x1b0] sm:$0xff]
  %v2826 = vld [vmem:[%s3 + $0x1b8] sm:$0xff]
  %v2827 = vld [vmem:[%s3 + $0x1c0] sm:$0xff]
  %v2828 = vld [vmem:[%s3 + $0x1c8] sm:$0xff]
  %v2829 = vld [vmem:[%s3 + $0x1d0] sm:$0xff]
  %v2830 = vld [vmem:[%s3 + $0x1d8] sm:$0xff]
  %v2831 = vld [vmem:[%s3 + $0x1e0] sm:$0xff]
  %v2832 = vld [vmem:[%s3 + $0x1e8] sm:$0xff]
  %v2833 = vld [vmem:[%s3 + $0x1f0] sm:$0xff]
  %v2834 = vld [vmem:[%s3 + $0x1f8] sm:$0xff]
  %v2835 = vld [vmem:[%s3 + $0x200] sm:$0xff]
  %v2836 = vld [vmem:[%s3 + $0x208] sm:$0xff]
  %v2837 = vld [vmem:[%s3 + $0x210] sm:$0xff]
  %v2838 = vld [vmem:[%s3 + $0x218] sm:$0xff]
  %v2839 = vld [vmem:[%s3 + $0x220] sm:$0xff]
  %v2840 = vld [vmem:[%s3 + $0x228] sm:$0xff]
  %v2841 = vld [vmem:[%s3 + $0x230] sm:$0xff]
  %v2842 = vld [vmem:[%s3 + $0x238] sm:$0xff]
  %v2843 = vld [vmem:[%s3 + $0x240] sm:$0xff]
  %v2844 = vld [vmem:[%s3 + $0x248] sm:$0xff]
  %v2845 = vld [vmem:[%s3 + $0x250] sm:$0xff]
  %v2846 = vld [vmem:[%s3 + $0x258] sm:$0xff]
  %v2847 = vld [vmem:[%s3 + $0x260] sm:$0xff]
  %v2848 = vld [vmem:[%s3 + $0x268] sm:$0xff]
  %v2849 = vld [vmem:[%s3 + $0x270] sm:$0xff]
  %v2850 = vld [vmem:[%s3 + $0x278] sm:$0xff]
  %v2851 = vld [vmem:[%s3 + $0x280] sm:$0xff]
  %v2852 = vld [vmem:[%s3 + $0x288] sm:$0xff]
  %v2853 = vld [vmem:[%s3 + $0x290] sm:$0xff]
  %v2854 = vld [vmem:[%s3 + $0x298] sm:$0xff]
  %v2855 = vld [vmem:[%s3 + $0x2a0] sm:$0xff]
  %v2856 = vld [vmem:[%s3 + $0x2a8] sm:$0xff]
  %v2857 = vld [vmem:[%s3 + $0x2b0] sm:$0xff]
  %v2858 = vld [vmem:[%s3 + $0x2b8] sm:$0xff]
  %v2859 = vld [vmem:[%s3 + $0x2c0] sm:$0xff]
  %v2860 = vld [vmem:[%s3 + $0x2c8] sm:$0xff]
  %v2861 = vld [vmem:[%s3 + $0x2d0] sm:$0xff]
  %v2862 = vld [vmem:[%s3 + $0x2d8] sm:$0xff]
  %v2863 = vld [vmem:[%s3 + $0x2e0] sm:$0xff]
  %v2864 = vld [vmem:[%s3 + $0x2e8] sm:$0xff]
  %v2865 = vld [vmem:[%s3 + $0x2f0] sm:$0xff]
  %v2866 = vld [vmem:[%s3 + $0x2f8] sm:$0xff]
  %v2867 = vld [vmem:[%s3 + $0x300] sm:$0xff]
  %v2868 = vld [vmem:[%s3 + $0x308] sm:$0xff]
  %v2869 = vld [vmem:[%s3 + $0x310] sm:$0xff]
  %v2870 = vld [vmem:[%s3 + $0x318] sm:$0xff]
  %v2871 = vld [vmem:[%s3 + $0x320] sm:$0xff]
  %v2872 = vld [vmem:[%s3 + $0x328] sm:$0xff]
  %v2873 = vld [vmem:[%s3 + $0x330] sm:$0xff]
  %v2874 = vld [vmem:[%s3 + $0x338] sm:$0xff]
  %v2875 = vld [vmem:[%s3 + $0x340] sm:$0xff]
  %v2876 = vld [vmem:[%s3 + $0x348] sm:$0xff]
  %v2877 = vld [vmem:[%s3 + $0x350] sm:$0xff]
  %v2878 = vld [vmem:[%s3 + $0x358] sm:$0xff]
  %v2879 = vld [vmem:[%s3 + $0x360] sm:$0xff]
  %v2880 = vld [vmem:[%s3 + $0x368] sm:$0xff]
  %v2881 = vld [vmem:[%s3 + $0x370] sm:$0xff]
  %v2882 = vld [vmem:[%s3 + $0x378] sm:$0xff]
  %v2883 = vld [vmem:[%s3 + $0x380] sm:$0xff]
  %v2884 = vld [vmem:[%s3 + $0x388] sm:$0xff]
  %v2885 = vld [vmem:[%s3 + $0x390] sm:$0xff]
  %v2886 = vld [vmem:[%s3 + $0x398] sm:$0xff]
  %v2887 = vld [vmem:[%s3 + $0x3a0] sm:$0xff]
  %v2888 = vld [vmem:[%s3 + $0x3a8] sm:$0xff]
  %v2889 = vld [vmem:[%s3 + $0x3b0] sm:$0xff]
  %v2890 = vld [vmem:[%s3 + $0x3b8] sm:$0xff]
  %v2891 = vld [vmem:[%s3 + $0x3c0] sm:$0xff]
  %v2892 = vld [vmem:[%s3 + $0x3c8] sm:$0xff]
  %v2893 = vld [vmem:[%s3 + $0x3d0] sm:$0xff]
  %v2894 = vld [vmem:[%s3 + $0x3d8] sm:$0xff]
  %v2895 = vld [vmem:[%s3 + $0x3e0] sm:$0xff]
  %v2896 = vld [vmem:[%s3 + $0x3e8] sm:$0xff]
  %v2897 = vld [vmem:[%s3 + $0x3f0] sm:$0xff]
  %v2898 = vld [vmem:[%s3 + $0x3f8] sm:$0xff]
  %v3027 = vunpack.c.l.b16 %v2771
  %v3028 = vunpack.c.h.b16 %v2771
  %v3029 = vunpack.c.l.b16 %v2772
  %v3030 = vunpack.c.h.b16 %v2772
  %v3031 = vunpack.c.l.b16 %v2773
  %v3032 = vunpack.c.h.b16 %v2773
  %v3033 = vunpack.c.l.b16 %v2774
  %v3034 = vunpack.c.h.b16 %v2774
  %v3035 = vunpack.c.l.b16 %v2775
  %v3036 = vunpack.c.h.b16 %v2775
  %v3037 = vunpack.c.l.b16 %v2776
  %v3038 = vunpack.c.h.b16 %v2776
  %v3039 = vunpack.c.l.b16 %v2777
  %v3040 = vunpack.c.h.b16 %v2777
  %v3041 = vunpack.c.l.b16 %v2778
  %v3042 = vunpack.c.h.b16 %v2778
  %v3043 = vunpack.c.l.b16 %v2779
  %v3044 = vunpack.c.h.b16 %v2779
  %v3045 = vunpack.c.l.b16 %v2780
  %v3046 = vunpack.c.h.b16 %v2780
  %v3047 = vunpack.c.l.b16 %v2781
  %v3048 = vunpack.c.h.b16 %v2781
  %v3049 = vunpack.c.l.b16 %v2782
  %v3050 = vunpack.c.h.b16 %v2782
  %v3051 = vunpack.c.l.b16 %v2783
  %v3052 = vunpack.c.h.b16 %v2783
  %v3053 = vunpack.c.l.b16 %v2784
  %v3054 = vunpack.c.h.b16 %v2784
  %v3055 = vunpack.c.l.b16 %v2785
  %v3056 = vunpack.c.h.b16 %v2785
  %v3057 = vunpack.c.l.b16 %v2786
  %v3058 = vunpack.c.h.b16 %v2786
  %v3059 = vunpack.c.l.b16 %v2787
  %v3060 = vunpack.c.h.b16 %v2787
  %v3061 = vunpack.c.l.b16 %v2788
  %v3062 = vunpack.c.h.b16 %v2788
  %v3063 = vunpack.c.l.b16 %v2789
  %v3064 = vunpack.c.h.b16 %v2789
  %v3065 = vunpack.c.l.b16 %v2790
  %v3066 = vunpack.c.h.b16 %v2790
  %v3067 = vunpack.c.l.b16 %v2791
  %v3068 = vunpack.c.h.b16 %v2791
  %v3069 = vunpack.c.l.b16 %v2792
  %v3070 = vunpack.c.h.b16 %v2792
  %v3071 = vunpack.c.l.b16 %v2793
  %v3072 = vunpack.c.h.b16 %v2793
  %v3073 = vunpack.c.l.b16 %v2794
  %v3074 = vunpack.c.h.b16 %v2794
  %v3075 = vunpack.c.l.b16 %v2795
  %v3076 = vunpack.c.h.b16 %v2795
  %v3077 = vunpack.c.l.b16 %v2796
  %v3078 = vunpack.c.h.b16 %v2796
  %v3079 = vunpack.c.l.b16 %v2797
  %v3080 = vunpack.c.h.b16 %v2797
  %v3081 = vunpack.c.l.b16 %v2798
  %v3082 = vunpack.c.h.b16 %v2798
  %v3083 = vunpack.c.l.b16 %v2799
  %v3084 = vunpack.c.h.b16 %v2799
  %v3085 = vunpack.c.l.b16 %v2800
  %v3086 = vunpack.c.h.b16 %v2800
  %v3087 = vunpack.c.l.b16 %v2801
  %v3088 = vunpack.c.h.b16 %v2801
  %v3089 = vunpack.c.l.b16 %v2802
  %v3090 = vunpack.c.h.b16 %v2802
  %v3091 = vunpack.c.l.b16 %v2803
  %v3092 = vunpack.c.h.b16 %v2803
  %v3093 = vunpack.c.l.b16 %v2804
  %v3094 = vunpack.c.h.b16 %v2804
  %v3095 = vunpack.c.l.b16 %v2805
  %v3096 = vunpack.c.h.b16 %v2805
  %v3097 = vunpack.c.l.b16 %v2806
  %v3098 = vunpack.c.h.b16 %v2806
  %v3099 = vunpack.c.l.b16 %v2807
  %v3100 = vunpack.c.h.b16 %v2807
  %v3101 = vunpack.c.l.b16 %v2808
  %v3102 = vunpack.c.h.b16 %v2808
  %v3103 = vunpack.c.l.b16 %v2809
  %v3104 = vunpack.c.h.b16 %v2809
  %v3105 = vunpack.c.l.b16 %v2810
  %v3106 = vunpack.c.h.b16 %v2810
  %v3107 = vunpack.c.l.b16 %v2811
  %v3108 = vunpack.c.h.b16 %v2811
  %v3109 = vunpack.c.l.b16 %v2812
  %v3110 = vunpack.c.h.b16 %v2812
  %v3111 = vunpack.c.l.b16 %v2813
  %v3112 = vunpack.c.h.b16 %v2813
  %v3113 = vunpack.c.l.b16 %v2814
  %v3114 = vunpack.c.h.b16 %v2814
  %v3115 = vunpack.c.l.b16 %v2815
  %v3116 = vunpack.c.h.b16 %v2815
  %v3117 = vunpack.c.l.b16 %v2816
  %v3118 = vunpack.c.h.b16 %v2816
  %v3119 = vunpack.c.l.b16 %v2817
  %v3120 = vunpack.c.h.b16 %v2817
  %v3121 = vunpack.c.l.b16 %v2818
  %v3122 = vunpack.c.h.b16 %v2818
  %v3123 = vunpack.c.l.b16 %v2819
  %v3124 = vunpack.c.h.b16 %v2819
  %v3125 = vunpack.c.l.b16 %v2820
  %v3126 = vunpack.c.h.b16 %v2820
  %v3127 = vunpack.c.l.b16 %v2821
  %v3128 = vunpack.c.h.b16 %v2821
  %v3129 = vunpack.c.l.b16 %v2822
  %v3130 = vunpack.c.h.b16 %v2822
  %v3131 = vunpack.c.l.b16 %v2823
  %v3132 = vunpack.c.h.b16 %v2823
  %v3133 = vunpack.c.l.b16 %v2824
  %v3134 = vunpack.c.h.b16 %v2824
  %v3135 = vunpack.c.l.b16 %v2825
  %v3136 = vunpack.c.h.b16 %v2825
  %v3137 = vunpack.c.l.b16 %v2826
  %v3138 = vunpack.c.h.b16 %v2826
  %v3139 = vunpack.c.l.b16 %v2827
  %v3140 = vunpack.c.h.b16 %v2827
  %v3141 = vunpack.c.l.b16 %v2828
  %v3142 = vunpack.c.h.b16 %v2828
  %v3143 = vunpack.c.l.b16 %v2829
  %v3144 = vunpack.c.h.b16 %v2829
  %v3145 = vunpack.c.l.b16 %v2830
  %v3146 = vunpack.c.h.b16 %v2830
  %v3147 = vunpack.c.l.b16 %v2831
  %v3148 = vunpack.c.h.b16 %v2831
  %v3149 = vunpack.c.l.b16 %v2832
  %v3150 = vunpack.c.h.b16 %v2832
  %v3151 = vunpack.c.l.b16 %v2833
  %v3152 = vunpack.c.h.b16 %v2833
  %v3153 = vunpack.c.l.b16 %v2834
  %v3154 = vunpack.c.h.b16 %v2834
  %v3155 = vunpack.c.l.b16 %v2835
  %v3156 = vunpack.c.h.b16 %v2835
  %v3157 = vunpack.c.l.b16 %v2836
  %v3158 = vunpack.c.h.b16 %v2836
  %v3159 = vunpack.c.l.b16 %v2837
  %v3160 = vunpack.c.h.b16 %v2837
  %v3161 = vunpack.c.l.b16 %v2838
  %v3162 = vunpack.c.h.b16 %v2838
  %v3163 = vunpack.c.l.b16 %v2839
  %v3164 = vunpack.c.h.b16 %v2839
  %v3165 = vunpack.c.l.b16 %v2840
  %v3166 = vunpack.c.h.b16 %v2840
  %v3167 = vunpack.c.l.b16 %v2841
  %v3168 = vunpack.c.h.b16 %v2841
  %v3169 = vunpack.c.l.b16 %v2842
  %v3170 = vunpack.c.h.b16 %v2842
  %v3171 = vunpack.c.l.b16 %v2843
  %v3172 = vunpack.c.h.b16 %v2843
  %v3173 = vunpack.c.l.b16 %v2844
  %v3174 = vunpack.c.h.b16 %v2844
  %v3175 = vunpack.c.l.b16 %v2845
  %v3176 = vunpack.c.h.b16 %v2845
  %v3177 = vunpack.c.l.b16 %v2846
  %v3178 = vunpack.c.h.b16 %v2846
  %v3179 = vunpack.c.l.b16 %v2847
  %v3180 = vunpack.c.h.b16 %v2847
  %v3181 = vunpack.c.l.b16 %v2848
  %v3182 = vunpack.c.h.b16 %v2848
  %v3183 = vunpack.c.l.b16 %v2849
  %v3184 = vunpack.c.h.b16 %v2849
  %v3185 = vunpack.c.l.b16 %v2850
  %v3186 = vunpack.c.h.b16 %v2850
  %v3187 = vunpack.c.l.b16 %v2851
  %v3188 = vunpack.c.h.b16 %v2851
  %v3189 = vunpack.c.l.b16 %v2852
  %v3190 = vunpack.c.h.b16 %v2852
  %v3191 = vunpack.c.l.b16 %v2853
  %v3192 = vunpack.c.h.b16 %v2853
  %v3193 = vunpack.c.l.b16 %v2854
  %v3194 = vunpack.c.h.b16 %v2854
  %v3195 = vunpack.c.l.b16 %v2855
  %v3196 = vunpack.c.h.b16 %v2855
  %v3197 = vunpack.c.l.b16 %v2856
  %v3198 = vunpack.c.h.b16 %v2856
  %v3199 = vunpack.c.l.b16 %v2857
  %v3200 = vunpack.c.h.b16 %v2857
  %v3201 = vunpack.c.l.b16 %v2858
  %v3202 = vunpack.c.h.b16 %v2858
  %v3203 = vunpack.c.l.b16 %v2859
  %v3204 = vunpack.c.h.b16 %v2859
  %v3205 = vunpack.c.l.b16 %v2860
  %v3206 = vunpack.c.h.b16 %v2860
  %v3207 = vunpack.c.l.b16 %v2861
  %v3208 = vunpack.c.h.b16 %v2861
  %v3209 = vunpack.c.l.b16 %v2862
  %v3210 = vunpack.c.h.b16 %v2862
  %v3211 = vunpack.c.l.b16 %v2863
  %v3212 = vunpack.c.h.b16 %v2863
  %v3213 = vunpack.c.l.b16 %v2864
  %v3214 = vunpack.c.h.b16 %v2864
  %v3215 = vunpack.c.l.b16 %v2865
  %v3216 = vunpack.c.h.b16 %v2865
  %v3217 = vunpack.c.l.b16 %v2866
  %v3218 = vunpack.c.h.b16 %v2866
  %v3219 = vunpack.c.l.b16 %v2867
  %v3220 = vunpack.c.h.b16 %v2867
  %v3221 = vunpack.c.l.b16 %v2868
  %v3222 = vunpack.c.h.b16 %v2868
  %v3223 = vunpack.c.l.b16 %v2869
  %v3224 = vunpack.c.h.b16 %v2869
  %v3225 = vunpack.c.l.b16 %v2870
  %v3226 = vunpack.c.h.b16 %v2870
  %v3227 = vunpack.c.l.b16 %v2871
  %v3228 = vunpack.c.h.b16 %v2871
  %v3229 = vunpack.c.l.b16 %v2872
  %v3230 = vunpack.c.h.b16 %v2872
  %v3231 = vunpack.c.l.b16 %v2873
  %v3232 = vunpack.c.h.b16 %v2873
  %v3233 = vunpack.c.l.b16 %v2874
  %v3234 = vunpack.c.h.b16 %v2874
  %v3235 = vunpack.c.l.b16 %v2875
  %v3236 = vunpack.c.h.b16 %v2875
  %v3237 = vunpack.c.l.b16 %v2876
  %v3238 = vunpack.c.h.b16 %v2876
  %v3239 = vunpack.c.l.b16 %v2877
  %v3240 = vunpack.c.h.b16 %v2877
  %v3241 = vunpack.c.l.b16 %v2878
  %v3242 = vunpack.c.h.b16 %v2878
  %v3243 = vunpack.c.l.b16 %v2879
  %v3244 = vunpack.c.h.b16 %v2879
  %v3245 = vunpack.c.l.b16 %v2880
  %v3246 = vunpack.c.h.b16 %v2880
  %v3247 = vunpack.c.l.b16 %v2881
  %v3248 = vunpack.c.h.b16 %v2881
  %v3249 = vunpack.c.l.b16 %v2882
  %v3250 = vunpack.c.h.b16 %v2882
  %v3251 = vunpack.c.l.b16 %v2883
  %v3252 = vunpack.c.h.b16 %v2883
  %v3253 = vunpack.c.l.b16 %v2884
  %v3254 = vunpack.c.h.b16 %v2884
  %v3255 = vunpack.c.l.b16 %v2885
  %v3256 = vunpack.c.h.b16 %v2885
  %v3257 = vunpack.c.l.b16 %v2886
  %v3258 = vunpack.c.h.b16 %v2886
  %v3259 = vunpack.c.l.b16 %v2887
  %v3260 = vunpack.c.h.b16 %v2887
  %v3261 = vunpack.c.l.b16 %v2888
  %v3262 = vunpack.c.h.b16 %v2888
  %v3263 = vunpack.c.l.b16 %v2889
  %v3264 = vunpack.c.h.b16 %v2889
  %v3265 = vunpack.c.l.b16 %v2890
  %v3266 = vunpack.c.h.b16 %v2890
  %v3267 = vunpack.c.l.b16 %v2891
  %v3268 = vunpack.c.h.b16 %v2891
  %v3269 = vunpack.c.l.b16 %v2892
  %v3270 = vunpack.c.h.b16 %v2892
  %v3271 = vunpack.c.l.b16 %v2893
  %v3272 = vunpack.c.h.b16 %v2893
  %v3273 = vunpack.c.l.b16 %v2894
  %v3274 = vunpack.c.h.b16 %v2894
  %v3275 = vunpack.c.l.b16 %v2895
  %v3276 = vunpack.c.h.b16 %v2895
  %v3277 = vunpack.c.l.b16 %v2896
  %v3278 = vunpack.c.h.b16 %v2896
  %v3279 = vunpack.c.l.b16 %v2897
  %v3280 = vunpack.c.h.b16 %v2897
  %v3281 = vunpack.c.l.b16 %v2898
  %v3282 = vunpack.c.h.b16 %v2898
  %v3283 = vpack.c.b16 %v3035, %v3027
  %v3284 = vpack.c.b16 %v3036, %v3028
  %v3285 = vpack.c.b16 %v3037, %v3029
  %v3286 = vpack.c.b16 %v3038, %v3030
  %v3287 = vpack.c.b16 %v3039, %v3031
  %v3288 = vpack.c.b16 %v3040, %v3032
  %v3289 = vpack.c.b16 %v3041, %v3033
  %v3290 = vpack.c.b16 %v3042, %v3034
  %v3291 = vpack.c.b16 %v3051, %v3043
  %v3292 = vpack.c.b16 %v3052, %v3044
  %v3293 = vpack.c.b16 %v3053, %v3045
  %v3294 = vpack.c.b16 %v3054, %v3046
  %v3295 = vpack.c.b16 %v3055, %v3047
  %v3296 = vpack.c.b16 %v3056, %v3048
  %v3297 = vpack.c.b16 %v3057, %v3049
  %v3298 = vpack.c.b16 %v3058, %v3050
  %v3299 = vpack.c.b16 %v3067, %v3059
  %v3300 = vpack.c.b16 %v3068, %v3060
  %v3301 = vpack.c.b16 %v3069, %v3061
  %v3302 = vpack.c.b16 %v3070, %v3062
  %v3303 = vpack.c.b16 %v3071, %v3063
  %v3304 = vpack.c.b16 %v3072, %v3064
  %v3305 = vpack.c.b16 %v3073, %v3065
  %v3306 = vpack.c.b16 %v3074, %v3066
  %v3307 = vpack.c.b16 %v3083, %v3075
  %v3308 = vpack.c.b16 %v3084, %v3076
  %v3309 = vpack.c.b16 %v3085, %v3077
  %v3310 = vpack.c.b16 %v3086, %v3078
  %v3311 = vpack.c.b16 %v3087, %v3079
  %v3312 = vpack.c.b16 %v3088, %v3080
  %v3313 = vpack.c.b16 %v3089, %v3081
  %v3314 = vpack.c.b16 %v3090, %v3082
  %v3315 = vpack.c.b16 %v3099, %v3091
  %v3316 = vpack.c.b16 %v3100, %v3092
  %v3317 = vpack.c.b16 %v3101, %v3093
  %v3318 = vpack.c.b16 %v3102, %v3094
  %v3319 = vpack.c.b16 %v3103, %v3095
  %v3320 = vpack.c.b16 %v3104, %v3096
  %v3321 = vpack.c.b16 %v3105, %v3097
  %v3322 = vpack.c.b16 %v3106, %v3098
  %v3323 = vpack.c.b16 %v3115, %v3107
  %v3324 = vpack.c.b16 %v3116, %v3108
  %v3325 = vpack.c.b16 %v3117, %v3109
  %v3326 = vpack.c.b16 %v3118, %v3110
  %v3327 = vpack.c.b16 %v3119, %v3111
  %v3328 = vpack.c.b16 %v3120, %v3112
  %v3329 = vpack.c.b16 %v3121, %v3113
  %v3330 = vpack.c.b16 %v3122, %v3114
  %v3331 = vpack.c.b16 %v3131, %v3123
  %v3332 = vpack.c.b16 %v3132, %v3124
  %v3333 = vpack.c.b16 %v3133, %v3125
  %v3334 = vpack.c.b16 %v3134, %v3126
  %v3335 = vpack.c.b16 %v3135, %v3127
  %v3336 = vpack.c.b16 %v3136, %v3128
  %v3337 = vpack.c.b16 %v3137, %v3129
  %v3338 = vpack.c.b16 %v3138, %v3130
  %v3339 = vpack.c.b16 %v3147, %v3139
  %v3340 = vpack.c.b16 %v3148, %v3140
  %v3341 = vpack.c.b16 %v3149, %v3141
  %v3342 = vpack.c.b16 %v3150, %v3142
  %v3343 = vpack.c.b16 %v3151, %v3143
  %v3344 = vpack.c.b16 %v3152, %v3144
  %v3345 = vpack.c.b16 %v3153, %v3145
  %v3346 = vpack.c.b16 %v3154, %v3146
  %v3347 = vpack.c.b16 %v3163, %v3155
  %v3348 = vpack.c.b16 %v3164, %v3156
  %v3349 = vpack.c.b16 %v3165, %v3157
  %v3350 = vpack.c.b16 %v3166, %v3158
  %v3351 = vpack.c.b16 %v3167, %v3159
  %v3352 = vpack.c.b16 %v3168, %v3160
  %v3353 = vpack.c.b16 %v3169, %v3161
  %v3354 = vpack.c.b16 %v3170, %v3162
  %v3355 = vpack.c.b16 %v3179, %v3171
  %v3356 = vpack.c.b16 %v3180, %v3172
  %v3357 = vpack.c.b16 %v3181, %v3173
  %v3358 = vpack.c.b16 %v3182, %v3174
  %v3359 = vpack.c.b16 %v3183, %v3175
  %v3360 = vpack.c.b16 %v3184, %v3176
  %v3361 = vpack.c.b16 %v3185, %v3177
  %v3362 = vpack.c.b16 %v3186, %v3178
  %v3363 = vpack.c.b16 %v3195, %v3187
  %v3364 = vpack.c.b16 %v3196, %v3188
  %v3365 = vpack.c.b16 %v3197, %v3189
  %v3366 = vpack.c.b16 %v3198, %v3190
  %v3367 = vpack.c.b16 %v3199, %v3191
  %v3368 = vpack.c.b16 %v3200, %v3192
  %v3369 = vpack.c.b16 %v3201, %v3193
  %v3370 = vpack.c.b16 %v3202, %v3194
  %v3371 = vpack.c.b16 %v3211, %v3203
  %v3372 = vpack.c.b16 %v3212, %v3204
  %v3373 = vpack.c.b16 %v3213, %v3205
  %v3374 = vpack.c.b16 %v3214, %v3206
  %v3375 = vpack.c.b16 %v3215, %v3207
  %v3376 = vpack.c.b16 %v3216, %v3208
  %v3377 = vpack.c.b16 %v3217, %v3209
  %v3378 = vpack.c.b16 %v3218, %v3210
  %v3379 = vpack.c.b16 %v3227, %v3219
  %v3380 = vpack.c.b16 %v3228, %v3220
  %v3381 = vpack.c.b16 %v3229, %v3221
  %v3382 = vpack.c.b16 %v3230, %v3222
  %v3383 = vpack.c.b16 %v3231, %v3223
  %v3384 = vpack.c.b16 %v3232, %v3224
  %v3385 = vpack.c.b16 %v3233, %v3225
  %v3386 = vpack.c.b16 %v3234, %v3226
  %v3387 = vpack.c.b16 %v3243, %v3235
  %v3388 = vpack.c.b16 %v3244, %v3236
  %v3389 = vpack.c.b16 %v3245, %v3237
  %v3390 = vpack.c.b16 %v3246, %v3238
  %v3391 = vpack.c.b16 %v3247, %v3239
  %v3392 = vpack.c.b16 %v3248, %v3240
  %v3393 = vpack.c.b16 %v3249, %v3241
  %v3394 = vpack.c.b16 %v3250, %v3242
  %v3395 = vpack.c.b16 %v3259, %v3251
  %v3396 = vpack.c.b16 %v3260, %v3252
  %v3397 = vpack.c.b16 %v3261, %v3253
  %v3398 = vpack.c.b16 %v3262, %v3254
  %v3399 = vpack.c.b16 %v3263, %v3255
  %v3400 = vpack.c.b16 %v3264, %v3256
  %v3401 = vpack.c.b16 %v3265, %v3257
  %v3402 = vpack.c.b16 %v3266, %v3258
  %v3403 = vpack.c.b16 %v3275, %v3267
  %v3404 = vpack.c.b16 %v3276, %v3268
  %v3405 = vpack.c.b16 %v3277, %v3269
  %v3406 = vpack.c.b16 %v3278, %v3270
  %v3407 = vpack.c.b16 %v3279, %v3271
  %v3408 = vpack.c.b16 %v3280, %v3272
  %v3409 = vpack.c.b16 %v3281, %v3273
  %v3410 = vpack.c.b16 %v3282, %v3274
  %3539 = vmatpush.bf16.msra.mxu0 %v3339
  %3540 = vmatpush.bf16.msra.mxu0 %v3331
  %3541 = vmatpush.bf16.msra.mxu0 %v3323
  %3542 = vmatpush.bf16.msra.mxu0 %v3315
  %3543 = vmatpush.bf16.msra.mxu0 %v3307
  %3544 = vmatpush.bf16.msra.mxu0 %v3299
  %3545 = vmatpush.bf16.msra.mxu0 %v3291
  %3546 = vmatpush.bf16.msra.mxu0 %v3283
  %3547 = vmatmul.bf16.gmra.mxu0 %v2769
  %v3548 = vpop.f32.mrf.mxu0
  %v3549 = vadd.f32 0.0, %v3548
  %v3550 = vpop.f32.mrf.mxu0
  %3551 = vdwg.mxu0
  %3552 = vmatpush.bf16.msra.mxu0 %v3403
  %3553 = vmatpush.bf16.msra.mxu0 %v3395
  %3554 = vmatpush.bf16.msra.mxu0 %v3387
  %3555 = vmatpush.bf16.msra.mxu0 %v3379
  %3556 = vmatpush.bf16.msra.mxu0 %v3371
  %3557 = vmatpush.bf16.msra.mxu0 %v3363
  %3558 = vmatpush.bf16.msra.mxu0 %v3355
  %3559 = vmatpush.bf16.msra.mxu0 %v3347
  %3560 = vmatmul.bf16.gmra.mxu0 %v2770
  %v3561 = vpop.f32.mrf.mxu0
  %v3562 = vadd.f32 %v3549, %v3561
  %v3563 = vpop.f32.mrf.mxu0
  %3564 = vdwg.mxu0
  %3565 = vmatpush.bf16.msra.mxu0 %v3340
  %3566 = vmatpush.bf16.msra.mxu0 %v3332
  %3567 = vmatpush.bf16.msra.mxu0 %v3324
  %3568 = vmatpush.bf16.msra.mxu0 %v3316
  %3569 = vmatpush.bf16.msra.mxu0 %v3308
  %3570 = vmatpush.bf16.msra.mxu0 %v3300
  %3571 = vmatpush.bf16.msra.mxu0 %v3292
  %3572 = vmatpush.bf16.msra.mxu0 %v3284
  %3573 = vmatmul.bf16.gmra.mxu0 %v2769
  %v3574 = vpop.f32.mrf.mxu0
  %v3575 = vadd.f32 0.0, %v3574
  %v3576 = vpop.f32.mrf.mxu0
  %3577 = vdwg.mxu0
  %3578 = vmatpush.bf16.msra.mxu0 %v3404
  %3579 = vmatpush.bf16.msra.mxu0 %v3396
  %3580 = vmatpush.bf16.msra.mxu0 %v3388
  %3581 = vmatpush.bf16.msra.mxu0 %v3380
  %3582 = vmatpush.bf16.msra.mxu0 %v3372
  %3583 = vmatpush.bf16.msra.mxu0 %v3364
  %3584 = vmatpush.bf16.msra.mxu0 %v3356
  %3585 = vmatpush.bf16.msra.mxu0 %v3348
  %3586 = vmatmul.bf16.gmra.mxu0 %v2770
  %v3587 = vpop.f32.mrf.mxu0
  %v3588 = vadd.f32 %v3575, %v3587
  %v3589 = vpop.f32.mrf.mxu0
  %3590 = vdwg.mxu0
  %3591 = vmatpush.bf16.msra.mxu0 %v3341
  %3592 = vmatpush.bf16.msra.mxu0 %v3333
  %3593 = vmatpush.bf16.msra.mxu0 %v3325
  %3594 = vmatpush.bf16.msra.mxu0 %v3317
  %3595 = vmatpush.bf16.msra.mxu0 %v3309
  %3596 = vmatpush.bf16.msra.mxu0 %v3301
  %3597 = vmatpush.bf16.msra.mxu0 %v3293
  %3598 = vmatpush.bf16.msra.mxu0 %v3285
  %3599 = vmatmul.bf16.gmra.mxu0 %v2769
  %v3600 = vpop.f32.mrf.mxu0
  %v3601 = vadd.f32 0.0, %v3600
  %v3602 = vpop.f32.mrf.mxu0
  %3603 = vdwg.mxu0
  %3604 = vmatpush.bf16.msra.mxu0 %v3405
  %3605 = vmatpush.bf16.msra.mxu0 %v3397
  %3606 = vmatpush.bf16.msra.mxu0 %v3389
  %3607 = vmatpush.bf16.msra.mxu0 %v3381
  %3608 = vmatpush.bf16.msra.mxu0 %v3373
  %3609 = vmatpush.bf16.msra.mxu0 %v3365
  %3610 = vmatpush.bf16.msra.mxu0 %v3357
  %3611 = vmatpush.bf16.msra.mxu0 %v3349
  %3612 = vmatmul.bf16.gmra.mxu0 %v2770
  %v3613 = vpop.f32.mrf.mxu0
  %v3614 = vadd.f32 %v3601, %v3613
  %v3615 = vpop.f32.mrf.mxu0
  %3616 = vdwg.mxu0
  %3617 = vmatpush.bf16.msra.mxu0 %v3342
  %3618 = vmatpush.bf16.msra.mxu0 %v3334
  %3619 = vmatpush.bf16.msra.mxu0 %v3326
  %3620 = vmatpush.bf16.msra.mxu0 %v3318
  %3621 = vmatpush.bf16.msra.mxu0 %v3310
  %3622 = vmatpush.bf16.msra.mxu0 %v3302
  %3623 = vmatpush.bf16.msra.mxu0 %v3294
  %3624 = vmatpush.bf16.msra.mxu0 %v3286
  %3625 = vmatmul.bf16.gmra.mxu0 %v2769
  %v3626 = vpop.f32.mrf.mxu0
  %v3627 = vadd.f32 0.0, %v3626
  %v3628 = vpop.f32.mrf.mxu0
  %3629 = vdwg.mxu0
  %3630 = vmatpush.bf16.msra.mxu0 %v3406
  %3631 = vmatpush.bf16.msra.mxu0 %v3398
  %3632 = vmatpush.bf16.msra.mxu0 %v3390
  %3633 = vmatpush.bf16.msra.mxu0 %v3382
  %3634 = vmatpush.bf16.msra.mxu0 %v3374
  %3635 = vmatpush.bf16.msra.mxu0 %v3366
  %3636 = vmatpush.bf16.msra.mxu0 %v3358
  %3637 = vmatpush.bf16.msra.mxu0 %v3350
  %3638 = vmatmul.bf16.gmra.mxu0 %v2770
  %v3639 = vpop.f32.mrf.mxu0
  %v3640 = vadd.f32 %v3627, %v3639
  %v3641 = vpop.f32.mrf.mxu0
  %3642 = vdwg.mxu0
  %3643 = vmatpush.bf16.msra.mxu0 %v3343
  %3644 = vmatpush.bf16.msra.mxu0 %v3335
  %3645 = vmatpush.bf16.msra.mxu0 %v3327
  %3646 = vmatpush.bf16.msra.mxu0 %v3319
  %3647 = vmatpush.bf16.msra.mxu0 %v3311
  %3648 = vmatpush.bf16.msra.mxu0 %v3303
  %3649 = vmatpush.bf16.msra.mxu0 %v3295
  %3650 = vmatpush.bf16.msra.mxu0 %v3287
  %3651 = vmatmul.bf16.gmra.mxu0 %v2769
  %v3652 = vpop.f32.mrf.mxu0
  %v3653 = vadd.f32 0.0, %v3652
  %v3654 = vpop.f32.mrf.mxu0
  %3655 = vdwg.mxu0
  %3656 = vmatpush.bf16.msra.mxu0 %v3407
  %3657 = vmatpush.bf16.msra.mxu0 %v3399
  %3658 = vmatpush.bf16.msra.mxu0 %v3391
  %3659 = vmatpush.bf16.msra.mxu0 %v3383
  %3660 = vmatpush.bf16.msra.mxu0 %v3375
  %3661 = vmatpush.bf16.msra.mxu0 %v3367
  %3662 = vmatpush.bf16.msra.mxu0 %v3359
  %3663 = vmatpush.bf16.msra.mxu0 %v3351
  %3664 = vmatmul.bf16.gmra.mxu0 %v2770
  %v3665 = vpop.f32.mrf.mxu0
  %v3666 = vadd.f32 %v3653, %v3665
  %v3667 = vpop.f32.mrf.mxu0
  %3668 = vdwg.mxu0
  %3669 = vmatpush.bf16.msra.mxu0 %v3344
  %3670 = vmatpush.bf16.msra.mxu0 %v3336
  %3671 = vmatpush.bf16.msra.mxu0 %v3328
  %3672 = vmatpush.bf16.msra.mxu0 %v3320
  %3673 = vmatpush.bf16.msra.mxu0 %v3312
  %3674 = vmatpush.bf16.msra.mxu0 %v3304
  %3675 = vmatpush.bf16.msra.mxu0 %v3296
  %3676 = vmatpush.bf16.msra.mxu0 %v3288
  %3677 = vmatmul.bf16.gmra.mxu0 %v2769
  %v3678 = vpop.f32.mrf.mxu0
  %v3679 = vadd.f32 0.0, %v3678
  %v3680 = vpop.f32.mrf.mxu0
  %3681 = vdwg.mxu0
  %3682 = vmatpush.bf16.msra.mxu0 %v3408
  %3683 = vmatpush.bf16.msra.mxu0 %v3400
  %3684 = vmatpush.bf16.msra.mxu0 %v3392
  %3685 = vmatpush.bf16.msra.mxu0 %v3384
  %3686 = vmatpush.bf16.msra.mxu0 %v3376
  %3687 = vmatpush.bf16.msra.mxu0 %v3368
  %3688 = vmatpush.bf16.msra.mxu0 %v3360
  %3689 = vmatpush.bf16.msra.mxu0 %v3352
  %3690 = vmatmul.bf16.gmra.mxu0 %v2770
  %v3691 = vpop.f32.mrf.mxu0
  %v3692 = vadd.f32 %v3679, %v3691
  %v3693 = vpop.f32.mrf.mxu0
  %3694 = vdwg.mxu0
  %3695 = vmatpush.bf16.msra.mxu0 %v3345
  %3696 = vmatpush.bf16.msra.mxu0 %v3337
  %3697 = vmatpush.bf16.msra.mxu0 %v3329
  %3698 = vmatpush.bf16.msra.mxu0 %v3321
  %3699 = vmatpush.bf16.msra.mxu0 %v3313
  %3700 = vmatpush.bf16.msra.mxu0 %v3305
  %3701 = vmatpush.bf16.msra.mxu0 %v3297
  %3702 = vmatpush.bf16.msra.mxu0 %v3289
  %3703 = vmatmul.bf16.gmra.mxu0 %v2769
  %v3704 = vpop.f32.mrf.mxu0
  %v3705 = vadd.f32 0.0, %v3704
  %v3706 = vpop.f32.mrf.mxu0
  %3707 = vdwg.mxu0
  %3708 = vmatpush.bf16.msra.mxu0 %v3409
  %3709 = vmatpush.bf16.msra.mxu0 %v3401
  %3710 = vmatpush.bf16.msra.mxu0 %v3393
  %3711 = vmatpush.bf16.msra.mxu0 %v3385
  %3712 = vmatpush.bf16.msra.mxu0 %v3377
  %3713 = vmatpush.bf16.msra.mxu0 %v3369
  %3714 = vmatpush.bf16.msra.mxu0 %v3361
  %3715 = vmatpush.bf16.msra.mxu0 %v3353
  %3716 = vmatmul.bf16.gmra.mxu0 %v2770
  %v3717 = vpop.f32.mrf.mxu0
  %v3718 = vadd.f32 %v3705, %v3717
  %v3719 = vpop.f32.mrf.mxu0
  %3720 = vdwg.mxu0
  %3721 = vmatpush.bf16.msra.mxu0 %v3346
  %3722 = vmatpush.bf16.msra.mxu0 %v3338
  %3723 = vmatpush.bf16.msra.mxu0 %v3330
  %3724 = vmatpush.bf16.msra.mxu0 %v3322
  %3725 = vmatpush.bf16.msra.mxu0 %v3314
  %3726 = vmatpush.bf16.msra.mxu0 %v3306
  %3727 = vmatpush.bf16.msra.mxu0 %v3298
  %3728 = vmatpush.bf16.msra.mxu0 %v3290
  %3729 = vmatmul.bf16.gmra.mxu0 %v2769
  %v3730 = vpop.f32.mrf.mxu0
  %v3731 = vadd.f32 0.0, %v3730
  %v3732 = vpop.f32.mrf.mxu0
  %3733 = vdwg.mxu0
  %3734 = vmatpush.bf16.msra.mxu0 %v3410
  %3735 = vmatpush.bf16.msra.mxu0 %v3402
  %3736 = vmatpush.bf16.msra.mxu0 %v3394
  %3737 = vmatpush.bf16.msra.mxu0 %v3386
  %3738 = vmatpush.bf16.msra.mxu0 %v3378
  %3739 = vmatpush.bf16.msra.mxu0 %v3370
  %3740 = vmatpush.bf16.msra.mxu0 %v3362
  %3741 = vmatpush.bf16.msra.mxu0 %v3354
  %3742 = vmatmul.bf16.gmra.mxu0 %v2770
  %v3743 = vpop.f32.mrf.mxu0
  %v3744 = vadd.f32 %v3731, %v3743
  %v3745 = vpop.f32.mrf.mxu0
  %3746 = vdwg.mxu0
  %s3747 = smul.u32 2, 8
  %s3748 = smul.addr %s3747, 8
  %s3749 = scalar_lea.vmem [#allocation2], %s3748
  %v3750 = vld [vmem:[%s3749] sm:$0xff]
  %v3751 = vld [vmem:[%s3749 + $0x8] sm:$0xff]
  %v3752 = vld [vmem:[%s3749 + $0x10] sm:$0xff]
  %v3753 = vld [vmem:[%s3749 + $0x18] sm:$0xff]
  %v3754 = vadd.f32 %v3750, %v3562
  %v3755 = vadd.f32 %v3751, %v3588
  %v3756 = vadd.f32 %v3752, %v3614
  %v3757 = vadd.f32 %v3753, %v3640
  %s3758 = smul.u32 5, 8
  %s3759 = smul.addr %s3758, 8
  %s3760 = scalar_lea.vmem [#allocation2], %s3759
  %v3761 = vld [vmem:[%s3760 + $0x20] sm:$0xff]
  %v3762 = vld [vmem:[%s3760 + $0x28] sm:$0xff]
  %v3763 = vld [vmem:[%s3760 + $0x30] sm:$0xff]
  %v3764 = vld [vmem:[%s3760 + $0x38] sm:$0xff]
  %v3765 = vadd.f32 %v3761, %v3666
  %v3766 = vadd.f32 %v3762, %v3692
  %v3767 = vadd.f32 %v3763, %v3718
  %v3768 = vadd.f32 %v3764, %v3744
  %v3769 = vxor.u32 %v3754, 2147483648
  %v3770 = vmul.f32 %v3769, 1.442695
  %v3771 = vpow.pop %v3770
  %v3772 = vadd.f32 %v3771, 1.0
  %v3773 = vrcp.pop %v3772
  %v3774 = vmul.f32 %v3772, %v3773
  %v3775 = vsub.f32 1.0, %v3774
  %v3776 = vmul.f32 %v3773, %v3775
  %v3777 = vadd.f32 %v3773, %v3776
  %vm3778 = vweird.f32 %v3772
  %vm3779 = vweird.f32 %v3773
  %vm3780 = vmor %vm3778, %vm3779
  %v3781 = vsel %vm3780, %v3773, %v3777
  %v3782 = vand.u32 2147483647, %v3772
  %vm3783 = vcmp.eq.f32.partialorder %v3782, 8.507059e+37
  %v3784 = vand.u32 %v3772, 2147483648
  %v3785 = vor.u32 1.1754944e-38, %v3784
  %v3786 = vsel %vm3783, %v3785, %v3781
  %v3787 = vmul.f32 1.0, %v3786
  %v3788 = vxor.u32 %v3755, 2147483648
  %v3789 = vmul.f32 %v3788, 1.442695
  %v3790 = vpow.pop %v3789
  %v3791 = vadd.f32 %v3790, 1.0
  %v3792 = vrcp.pop %v3791
  %v3793 = vmul.f32 %v3791, %v3792
  %v3794 = vsub.f32 1.0, %v3793
  %v3795 = vmul.f32 %v3792, %v3794
  %v3796 = vadd.f32 %v3792, %v3795
  %vm3797 = vweird.f32 %v3791
  %vm3798 = vweird.f32 %v3792
  %vm3799 = vmor %vm3797, %vm3798
  %v3800 = vsel %vm3799, %v3792, %v3796
  %v3801 = vand.u32 2147483647, %v3791
  %vm3802 = vcmp.eq.f32.partialorder %v3801, 8.507059e+37
  %v3803 = vand.u32 %v3791, 2147483648
  %v3804 = vor.u32 1.1754944e-38, %v3803
  %v3805 = vsel %vm3802, %v3804, %v3800
  %v3806 = vmul.f32 1.0, %v3805
  %v3807 = vtanh.pop %v3756
  %v3808 = vxor.u32 %v3757, 2147483648
  %v3809 = vmul.f32 %v3808, 1.442695
  %v3810 = vpow.pop %v3809
  %v3811 = vadd.f32 %v3810, 1.0
  %v3812 = vrcp.pop %v3811
  %v3813 = vmul.f32 %v3811, %v3812
  %v3814 = vsub.f32 1.0, %v3813
  %v3815 = vmul.f32 %v3812, %v3814
  %v3816 = vadd.f32 %v3812, %v3815
  %vm3817 = vweird.f32 %v3811
  %vm3818 = vweird.f32 %v3812
  %vm3819 = vmor %vm3817, %vm3818
  %v3820 = vsel %vm3819, %v3812, %v3816
  %v3821 = vand.u32 2147483647, %v3811
  %vm3822 = vcmp.eq.f32.partialorder %v3821, 8.507059e+37
  %v3823 = vand.u32 %v3811, 2147483648
  %v3824 = vor.u32 1.1754944e-38, %v3823
  %v3825 = vsel %vm3822, %v3824, %v3820
  %v3826 = vmul.f32 1.0, %v3825
  %v3827 = vmul.f32 %v3806, %v2766
  %v3828 = vmul.f32 %v3787, %v3807
  %v3829 = vadd.f32 %v3827, %v3828
  %v3830 = vtanh.pop %v3829
  %v3831 = vmul.f32 %v3826, %v3830
  %v3832 = vxor.u32 %v3765, 2147483648
  %v3833 = vmul.f32 %v3832, 1.442695
  %v3834 = vpow.pop %v3833
  %v3835 = vadd.f32 %v3834, 1.0
  %v3836 = vrcp.pop %v3835
  %v3837 = vmul.f32 %v3835, %v3836
  %v3838 = vsub.f32 1.0, %v3837
  %v3839 = vmul.f32 %v3836, %v3838
  %v3840 = vadd.f32 %v3836, %v3839
  %vm3841 = vweird.f32 %v3835
  %vm3842 = vweird.f32 %v3836
  %vm3843 = vmor %vm3841, %vm3842
  %v3844 = vsel %vm3843, %v3836, %v3840
  %v3845 = vand.u32 2147483647, %v3835
  %vm3846 = vcmp.eq.f32.partialorder %v3845, 8.507059e+37
  %v3847 = vand.u32 %v3835, 2147483648
  %v3848 = vor.u32 1.1754944e-38, %v3847
  %v3849 = vsel %vm3846, %v3848, %v3844
  %v3850 = vmul.f32 1.0, %v3849
  %v3851 = vxor.u32 %v3766, 2147483648
  %v3852 = vmul.f32 %v3851, 1.442695
  %v3853 = vpow.pop %v3852
  %v3854 = vadd.f32 %v3853, 1.0
  %v3855 = vrcp.pop %v3854
  %v3856 = vmul.f32 %v3854, %v3855
  %v3857 = vsub.f32 1.0, %v3856
  %v3858 = vmul.f32 %v3855, %v3857
  %v3859 = vadd.f32 %v3855, %v3858
  %vm3860 = vweird.f32 %v3854
  %vm3861 = vweird.f32 %v3855
  %vm3862 = vmor %vm3860, %vm3861
  %v3863 = vsel %vm3862, %v3855, %v3859
  %v3864 = vand.u32 2147483647, %v3854
  %vm3865 = vcmp.eq.f32.partialorder %v3864, 8.507059e+37
  %v3866 = vand.u32 %v3854, 2147483648
  %v3867 = vor.u32 1.1754944e-38, %v3866
  %v3868 = vsel %vm3865, %v3867, %v3863
  %v3869 = vmul.f32 1.0, %v3868
  %v3870 = vtanh.pop %v3767
  %v3871 = vxor.u32 %v3768, 2147483648
  %v3872 = vmul.f32 %v3871, 1.442695
  %v3873 = vpow.pop %v3872
  %v3874 = vadd.f32 %v3873, 1.0
  %v3875 = vrcp.pop %v3874
  %v3876 = vmul.f32 %v3874, %v3875
  %v3877 = vsub.f32 1.0, %v3876
  %v3878 = vmul.f32 %v3875, %v3877
  %v3879 = vadd.f32 %v3875, %v3878
  %vm3880 = vweird.f32 %v3874
  %vm3881 = vweird.f32 %v3875
  %vm3882 = vmor %vm3880, %vm3881
  %v3883 = vsel %vm3882, %v3875, %v3879
  %v3884 = vand.u32 2147483647, %v3874
  %vm3885 = vcmp.eq.f32.partialorder %v3884, 8.507059e+37
  %v3886 = vand.u32 %v3874, 2147483648
  %v3887 = vor.u32 1.1754944e-38, %v3886
  %v3888 = vsel %vm3885, %v3887, %v3883
  %v3889 = vmul.f32 1.0, %v3888
  %v3890 = vmul.f32 %v3869, %v2768
  %v3891 = vmul.f32 %v3850, %v3870
  %v3892 = vadd.f32 %v3890, %v3891
  %v3893 = vtanh.pop %v3892
  %v3894 = vmul.f32 %v3889, %v3893
  %vm3895 = vcmp.gt.s32.totalorder %v476, 2
  %v3896 = vsel %vm3895, 1, 0
  %3897 = vset.pattern.permute.xlu0 0
  %3898 = vperm.xlu0 %3897, %v3896
  %v3899 = vpop.permute.xlu0 %3898
  %vm3900 = vcmp.eq.s32.totalorder %v3899, 1
  %vm3901 = vcmp.gt.s32.totalorder %v476, 5
  %v3902 = vsel %vm3901, 1, 0
  %3903 = vset.pattern.permute.xlu0 0
  %3904 = vperm.xlu0 %3903, %v3902
  %v3905 = vpop.permute.xlu0 %3904
  %vm3906 = vcmp.eq.s32.totalorder %v3905, 1
  %v3907 = vsel %vm3900, %v3831, 0.0
  %s3908 = scalar_lea.vmem %s5, 16
  %3909 = vst [vmem:[%s3908] sm:$0xff] %v3907
  %v3910 = vsel %vm3906, %v3894, 0.0
  %s3911 = scalar_lea.vmem %s6, 40
  %3912 = vst [vmem:[%s3911] sm:$0xff] %v3910
  %v3913 = vsel %vm3900, %v3831, %v2765
  %v3914 = vsel %vm3900, %v3829, %v2766
  %v3915 = vsel %vm3906, %v3894, %v2767
  %v3916 = vsel %vm3906, %v3892, %v2768
  %v3917 = vpack.c.bf16 %v3913, %v3913
  %v3918 = vpack.c.bf16 %v3915, %v3915
  %v3919 = vld [vmem:[%s3] sm:$0xff]
  %v3920 = vld [vmem:[%s3 + $0x8] sm:$0xff]
  %v3921 = vld [vmem:[%s3 + $0x10] sm:$0xff]
  %v3922 = vld [vmem:[%s3 + $0x18] sm:$0xff]
  %v3923 = vld [vmem:[%s3 + $0x20] sm:$0xff]
  %v3924 = vld [vmem:[%s3 + $0x28] sm:$0xff]
  %v3925 = vld [vmem:[%s3 + $0x30] sm:$0xff]
  %v3926 = vld [vmem:[%s3 + $0x38] sm:$0xff]
  %v3927 = vld [vmem:[%s3 + $0x40] sm:$0xff]
  %v3928 = vld [vmem:[%s3 + $0x48] sm:$0xff]
  %v3929 = vld [vmem:[%s3 + $0x50] sm:$0xff]
  %v3930 = vld [vmem:[%s3 + $0x58] sm:$0xff]
  %v3931 = vld [vmem:[%s3 + $0x60] sm:$0xff]
  %v3932 = vld [vmem:[%s3 + $0x68] sm:$0xff]
  %v3933 = vld [vmem:[%s3 + $0x70] sm:$0xff]
  %v3934 = vld [vmem:[%s3 + $0x78] sm:$0xff]
  %v3935 = vld [vmem:[%s3 + $0x80] sm:$0xff]
  %v3936 = vld [vmem:[%s3 + $0x88] sm:$0xff]
  %v3937 = vld [vmem:[%s3 + $0x90] sm:$0xff]
  %v3938 = vld [vmem:[%s3 + $0x98] sm:$0xff]
  %v3939 = vld [vmem:[%s3 + $0xa0] sm:$0xff]
  %v3940 = vld [vmem:[%s3 + $0xa8] sm:$0xff]
  %v3941 = vld [vmem:[%s3 + $0xb0] sm:$0xff]
  %v3942 = vld [vmem:[%s3 + $0xb8] sm:$0xff]
  %v3943 = vld [vmem:[%s3 + $0xc0] sm:$0xff]
  %v3944 = vld [vmem:[%s3 + $0xc8] sm:$0xff]
  %v3945 = vld [vmem:[%s3 + $0xd0] sm:$0xff]
  %v3946 = vld [vmem:[%s3 + $0xd8] sm:$0xff]
  %v3947 = vld [vmem:[%s3 + $0xe0] sm:$0xff]
  %v3948 = vld [vmem:[%s3 + $0xe8] sm:$0xff]
  %v3949 = vld [vmem:[%s3 + $0xf0] sm:$0xff]
  %v3950 = vld [vmem:[%s3 + $0xf8] sm:$0xff]
  %v3951 = vld [vmem:[%s3 + $0x100] sm:$0xff]
  %v3952 = vld [vmem:[%s3 + $0x108] sm:$0xff]
  %v3953 = vld [vmem:[%s3 + $0x110] sm:$0xff]
  %v3954 = vld [vmem:[%s3 + $0x118] sm:$0xff]
  %v3955 = vld [vmem:[%s3 + $0x120] sm:$0xff]
  %v3956 = vld [vmem:[%s3 + $0x128] sm:$0xff]
  %v3957 = vld [vmem:[%s3 + $0x130] sm:$0xff]
  %v3958 = vld [vmem:[%s3 + $0x138] sm:$0xff]
  %v3959 = vld [vmem:[%s3 + $0x140] sm:$0xff]
  %v3960 = vld [vmem:[%s3 + $0x148] sm:$0xff]
  %v3961 = vld [vmem:[%s3 + $0x150] sm:$0xff]
  %v3962 = vld [vmem:[%s3 + $0x158] sm:$0xff]
  %v3963 = vld [vmem:[%s3 + $0x160] sm:$0xff]
  %v3964 = vld [vmem:[%s3 + $0x168] sm:$0xff]
  %v3965 = vld [vmem:[%s3 + $0x170] sm:$0xff]
  %v3966 = vld [vmem:[%s3 + $0x178] sm:$0xff]
  %v3967 = vld [vmem:[%s3 + $0x180] sm:$0xff]
  %v3968 = vld [vmem:[%s3 + $0x188] sm:$0xff]
  %v3969 = vld [vmem:[%s3 + $0x190] sm:$0xff]
  %v3970 = vld [vmem:[%s3 + $0x198] sm:$0xff]
  %v3971 = vld [vmem:[%s3 + $0x1a0] sm:$0xff]
  %v3972 = vld [vmem:[%s3 + $0x1a8] sm:$0xff]
  %v3973 = vld [vmem:[%s3 + $0x1b0] sm:$0xff]
  %v3974 = vld [vmem:[%s3 + $0x1b8] sm:$0xff]
  %v3975 = vld [vmem:[%s3 + $0x1c0] sm:$0xff]
  %v3976 = vld [vmem:[%s3 + $0x1c8] sm:$0xff]
  %v3977 = vld [vmem:[%s3 + $0x1d0] sm:$0xff]
  %v3978 = vld [vmem:[%s3 + $0x1d8] sm:$0xff]
  %v3979 = vld [vmem:[%s3 + $0x1e0] sm:$0xff]
  %v3980 = vld [vmem:[%s3 + $0x1e8] sm:$0xff]
  %v3981 = vld [vmem:[%s3 + $0x1f0] sm:$0xff]
  %v3982 = vld [vmem:[%s3 + $0x1f8] sm:$0xff]
  %v3983 = vld [vmem:[%s3 + $0x200] sm:$0xff]
  %v3984 = vld [vmem:[%s3 + $0x208] sm:$0xff]
  %v3985 = vld [vmem:[%s3 + $0x210] sm:$0xff]
  %v3986 = vld [vmem:[%s3 + $0x218] sm:$0xff]
  %v3987 = vld [vmem:[%s3 + $0x220] sm:$0xff]
  %v3988 = vld [vmem:[%s3 + $0x228] sm:$0xff]
  %v3989 = vld [vmem:[%s3 + $0x230] sm:$0xff]
  %v3990 = vld [vmem:[%s3 + $0x238] sm:$0xff]
  %v3991 = vld [vmem:[%s3 + $0x240] sm:$0xff]
  %v3992 = vld [vmem:[%s3 + $0x248] sm:$0xff]
  %v3993 = vld [vmem:[%s3 + $0x250] sm:$0xff]
  %v3994 = vld [vmem:[%s3 + $0x258] sm:$0xff]
  %v3995 = vld [vmem:[%s3 + $0x260] sm:$0xff]
  %v3996 = vld [vmem:[%s3 + $0x268] sm:$0xff]
  %v3997 = vld [vmem:[%s3 + $0x270] sm:$0xff]
  %v3998 = vld [vmem:[%s3 + $0x278] sm:$0xff]
  %v3999 = vld [vmem:[%s3 + $0x280] sm:$0xff]
  %v4000 = vld [vmem:[%s3 + $0x288] sm:$0xff]
  %v4001 = vld [vmem:[%s3 + $0x290] sm:$0xff]
  %v4002 = vld [vmem:[%s3 + $0x298] sm:$0xff]
  %v4003 = vld [vmem:[%s3 + $0x2a0] sm:$0xff]
  %v4004 = vld [vmem:[%s3 + $0x2a8] sm:$0xff]
  %v4005 = vld [vmem:[%s3 + $0x2b0] sm:$0xff]
  %v4006 = vld [vmem:[%s3 + $0x2b8] sm:$0xff]
  %v4007 = vld [vmem:[%s3 + $0x2c0] sm:$0xff]
  %v4008 = vld [vmem:[%s3 + $0x2c8] sm:$0xff]
  %v4009 = vld [vmem:[%s3 + $0x2d0] sm:$0xff]
  %v4010 = vld [vmem:[%s3 + $0x2d8] sm:$0xff]
  %v4011 = vld [vmem:[%s3 + $0x2e0] sm:$0xff]
  %v4012 = vld [vmem:[%s3 + $0x2e8] sm:$0xff]
  %v4013 = vld [vmem:[%s3 + $0x2f0] sm:$0xff]
  %v4014 = vld [vmem:[%s3 + $0x2f8] sm:$0xff]
  %v4015 = vld [vmem:[%s3 + $0x300] sm:$0xff]
  %v4016 = vld [vmem:[%s3 + $0x308] sm:$0xff]
  %v4017 = vld [vmem:[%s3 + $0x310] sm:$0xff]
  %v4018 = vld [vmem:[%s3 + $0x318] sm:$0xff]
  %v4019 = vld [vmem:[%s3 + $0x320] sm:$0xff]
  %v4020 = vld [vmem:[%s3 + $0x328] sm:$0xff]
  %v4021 = vld [vmem:[%s3 + $0x330] sm:$0xff]
  %v4022 = vld [vmem:[%s3 + $0x338] sm:$0xff]
  %v4023 = vld [vmem:[%s3 + $0x340] sm:$0xff]
  %v4024 = vld [vmem:[%s3 + $0x348] sm:$0xff]
  %v4025 = vld [vmem:[%s3 + $0x350] sm:$0xff]
  %v4026 = vld [vmem:[%s3 + $0x358] sm:$0xff]
  %v4027 = vld [vmem:[%s3 + $0x360] sm:$0xff]
  %v4028 = vld [vmem:[%s3 + $0x368] sm:$0xff]
  %v4029 = vld [vmem:[%s3 + $0x370] sm:$0xff]
  %v4030 = vld [vmem:[%s3 + $0x378] sm:$0xff]
  %v4031 = vld [vmem:[%s3 + $0x380] sm:$0xff]
  %v4032 = vld [vmem:[%s3 + $0x388] sm:$0xff]
  %v4033 = vld [vmem:[%s3 + $0x390] sm:$0xff]
  %v4034 = vld [vmem:[%s3 + $0x398] sm:$0xff]
  %v4035 = vld [vmem:[%s3 + $0x3a0] sm:$0xff]
  %v4036 = vld [vmem:[%s3 + $0x3a8] sm:$0xff]
  %v4037 = vld [vmem:[%s3 + $0x3b0] sm:$0xff]
  %v4038 = vld [vmem:[%s3 + $0x3b8] sm:$0xff]
  %v4039 = vld [vmem:[%s3 + $0x3c0] sm:$0xff]
  %v4040 = vld [vmem:[%s3 + $0x3c8] sm:$0xff]
  %v4041 = vld [vmem:[%s3 + $0x3d0] sm:$0xff]
  %v4042 = vld [vmem:[%s3 + $0x3d8] sm:$0xff]
  %v4043 = vld [vmem:[%s3 + $0x3e0] sm:$0xff]
  %v4044 = vld [vmem:[%s3 + $0x3e8] sm:$0xff]
  %v4045 = vld [vmem:[%s3 + $0x3f0] sm:$0xff]
  %v4046 = vld [vmem:[%s3 + $0x3f8] sm:$0xff]
  %v4175 = vunpack.c.l.b16 %v3919
  %v4176 = vunpack.c.h.b16 %v3919
  %v4177 = vunpack.c.l.b16 %v3920
  %v4178 = vunpack.c.h.b16 %v3920
  %v4179 = vunpack.c.l.b16 %v3921
  %v4180 = vunpack.c.h.b16 %v3921
  %v4181 = vunpack.c.l.b16 %v3922
  %v4182 = vunpack.c.h.b16 %v3922
  %v4183 = vunpack.c.l.b16 %v3923
  %v4184 = vunpack.c.h.b16 %v3923
  %v4185 = vunpack.c.l.b16 %v3924
  %v4186 = vunpack.c.h.b16 %v3924
  %v4187 = vunpack.c.l.b16 %v3925
  %v4188 = vunpack.c.h.b16 %v3925
  %v4189 = vunpack.c.l.b16 %v3926
  %v4190 = vunpack.c.h.b16 %v3926
  %v4191 = vunpack.c.l.b16 %v3927
  %v4192 = vunpack.c.h.b16 %v3927
  %v4193 = vunpack.c.l.b16 %v3928
  %v4194 = vunpack.c.h.b16 %v3928
  %v4195 = vunpack.c.l.b16 %v3929
  %v4196 = vunpack.c.h.b16 %v3929
  %v4197 = vunpack.c.l.b16 %v3930
  %v4198 = vunpack.c.h.b16 %v3930
  %v4199 = vunpack.c.l.b16 %v3931
  %v4200 = vunpack.c.h.b16 %v3931
  %v4201 = vunpack.c.l.b16 %v3932
  %v4202 = vunpack.c.h.b16 %v3932
  %v4203 = vunpack.c.l.b16 %v3933
  %v4204 = vunpack.c.h.b16 %v3933
  %v4205 = vunpack.c.l.b16 %v3934
  %v4206 = vunpack.c.h.b16 %v3934
  %v4207 = vunpack.c.l.b16 %v3935
  %v4208 = vunpack.c.h.b16 %v3935
  %v4209 = vunpack.c.l.b16 %v3936
  %v4210 = vunpack.c.h.b16 %v3936
  %v4211 = vunpack.c.l.b16 %v3937
  %v4212 = vunpack.c.h.b16 %v3937
  %v4213 = vunpack.c.l.b16 %v3938
  %v4214 = vunpack.c.h.b16 %v3938
  %v4215 = vunpack.c.l.b16 %v3939
  %v4216 = vunpack.c.h.b16 %v3939
  %v4217 = vunpack.c.l.b16 %v3940
  %v4218 = vunpack.c.h.b16 %v3940
  %v4219 = vunpack.c.l.b16 %v3941
  %v4220 = vunpack.c.h.b16 %v3941
  %v4221 = vunpack.c.l.b16 %v3942
  %v4222 = vunpack.c.h.b16 %v3942
  %v4223 = vunpack.c.l.b16 %v3943
  %v4224 = vunpack.c.h.b16 %v3943
  %v4225 = vunpack.c.l.b16 %v3944
  %v4226 = vunpack.c.h.b16 %v3944
  %v4227 = vunpack.c.l.b16 %v3945
  %v4228 = vunpack.c.h.b16 %v3945
  %v4229 = vunpack.c.l.b16 %v3946
  %v4230 = vunpack.c.h.b16 %v3946
  %v4231 = vunpack.c.l.b16 %v3947
  %v4232 = vunpack.c.h.b16 %v3947
  %v4233 = vunpack.c.l.b16 %v3948
  %v4234 = vunpack.c.h.b16 %v3948
  %v4235 = vunpack.c.l.b16 %v3949
  %v4236 = vunpack.c.h.b16 %v3949
  %v4237 = vunpack.c.l.b16 %v3950
  %v4238 = vunpack.c.h.b16 %v3950
  %v4239 = vunpack.c.l.b16 %v3951
  %v4240 = vunpack.c.h.b16 %v3951
  %v4241 = vunpack.c.l.b16 %v3952
  %v4242 = vunpack.c.h.b16 %v3952
  %v4243 = vunpack.c.l.b16 %v3953
  %v4244 = vunpack.c.h.b16 %v3953
  %v4245 = vunpack.c.l.b16 %v3954
  %v4246 = vunpack.c.h.b16 %v3954
  %v4247 = vunpack.c.l.b16 %v3955
  %v4248 = vunpack.c.h.b16 %v3955
  %v4249 = vunpack.c.l.b16 %v3956
  %v4250 = vunpack.c.h.b16 %v3956
  %v4251 = vunpack.c.l.b16 %v3957
  %v4252 = vunpack.c.h.b16 %v3957
  %v4253 = vunpack.c.l.b16 %v3958
  %v4254 = vunpack.c.h.b16 %v3958
  %v4255 = vunpack.c.l.b16 %v3959
  %v4256 = vunpack.c.h.b16 %v3959
  %v4257 = vunpack.c.l.b16 %v3960
  %v4258 = vunpack.c.h.b16 %v3960
  %v4259 = vunpack.c.l.b16 %v3961
  %v4260 = vunpack.c.h.b16 %v3961
  %v4261 = vunpack.c.l.b16 %v3962
  %v4262 = vunpack.c.h.b16 %v3962
  %v4263 = vunpack.c.l.b16 %v3963
  %v4264 = vunpack.c.h.b16 %v3963
  %v4265 = vunpack.c.l.b16 %v3964
  %v4266 = vunpack.c.h.b16 %v3964
  %v4267 = vunpack.c.l.b16 %v3965
  %v4268 = vunpack.c.h.b16 %v3965
  %v4269 = vunpack.c.l.b16 %v3966
  %v4270 = vunpack.c.h.b16 %v3966
  %v4271 = vunpack.c.l.b16 %v3967
  %v4272 = vunpack.c.h.b16 %v3967
  %v4273 = vunpack.c.l.b16 %v3968
  %v4274 = vunpack.c.h.b16 %v3968
  %v4275 = vunpack.c.l.b16 %v3969
  %v4276 = vunpack.c.h.b16 %v3969
  %v4277 = vunpack.c.l.b16 %v3970
  %v4278 = vunpack.c.h.b16 %v3970
  %v4279 = vunpack.c.l.b16 %v3971
  %v4280 = vunpack.c.h.b16 %v3971
  %v4281 = vunpack.c.l.b16 %v3972
  %v4282 = vunpack.c.h.b16 %v3972
  %v4283 = vunpack.c.l.b16 %v3973
  %v4284 = vunpack.c.h.b16 %v3973
  %v4285 = vunpack.c.l.b16 %v3974
  %v4286 = vunpack.c.h.b16 %v3974
  %v4287 = vunpack.c.l.b16 %v3975
  %v4288 = vunpack.c.h.b16 %v3975
  %v4289 = vunpack.c.l.b16 %v3976
  %v4290 = vunpack.c.h.b16 %v3976
  %v4291 = vunpack.c.l.b16 %v3977
  %v4292 = vunpack.c.h.b16 %v3977
  %v4293 = vunpack.c.l.b16 %v3978
  %v4294 = vunpack.c.h.b16 %v3978
  %v4295 = vunpack.c.l.b16 %v3979
  %v4296 = vunpack.c.h.b16 %v3979
  %v4297 = vunpack.c.l.b16 %v3980
  %v4298 = vunpack.c.h.b16 %v3980
  %v4299 = vunpack.c.l.b16 %v3981
  %v4300 = vunpack.c.h.b16 %v3981
  %v4301 = vunpack.c.l.b16 %v3982
  %v4302 = vunpack.c.h.b16 %v3982
  %v4303 = vunpack.c.l.b16 %v3983
  %v4304 = vunpack.c.h.b16 %v3983
  %v4305 = vunpack.c.l.b16 %v3984
  %v4306 = vunpack.c.h.b16 %v3984
  %v4307 = vunpack.c.l.b16 %v3985
  %v4308 = vunpack.c.h.b16 %v3985
  %v4309 = vunpack.c.l.b16 %v3986
  %v4310 = vunpack.c.h.b16 %v3986
  %v4311 = vunpack.c.l.b16 %v3987
  %v4312 = vunpack.c.h.b16 %v3987
  %v4313 = vunpack.c.l.b16 %v3988
  %v4314 = vunpack.c.h.b16 %v3988
  %v4315 = vunpack.c.l.b16 %v3989
  %v4316 = vunpack.c.h.b16 %v3989
  %v4317 = vunpack.c.l.b16 %v3990
  %v4318 = vunpack.c.h.b16 %v3990
  %v4319 = vunpack.c.l.b16 %v3991
  %v4320 = vunpack.c.h.b16 %v3991
  %v4321 = vunpack.c.l.b16 %v3992
  %v4322 = vunpack.c.h.b16 %v3992
  %v4323 = vunpack.c.l.b16 %v3993
  %v4324 = vunpack.c.h.b16 %v3993
  %v4325 = vunpack.c.l.b16 %v3994
  %v4326 = vunpack.c.h.b16 %v3994
  %v4327 = vunpack.c.l.b16 %v3995
  %v4328 = vunpack.c.h.b16 %v3995
  %v4329 = vunpack.c.l.b16 %v3996
  %v4330 = vunpack.c.h.b16 %v3996
  %v4331 = vunpack.c.l.b16 %v3997
  %v4332 = vunpack.c.h.b16 %v3997
  %v4333 = vunpack.c.l.b16 %v3998
  %v4334 = vunpack.c.h.b16 %v3998
  %v4335 = vunpack.c.l.b16 %v3999
  %v4336 = vunpack.c.h.b16 %v3999
  %v4337 = vunpack.c.l.b16 %v4000
  %v4338 = vunpack.c.h.b16 %v4000
  %v4339 = vunpack.c.l.b16 %v4001
  %v4340 = vunpack.c.h.b16 %v4001
  %v4341 = vunpack.c.l.b16 %v4002
  %v4342 = vunpack.c.h.b16 %v4002
  %v4343 = vunpack.c.l.b16 %v4003
  %v4344 = vunpack.c.h.b16 %v4003
  %v4345 = vunpack.c.l.b16 %v4004
  %v4346 = vunpack.c.h.b16 %v4004
  %v4347 = vunpack.c.l.b16 %v4005
  %v4348 = vunpack.c.h.b16 %v4005
  %v4349 = vunpack.c.l.b16 %v4006
  %v4350 = vunpack.c.h.b16 %v4006
  %v4351 = vunpack.c.l.b16 %v4007
  %v4352 = vunpack.c.h.b16 %v4007
  %v4353 = vunpack.c.l.b16 %v4008
  %v4354 = vunpack.c.h.b16 %v4008
  %v4355 = vunpack.c.l.b16 %v4009
  %v4356 = vunpack.c.h.b16 %v4009
  %v4357 = vunpack.c.l.b16 %v4010
  %v4358 = vunpack.c.h.b16 %v4010
  %v4359 = vunpack.c.l.b16 %v4011
  %v4360 = vunpack.c.h.b16 %v4011
  %v4361 = vunpack.c.l.b16 %v4012
  %v4362 = vunpack.c.h.b16 %v4012
  %v4363 = vunpack.c.l.b16 %v4013
  %v4364 = vunpack.c.h.b16 %v4013
  %v4365 = vunpack.c.l.b16 %v4014
  %v4366 = vunpack.c.h.b16 %v4014
  %v4367 = vunpack.c.l.b16 %v4015
  %v4368 = vunpack.c.h.b16 %v4015
  %v4369 = vunpack.c.l.b16 %v4016
  %v4370 = vunpack.c.h.b16 %v4016
  %v4371 = vunpack.c.l.b16 %v4017
  %v4372 = vunpack.c.h.b16 %v4017
  %v4373 = vunpack.c.l.b16 %v4018
  %v4374 = vunpack.c.h.b16 %v4018
  %v4375 = vunpack.c.l.b16 %v4019
  %v4376 = vunpack.c.h.b16 %v4019
  %v4377 = vunpack.c.l.b16 %v4020
  %v4378 = vunpack.c.h.b16 %v4020
  %v4379 = vunpack.c.l.b16 %v4021
  %v4380 = vunpack.c.h.b16 %v4021
  %v4381 = vunpack.c.l.b16 %v4022
  %v4382 = vunpack.c.h.b16 %v4022
  %v4383 = vunpack.c.l.b16 %v4023
  %v4384 = vunpack.c.h.b16 %v4023
  %v4385 = vunpack.c.l.b16 %v4024
  %v4386 = vunpack.c.h.b16 %v4024
  %v4387 = vunpack.c.l.b16 %v4025
  %v4388 = vunpack.c.h.b16 %v4025
  %v4389 = vunpack.c.l.b16 %v4026
  %v4390 = vunpack.c.h.b16 %v4026
  %v4391 = vunpack.c.l.b16 %v4027
  %v4392 = vunpack.c.h.b16 %v4027
  %v4393 = vunpack.c.l.b16 %v4028
  %v4394 = vunpack.c.h.b16 %v4028
  %v4395 = vunpack.c.l.b16 %v4029
  %v4396 = vunpack.c.h.b16 %v4029
  %v4397 = vunpack.c.l.b16 %v4030
  %v4398 = vunpack.c.h.b16 %v4030
  %v4399 = vunpack.c.l.b16 %v4031
  %v4400 = vunpack.c.h.b16 %v4031
  %v4401 = vunpack.c.l.b16 %v4032
  %v4402 = vunpack.c.h.b16 %v4032
  %v4403 = vunpack.c.l.b16 %v4033
  %v4404 = vunpack.c.h.b16 %v4033
  %v4405 = vunpack.c.l.b16 %v4034
  %v4406 = vunpack.c.h.b16 %v4034
  %v4407 = vunpack.c.l.b16 %v4035
  %v4408 = vunpack.c.h.b16 %v4035
  %v4409 = vunpack.c.l.b16 %v4036
  %v4410 = vunpack.c.h.b16 %v4036
  %v4411 = vunpack.c.l.b16 %v4037
  %v4412 = vunpack.c.h.b16 %v4037
  %v4413 = vunpack.c.l.b16 %v4038
  %v4414 = vunpack.c.h.b16 %v4038
  %v4415 = vunpack.c.l.b16 %v4039
  %v4416 = vunpack.c.h.b16 %v4039
  %v4417 = vunpack.c.l.b16 %v4040
  %v4418 = vunpack.c.h.b16 %v4040
  %v4419 = vunpack.c.l.b16 %v4041
  %v4420 = vunpack.c.h.b16 %v4041
  %v4421 = vunpack.c.l.b16 %v4042
  %v4422 = vunpack.c.h.b16 %v4042
  %v4423 = vunpack.c.l.b16 %v4043
  %v4424 = vunpack.c.h.b16 %v4043
  %v4425 = vunpack.c.l.b16 %v4044
  %v4426 = vunpack.c.h.b16 %v4044
  %v4427 = vunpack.c.l.b16 %v4045
  %v4428 = vunpack.c.h.b16 %v4045
  %v4429 = vunpack.c.l.b16 %v4046
  %v4430 = vunpack.c.h.b16 %v4046
  %v4431 = vpack.c.b16 %v4183, %v4175
  %v4432 = vpack.c.b16 %v4184, %v4176
  %v4433 = vpack.c.b16 %v4185, %v4177
  %v4434 = vpack.c.b16 %v4186, %v4178
  %v4435 = vpack.c.b16 %v4187, %v4179
  %v4436 = vpack.c.b16 %v4188, %v4180
  %v4437 = vpack.c.b16 %v4189, %v4181
  %v4438 = vpack.c.b16 %v4190, %v4182
  %v4439 = vpack.c.b16 %v4199, %v4191
  %v4440 = vpack.c.b16 %v4200, %v4192
  %v4441 = vpack.c.b16 %v4201, %v4193
  %v4442 = vpack.c.b16 %v4202, %v4194
  %v4443 = vpack.c.b16 %v4203, %v4195
  %v4444 = vpack.c.b16 %v4204, %v4196
  %v4445 = vpack.c.b16 %v4205, %v4197
  %v4446 = vpack.c.b16 %v4206, %v4198
  %v4447 = vpack.c.b16 %v4215, %v4207
  %v4448 = vpack.c.b16 %v4216, %v4208
  %v4449 = vpack.c.b16 %v4217, %v4209
  %v4450 = vpack.c.b16 %v4218, %v4210
  %v4451 = vpack.c.b16 %v4219, %v4211
  %v4452 = vpack.c.b16 %v4220, %v4212
  %v4453 = vpack.c.b16 %v4221, %v4213
  %v4454 = vpack.c.b16 %v4222, %v4214
  %v4455 = vpack.c.b16 %v4231, %v4223
  %v4456 = vpack.c.b16 %v4232, %v4224
  %v4457 = vpack.c.b16 %v4233, %v4225
  %v4458 = vpack.c.b16 %v4234, %v4226
  %v4459 = vpack.c.b16 %v4235, %v4227
  %v4460 = vpack.c.b16 %v4236, %v4228
  %v4461 = vpack.c.b16 %v4237, %v4229
  %v4462 = vpack.c.b16 %v4238, %v4230
  %v4463 = vpack.c.b16 %v4247, %v4239
  %v4464 = vpack.c.b16 %v4248, %v4240
  %v4465 = vpack.c.b16 %v4249, %v4241
  %v4466 = vpack.c.b16 %v4250, %v4242
  %v4467 = vpack.c.b16 %v4251, %v4243
  %v4468 = vpack.c.b16 %v4252, %v4244
  %v4469 = vpack.c.b16 %v4253, %v4245
  %v4470 = vpack.c.b16 %v4254, %v4246
  %v4471 = vpack.c.b16 %v4263, %v4255
  %v4472 = vpack.c.b16 %v4264, %v4256
  %v4473 = vpack.c.b16 %v4265, %v4257
  %v4474 = vpack.c.b16 %v4266, %v4258
  %v4475 = vpack.c.b16 %v4267, %v4259
  %v4476 = vpack.c.b16 %v4268, %v4260
  %v4477 = vpack.c.b16 %v4269, %v4261
  %v4478 = vpack.c.b16 %v4270, %v4262
  %v4479 = vpack.c.b16 %v4279, %v4271
  %v4480 = vpack.c.b16 %v4280, %v4272
  %v4481 = vpack.c.b16 %v4281, %v4273
  %v4482 = vpack.c.b16 %v4282, %v4274
  %v4483 = vpack.c.b16 %v4283, %v4275
  %v4484 = vpack.c.b16 %v4284, %v4276
  %v4485 = vpack.c.b16 %v4285, %v4277
  %v4486 = vpack.c.b16 %v4286, %v4278
  %v4487 = vpack.c.b16 %v4295, %v4287
  %v4488 = vpack.c.b16 %v4296, %v4288
  %v4489 = vpack.c.b16 %v4297, %v4289
  %v4490 = vpack.c.b16 %v4298, %v4290
  %v4491 = vpack.c.b16 %v4299, %v4291
  %v4492 = vpack.c.b16 %v4300, %v4292
  %v4493 = vpack.c.b16 %v4301, %v4293
  %v4494 = vpack.c.b16 %v4302, %v4294
  %v4495 = vpack.c.b16 %v4311, %v4303
  %v4496 = vpack.c.b16 %v4312, %v4304
  %v4497 = vpack.c.b16 %v4313, %v4305
  %v4498 = vpack.c.b16 %v4314, %v4306
  %v4499 = vpack.c.b16 %v4315, %v4307
  %v4500 = vpack.c.b16 %v4316, %v4308
  %v4501 = vpack.c.b16 %v4317, %v4309
  %v4502 = vpack.c.b16 %v4318, %v4310
  %v4503 = vpack.c.b16 %v4327, %v4319
  %v4504 = vpack.c.b16 %v4328, %v4320
  %v4505 = vpack.c.b16 %v4329, %v4321
  %v4506 = vpack.c.b16 %v4330, %v4322
  %v4507 = vpack.c.b16 %v4331, %v4323
  %v4508 = vpack.c.b16 %v4332, %v4324
  %v4509 = vpack.c.b16 %v4333, %v4325
  %v4510 = vpack.c.b16 %v4334, %v4326
  %v4511 = vpack.c.b16 %v4343, %v4335
  %v4512 = vpack.c.b16 %v4344, %v4336
  %v4513 = vpack.c.b16 %v4345, %v4337
  %v4514 = vpack.c.b16 %v4346, %v4338
  %v4515 = vpack.c.b16 %v4347, %v4339
  %v4516 = vpack.c.b16 %v4348, %v4340
  %v4517 = vpack.c.b16 %v4349, %v4341
  %v4518 = vpack.c.b16 %v4350, %v4342
  %v4519 = vpack.c.b16 %v4359, %v4351
  %v4520 = vpack.c.b16 %v4360, %v4352
  %v4521 = vpack.c.b16 %v4361, %v4353
  %v4522 = vpack.c.b16 %v4362, %v4354
  %v4523 = vpack.c.b16 %v4363, %v4355
  %v4524 = vpack.c.b16 %v4364, %v4356
  %v4525 = vpack.c.b16 %v4365, %v4357
  %v4526 = vpack.c.b16 %v4366, %v4358
  %v4527 = vpack.c.b16 %v4375, %v4367
  %v4528 = vpack.c.b16 %v4376, %v4368
  %v4529 = vpack.c.b16 %v4377, %v4369
  %v4530 = vpack.c.b16 %v4378, %v4370
  %v4531 = vpack.c.b16 %v4379, %v4371
  %v4532 = vpack.c.b16 %v4380, %v4372
  %v4533 = vpack.c.b16 %v4381, %v4373
  %v4534 = vpack.c.b16 %v4382, %v4374
  %v4535 = vpack.c.b16 %v4391, %v4383
  %v4536 = vpack.c.b16 %v4392, %v4384
  %v4537 = vpack.c.b16 %v4393, %v4385
  %v4538 = vpack.c.b16 %v4394, %v4386
  %v4539 = vpack.c.b16 %v4395, %v4387
  %v4540 = vpack.c.b16 %v4396, %v4388
  %v4541 = vpack.c.b16 %v4397, %v4389
  %v4542 = vpack.c.b16 %v4398, %v4390
  %v4543 = vpack.c.b16 %v4407, %v4399
  %v4544 = vpack.c.b16 %v4408, %v4400
  %v4545 = vpack.c.b16 %v4409, %v4401
  %v4546 = vpack.c.b16 %v4410, %v4402
  %v4547 = vpack.c.b16 %v4411, %v4403
  %v4548 = vpack.c.b16 %v4412, %v4404
  %v4549 = vpack.c.b16 %v4413, %v4405
  %v4550 = vpack.c.b16 %v4414, %v4406
  %v4551 = vpack.c.b16 %v4423, %v4415
  %v4552 = vpack.c.b16 %v4424, %v4416
  %v4553 = vpack.c.b16 %v4425, %v4417
  %v4554 = vpack.c.b16 %v4426, %v4418
  %v4555 = vpack.c.b16 %v4427, %v4419
  %v4556 = vpack.c.b16 %v4428, %v4420
  %v4557 = vpack.c.b16 %v4429, %v4421
  %v4558 = vpack.c.b16 %v4430, %v4422
  %4687 = vmatpush.bf16.msra.mxu0 %v4487
  %4688 = vmatpush.bf16.msra.mxu0 %v4479
  %4689 = vmatpush.bf16.msra.mxu0 %v4471
  %4690 = vmatpush.bf16.msra.mxu0 %v4463
  %4691 = vmatpush.bf16.msra.mxu0 %v4455
  %4692 = vmatpush.bf16.msra.mxu0 %v4447
  %4693 = vmatpush.bf16.msra.mxu0 %v4439
  %4694 = vmatpush.bf16.msra.mxu0 %v4431
  %4695 = vmatmul.bf16.gmra.mxu0 %v3917
  %v4696 = vpop.f32.mrf.mxu0
  %v4697 = vadd.f32 0.0, %v4696
  %v4698 = vpop.f32.mrf.mxu0
  %4699 = vdwg.mxu0
  %4700 = vmatpush.bf16.msra.mxu0 %v4551
  %4701 = vmatpush.bf16.msra.mxu0 %v4543
  %4702 = vmatpush.bf16.msra.mxu0 %v4535
  %4703 = vmatpush.bf16.msra.mxu0 %v4527
  %4704 = vmatpush.bf16.msra.mxu0 %v4519
  %4705 = vmatpush.bf16.msra.mxu0 %v4511
  %4706 = vmatpush.bf16.msra.mxu0 %v4503
  %4707 = vmatpush.bf16.msra.mxu0 %v4495
  %4708 = vmatmul.bf16.gmra.mxu0 %v3918
  %v4709 = vpop.f32.mrf.mxu0
  %v4710 = vadd.f32 %v4697, %v4709
  %v4711 = vpop.f32.mrf.mxu0
  %4712 = vdwg.mxu0
  %4713 = vmatpush.bf16.msra.mxu0 %v4488
  %4714 = vmatpush.bf16.msra.mxu0 %v4480
  %4715 = vmatpush.bf16.msra.mxu0 %v4472
  %4716 = vmatpush.bf16.msra.mxu0 %v4464
  %4717 = vmatpush.bf16.msra.mxu0 %v4456
  %4718 = vmatpush.bf16.msra.mxu0 %v4448
  %4719 = vmatpush.bf16.msra.mxu0 %v4440
  %4720 = vmatpush.bf16.msra.mxu0 %v4432
  %4721 = vmatmul.bf16.gmra.mxu0 %v3917
  %v4722 = vpop.f32.mrf.mxu0
  %v4723 = vadd.f32 0.0, %v4722
  %v4724 = vpop.f32.mrf.mxu0
  %4725 = vdwg.mxu0
  %4726 = vmatpush.bf16.msra.mxu0 %v4552
  %4727 = vmatpush.bf16.msra.mxu0 %v4544
  %4728 = vmatpush.bf16.msra.mxu0 %v4536
  %4729 = vmatpush.bf16.msra.mxu0 %v4528
  %4730 = vmatpush.bf16.msra.mxu0 %v4520
  %4731 = vmatpush.bf16.msra.mxu0 %v4512
  %4732 = vmatpush.bf16.msra.mxu0 %v4504
  %4733 = vmatpush.bf16.msra.mxu0 %v4496
  %4734 = vmatmul.bf16.gmra.mxu0 %v3918
  %v4735 = vpop.f32.mrf.mxu0
  %v4736 = vadd.f32 %v4723, %v4735
  %v4737 = vpop.f32.mrf.mxu0
  %4738 = vdwg.mxu0
  %4739 = vmatpush.bf16.msra.mxu0 %v4489
  %4740 = vmatpush.bf16.msra.mxu0 %v4481
  %4741 = vmatpush.bf16.msra.mxu0 %v4473
  %4742 = vmatpush.bf16.msra.mxu0 %v4465
  %4743 = vmatpush.bf16.msra.mxu0 %v4457
  %4744 = vmatpush.bf16.msra.mxu0 %v4449
  %4745 = vmatpush.bf16.msra.mxu0 %v4441
  %4746 = vmatpush.bf16.msra.mxu0 %v4433
  %4747 = vmatmul.bf16.gmra.mxu0 %v3917
  %v4748 = vpop.f32.mrf.mxu0
  %v4749 = vadd.f32 0.0, %v4748
  %v4750 = vpop.f32.mrf.mxu0
  %4751 = vdwg.mxu0
  %4752 = vmatpush.bf16.msra.mxu0 %v4553
  %4753 = vmatpush.bf16.msra.mxu0 %v4545
  %4754 = vmatpush.bf16.msra.mxu0 %v4537
  %4755 = vmatpush.bf16.msra.mxu0 %v4529
  %4756 = vmatpush.bf16.msra.mxu0 %v4521
  %4757 = vmatpush.bf16.msra.mxu0 %v4513
  %4758 = vmatpush.bf16.msra.mxu0 %v4505
  %4759 = vmatpush.bf16.msra.mxu0 %v4497
  %4760 = vmatmul.bf16.gmra.mxu0 %v3918
  %v4761 = vpop.f32.mrf.mxu0
  %v4762 = vadd.f32 %v4749, %v4761
  %v4763 = vpop.f32.mrf.mxu0
  %4764 = vdwg.mxu0
  %4765 = vmatpush.bf16.msra.mxu0 %v4490
  %4766 = vmatpush.bf16.msra.mxu0 %v4482
  %4767 = vmatpush.bf16.msra.mxu0 %v4474
  %4768 = vmatpush.bf16.msra.mxu0 %v4466
  %4769 = vmatpush.bf16.msra.mxu0 %v4458
  %4770 = vmatpush.bf16.msra.mxu0 %v4450
  %4771 = vmatpush.bf16.msra.mxu0 %v4442
  %4772 = vmatpush.bf16.msra.mxu0 %v4434
  %4773 = vmatmul.bf16.gmra.mxu0 %v3917
  %v4774 = vpop.f32.mrf.mxu0
  %v4775 = vadd.f32 0.0, %v4774
  %v4776 = vpop.f32.mrf.mxu0
  %4777 = vdwg.mxu0
  %4778 = vmatpush.bf16.msra.mxu0 %v4554
  %4779 = vmatpush.bf16.msra.mxu0 %v4546
  %4780 = vmatpush.bf16.msra.mxu0 %v4538
  %4781 = vmatpush.bf16.msra.mxu0 %v4530
  %4782 = vmatpush.bf16.msra.mxu0 %v4522
  %4783 = vmatpush.bf16.msra.mxu0 %v4514
  %4784 = vmatpush.bf16.msra.mxu0 %v4506
  %4785 = vmatpush.bf16.msra.mxu0 %v4498
  %4786 = vmatmul.bf16.gmra.mxu0 %v3918
  %v4787 = vpop.f32.mrf.mxu0
  %v4788 = vadd.f32 %v4775, %v4787
  %v4789 = vpop.f32.mrf.mxu0
  %4790 = vdwg.mxu0
  %4791 = vmatpush.bf16.msra.mxu0 %v4491
  %4792 = vmatpush.bf16.msra.mxu0 %v4483
  %4793 = vmatpush.bf16.msra.mxu0 %v4475
  %4794 = vmatpush.bf16.msra.mxu0 %v4467
  %4795 = vmatpush.bf16.msra.mxu0 %v4459
  %4796 = vmatpush.bf16.msra.mxu0 %v4451
  %4797 = vmatpush.bf16.msra.mxu0 %v4443
  %4798 = vmatpush.bf16.msra.mxu0 %v4435
  %4799 = vmatmul.bf16.gmra.mxu0 %v3917
  %v4800 = vpop.f32.mrf.mxu0
  %v4801 = vadd.f32 0.0, %v4800
  %v4802 = vpop.f32.mrf.mxu0
  %4803 = vdwg.mxu0
  %4804 = vmatpush.bf16.msra.mxu0 %v4555
  %4805 = vmatpush.bf16.msra.mxu0 %v4547
  %4806 = vmatpush.bf16.msra.mxu0 %v4539
  %4807 = vmatpush.bf16.msra.mxu0 %v4531
  %4808 = vmatpush.bf16.msra.mxu0 %v4523
  %4809 = vmatpush.bf16.msra.mxu0 %v4515
  %4810 = vmatpush.bf16.msra.mxu0 %v4507
  %4811 = vmatpush.bf16.msra.mxu0 %v4499
  %4812 = vmatmul.bf16.gmra.mxu0 %v3918
  %v4813 = vpop.f32.mrf.mxu0
  %v4814 = vadd.f32 %v4801, %v4813
  %v4815 = vpop.f32.mrf.mxu0
  %4816 = vdwg.mxu0
  %4817 = vmatpush.bf16.msra.mxu0 %v4492
  %4818 = vmatpush.bf16.msra.mxu0 %v4484
  %4819 = vmatpush.bf16.msra.mxu0 %v4476
  %4820 = vmatpush.bf16.msra.mxu0 %v4468
  %4821 = vmatpush.bf16.msra.mxu0 %v4460
  %4822 = vmatpush.bf16.msra.mxu0 %v4452
  %4823 = vmatpush.bf16.msra.mxu0 %v4444
  %4824 = vmatpush.bf16.msra.mxu0 %v4436
  %4825 = vmatmul.bf16.gmra.mxu0 %v3917
  %v4826 = vpop.f32.mrf.mxu0
  %v4827 = vadd.f32 0.0, %v4826
  %v4828 = vpop.f32.mrf.mxu0
  %4829 = vdwg.mxu0
  %4830 = vmatpush.bf16.msra.mxu0 %v4556
  %4831 = vmatpush.bf16.msra.mxu0 %v4548
  %4832 = vmatpush.bf16.msra.mxu0 %v4540
  %4833 = vmatpush.bf16.msra.mxu0 %v4532
  %4834 = vmatpush.bf16.msra.mxu0 %v4524
  %4835 = vmatpush.bf16.msra.mxu0 %v4516
  %4836 = vmatpush.bf16.msra.mxu0 %v4508
  %4837 = vmatpush.bf16.msra.mxu0 %v4500
  %4838 = vmatmul.bf16.gmra.mxu0 %v3918
  %v4839 = vpop.f32.mrf.mxu0
  %v4840 = vadd.f32 %v4827, %v4839
  %v4841 = vpop.f32.mrf.mxu0
  %4842 = vdwg.mxu0
  %4843 = vmatpush.bf16.msra.mxu0 %v4493
  %4844 = vmatpush.bf16.msra.mxu0 %v4485
  %4845 = vmatpush.bf16.msra.mxu0 %v4477
  %4846 = vmatpush.bf16.msra.mxu0 %v4469
  %4847 = vmatpush.bf16.msra.mxu0 %v4461
  %4848 = vmatpush.bf16.msra.mxu0 %v4453
  %4849 = vmatpush.bf16.msra.mxu0 %v4445
  %4850 = vmatpush.bf16.msra.mxu0 %v4437
  %4851 = vmatmul.bf16.gmra.mxu0 %v3917
  %v4852 = vpop.f32.mrf.mxu0
  %v4853 = vadd.f32 0.0, %v4852
  %v4854 = vpop.f32.mrf.mxu0
  %4855 = vdwg.mxu0
  %4856 = vmatpush.bf16.msra.mxu0 %v4557
  %4857 = vmatpush.bf16.msra.mxu0 %v4549
  %4858 = vmatpush.bf16.msra.mxu0 %v4541
  %4859 = vmatpush.bf16.msra.mxu0 %v4533
  %4860 = vmatpush.bf16.msra.mxu0 %v4525
  %4861 = vmatpush.bf16.msra.mxu0 %v4517
  %4862 = vmatpush.bf16.msra.mxu0 %v4509
  %4863 = vmatpush.bf16.msra.mxu0 %v4501
  %4864 = vmatmul.bf16.gmra.mxu0 %v3918
  %v4865 = vpop.f32.mrf.mxu0
  %v4866 = vadd.f32 %v4853, %v4865
  %v4867 = vpop.f32.mrf.mxu0
  %4868 = vdwg.mxu0
  %4869 = vmatpush.bf16.msra.mxu0 %v4494
  %4870 = vmatpush.bf16.msra.mxu0 %v4486
  %4871 = vmatpush.bf16.msra.mxu0 %v4478
  %4872 = vmatpush.bf16.msra.mxu0 %v4470
  %4873 = vmatpush.bf16.msra.mxu0 %v4462
  %4874 = vmatpush.bf16.msra.mxu0 %v4454
  %4875 = vmatpush.bf16.msra.mxu0 %v4446
  %4876 = vmatpush.bf16.msra.mxu0 %v4438
  %4877 = vmatmul.bf16.gmra.mxu0 %v3917
  %v4878 = vpop.f32.mrf.mxu0
  %v4879 = vadd.f32 0.0, %v4878
  %v4880 = vpop.f32.mrf.mxu0
  %4881 = vdwg.mxu0
  %4882 = vmatpush.bf16.msra.mxu0 %v4558
  %4883 = vmatpush.bf16.msra.mxu0 %v4550
  %4884 = vmatpush.bf16.msra.mxu0 %v4542
  %4885 = vmatpush.bf16.msra.mxu0 %v4534
  %4886 = vmatpush.bf16.msra.mxu0 %v4526
  %4887 = vmatpush.bf16.msra.mxu0 %v4518
  %4888 = vmatpush.bf16.msra.mxu0 %v4510
  %4889 = vmatpush.bf16.msra.mxu0 %v4502
  %4890 = vmatmul.bf16.gmra.mxu0 %v3918
  %v4891 = vpop.f32.mrf.mxu0
  %v4892 = vadd.f32 %v4879, %v4891
  %v4893 = vpop.f32.mrf.mxu0
  %4894 = vdwg.mxu0
  %s4895 = smul.u32 3, 8
  %s4896 = smul.addr %s4895, 8
  %s4897 = scalar_lea.vmem [#allocation2], %s4896
  %v4898 = vld [vmem:[%s4897] sm:$0xff]
  %v4899 = vld [vmem:[%s4897 + $0x8] sm:$0xff]
  %v4900 = vld [vmem:[%s4897 + $0x10] sm:$0xff]
  %v4901 = vld [vmem:[%s4897 + $0x18] sm:$0xff]
  %v4902 = vadd.f32 %v4898, %v4710
  %v4903 = vadd.f32 %v4899, %v4736
  %v4904 = vadd.f32 %v4900, %v4762
  %v4905 = vadd.f32 %v4901, %v4788
  %s4906 = smul.u32 4, 8
  %s4907 = smul.addr %s4906, 8
  %s4908 = scalar_lea.vmem [#allocation2], %s4907
  %v4909 = vld [vmem:[%s4908 + $0x20] sm:$0xff]
  %v4910 = vld [vmem:[%s4908 + $0x28] sm:$0xff]
  %v4911 = vld [vmem:[%s4908 + $0x30] sm:$0xff]
  %v4912 = vld [vmem:[%s4908 + $0x38] sm:$0xff]
  %v4913 = vadd.f32 %v4909, %v4814
  %v4914 = vadd.f32 %v4910, %v4840
  %v4915 = vadd.f32 %v4911, %v4866
  %v4916 = vadd.f32 %v4912, %v4892
  %v4917 = vxor.u32 %v4902, 2147483648
  %v4918 = vmul.f32 %v4917, 1.442695
  %v4919 = vpow.pop %v4918
  %v4920 = vadd.f32 %v4919, 1.0
  %v4921 = vrcp.pop %v4920
  %v4922 = vmul.f32 %v4920, %v4921
  %v4923 = vsub.f32 1.0, %v4922
  %v4924 = vmul.f32 %v4921, %v4923
  %v4925 = vadd.f32 %v4921, %v4924
  %vm4926 = vweird.f32 %v4920
  %vm4927 = vweird.f32 %v4921
  %vm4928 = vmor %vm4926, %vm4927
  %v4929 = vsel %vm4928, %v4921, %v4925
  %v4930 = vand.u32 2147483647, %v4920
  %vm4931 = vcmp.eq.f32.partialorder %v4930, 8.507059e+37
  %v4932 = vand.u32 %v4920, 2147483648
  %v4933 = vor.u32 1.1754944e-38, %v4932
  %v4934 = vsel %vm4931, %v4933, %v4929
  %v4935 = vmul.f32 1.0, %v4934
  %v4936 = vxor.u32 %v4903, 2147483648
  %v4937 = vmul.f32 %v4936, 1.442695
  %v4938 = vpow.pop %v4937
  %v4939 = vadd.f32 %v4938, 1.0
  %v4940 = vrcp.pop %v4939
  %v4941 = vmul.f32 %v4939, %v4940
  %v4942 = vsub.f32 1.0, %v4941
  %v4943 = vmul.f32 %v4940, %v4942
  %v4944 = vadd.f32 %v4940, %v4943
  %vm4945 = vweird.f32 %v4939
  %vm4946 = vweird.f32 %v4940
  %vm4947 = vmor %vm4945, %vm4946
  %v4948 = vsel %vm4947, %v4940, %v4944
  %v4949 = vand.u32 2147483647, %v4939
  %vm4950 = vcmp.eq.f32.partialorder %v4949, 8.507059e+37
  %v4951 = vand.u32 %v4939, 2147483648
  %v4952 = vor.u32 1.1754944e-38, %v4951
  %v4953 = vsel %vm4950, %v4952, %v4948
  %v4954 = vmul.f32 1.0, %v4953
  %v4955 = vtanh.pop %v4904
  %v4956 = vxor.u32 %v4905, 2147483648
  %v4957 = vmul.f32 %v4956, 1.442695
  %v4958 = vpow.pop %v4957
  %v4959 = vadd.f32 %v4958, 1.0
  %v4960 = vrcp.pop %v4959
  %v4961 = vmul.f32 %v4959, %v4960
  %v4962 = vsub.f32 1.0, %v4961
  %v4963 = vmul.f32 %v4960, %v4962
  %v4964 = vadd.f32 %v4960, %v4963
  %vm4965 = vweird.f32 %v4959
  %vm4966 = vweird.f32 %v4960
  %vm4967 = vmor %vm4965, %vm4966
  %v4968 = vsel %vm4967, %v4960, %v4964
  %v4969 = vand.u32 2147483647, %v4959
  %vm4970 = vcmp.eq.f32.partialorder %v4969, 8.507059e+37
  %v4971 = vand.u32 %v4959, 2147483648
  %v4972 = vor.u32 1.1754944e-38, %v4971
  %v4973 = vsel %vm4970, %v4972, %v4968
  %v4974 = vmul.f32 1.0, %v4973
  %v4975 = vmul.f32 %v4954, %v3914
  %v4976 = vmul.f32 %v4935, %v4955
  %v4977 = vadd.f32 %v4975, %v4976
  %v4978 = vtanh.pop %v4977
  %v4979 = vmul.f32 %v4974, %v4978
  %v4980 = vxor.u32 %v4913, 2147483648
  %v4981 = vmul.f32 %v4980, 1.442695
  %v4982 = vpow.pop %v4981
  %v4983 = vadd.f32 %v4982, 1.0
  %v4984 = vrcp.pop %v4983
  %v4985 = vmul.f32 %v4983, %v4984
  %v4986 = vsub.f32 1.0, %v4985
  %v4987 = vmul.f32 %v4984, %v4986
  %v4988 = vadd.f32 %v4984, %v4987
  %vm4989 = vweird.f32 %v4983
  %vm4990 = vweird.f32 %v4984
  %vm4991 = vmor %vm4989, %vm4990
  %v4992 = vsel %vm4991, %v4984, %v4988
  %v4993 = vand.u32 2147483647, %v4983
  %vm4994 = vcmp.eq.f32.partialorder %v4993, 8.507059e+37
  %v4995 = vand.u32 %v4983, 2147483648
  %v4996 = vor.u32 1.1754944e-38, %v4995
  %v4997 = vsel %vm4994, %v4996, %v4992
  %v4998 = vmul.f32 1.0, %v4997
  %v4999 = vxor.u32 %v4914, 2147483648
  %v5000 = vmul.f32 %v4999, 1.442695
  %v5001 = vpow.pop %v5000
  %v5002 = vadd.f32 %v5001, 1.0
  %v5003 = vrcp.pop %v5002
  %v5004 = vmul.f32 %v5002, %v5003
  %v5005 = vsub.f32 1.0, %v5004
  %v5006 = vmul.f32 %v5003, %v5005
  %v5007 = vadd.f32 %v5003, %v5006
  %vm5008 = vweird.f32 %v5002
  %vm5009 = vweird.f32 %v5003
  %vm5010 = vmor %vm5008, %vm5009
  %v5011 = vsel %vm5010, %v5003, %v5007
  %v5012 = vand.u32 2147483647, %v5002
  %vm5013 = vcmp.eq.f32.partialorder %v5012, 8.507059e+37
  %v5014 = vand.u32 %v5002, 2147483648
  %v5015 = vor.u32 1.1754944e-38, %v5014
  %v5016 = vsel %vm5013, %v5015, %v5011
  %v5017 = vmul.f32 1.0, %v5016
  %v5018 = vtanh.pop %v4915
  %v5019 = vxor.u32 %v4916, 2147483648
  %v5020 = vmul.f32 %v5019, 1.442695
  %v5021 = vpow.pop %v5020
  %v5022 = vadd.f32 %v5021, 1.0
  %v5023 = vrcp.pop %v5022
  %v5024 = vmul.f32 %v5022, %v5023
  %v5025 = vsub.f32 1.0, %v5024
  %v5026 = vmul.f32 %v5023, %v5025
  %v5027 = vadd.f32 %v5023, %v5026
  %vm5028 = vweird.f32 %v5022
  %vm5029 = vweird.f32 %v5023
  %vm5030 = vmor %vm5028, %vm5029
  %v5031 = vsel %vm5030, %v5023, %v5027
  %v5032 = vand.u32 2147483647, %v5022
  %vm5033 = vcmp.eq.f32.partialorder %v5032, 8.507059e+37
  %v5034 = vand.u32 %v5022, 2147483648
  %v5035 = vor.u32 1.1754944e-38, %v5034
  %v5036 = vsel %vm5033, %v5035, %v5031
  %v5037 = vmul.f32 1.0, %v5036
  %v5038 = vmul.f32 %v5017, %v3916
  %v5039 = vmul.f32 %v4998, %v5018
  %v5040 = vadd.f32 %v5038, %v5039
  %v5041 = vtanh.pop %v5040
  %v5042 = vmul.f32 %v5037, %v5041
  %vm5043 = vcmp.gt.s32.totalorder %v476, 3
  %v5044 = vsel %vm5043, 1, 0
  %5045 = vset.pattern.permute.xlu0 0
  %5046 = vperm.xlu0 %5045, %v5044
  %v5047 = vpop.permute.xlu0 %5046
  %vm5048 = vcmp.eq.s32.totalorder %v5047, 1
  %vm5049 = vcmp.gt.s32.totalorder %v476, 4
  %v5050 = vsel %vm5049, 1, 0
  %5051 = vset.pattern.permute.xlu0 0
  %5052 = vperm.xlu0 %5051, %v5050
  %v5053 = vpop.permute.xlu0 %5052
  %vm5054 = vcmp.eq.s32.totalorder %v5053, 1
  %v5055 = vsel %vm5048, %v4979, 0.0
  %s5056 = scalar_lea.vmem %s5, 24
  %5057 = vst [vmem:[%s5056] sm:$0xff] %v5055
  %v5058 = vsel %vm5054, %v5042, 0.0
  %s5059 = scalar_lea.vmem %s6, 32
  %5060 = vst [vmem:[%s5059] sm:$0xff] %v5058
  %v5061 = vsel %vm5048, %v4979, %v3913
  %v5062 = vsel %vm5048, %v4977, %v3914
  %v5063 = vsel %vm5054, %v5042, %v3915
  %v5064 = vsel %vm5054, %v5040, %v3916
  %v5065 = vpack.c.bf16 %v5061, %v5061
  %v5066 = vpack.c.bf16 %v5063, %v5063
  %v5067 = vld [vmem:[%s3] sm:$0xff]
  %v5068 = vld [vmem:[%s3 + $0x8] sm:$0xff]
  %v5069 = vld [vmem:[%s3 + $0x10] sm:$0xff]
  %v5070 = vld [vmem:[%s3 + $0x18] sm:$0xff]
  %v5071 = vld [vmem:[%s3 + $0x20] sm:$0xff]
  %v5072 = vld [vmem:[%s3 + $0x28] sm:$0xff]
  %v5073 = vld [vmem:[%s3 + $0x30] sm:$0xff]
  %v5074 = vld [vmem:[%s3 + $0x38] sm:$0xff]
  %v5075 = vld [vmem:[%s3 + $0x40] sm:$0xff]
  %v5076 = vld [vmem:[%s3 + $0x48] sm:$0xff]
  %v5077 = vld [vmem:[%s3 + $0x50] sm:$0xff]
  %v5078 = vld [vmem:[%s3 + $0x58] sm:$0xff]
  %v5079 = vld [vmem:[%s3 + $0x60] sm:$0xff]
  %v5080 = vld [vmem:[%s3 + $0x68] sm:$0xff]
  %v5081 = vld [vmem:[%s3 + $0x70] sm:$0xff]
  %v5082 = vld [vmem:[%s3 + $0x78] sm:$0xff]
  %v5083 = vld [vmem:[%s3 + $0x80] sm:$0xff]
  %v5084 = vld [vmem:[%s3 + $0x88] sm:$0xff]
  %v5085 = vld [vmem:[%s3 + $0x90] sm:$0xff]
  %v5086 = vld [vmem:[%s3 + $0x98] sm:$0xff]
  %v5087 = vld [vmem:[%s3 + $0xa0] sm:$0xff]
  %v5088 = vld [vmem:[%s3 + $0xa8] sm:$0xff]
  %v5089 = vld [vmem:[%s3 + $0xb0] sm:$0xff]
  %v5090 = vld [vmem:[%s3 + $0xb8] sm:$0xff]
  %v5091 = vld [vmem:[%s3 + $0xc0] sm:$0xff]
  %v5092 = vld [vmem:[%s3 + $0xc8] sm:$0xff]
  %v5093 = vld [vmem:[%s3 + $0xd0] sm:$0xff]
  %v5094 = vld [vmem:[%s3 + $0xd8] sm:$0xff]
  %v5095 = vld [vmem:[%s3 + $0xe0] sm:$0xff]
  %v5096 = vld [vmem:[%s3 + $0xe8] sm:$0xff]
  %v5097 = vld [vmem:[%s3 + $0xf0] sm:$0xff]
  %v5098 = vld [vmem:[%s3 + $0xf8] sm:$0xff]
  %v5099 = vld [vmem:[%s3 + $0x100] sm:$0xff]
  %v5100 = vld [vmem:[%s3 + $0x108] sm:$0xff]
  %v5101 = vld [vmem:[%s3 + $0x110] sm:$0xff]
  %v5102 = vld [vmem:[%s3 + $0x118] sm:$0xff]
  %v5103 = vld [vmem:[%s3 + $0x120] sm:$0xff]
  %v5104 = vld [vmem:[%s3 + $0x128] sm:$0xff]
  %v5105 = vld [vmem:[%s3 + $0x130] sm:$0xff]
  %v5106 = vld [vmem:[%s3 + $0x138] sm:$0xff]
  %v5107 = vld [vmem:[%s3 + $0x140] sm:$0xff]
  %v5108 = vld [vmem:[%s3 + $0x148] sm:$0xff]
  %v5109 = vld [vmem:[%s3 + $0x150] sm:$0xff]
  %v5110 = vld [vmem:[%s3 + $0x158] sm:$0xff]
  %v5111 = vld [vmem:[%s3 + $0x160] sm:$0xff]
  %v5112 = vld [vmem:[%s3 + $0x168] sm:$0xff]
  %v5113 = vld [vmem:[%s3 + $0x170] sm:$0xff]
  %v5114 = vld [vmem:[%s3 + $0x178] sm:$0xff]
  %v5115 = vld [vmem:[%s3 + $0x180] sm:$0xff]
  %v5116 = vld [vmem:[%s3 + $0x188] sm:$0xff]
  %v5117 = vld [vmem:[%s3 + $0x190] sm:$0xff]
  %v5118 = vld [vmem:[%s3 + $0x198] sm:$0xff]
  %v5119 = vld [vmem:[%s3 + $0x1a0] sm:$0xff]
  %v5120 = vld [vmem:[%s3 + $0x1a8] sm:$0xff]
  %v5121 = vld [vmem:[%s3 + $0x1b0] sm:$0xff]
  %v5122 = vld [vmem:[%s3 + $0x1b8] sm:$0xff]
  %v5123 = vld [vmem:[%s3 + $0x1c0] sm:$0xff]
  %v5124 = vld [vmem:[%s3 + $0x1c8] sm:$0xff]
  %v5125 = vld [vmem:[%s3 + $0x1d0] sm:$0xff]
  %v5126 = vld [vmem:[%s3 + $0x1d8] sm:$0xff]
  %v5127 = vld [vmem:[%s3 + $0x1e0] sm:$0xff]
  %v5128 = vld [vmem:[%s3 + $0x1e8] sm:$0xff]
  %v5129 = vld [vmem:[%s3 + $0x1f0] sm:$0xff]
  %v5130 = vld [vmem:[%s3 + $0x1f8] sm:$0xff]
  %v5131 = vld [vmem:[%s3 + $0x200] sm:$0xff]
  %v5132 = vld [vmem:[%s3 + $0x208] sm:$0xff]
  %v5133 = vld [vmem:[%s3 + $0x210] sm:$0xff]
  %v5134 = vld [vmem:[%s3 + $0x218] sm:$0xff]
  %v5135 = vld [vmem:[%s3 + $0x220] sm:$0xff]
  %v5136 = vld [vmem:[%s3 + $0x228] sm:$0xff]
  %v5137 = vld [vmem:[%s3 + $0x230] sm:$0xff]
  %v5138 = vld [vmem:[%s3 + $0x238] sm:$0xff]
  %v5139 = vld [vmem:[%s3 + $0x240] sm:$0xff]
  %v5140 = vld [vmem:[%s3 + $0x248] sm:$0xff]
  %v5141 = vld [vmem:[%s3 + $0x250] sm:$0xff]
  %v5142 = vld [vmem:[%s3 + $0x258] sm:$0xff]
  %v5143 = vld [vmem:[%s3 + $0x260] sm:$0xff]
  %v5144 = vld [vmem:[%s3 + $0x268] sm:$0xff]
  %v5145 = vld [vmem:[%s3 + $0x270] sm:$0xff]
  %v5146 = vld [vmem:[%s3 + $0x278] sm:$0xff]
  %v5147 = vld [vmem:[%s3 + $0x280] sm:$0xff]
  %v5148 = vld [vmem:[%s3 + $0x288] sm:$0xff]
  %v5149 = vld [vmem:[%s3 + $0x290] sm:$0xff]
  %v5150 = vld [vmem:[%s3 + $0x298] sm:$0xff]
  %v5151 = vld [vmem:[%s3 + $0x2a0] sm:$0xff]
  %v5152 = vld [vmem:[%s3 + $0x2a8] sm:$0xff]
  %v5153 = vld [vmem:[%s3 + $0x2b0] sm:$0xff]
  %v5154 = vld [vmem:[%s3 + $0x2b8] sm:$0xff]
  %v5155 = vld [vmem:[%s3 + $0x2c0] sm:$0xff]
  %v5156 = vld [vmem:[%s3 + $0x2c8] sm:$0xff]
  %v5157 = vld [vmem:[%s3 + $0x2d0] sm:$0xff]
  %v5158 = vld [vmem:[%s3 + $0x2d8] sm:$0xff]
  %v5159 = vld [vmem:[%s3 + $0x2e0] sm:$0xff]
  %v5160 = vld [vmem:[%s3 + $0x2e8] sm:$0xff]
  %v5161 = vld [vmem:[%s3 + $0x2f0] sm:$0xff]
  %v5162 = vld [vmem:[%s3 + $0x2f8] sm:$0xff]
  %v5163 = vld [vmem:[%s3 + $0x300] sm:$0xff]
  %v5164 = vld [vmem:[%s3 + $0x308] sm:$0xff]
  %v5165 = vld [vmem:[%s3 + $0x310] sm:$0xff]
  %v5166 = vld [vmem:[%s3 + $0x318] sm:$0xff]
  %v5167 = vld [vmem:[%s3 + $0x320] sm:$0xff]
  %v5168 = vld [vmem:[%s3 + $0x328] sm:$0xff]
  %v5169 = vld [vmem:[%s3 + $0x330] sm:$0xff]
  %v5170 = vld [vmem:[%s3 + $0x338] sm:$0xff]
  %v5171 = vld [vmem:[%s3 + $0x340] sm:$0xff]
  %v5172 = vld [vmem:[%s3 + $0x348] sm:$0xff]
  %v5173 = vld [vmem:[%s3 + $0x350] sm:$0xff]
  %v5174 = vld [vmem:[%s3 + $0x358] sm:$0xff]
  %v5175 = vld [vmem:[%s3 + $0x360] sm:$0xff]
  %v5176 = vld [vmem:[%s3 + $0x368] sm:$0xff]
  %v5177 = vld [vmem:[%s3 + $0x370] sm:$0xff]
  %v5178 = vld [vmem:[%s3 + $0x378] sm:$0xff]
  %v5179 = vld [vmem:[%s3 + $0x380] sm:$0xff]
  %v5180 = vld [vmem:[%s3 + $0x388] sm:$0xff]
  %v5181 = vld [vmem:[%s3 + $0x390] sm:$0xff]
  %v5182 = vld [vmem:[%s3 + $0x398] sm:$0xff]
  %v5183 = vld [vmem:[%s3 + $0x3a0] sm:$0xff]
  %v5184 = vld [vmem:[%s3 + $0x3a8] sm:$0xff]
  %v5185 = vld [vmem:[%s3 + $0x3b0] sm:$0xff]
  %v5186 = vld [vmem:[%s3 + $0x3b8] sm:$0xff]
  %v5187 = vld [vmem:[%s3 + $0x3c0] sm:$0xff]
  %v5188 = vld [vmem:[%s3 + $0x3c8] sm:$0xff]
  %v5189 = vld [vmem:[%s3 + $0x3d0] sm:$0xff]
  %v5190 = vld [vmem:[%s3 + $0x3d8] sm:$0xff]
  %v5191 = vld [vmem:[%s3 + $0x3e0] sm:$0xff]
  %v5192 = vld [vmem:[%s3 + $0x3e8] sm:$0xff]
  %v5193 = vld [vmem:[%s3 + $0x3f0] sm:$0xff]
  %v5194 = vld [vmem:[%s3 + $0x3f8] sm:$0xff]
  %v5323 = vunpack.c.l.b16 %v5067
  %v5324 = vunpack.c.h.b16 %v5067
  %v5325 = vunpack.c.l.b16 %v5068
  %v5326 = vunpack.c.h.b16 %v5068
  %v5327 = vunpack.c.l.b16 %v5069
  %v5328 = vunpack.c.h.b16 %v5069
  %v5329 = vunpack.c.l.b16 %v5070
  %v5330 = vunpack.c.h.b16 %v5070
  %v5331 = vunpack.c.l.b16 %v5071
  %v5332 = vunpack.c.h.b16 %v5071
  %v5333 = vunpack.c.l.b16 %v5072
  %v5334 = vunpack.c.h.b16 %v5072
  %v5335 = vunpack.c.l.b16 %v5073
  %v5336 = vunpack.c.h.b16 %v5073
  %v5337 = vunpack.c.l.b16 %v5074
  %v5338 = vunpack.c.h.b16 %v5074
  %v5339 = vunpack.c.l.b16 %v5075
  %v5340 = vunpack.c.h.b16 %v5075
  %v5341 = vunpack.c.l.b16 %v5076
  %v5342 = vunpack.c.h.b16 %v5076
  %v5343 = vunpack.c.l.b16 %v5077
  %v5344 = vunpack.c.h.b16 %v5077
  %v5345 = vunpack.c.l.b16 %v5078
  %v5346 = vunpack.c.h.b16 %v5078
  %v5347 = vunpack.c.l.b16 %v5079
  %v5348 = vunpack.c.h.b16 %v5079
  %v5349 = vunpack.c.l.b16 %v5080
  %v5350 = vunpack.c.h.b16 %v5080
  %v5351 = vunpack.c.l.b16 %v5081
  %v5352 = vunpack.c.h.b16 %v5081
  %v5353 = vunpack.c.l.b16 %v5082
  %v5354 = vunpack.c.h.b16 %v5082
  %v5355 = vunpack.c.l.b16 %v5083
  %v5356 = vunpack.c.h.b16 %v5083
  %v5357 = vunpack.c.l.b16 %v5084
  %v5358 = vunpack.c.h.b16 %v5084
  %v5359 = vunpack.c.l.b16 %v5085
  %v5360 = vunpack.c.h.b16 %v5085
  %v5361 = vunpack.c.l.b16 %v5086
  %v5362 = vunpack.c.h.b16 %v5086
  %v5363 = vunpack.c.l.b16 %v5087
  %v5364 = vunpack.c.h.b16 %v5087
  %v5365 = vunpack.c.l.b16 %v5088
  %v5366 = vunpack.c.h.b16 %v5088
  %v5367 = vunpack.c.l.b16 %v5089
  %v5368 = vunpack.c.h.b16 %v5089
  %v5369 = vunpack.c.l.b16 %v5090
  %v5370 = vunpack.c.h.b16 %v5090
  %v5371 = vunpack.c.l.b16 %v5091
  %v5372 = vunpack.c.h.b16 %v5091
  %v5373 = vunpack.c.l.b16 %v5092
  %v5374 = vunpack.c.h.b16 %v5092
  %v5375 = vunpack.c.l.b16 %v5093
  %v5376 = vunpack.c.h.b16 %v5093
  %v5377 = vunpack.c.l.b16 %v5094
  %v5378 = vunpack.c.h.b16 %v5094
  %v5379 = vunpack.c.l.b16 %v5095
  %v5380 = vunpack.c.h.b16 %v5095
  %v5381 = vunpack.c.l.b16 %v5096
  %v5382 = vunpack.c.h.b16 %v5096
  %v5383 = vunpack.c.l.b16 %v5097
  %v5384 = vunpack.c.h.b16 %v5097
  %v5385 = vunpack.c.l.b16 %v5098
  %v5386 = vunpack.c.h.b16 %v5098
  %v5387 = vunpack.c.l.b16 %v5099
  %v5388 = vunpack.c.h.b16 %v5099
  %v5389 = vunpack.c.l.b16 %v5100
  %v5390 = vunpack.c.h.b16 %v5100
  %v5391 = vunpack.c.l.b16 %v5101
  %v5392 = vunpack.c.h.b16 %v5101
  %v5393 = vunpack.c.l.b16 %v5102
  %v5394 = vunpack.c.h.b16 %v5102
  %v5395 = vunpack.c.l.b16 %v5103
  %v5396 = vunpack.c.h.b16 %v5103
  %v5397 = vunpack.c.l.b16 %v5104
  %v5398 = vunpack.c.h.b16 %v5104
  %v5399 = vunpack.c.l.b16 %v5105
  %v5400 = vunpack.c.h.b16 %v5105
  %v5401 = vunpack.c.l.b16 %v5106
  %v5402 = vunpack.c.h.b16 %v5106
  %v5403 = vunpack.c.l.b16 %v5107
  %v5404 = vunpack.c.h.b16 %v5107
  %v5405 = vunpack.c.l.b16 %v5108
  %v5406 = vunpack.c.h.b16 %v5108
  %v5407 = vunpack.c.l.b16 %v5109
  %v5408 = vunpack.c.h.b16 %v5109
  %v5409 = vunpack.c.l.b16 %v5110
  %v5410 = vunpack.c.h.b16 %v5110
  %v5411 = vunpack.c.l.b16 %v5111
  %v5412 = vunpack.c.h.b16 %v5111
  %v5413 = vunpack.c.l.b16 %v5112
  %v5414 = vunpack.c.h.b16 %v5112
  %v5415 = vunpack.c.l.b16 %v5113
  %v5416 = vunpack.c.h.b16 %v5113
  %v5417 = vunpack.c.l.b16 %v5114
  %v5418 = vunpack.c.h.b16 %v5114
  %v5419 = vunpack.c.l.b16 %v5115
  %v5420 = vunpack.c.h.b16 %v5115
  %v5421 = vunpack.c.l.b16 %v5116
  %v5422 = vunpack.c.h.b16 %v5116
  %v5423 = vunpack.c.l.b16 %v5117
  %v5424 = vunpack.c.h.b16 %v5117
  %v5425 = vunpack.c.l.b16 %v5118
  %v5426 = vunpack.c.h.b16 %v5118
  %v5427 = vunpack.c.l.b16 %v5119
  %v5428 = vunpack.c.h.b16 %v5119
  %v5429 = vunpack.c.l.b16 %v5120
  %v5430 = vunpack.c.h.b16 %v5120
  %v5431 = vunpack.c.l.b16 %v5121
  %v5432 = vunpack.c.h.b16 %v5121
  %v5433 = vunpack.c.l.b16 %v5122
  %v5434 = vunpack.c.h.b16 %v5122
  %v5435 = vunpack.c.l.b16 %v5123
  %v5436 = vunpack.c.h.b16 %v5123
  %v5437 = vunpack.c.l.b16 %v5124
  %v5438 = vunpack.c.h.b16 %v5124
  %v5439 = vunpack.c.l.b16 %v5125
  %v5440 = vunpack.c.h.b16 %v5125
  %v5441 = vunpack.c.l.b16 %v5126
  %v5442 = vunpack.c.h.b16 %v5126
  %v5443 = vunpack.c.l.b16 %v5127
  %v5444 = vunpack.c.h.b16 %v5127
  %v5445 = vunpack.c.l.b16 %v5128
  %v5446 = vunpack.c.h.b16 %v5128
  %v5447 = vunpack.c.l.b16 %v5129
  %v5448 = vunpack.c.h.b16 %v5129
  %v5449 = vunpack.c.l.b16 %v5130
  %v5450 = vunpack.c.h.b16 %v5130
  %v5451 = vunpack.c.l.b16 %v5131
  %v5452 = vunpack.c.h.b16 %v5131
  %v5453 = vunpack.c.l.b16 %v5132
  %v5454 = vunpack.c.h.b16 %v5132
  %v5455 = vunpack.c.l.b16 %v5133
  %v5456 = vunpack.c.h.b16 %v5133
  %v5457 = vunpack.c.l.b16 %v5134
  %v5458 = vunpack.c.h.b16 %v5134
  %v5459 = vunpack.c.l.b16 %v5135
  %v5460 = vunpack.c.h.b16 %v5135
  %v5461 = vunpack.c.l.b16 %v5136
  %v5462 = vunpack.c.h.b16 %v5136
  %v5463 = vunpack.c.l.b16 %v5137
  %v5464 = vunpack.c.h.b16 %v5137
  %v5465 = vunpack.c.l.b16 %v5138
  %v5466 = vunpack.c.h.b16 %v5138
  %v5467 = vunpack.c.l.b16 %v5139
  %v5468 = vunpack.c.h.b16 %v5139
  %v5469 = vunpack.c.l.b16 %v5140
  %v5470 = vunpack.c.h.b16 %v5140
  %v5471 = vunpack.c.l.b16 %v5141
  %v5472 = vunpack.c.h.b16 %v5141
  %v5473 = vunpack.c.l.b16 %v5142
  %v5474 = vunpack.c.h.b16 %v5142
  %v5475 = vunpack.c.l.b16 %v5143
  %v5476 = vunpack.c.h.b16 %v5143
  %v5477 = vunpack.c.l.b16 %v5144
  %v5478 = vunpack.c.h.b16 %v5144
  %v5479 = vunpack.c.l.b16 %v5145
  %v5480 = vunpack.c.h.b16 %v5145
  %v5481 = vunpack.c.l.b16 %v5146
  %v5482 = vunpack.c.h.b16 %v5146
  %v5483 = vunpack.c.l.b16 %v5147
  %v5484 = vunpack.c.h.b16 %v5147
  %v5485 = vunpack.c.l.b16 %v5148
  %v5486 = vunpack.c.h.b16 %v5148
  %v5487 = vunpack.c.l.b16 %v5149
  %v5488 = vunpack.c.h.b16 %v5149
  %v5489 = vunpack.c.l.b16 %v5150
  %v5490 = vunpack.c.h.b16 %v5150
  %v5491 = vunpack.c.l.b16 %v5151
  %v5492 = vunpack.c.h.b16 %v5151
  %v5493 = vunpack.c.l.b16 %v5152
  %v5494 = vunpack.c.h.b16 %v5152
  %v5495 = vunpack.c.l.b16 %v5153
  %v5496 = vunpack.c.h.b16 %v5153
  %v5497 = vunpack.c.l.b16 %v5154
  %v5498 = vunpack.c.h.b16 %v5154
  %v5499 = vunpack.c.l.b16 %v5155
  %v5500 = vunpack.c.h.b16 %v5155
  %v5501 = vunpack.c.l.b16 %v5156
  %v5502 = vunpack.c.h.b16 %v5156
  %v5503 = vunpack.c.l.b16 %v5157
  %v5504 = vunpack.c.h.b16 %v5157
  %v5505 = vunpack.c.l.b16 %v5158
  %v5506 = vunpack.c.h.b16 %v5158
  %v5507 = vunpack.c.l.b16 %v5159
  %v5508 = vunpack.c.h.b16 %v5159
  %v5509 = vunpack.c.l.b16 %v5160
  %v5510 = vunpack.c.h.b16 %v5160
  %v5511 = vunpack.c.l.b16 %v5161
  %v5512 = vunpack.c.h.b16 %v5161
  %v5513 = vunpack.c.l.b16 %v5162
  %v5514 = vunpack.c.h.b16 %v5162
  %v5515 = vunpack.c.l.b16 %v5163
  %v5516 = vunpack.c.h.b16 %v5163
  %v5517 = vunpack.c.l.b16 %v5164
  %v5518 = vunpack.c.h.b16 %v5164
  %v5519 = vunpack.c.l.b16 %v5165
  %v5520 = vunpack.c.h.b16 %v5165
  %v5521 = vunpack.c.l.b16 %v5166
  %v5522 = vunpack.c.h.b16 %v5166
  %v5523 = vunpack.c.l.b16 %v5167
  %v5524 = vunpack.c.h.b16 %v5167
  %v5525 = vunpack.c.l.b16 %v5168
  %v5526 = vunpack.c.h.b16 %v5168
  %v5527 = vunpack.c.l.b16 %v5169
  %v5528 = vunpack.c.h.b16 %v5169
  %v5529 = vunpack.c.l.b16 %v5170
  %v5530 = vunpack.c.h.b16 %v5170
  %v5531 = vunpack.c.l.b16 %v5171
  %v5532 = vunpack.c.h.b16 %v5171
  %v5533 = vunpack.c.l.b16 %v5172
  %v5534 = vunpack.c.h.b16 %v5172
  %v5535 = vunpack.c.l.b16 %v5173
  %v5536 = vunpack.c.h.b16 %v5173
  %v5537 = vunpack.c.l.b16 %v5174
  %v5538 = vunpack.c.h.b16 %v5174
  %v5539 = vunpack.c.l.b16 %v5175
  %v5540 = vunpack.c.h.b16 %v5175
  %v5541 = vunpack.c.l.b16 %v5176
  %v5542 = vunpack.c.h.b16 %v5176
  %v5543 = vunpack.c.l.b16 %v5177
  %v5544 = vunpack.c.h.b16 %v5177
  %v5545 = vunpack.c.l.b16 %v5178
  %v5546 = vunpack.c.h.b16 %v5178
  %v5547 = vunpack.c.l.b16 %v5179
  %v5548 = vunpack.c.h.b16 %v5179
  %v5549 = vunpack.c.l.b16 %v5180
  %v5550 = vunpack.c.h.b16 %v5180
  %v5551 = vunpack.c.l.b16 %v5181
  %v5552 = vunpack.c.h.b16 %v5181
  %v5553 = vunpack.c.l.b16 %v5182
  %v5554 = vunpack.c.h.b16 %v5182
  %v5555 = vunpack.c.l.b16 %v5183
  %v5556 = vunpack.c.h.b16 %v5183
  %v5557 = vunpack.c.l.b16 %v5184
  %v5558 = vunpack.c.h.b16 %v5184
  %v5559 = vunpack.c.l.b16 %v5185
  %v5560 = vunpack.c.h.b16 %v5185
  %v5561 = vunpack.c.l.b16 %v5186
  %v5562 = vunpack.c.h.b16 %v5186
  %v5563 = vunpack.c.l.b16 %v5187
  %v5564 = vunpack.c.h.b16 %v5187
  %v5565 = vunpack.c.l.b16 %v5188
  %v5566 = vunpack.c.h.b16 %v5188
  %v5567 = vunpack.c.l.b16 %v5189
  %v5568 = vunpack.c.h.b16 %v5189
  %v5569 = vunpack.c.l.b16 %v5190
  %v5570 = vunpack.c.h.b16 %v5190
  %v5571 = vunpack.c.l.b16 %v5191
  %v5572 = vunpack.c.h.b16 %v5191
  %v5573 = vunpack.c.l.b16 %v5192
  %v5574 = vunpack.c.h.b16 %v5192
  %v5575 = vunpack.c.l.b16 %v5193
  %v5576 = vunpack.c.h.b16 %v5193
  %v5577 = vunpack.c.l.b16 %v5194
  %v5578 = vunpack.c.h.b16 %v5194
  %v5579 = vpack.c.b16 %v5331, %v5323
  %v5580 = vpack.c.b16 %v5332, %v5324
  %v5581 = vpack.c.b16 %v5333, %v5325
  %v5582 = vpack.c.b16 %v5334, %v5326
  %v5583 = vpack.c.b16 %v5335, %v5327
  %v5584 = vpack.c.b16 %v5336, %v5328
  %v5585 = vpack.c.b16 %v5337, %v5329
  %v5586 = vpack.c.b16 %v5338, %v5330
  %v5587 = vpack.c.b16 %v5347, %v5339
  %v5588 = vpack.c.b16 %v5348, %v5340
  %v5589 = vpack.c.b16 %v5349, %v5341
  %v5590 = vpack.c.b16 %v5350, %v5342
  %v5591 = vpack.c.b16 %v5351, %v5343
  %v5592 = vpack.c.b16 %v5352, %v5344
  %v5593 = vpack.c.b16 %v5353, %v5345
  %v5594 = vpack.c.b16 %v5354, %v5346
  %v5595 = vpack.c.b16 %v5363, %v5355
  %v5596 = vpack.c.b16 %v5364, %v5356
  %v5597 = vpack.c.b16 %v5365, %v5357
  %v5598 = vpack.c.b16 %v5366, %v5358
  %v5599 = vpack.c.b16 %v5367, %v5359
  %v5600 = vpack.c.b16 %v5368, %v5360
  %v5601 = vpack.c.b16 %v5369, %v5361
  %v5602 = vpack.c.b16 %v5370, %v5362
  %v5603 = vpack.c.b16 %v5379, %v5371
  %v5604 = vpack.c.b16 %v5380, %v5372
  %v5605 = vpack.c.b16 %v5381, %v5373
  %v5606 = vpack.c.b16 %v5382, %v5374
  %v5607 = vpack.c.b16 %v5383, %v5375
  %v5608 = vpack.c.b16 %v5384, %v5376
  %v5609 = vpack.c.b16 %v5385, %v5377
  %v5610 = vpack.c.b16 %v5386, %v5378
  %v5611 = vpack.c.b16 %v5395, %v5387
  %v5612 = vpack.c.b16 %v5396, %v5388
  %v5613 = vpack.c.b16 %v5397, %v5389
  %v5614 = vpack.c.b16 %v5398, %v5390
  %v5615 = vpack.c.b16 %v5399, %v5391
  %v5616 = vpack.c.b16 %v5400, %v5392
  %v5617 = vpack.c.b16 %v5401, %v5393
  %v5618 = vpack.c.b16 %v5402, %v5394
  %v5619 = vpack.c.b16 %v5411, %v5403
  %v5620 = vpack.c.b16 %v5412, %v5404
  %v5621 = vpack.c.b16 %v5413, %v5405
  %v5622 = vpack.c.b16 %v5414, %v5406
  %v5623 = vpack.c.b16 %v5415, %v5407
  %v5624 = vpack.c.b16 %v5416, %v5408
  %v5625 = vpack.c.b16 %v5417, %v5409
  %v5626 = vpack.c.b16 %v5418, %v5410
  %v5627 = vpack.c.b16 %v5427, %v5419
  %v5628 = vpack.c.b16 %v5428, %v5420
  %v5629 = vpack.c.b16 %v5429, %v5421
  %v5630 = vpack.c.b16 %v5430, %v5422
  %v5631 = vpack.c.b16 %v5431, %v5423
  %v5632 = vpack.c.b16 %v5432, %v5424
  %v5633 = vpack.c.b16 %v5433, %v5425
  %v5634 = vpack.c.b16 %v5434, %v5426
  %v5635 = vpack.c.b16 %v5443, %v5435
  %v5636 = vpack.c.b16 %v5444, %v5436
  %v5637 = vpack.c.b16 %v5445, %v5437
  %v5638 = vpack.c.b16 %v5446, %v5438
  %v5639 = vpack.c.b16 %v5447, %v5439
  %v5640 = vpack.c.b16 %v5448, %v5440
  %v5641 = vpack.c.b16 %v5449, %v5441
  %v5642 = vpack.c.b16 %v5450, %v5442
  %v5643 = vpack.c.b16 %v5459, %v5451
  %v5644 = vpack.c.b16 %v5460, %v5452
  %v5645 = vpack.c.b16 %v5461, %v5453
  %v5646 = vpack.c.b16 %v5462, %v5454
  %v5647 = vpack.c.b16 %v5463, %v5455
  %v5648 = vpack.c.b16 %v5464, %v5456
  %v5649 = vpack.c.b16 %v5465, %v5457
  %v5650 = vpack.c.b16 %v5466, %v5458
  %v5651 = vpack.c.b16 %v5475, %v5467
  %v5652 = vpack.c.b16 %v5476, %v5468
  %v5653 = vpack.c.b16 %v5477, %v5469
  %v5654 = vpack.c.b16 %v5478, %v5470
  %v5655 = vpack.c.b16 %v5479, %v5471
  %v5656 = vpack.c.b16 %v5480, %v5472
  %v5657 = vpack.c.b16 %v5481, %v5473
  %v5658 = vpack.c.b16 %v5482, %v5474
  %v5659 = vpack.c.b16 %v5491, %v5483
  %v5660 = vpack.c.b16 %v5492, %v5484
  %v5661 = vpack.c.b16 %v5493, %v5485
  %v5662 = vpack.c.b16 %v5494, %v5486
  %v5663 = vpack.c.b16 %v5495, %v5487
  %v5664 = vpack.c.b16 %v5496, %v5488
  %v5665 = vpack.c.b16 %v5497, %v5489
  %v5666 = vpack.c.b16 %v5498, %v5490
  %v5667 = vpack.c.b16 %v5507, %v5499
  %v5668 = vpack.c.b16 %v5508, %v5500
  %v5669 = vpack.c.b16 %v5509, %v5501
  %v5670 = vpack.c.b16 %v5510, %v5502
  %v5671 = vpack.c.b16 %v5511, %v5503
  %v5672 = vpack.c.b16 %v5512, %v5504
  %v5673 = vpack.c.b16 %v5513, %v5505
  %v5674 = vpack.c.b16 %v5514, %v5506
  %v5675 = vpack.c.b16 %v5523, %v5515
  %v5676 = vpack.c.b16 %v5524, %v5516
  %v5677 = vpack.c.b16 %v5525, %v5517
  %v5678 = vpack.c.b16 %v5526, %v5518
  %v5679 = vpack.c.b16 %v5527, %v5519
  %v5680 = vpack.c.b16 %v5528, %v5520
  %v5681 = vpack.c.b16 %v5529, %v5521
  %v5682 = vpack.c.b16 %v5530, %v5522
  %v5683 = vpack.c.b16 %v5539, %v5531
  %v5684 = vpack.c.b16 %v5540, %v5532
  %v5685 = vpack.c.b16 %v5541, %v5533
  %v5686 = vpack.c.b16 %v5542, %v5534
  %v5687 = vpack.c.b16 %v5543, %v5535
  %v5688 = vpack.c.b16 %v5544, %v5536
  %v5689 = vpack.c.b16 %v5545, %v5537
  %v5690 = vpack.c.b16 %v5546, %v5538
  %v5691 = vpack.c.b16 %v5555, %v5547
  %v5692 = vpack.c.b16 %v5556, %v5548
  %v5693 = vpack.c.b16 %v5557, %v5549
  %v5694 = vpack.c.b16 %v5558, %v5550
  %v5695 = vpack.c.b16 %v5559, %v5551
  %v5696 = vpack.c.b16 %v5560, %v5552
  %v5697 = vpack.c.b16 %v5561, %v5553
  %v5698 = vpack.c.b16 %v5562, %v5554
  %v5699 = vpack.c.b16 %v5571, %v5563
  %v5700 = vpack.c.b16 %v5572, %v5564
  %v5701 = vpack.c.b16 %v5573, %v5565
  %v5702 = vpack.c.b16 %v5574, %v5566
  %v5703 = vpack.c.b16 %v5575, %v5567
  %v5704 = vpack.c.b16 %v5576, %v5568
  %v5705 = vpack.c.b16 %v5577, %v5569
  %v5706 = vpack.c.b16 %v5578, %v5570
  %5835 = vmatpush.bf16.msra.mxu0 %v5635
  %5836 = vmatpush.bf16.msra.mxu0 %v5627
  %5837 = vmatpush.bf16.msra.mxu0 %v5619
  %5838 = vmatpush.bf16.msra.mxu0 %v5611
  %5839 = vmatpush.bf16.msra.mxu0 %v5603
  %5840 = vmatpush.bf16.msra.mxu0 %v5595
  %5841 = vmatpush.bf16.msra.mxu0 %v5587
  %5842 = vmatpush.bf16.msra.mxu0 %v5579
  %5843 = vmatmul.bf16.gmra.mxu0 %v5065
  %v5844 = vpop.f32.mrf.mxu0
  %v5845 = vadd.f32 0.0, %v5844
  %v5846 = vpop.f32.mrf.mxu0
  %5847 = vdwg.mxu0
  %5848 = vmatpush.bf16.msra.mxu0 %v5699
  %5849 = vmatpush.bf16.msra.mxu0 %v5691
  %5850 = vmatpush.bf16.msra.mxu0 %v5683
  %5851 = vmatpush.bf16.msra.mxu0 %v5675
  %5852 = vmatpush.bf16.msra.mxu0 %v5667
  %5853 = vmatpush.bf16.msra.mxu0 %v5659
  %5854 = vmatpush.bf16.msra.mxu0 %v5651
  %5855 = vmatpush.bf16.msra.mxu0 %v5643
  %5856 = vmatmul.bf16.gmra.mxu0 %v5066
  %v5857 = vpop.f32.mrf.mxu0
  %v5858 = vadd.f32 %v5845, %v5857
  %v5859 = vpop.f32.mrf.mxu0
  %5860 = vdwg.mxu0
  %5861 = vmatpush.bf16.msra.mxu0 %v5636
  %5862 = vmatpush.bf16.msra.mxu0 %v5628
  %5863 = vmatpush.bf16.msra.mxu0 %v5620
  %5864 = vmatpush.bf16.msra.mxu0 %v5612
  %5865 = vmatpush.bf16.msra.mxu0 %v5604
  %5866 = vmatpush.bf16.msra.mxu0 %v5596
  %5867 = vmatpush.bf16.msra.mxu0 %v5588
  %5868 = vmatpush.bf16.msra.mxu0 %v5580
  %5869 = vmatmul.bf16.gmra.mxu0 %v5065
  %v5870 = vpop.f32.mrf.mxu0
  %v5871 = vadd.f32 0.0, %v5870
  %v5872 = vpop.f32.mrf.mxu0
  %5873 = vdwg.mxu0
  %5874 = vmatpush.bf16.msra.mxu0 %v5700
  %5875 = vmatpush.bf16.msra.mxu0 %v5692
  %5876 = vmatpush.bf16.msra.mxu0 %v5684
  %5877 = vmatpush.bf16.msra.mxu0 %v5676
  %5878 = vmatpush.bf16.msra.mxu0 %v5668
  %5879 = vmatpush.bf16.msra.mxu0 %v5660
  %5880 = vmatpush.bf16.msra.mxu0 %v5652
  %5881 = vmatpush.bf16.msra.mxu0 %v5644
  %5882 = vmatmul.bf16.gmra.mxu0 %v5066
  %v5883 = vpop.f32.mrf.mxu0
  %v5884 = vadd.f32 %v5871, %v5883
  %v5885 = vpop.f32.mrf.mxu0
  %5886 = vdwg.mxu0
  %5887 = vmatpush.bf16.msra.mxu0 %v5637
  %5888 = vmatpush.bf16.msra.mxu0 %v5629
  %5889 = vmatpush.bf16.msra.mxu0 %v5621
  %5890 = vmatpush.bf16.msra.mxu0 %v5613
  %5891 = vmatpush.bf16.msra.mxu0 %v5605
  %5892 = vmatpush.bf16.msra.mxu0 %v5597
  %5893 = vmatpush.bf16.msra.mxu0 %v5589
  %5894 = vmatpush.bf16.msra.mxu0 %v5581
  %5895 = vmatmul.bf16.gmra.mxu0 %v5065
  %v5896 = vpop.f32.mrf.mxu0
  %v5897 = vadd.f32 0.0, %v5896
  %v5898 = vpop.f32.mrf.mxu0
  %5899 = vdwg.mxu0
  %5900 = vmatpush.bf16.msra.mxu0 %v5701
  %5901 = vmatpush.bf16.msra.mxu0 %v5693
  %5902 = vmatpush.bf16.msra.mxu0 %v5685
  %5903 = vmatpush.bf16.msra.mxu0 %v5677
  %5904 = vmatpush.bf16.msra.mxu0 %v5669
  %5905 = vmatpush.bf16.msra.mxu0 %v5661
  %5906 = vmatpush.bf16.msra.mxu0 %v5653
  %5907 = vmatpush.bf16.msra.mxu0 %v5645
  %5908 = vmatmul.bf16.gmra.mxu0 %v5066
  %v5909 = vpop.f32.mrf.mxu0
  %v5910 = vadd.f32 %v5897, %v5909
  %v5911 = vpop.f32.mrf.mxu0
  %5912 = vdwg.mxu0
  %5913 = vmatpush.bf16.msra.mxu0 %v5638
  %5914 = vmatpush.bf16.msra.mxu0 %v5630
  %5915 = vmatpush.bf16.msra.mxu0 %v5622
  %5916 = vmatpush.bf16.msra.mxu0 %v5614
  %5917 = vmatpush.bf16.msra.mxu0 %v5606
  %5918 = vmatpush.bf16.msra.mxu0 %v5598
  %5919 = vmatpush.bf16.msra.mxu0 %v5590
  %5920 = vmatpush.bf16.msra.mxu0 %v5582
  %5921 = vmatmul.bf16.gmra.mxu0 %v5065
  %v5922 = vpop.f32.mrf.mxu0
  %v5923 = vadd.f32 0.0, %v5922
  %v5924 = vpop.f32.mrf.mxu0
  %5925 = vdwg.mxu0
  %5926 = vmatpush.bf16.msra.mxu0 %v5702
  %5927 = vmatpush.bf16.msra.mxu0 %v5694
  %5928 = vmatpush.bf16.msra.mxu0 %v5686
  %5929 = vmatpush.bf16.msra.mxu0 %v5678
  %5930 = vmatpush.bf16.msra.mxu0 %v5670
  %5931 = vmatpush.bf16.msra.mxu0 %v5662
  %5932 = vmatpush.bf16.msra.mxu0 %v5654
  %5933 = vmatpush.bf16.msra.mxu0 %v5646
  %5934 = vmatmul.bf16.gmra.mxu0 %v5066
  %v5935 = vpop.f32.mrf.mxu0
  %v5936 = vadd.f32 %v5923, %v5935
  %v5937 = vpop.f32.mrf.mxu0
  %5938 = vdwg.mxu0
  %5939 = vmatpush.bf16.msra.mxu0 %v5639
  %5940 = vmatpush.bf16.msra.mxu0 %v5631
  %5941 = vmatpush.bf16.msra.mxu0 %v5623
  %5942 = vmatpush.bf16.msra.mxu0 %v5615
  %5943 = vmatpush.bf16.msra.mxu0 %v5607
  %5944 = vmatpush.bf16.msra.mxu0 %v5599
  %5945 = vmatpush.bf16.msra.mxu0 %v5591
  %5946 = vmatpush.bf16.msra.mxu0 %v5583
  %5947 = vmatmul.bf16.gmra.mxu0 %v5065
  %v5948 = vpop.f32.mrf.mxu0
  %v5949 = vadd.f32 0.0, %v5948
  %v5950 = vpop.f32.mrf.mxu0
  %5951 = vdwg.mxu0
  %5952 = vmatpush.bf16.msra.mxu0 %v5703
  %5953 = vmatpush.bf16.msra.mxu0 %v5695
  %5954 = vmatpush.bf16.msra.mxu0 %v5687
  %5955 = vmatpush.bf16.msra.mxu0 %v5679
  %5956 = vmatpush.bf16.msra.mxu0 %v5671
  %5957 = vmatpush.bf16.msra.mxu0 %v5663
  %5958 = vmatpush.bf16.msra.mxu0 %v5655
  %5959 = vmatpush.bf16.msra.mxu0 %v5647
  %5960 = vmatmul.bf16.gmra.mxu0 %v5066
  %v5961 = vpop.f32.mrf.mxu0
  %v5962 = vadd.f32 %v5949, %v5961
  %v5963 = vpop.f32.mrf.mxu0
  %5964 = vdwg.mxu0
  %5965 = vmatpush.bf16.msra.mxu0 %v5640
  %5966 = vmatpush.bf16.msra.mxu0 %v5632
  %5967 = vmatpush.bf16.msra.mxu0 %v5624
  %5968 = vmatpush.bf16.msra.mxu0 %v5616
  %5969 = vmatpush.bf16.msra.mxu0 %v5608
  %5970 = vmatpush.bf16.msra.mxu0 %v5600
  %5971 = vmatpush.bf16.msra.mxu0 %v5592
  %5972 = vmatpush.bf16.msra.mxu0 %v5584
  %5973 = vmatmul.bf16.gmra.mxu0 %v5065
  %v5974 = vpop.f32.mrf.mxu0
  %v5975 = vadd.f32 0.0, %v5974
  %v5976 = vpop.f32.mrf.mxu0
  %5977 = vdwg.mxu0
  %5978 = vmatpush.bf16.msra.mxu0 %v5704
  %5979 = vmatpush.bf16.msra.mxu0 %v5696
  %5980 = vmatpush.bf16.msra.mxu0 %v5688
  %5981 = vmatpush.bf16.msra.mxu0 %v5680
  %5982 = vmatpush.bf16.msra.mxu0 %v5672
  %5983 = vmatpush.bf16.msra.mxu0 %v5664
  %5984 = vmatpush.bf16.msra.mxu0 %v5656
  %5985 = vmatpush.bf16.msra.mxu0 %v5648
  %5986 = vmatmul.bf16.gmra.mxu0 %v5066
  %v5987 = vpop.f32.mrf.mxu0
  %v5988 = vadd.f32 %v5975, %v5987
  %v5989 = vpop.f32.mrf.mxu0
  %5990 = vdwg.mxu0
  %5991 = vmatpush.bf16.msra.mxu0 %v5641
  %5992 = vmatpush.bf16.msra.mxu0 %v5633
  %5993 = vmatpush.bf16.msra.mxu0 %v5625
  %5994 = vmatpush.bf16.msra.mxu0 %v5617
  %5995 = vmatpush.bf16.msra.mxu0 %v5609
  %5996 = vmatpush.bf16.msra.mxu0 %v5601
  %5997 = vmatpush.bf16.msra.mxu0 %v5593
  %5998 = vmatpush.bf16.msra.mxu0 %v5585
  %5999 = vmatmul.bf16.gmra.mxu0 %v5065
  %v6000 = vpop.f32.mrf.mxu0
  %v6001 = vadd.f32 0.0, %v6000
  %v6002 = vpop.f32.mrf.mxu0
  %6003 = vdwg.mxu0
  %6004 = vmatpush.bf16.msra.mxu0 %v5705
  %6005 = vmatpush.bf16.msra.mxu0 %v5697
  %6006 = vmatpush.bf16.msra.mxu0 %v5689
  %6007 = vmatpush.bf16.msra.mxu0 %v5681
  %6008 = vmatpush.bf16.msra.mxu0 %v5673
  %6009 = vmatpush.bf16.msra.mxu0 %v5665
  %6010 = vmatpush.bf16.msra.mxu0 %v5657
  %6011 = vmatpush.bf16.msra.mxu0 %v5649
  %6012 = vmatmul.bf16.gmra.mxu0 %v5066
  %v6013 = vpop.f32.mrf.mxu0
  %v6014 = vadd.f32 %v6001, %v6013
  %v6015 = vpop.f32.mrf.mxu0
  %6016 = vdwg.mxu0
  %6017 = vmatpush.bf16.msra.mxu0 %v5642
  %6018 = vmatpush.bf16.msra.mxu0 %v5634
  %6019 = vmatpush.bf16.msra.mxu0 %v5626
  %6020 = vmatpush.bf16.msra.mxu0 %v5618
  %6021 = vmatpush.bf16.msra.mxu0 %v5610
  %6022 = vmatpush.bf16.msra.mxu0 %v5602
  %6023 = vmatpush.bf16.msra.mxu0 %v5594
  %6024 = vmatpush.bf16.msra.mxu0 %v5586
  %6025 = vmatmul.bf16.gmra.mxu0 %v5065
  %v6026 = vpop.f32.mrf.mxu0
  %v6027 = vadd.f32 0.0, %v6026
  %v6028 = vpop.f32.mrf.mxu0
  %6029 = vdwg.mxu0
  %6030 = vmatpush.bf16.msra.mxu0 %v5706
  %6031 = vmatpush.bf16.msra.mxu0 %v5698
  %6032 = vmatpush.bf16.msra.mxu0 %v5690
  %6033 = vmatpush.bf16.msra.mxu0 %v5682
  %6034 = vmatpush.bf16.msra.mxu0 %v5674
  %6035 = vmatpush.bf16.msra.mxu0 %v5666
  %6036 = vmatpush.bf16.msra.mxu0 %v5658
  %6037 = vmatpush.bf16.msra.mxu0 %v5650
  %6038 = vmatmul.bf16.gmra.mxu0 %v5066
  %v6039 = vpop.f32.mrf.mxu0
  %v6040 = vadd.f32 %v6027, %v6039
  %v6041 = vpop.f32.mrf.mxu0
  %6042 = vdwg.mxu0
  %v6043 = vld [vmem:[%s4908] sm:$0xff]
  %v6044 = vld [vmem:[%s4908 + $0x8] sm:$0xff]
  %v6045 = vld [vmem:[%s4908 + $0x10] sm:$0xff]
  %v6046 = vld [vmem:[%s4908 + $0x18] sm:$0xff]
  %v6047 = vadd.f32 %v6043, %v5858
  %v6048 = vadd.f32 %v6044, %v5884
  %v6049 = vadd.f32 %v6045, %v5910
  %v6050 = vadd.f32 %v6046, %v5936
  %v6051 = vld [vmem:[%s4897 + $0x20] sm:$0xff]
  %v6052 = vld [vmem:[%s4897 + $0x28] sm:$0xff]
  %v6053 = vld [vmem:[%s4897 + $0x30] sm:$0xff]
  %v6054 = vld [vmem:[%s4897 + $0x38] sm:$0xff]
  %v6055 = vadd.f32 %v6051, %v5962
  %v6056 = vadd.f32 %v6052, %v5988
  %v6057 = vadd.f32 %v6053, %v6014
  %v6058 = vadd.f32 %v6054, %v6040
  %v6059 = vxor.u32 %v6047, 2147483648
  %v6060 = vmul.f32 %v6059, 1.442695
  %v6061 = vpow.pop %v6060
  %v6062 = vadd.f32 %v6061, 1.0
  %v6063 = vrcp.pop %v6062
  %v6064 = vmul.f32 %v6062, %v6063
  %v6065 = vsub.f32 1.0, %v6064
  %v6066 = vmul.f32 %v6063, %v6065
  %v6067 = vadd.f32 %v6063, %v6066
  %vm6068 = vweird.f32 %v6062
  %vm6069 = vweird.f32 %v6063
  %vm6070 = vmor %vm6068, %vm6069
  %v6071 = vsel %vm6070, %v6063, %v6067
  %v6072 = vand.u32 2147483647, %v6062
  %vm6073 = vcmp.eq.f32.partialorder %v6072, 8.507059e+37
  %v6074 = vand.u32 %v6062, 2147483648
  %v6075 = vor.u32 1.1754944e-38, %v6074
  %v6076 = vsel %vm6073, %v6075, %v6071
  %v6077 = vmul.f32 1.0, %v6076
  %v6078 = vxor.u32 %v6048, 2147483648
  %v6079 = vmul.f32 %v6078, 1.442695
  %v6080 = vpow.pop %v6079
  %v6081 = vadd.f32 %v6080, 1.0
  %v6082 = vrcp.pop %v6081
  %v6083 = vmul.f32 %v6081, %v6082
  %v6084 = vsub.f32 1.0, %v6083
  %v6085 = vmul.f32 %v6082, %v6084
  %v6086 = vadd.f32 %v6082, %v6085
  %vm6087 = vweird.f32 %v6081
  %vm6088 = vweird.f32 %v6082
  %vm6089 = vmor %vm6087, %vm6088
  %v6090 = vsel %vm6089, %v6082, %v6086
  %v6091 = vand.u32 2147483647, %v6081
  %vm6092 = vcmp.eq.f32.partialorder %v6091, 8.507059e+37
  %v6093 = vand.u32 %v6081, 2147483648
  %v6094 = vor.u32 1.1754944e-38, %v6093
  %v6095 = vsel %vm6092, %v6094, %v6090
  %v6096 = vmul.f32 1.0, %v6095
  %v6097 = vtanh.pop %v6049
  %v6098 = vxor.u32 %v6050, 2147483648
  %v6099 = vmul.f32 %v6098, 1.442695
  %v6100 = vpow.pop %v6099
  %v6101 = vadd.f32 %v6100, 1.0
  %v6102 = vrcp.pop %v6101
  %v6103 = vmul.f32 %v6101, %v6102
  %v6104 = vsub.f32 1.0, %v6103
  %v6105 = vmul.f32 %v6102, %v6104
  %v6106 = vadd.f32 %v6102, %v6105
  %vm6107 = vweird.f32 %v6101
  %vm6108 = vweird.f32 %v6102
  %vm6109 = vmor %vm6107, %vm6108
  %v6110 = vsel %vm6109, %v6102, %v6106
  %v6111 = vand.u32 2147483647, %v6101
  %vm6112 = vcmp.eq.f32.partialorder %v6111, 8.507059e+37
  %v6113 = vand.u32 %v6101, 2147483648
  %v6114 = vor.u32 1.1754944e-38, %v6113
  %v6115 = vsel %vm6112, %v6114, %v6110
  %v6116 = vmul.f32 1.0, %v6115
  %v6117 = vmul.f32 %v6096, %v5062
  %v6118 = vmul.f32 %v6077, %v6097
  %v6119 = vadd.f32 %v6117, %v6118
  %v6120 = vtanh.pop %v6119
  %v6121 = vmul.f32 %v6116, %v6120
  %v6122 = vxor.u32 %v6055, 2147483648
  %v6123 = vmul.f32 %v6122, 1.442695
  %v6124 = vpow.pop %v6123
  %v6125 = vadd.f32 %v6124, 1.0
  %v6126 = vrcp.pop %v6125
  %v6127 = vmul.f32 %v6125, %v6126
  %v6128 = vsub.f32 1.0, %v6127
  %v6129 = vmul.f32 %v6126, %v6128
  %v6130 = vadd.f32 %v6126, %v6129
  %vm6131 = vweird.f32 %v6125
  %vm6132 = vweird.f32 %v6126
  %vm6133 = vmor %vm6131, %vm6132
  %v6134 = vsel %vm6133, %v6126, %v6130
  %v6135 = vand.u32 2147483647, %v6125
  %vm6136 = vcmp.eq.f32.partialorder %v6135, 8.507059e+37
  %v6137 = vand.u32 %v6125, 2147483648
  %v6138 = vor.u32 1.1754944e-38, %v6137
  %v6139 = vsel %vm6136, %v6138, %v6134
  %v6140 = vmul.f32 1.0, %v6139
  %v6141 = vxor.u32 %v6056, 2147483648
  %v6142 = vmul.f32 %v6141, 1.442695
  %v6143 = vpow.pop %v6142
  %v6144 = vadd.f32 %v6143, 1.0
  %v6145 = vrcp.pop %v6144
  %v6146 = vmul.f32 %v6144, %v6145
  %v6147 = vsub.f32 1.0, %v6146
  %v6148 = vmul.f32 %v6145, %v6147
  %v6149 = vadd.f32 %v6145, %v6148
  %vm6150 = vweird.f32 %v6144
  %vm6151 = vweird.f32 %v6145
  %vm6152 = vmor %vm6150, %vm6151
  %v6153 = vsel %vm6152, %v6145, %v6149
  %v6154 = vand.u32 2147483647, %v6144
  %vm6155 = vcmp.eq.f32.partialorder %v6154, 8.507059e+37
  %v6156 = vand.u32 %v6144, 2147483648
  %v6157 = vor.u32 1.1754944e-38, %v6156
  %v6158 = vsel %vm6155, %v6157, %v6153
  %v6159 = vmul.f32 1.0, %v6158
  %v6160 = vtanh.pop %v6057
  %v6161 = vxor.u32 %v6058, 2147483648
  %v6162 = vmul.f32 %v6161, 1.442695
  %v6163 = vpow.pop %v6162
  %v6164 = vadd.f32 %v6163, 1.0
  %v6165 = vrcp.pop %v6164
  %v6166 = vmul.f32 %v6164, %v6165
  %v6167 = vsub.f32 1.0, %v6166
  %v6168 = vmul.f32 %v6165, %v6167
  %v6169 = vadd.f32 %v6165, %v6168
  %vm6170 = vweird.f32 %v6164
  %vm6171 = vweird.f32 %v6165
  %vm6172 = vmor %vm6170, %vm6171
  %v6173 = vsel %vm6172, %v6165, %v6169
  %v6174 = vand.u32 2147483647, %v6164
  %vm6175 = vcmp.eq.f32.partialorder %v6174, 8.507059e+37
  %v6176 = vand.u32 %v6164, 2147483648
  %v6177 = vor.u32 1.1754944e-38, %v6176
  %v6178 = vsel %vm6175, %v6177, %v6173
  %v6179 = vmul.f32 1.0, %v6178
  %v6180 = vmul.f32 %v6159, %v5064
  %v6181 = vmul.f32 %v6140, %v6160
  %v6182 = vadd.f32 %v6180, %v6181
  %v6183 = vtanh.pop %v6182
  %v6184 = vmul.f32 %v6179, %v6183
  %v6185 = vsel %vm5054, %v6121, 0.0
  %s6186 = scalar_lea.vmem %s5, 32
  %6187 = vst [vmem:[%s6186] sm:$0xff] %v6185
  %v6188 = vsel %vm5048, %v6184, 0.0
  %s6189 = scalar_lea.vmem %s6, 24
  %6190 = vst [vmem:[%s6189] sm:$0xff] %v6188
  %v6191 = vsel %vm5054, %v6121, %v5061
  %v6192 = vsel %vm5054, %v6119, %v5062
  %v6193 = vsel %vm5048, %v6184, %v5063
  %v6194 = vsel %vm5048, %v6182, %v5064
  %v6195 = vpack.c.bf16 %v6191, %v6191
  %v6196 = vpack.c.bf16 %v6193, %v6193
  %v6197 = vld [vmem:[%s3] sm:$0xff]
  %v6198 = vld [vmem:[%s3 + $0x8] sm:$0xff]
  %v6199 = vld [vmem:[%s3 + $0x10] sm:$0xff]
  %v6200 = vld [vmem:[%s3 + $0x18] sm:$0xff]
  %v6201 = vld [vmem:[%s3 + $0x20] sm:$0xff]
  %v6202 = vld [vmem:[%s3 + $0x28] sm:$0xff]
  %v6203 = vld [vmem:[%s3 + $0x30] sm:$0xff]
  %v6204 = vld [vmem:[%s3 + $0x38] sm:$0xff]
  %v6205 = vld [vmem:[%s3 + $0x40] sm:$0xff]
  %v6206 = vld [vmem:[%s3 + $0x48] sm:$0xff]
  %v6207 = vld [vmem:[%s3 + $0x50] sm:$0xff]
  %v6208 = vld [vmem:[%s3 + $0x58] sm:$0xff]
  %v6209 = vld [vmem:[%s3 + $0x60] sm:$0xff]
  %v6210 = vld [vmem:[%s3 + $0x68] sm:$0xff]
  %v6211 = vld [vmem:[%s3 + $0x70] sm:$0xff]
  %v6212 = vld [vmem:[%s3 + $0x78] sm:$0xff]
  %v6213 = vld [vmem:[%s3 + $0x80] sm:$0xff]
  %v6214 = vld [vmem:[%s3 + $0x88] sm:$0xff]
  %v6215 = vld [vmem:[%s3 + $0x90] sm:$0xff]
  %v6216 = vld [vmem:[%s3 + $0x98] sm:$0xff]
  %v6217 = vld [vmem:[%s3 + $0xa0] sm:$0xff]
  %v6218 = vld [vmem:[%s3 + $0xa8] sm:$0xff]
  %v6219 = vld [vmem:[%s3 + $0xb0] sm:$0xff]
  %v6220 = vld [vmem:[%s3 + $0xb8] sm:$0xff]
  %v6221 = vld [vmem:[%s3 + $0xc0] sm:$0xff]
  %v6222 = vld [vmem:[%s3 + $0xc8] sm:$0xff]
  %v6223 = vld [vmem:[%s3 + $0xd0] sm:$0xff]
  %v6224 = vld [vmem:[%s3 + $0xd8] sm:$0xff]
  %v6225 = vld [vmem:[%s3 + $0xe0] sm:$0xff]
  %v6226 = vld [vmem:[%s3 + $0xe8] sm:$0xff]
  %v6227 = vld [vmem:[%s3 + $0xf0] sm:$0xff]
  %v6228 = vld [vmem:[%s3 + $0xf8] sm:$0xff]
  %v6229 = vld [vmem:[%s3 + $0x100] sm:$0xff]
  %v6230 = vld [vmem:[%s3 + $0x108] sm:$0xff]
  %v6231 = vld [vmem:[%s3 + $0x110] sm:$0xff]
  %v6232 = vld [vmem:[%s3 + $0x118] sm:$0xff]
  %v6233 = vld [vmem:[%s3 + $0x120] sm:$0xff]
  %v6234 = vld [vmem:[%s3 + $0x128] sm:$0xff]
  %v6235 = vld [vmem:[%s3 + $0x130] sm:$0xff]
  %v6236 = vld [vmem:[%s3 + $0x138] sm:$0xff]
  %v6237 = vld [vmem:[%s3 + $0x140] sm:$0xff]
  %v6238 = vld [vmem:[%s3 + $0x148] sm:$0xff]
  %v6239 = vld [vmem:[%s3 + $0x150] sm:$0xff]
  %v6240 = vld [vmem:[%s3 + $0x158] sm:$0xff]
  %v6241 = vld [vmem:[%s3 + $0x160] sm:$0xff]
  %v6242 = vld [vmem:[%s3 + $0x168] sm:$0xff]
  %v6243 = vld [vmem:[%s3 + $0x170] sm:$0xff]
  %v6244 = vld [vmem:[%s3 + $0x178] sm:$0xff]
  %v6245 = vld [vmem:[%s3 + $0x180] sm:$0xff]
  %v6246 = vld [vmem:[%s3 + $0x188] sm:$0xff]
  %v6247 = vld [vmem:[%s3 + $0x190] sm:$0xff]
  %v6248 = vld [vmem:[%s3 + $0x198] sm:$0xff]
  %v6249 = vld [vmem:[%s3 + $0x1a0] sm:$0xff]
  %v6250 = vld [vmem:[%s3 + $0x1a8] sm:$0xff]
  %v6251 = vld [vmem:[%s3 + $0x1b0] sm:$0xff]
  %v6252 = vld [vmem:[%s3 + $0x1b8] sm:$0xff]
  %v6253 = vld [vmem:[%s3 + $0x1c0] sm:$0xff]
  %v6254 = vld [vmem:[%s3 + $0x1c8] sm:$0xff]
  %v6255 = vld [vmem:[%s3 + $0x1d0] sm:$0xff]
  %v6256 = vld [vmem:[%s3 + $0x1d8] sm:$0xff]
  %v6257 = vld [vmem:[%s3 + $0x1e0] sm:$0xff]
  %v6258 = vld [vmem:[%s3 + $0x1e8] sm:$0xff]
  %v6259 = vld [vmem:[%s3 + $0x1f0] sm:$0xff]
  %v6260 = vld [vmem:[%s3 + $0x1f8] sm:$0xff]
  %v6261 = vld [vmem:[%s3 + $0x200] sm:$0xff]
  %v6262 = vld [vmem:[%s3 + $0x208] sm:$0xff]
  %v6263 = vld [vmem:[%s3 + $0x210] sm:$0xff]
  %v6264 = vld [vmem:[%s3 + $0x218] sm:$0xff]
  %v6265 = vld [vmem:[%s3 + $0x220] sm:$0xff]
  %v6266 = vld [vmem:[%s3 + $0x228] sm:$0xff]
  %v6267 = vld [vmem:[%s3 + $0x230] sm:$0xff]
  %v6268 = vld [vmem:[%s3 + $0x238] sm:$0xff]
  %v6269 = vld [vmem:[%s3 + $0x240] sm:$0xff]
  %v6270 = vld [vmem:[%s3 + $0x248] sm:$0xff]
  %v6271 = vld [vmem:[%s3 + $0x250] sm:$0xff]
  %v6272 = vld [vmem:[%s3 + $0x258] sm:$0xff]
  %v6273 = vld [vmem:[%s3 + $0x260] sm:$0xff]
  %v6274 = vld [vmem:[%s3 + $0x268] sm:$0xff]
  %v6275 = vld [vmem:[%s3 + $0x270] sm:$0xff]
  %v6276 = vld [vmem:[%s3 + $0x278] sm:$0xff]
  %v6277 = vld [vmem:[%s3 + $0x280] sm:$0xff]
  %v6278 = vld [vmem:[%s3 + $0x288] sm:$0xff]
  %v6279 = vld [vmem:[%s3 + $0x290] sm:$0xff]
  %v6280 = vld [vmem:[%s3 + $0x298] sm:$0xff]
  %v6281 = vld [vmem:[%s3 + $0x2a0] sm:$0xff]
  %v6282 = vld [vmem:[%s3 + $0x2a8] sm:$0xff]
  %v6283 = vld [vmem:[%s3 + $0x2b0] sm:$0xff]
  %v6284 = vld [vmem:[%s3 + $0x2b8] sm:$0xff]
  %v6285 = vld [vmem:[%s3 + $0x2c0] sm:$0xff]
  %v6286 = vld [vmem:[%s3 + $0x2c8] sm:$0xff]
  %v6287 = vld [vmem:[%s3 + $0x2d0] sm:$0xff]
  %v6288 = vld [vmem:[%s3 + $0x2d8] sm:$0xff]
  %v6289 = vld [vmem:[%s3 + $0x2e0] sm:$0xff]
  %v6290 = vld [vmem:[%s3 + $0x2e8] sm:$0xff]
  %v6291 = vld [vmem:[%s3 + $0x2f0] sm:$0xff]
  %v6292 = vld [vmem:[%s3 + $0x2f8] sm:$0xff]
  %v6293 = vld [vmem:[%s3 + $0x300] sm:$0xff]
  %v6294 = vld [vmem:[%s3 + $0x308] sm:$0xff]
  %v6295 = vld [vmem:[%s3 + $0x310] sm:$0xff]
  %v6296 = vld [vmem:[%s3 + $0x318] sm:$0xff]
  %v6297 = vld [vmem:[%s3 + $0x320] sm:$0xff]
  %v6298 = vld [vmem:[%s3 + $0x328] sm:$0xff]
  %v6299 = vld [vmem:[%s3 + $0x330] sm:$0xff]
  %v6300 = vld [vmem:[%s3 + $0x338] sm:$0xff]
  %v6301 = vld [vmem:[%s3 + $0x340] sm:$0xff]
  %v6302 = vld [vmem:[%s3 + $0x348] sm:$0xff]
  %v6303 = vld [vmem:[%s3 + $0x350] sm:$0xff]
  %v6304 = vld [vmem:[%s3 + $0x358] sm:$0xff]
  %v6305 = vld [vmem:[%s3 + $0x360] sm:$0xff]
  %v6306 = vld [vmem:[%s3 + $0x368] sm:$0xff]
  %v6307 = vld [vmem:[%s3 + $0x370] sm:$0xff]
  %v6308 = vld [vmem:[%s3 + $0x378] sm:$0xff]
  %v6309 = vld [vmem:[%s3 + $0x380] sm:$0xff]
  %v6310 = vld [vmem:[%s3 + $0x388] sm:$0xff]
  %v6311 = vld [vmem:[%s3 + $0x390] sm:$0xff]
  %v6312 = vld [vmem:[%s3 + $0x398] sm:$0xff]
  %v6313 = vld [vmem:[%s3 + $0x3a0] sm:$0xff]
  %v6314 = vld [vmem:[%s3 + $0x3a8] sm:$0xff]
  %v6315 = vld [vmem:[%s3 + $0x3b0] sm:$0xff]
  %v6316 = vld [vmem:[%s3 + $0x3b8] sm:$0xff]
  %v6317 = vld [vmem:[%s3 + $0x3c0] sm:$0xff]
  %v6318 = vld [vmem:[%s3 + $0x3c8] sm:$0xff]
  %v6319 = vld [vmem:[%s3 + $0x3d0] sm:$0xff]
  %v6320 = vld [vmem:[%s3 + $0x3d8] sm:$0xff]
  %v6321 = vld [vmem:[%s3 + $0x3e0] sm:$0xff]
  %v6322 = vld [vmem:[%s3 + $0x3e8] sm:$0xff]
  %v6323 = vld [vmem:[%s3 + $0x3f0] sm:$0xff]
  %v6324 = vld [vmem:[%s3 + $0x3f8] sm:$0xff]
  %v6453 = vunpack.c.l.b16 %v6197
  %v6454 = vunpack.c.h.b16 %v6197
  %v6455 = vunpack.c.l.b16 %v6198
  %v6456 = vunpack.c.h.b16 %v6198
  %v6457 = vunpack.c.l.b16 %v6199
  %v6458 = vunpack.c.h.b16 %v6199
  %v6459 = vunpack.c.l.b16 %v6200
  %v6460 = vunpack.c.h.b16 %v6200
  %v6461 = vunpack.c.l.b16 %v6201
  %v6462 = vunpack.c.h.b16 %v6201
  %v6463 = vunpack.c.l.b16 %v6202
  %v6464 = vunpack.c.h.b16 %v6202
  %v6465 = vunpack.c.l.b16 %v6203
  %v6466 = vunpack.c.h.b16 %v6203
  %v6467 = vunpack.c.l.b16 %v6204
  %v6468 = vunpack.c.h.b16 %v6204
  %v6469 = vunpack.c.l.b16 %v6205
  %v6470 = vunpack.c.h.b16 %v6205
  %v6471 = vunpack.c.l.b16 %v6206
  %v6472 = vunpack.c.h.b16 %v6206
  %v6473 = vunpack.c.l.b16 %v6207
  %v6474 = vunpack.c.h.b16 %v6207
  %v6475 = vunpack.c.l.b16 %v6208
  %v6476 = vunpack.c.h.b16 %v6208
  %v6477 = vunpack.c.l.b16 %v6209
  %v6478 = vunpack.c.h.b16 %v6209
  %v6479 = vunpack.c.l.b16 %v6210
  %v6480 = vunpack.c.h.b16 %v6210
  %v6481 = vunpack.c.l.b16 %v6211
  %v6482 = vunpack.c.h.b16 %v6211
  %v6483 = vunpack.c.l.b16 %v6212
  %v6484 = vunpack.c.h.b16 %v6212
  %v6485 = vunpack.c.l.b16 %v6213
  %v6486 = vunpack.c.h.b16 %v6213
  %v6487 = vunpack.c.l.b16 %v6214
  %v6488 = vunpack.c.h.b16 %v6214
  %v6489 = vunpack.c.l.b16 %v6215
  %v6490 = vunpack.c.h.b16 %v6215
  %v6491 = vunpack.c.l.b16 %v6216
  %v6492 = vunpack.c.h.b16 %v6216
  %v6493 = vunpack.c.l.b16 %v6217
  %v6494 = vunpack.c.h.b16 %v6217
  %v6495 = vunpack.c.l.b16 %v6218
  %v6496 = vunpack.c.h.b16 %v6218
  %v6497 = vunpack.c.l.b16 %v6219
  %v6498 = vunpack.c.h.b16 %v6219
  %v6499 = vunpack.c.l.b16 %v6220
  %v6500 = vunpack.c.h.b16 %v6220
  %v6501 = vunpack.c.l.b16 %v6221
  %v6502 = vunpack.c.h.b16 %v6221
  %v6503 = vunpack.c.l.b16 %v6222
  %v6504 = vunpack.c.h.b16 %v6222
  %v6505 = vunpack.c.l.b16 %v6223
  %v6506 = vunpack.c.h.b16 %v6223
  %v6507 = vunpack.c.l.b16 %v6224
  %v6508 = vunpack.c.h.b16 %v6224
  %v6509 = vunpack.c.l.b16 %v6225
  %v6510 = vunpack.c.h.b16 %v6225
  %v6511 = vunpack.c.l.b16 %v6226
  %v6512 = vunpack.c.h.b16 %v6226
  %v6513 = vunpack.c.l.b16 %v6227
  %v6514 = vunpack.c.h.b16 %v6227
  %v6515 = vunpack.c.l.b16 %v6228
  %v6516 = vunpack.c.h.b16 %v6228
  %v6517 = vunpack.c.l.b16 %v6229
  %v6518 = vunpack.c.h.b16 %v6229
  %v6519 = vunpack.c.l.b16 %v6230
  %v6520 = vunpack.c.h.b16 %v6230
  %v6521 = vunpack.c.l.b16 %v6231
  %v6522 = vunpack.c.h.b16 %v6231
  %v6523 = vunpack.c.l.b16 %v6232
  %v6524 = vunpack.c.h.b16 %v6232
  %v6525 = vunpack.c.l.b16 %v6233
  %v6526 = vunpack.c.h.b16 %v6233
  %v6527 = vunpack.c.l.b16 %v6234
  %v6528 = vunpack.c.h.b16 %v6234
  %v6529 = vunpack.c.l.b16 %v6235
  %v6530 = vunpack.c.h.b16 %v6235
  %v6531 = vunpack.c.l.b16 %v6236
  %v6532 = vunpack.c.h.b16 %v6236
  %v6533 = vunpack.c.l.b16 %v6237
  %v6534 = vunpack.c.h.b16 %v6237
  %v6535 = vunpack.c.l.b16 %v6238
  %v6536 = vunpack.c.h.b16 %v6238
  %v6537 = vunpack.c.l.b16 %v6239
  %v6538 = vunpack.c.h.b16 %v6239
  %v6539 = vunpack.c.l.b16 %v6240
  %v6540 = vunpack.c.h.b16 %v6240
  %v6541 = vunpack.c.l.b16 %v6241
  %v6542 = vunpack.c.h.b16 %v6241
  %v6543 = vunpack.c.l.b16 %v6242
  %v6544 = vunpack.c.h.b16 %v6242
  %v6545 = vunpack.c.l.b16 %v6243
  %v6546 = vunpack.c.h.b16 %v6243
  %v6547 = vunpack.c.l.b16 %v6244
  %v6548 = vunpack.c.h.b16 %v6244
  %v6549 = vunpack.c.l.b16 %v6245
  %v6550 = vunpack.c.h.b16 %v6245
  %v6551 = vunpack.c.l.b16 %v6246
  %v6552 = vunpack.c.h.b16 %v6246
  %v6553 = vunpack.c.l.b16 %v6247
  %v6554 = vunpack.c.h.b16 %v6247
  %v6555 = vunpack.c.l.b16 %v6248
  %v6556 = vunpack.c.h.b16 %v6248
  %v6557 = vunpack.c.l.b16 %v6249
  %v6558 = vunpack.c.h.b16 %v6249
  %v6559 = vunpack.c.l.b16 %v6250
  %v6560 = vunpack.c.h.b16 %v6250
  %v6561 = vunpack.c.l.b16 %v6251
  %v6562 = vunpack.c.h.b16 %v6251
  %v6563 = vunpack.c.l.b16 %v6252
  %v6564 = vunpack.c.h.b16 %v6252
  %v6565 = vunpack.c.l.b16 %v6253
  %v6566 = vunpack.c.h.b16 %v6253
  %v6567 = vunpack.c.l.b16 %v6254
  %v6568 = vunpack.c.h.b16 %v6254
  %v6569 = vunpack.c.l.b16 %v6255
  %v6570 = vunpack.c.h.b16 %v6255
  %v6571 = vunpack.c.l.b16 %v6256
  %v6572 = vunpack.c.h.b16 %v6256
  %v6573 = vunpack.c.l.b16 %v6257
  %v6574 = vunpack.c.h.b16 %v6257
  %v6575 = vunpack.c.l.b16 %v6258
  %v6576 = vunpack.c.h.b16 %v6258
  %v6577 = vunpack.c.l.b16 %v6259
  %v6578 = vunpack.c.h.b16 %v6259
  %v6579 = vunpack.c.l.b16 %v6260
  %v6580 = vunpack.c.h.b16 %v6260
  %v6581 = vunpack.c.l.b16 %v6261
  %v6582 = vunpack.c.h.b16 %v6261
  %v6583 = vunpack.c.l.b16 %v6262
  %v6584 = vunpack.c.h.b16 %v6262
  %v6585 = vunpack.c.l.b16 %v6263
  %v6586 = vunpack.c.h.b16 %v6263
  %v6587 = vunpack.c.l.b16 %v6264
  %v6588 = vunpack.c.h.b16 %v6264
  %v6589 = vunpack.c.l.b16 %v6265
  %v6590 = vunpack.c.h.b16 %v6265
  %v6591 = vunpack.c.l.b16 %v6266
  %v6592 = vunpack.c.h.b16 %v6266
  %v6593 = vunpack.c.l.b16 %v6267
  %v6594 = vunpack.c.h.b16 %v6267
  %v6595 = vunpack.c.l.b16 %v6268
  %v6596 = vunpack.c.h.b16 %v6268
  %v6597 = vunpack.c.l.b16 %v6269
  %v6598 = vunpack.c.h.b16 %v6269
  %v6599 = vunpack.c.l.b16 %v6270
  %v6600 = vunpack.c.h.b16 %v6270
  %v6601 = vunpack.c.l.b16 %v6271
  %v6602 = vunpack.c.h.b16 %v6271
  %v6603 = vunpack.c.l.b16 %v6272
  %v6604 = vunpack.c.h.b16 %v6272
  %v6605 = vunpack.c.l.b16 %v6273
  %v6606 = vunpack.c.h.b16 %v6273
  %v6607 = vunpack.c.l.b16 %v6274
  %v6608 = vunpack.c.h.b16 %v6274
  %v6609 = vunpack.c.l.b16 %v6275
  %v6610 = vunpack.c.h.b16 %v6275
  %v6611 = vunpack.c.l.b16 %v6276
  %v6612 = vunpack.c.h.b16 %v6276
  %v6613 = vunpack.c.l.b16 %v6277
  %v6614 = vunpack.c.h.b16 %v6277
  %v6615 = vunpack.c.l.b16 %v6278
  %v6616 = vunpack.c.h.b16 %v6278
  %v6617 = vunpack.c.l.b16 %v6279
  %v6618 = vunpack.c.h.b16 %v6279
  %v6619 = vunpack.c.l.b16 %v6280
  %v6620 = vunpack.c.h.b16 %v6280
  %v6621 = vunpack.c.l.b16 %v6281
  %v6622 = vunpack.c.h.b16 %v6281
  %v6623 = vunpack.c.l.b16 %v6282
  %v6624 = vunpack.c.h.b16 %v6282
  %v6625 = vunpack.c.l.b16 %v6283
  %v6626 = vunpack.c.h.b16 %v6283
  %v6627 = vunpack.c.l.b16 %v6284
  %v6628 = vunpack.c.h.b16 %v6284
  %v6629 = vunpack.c.l.b16 %v6285
  %v6630 = vunpack.c.h.b16 %v6285
  %v6631 = vunpack.c.l.b16 %v6286
  %v6632 = vunpack.c.h.b16 %v6286
  %v6633 = vunpack.c.l.b16 %v6287
  %v6634 = vunpack.c.h.b16 %v6287
  %v6635 = vunpack.c.l.b16 %v6288
  %v6636 = vunpack.c.h.b16 %v6288
  %v6637 = vunpack.c.l.b16 %v6289
  %v6638 = vunpack.c.h.b16 %v6289
  %v6639 = vunpack.c.l.b16 %v6290
  %v6640 = vunpack.c.h.b16 %v6290
  %v6641 = vunpack.c.l.b16 %v6291
  %v6642 = vunpack.c.h.b16 %v6291
  %v6643 = vunpack.c.l.b16 %v6292
  %v6644 = vunpack.c.h.b16 %v6292
  %v6645 = vunpack.c.l.b16 %v6293
  %v6646 = vunpack.c.h.b16 %v6293
  %v6647 = vunpack.c.l.b16 %v6294
  %v6648 = vunpack.c.h.b16 %v6294
  %v6649 = vunpack.c.l.b16 %v6295
  %v6650 = vunpack.c.h.b16 %v6295
  %v6651 = vunpack.c.l.b16 %v6296
  %v6652 = vunpack.c.h.b16 %v6296
  %v6653 = vunpack.c.l.b16 %v6297
  %v6654 = vunpack.c.h.b16 %v6297
  %v6655 = vunpack.c.l.b16 %v6298
  %v6656 = vunpack.c.h.b16 %v6298
  %v6657 = vunpack.c.l.b16 %v6299
  %v6658 = vunpack.c.h.b16 %v6299
  %v6659 = vunpack.c.l.b16 %v6300
  %v6660 = vunpack.c.h.b16 %v6300
  %v6661 = vunpack.c.l.b16 %v6301
  %v6662 = vunpack.c.h.b16 %v6301
  %v6663 = vunpack.c.l.b16 %v6302
  %v6664 = vunpack.c.h.b16 %v6302
  %v6665 = vunpack.c.l.b16 %v6303
  %v6666 = vunpack.c.h.b16 %v6303
  %v6667 = vunpack.c.l.b16 %v6304
  %v6668 = vunpack.c.h.b16 %v6304
  %v6669 = vunpack.c.l.b16 %v6305
  %v6670 = vunpack.c.h.b16 %v6305
  %v6671 = vunpack.c.l.b16 %v6306
  %v6672 = vunpack.c.h.b16 %v6306
  %v6673 = vunpack.c.l.b16 %v6307
  %v6674 = vunpack.c.h.b16 %v6307
  %v6675 = vunpack.c.l.b16 %v6308
  %v6676 = vunpack.c.h.b16 %v6308
  %v6677 = vunpack.c.l.b16 %v6309
  %v6678 = vunpack.c.h.b16 %v6309
  %v6679 = vunpack.c.l.b16 %v6310
  %v6680 = vunpack.c.h.b16 %v6310
  %v6681 = vunpack.c.l.b16 %v6311
  %v6682 = vunpack.c.h.b16 %v6311
  %v6683 = vunpack.c.l.b16 %v6312
  %v6684 = vunpack.c.h.b16 %v6312
  %v6685 = vunpack.c.l.b16 %v6313
  %v6686 = vunpack.c.h.b16 %v6313
  %v6687 = vunpack.c.l.b16 %v6314
  %v6688 = vunpack.c.h.b16 %v6314
  %v6689 = vunpack.c.l.b16 %v6315
  %v6690 = vunpack.c.h.b16 %v6315
  %v6691 = vunpack.c.l.b16 %v6316
  %v6692 = vunpack.c.h.b16 %v6316
  %v6693 = vunpack.c.l.b16 %v6317
  %v6694 = vunpack.c.h.b16 %v6317
  %v6695 = vunpack.c.l.b16 %v6318
  %v6696 = vunpack.c.h.b16 %v6318
  %v6697 = vunpack.c.l.b16 %v6319
  %v6698 = vunpack.c.h.b16 %v6319
  %v6699 = vunpack.c.l.b16 %v6320
  %v6700 = vunpack.c.h.b16 %v6320
  %v6701 = vunpack.c.l.b16 %v6321
  %v6702 = vunpack.c.h.b16 %v6321
  %v6703 = vunpack.c.l.b16 %v6322
  %v6704 = vunpack.c.h.b16 %v6322
  %v6705 = vunpack.c.l.b16 %v6323
  %v6706 = vunpack.c.h.b16 %v6323
  %v6707 = vunpack.c.l.b16 %v6324
  %v6708 = vunpack.c.h.b16 %v6324
  %v6709 = vpack.c.b16 %v6461, %v6453
  %v6710 = vpack.c.b16 %v6462, %v6454
  %v6711 = vpack.c.b16 %v6463, %v6455
  %v6712 = vpack.c.b16 %v6464, %v6456
  %v6713 = vpack.c.b16 %v6465, %v6457
  %v6714 = vpack.c.b16 %v6466, %v6458
  %v6715 = vpack.c.b16 %v6467, %v6459
  %v6716 = vpack.c.b16 %v6468, %v6460
  %v6717 = vpack.c.b16 %v6477, %v6469
  %v6718 = vpack.c.b16 %v6478, %v6470
  %v6719 = vpack.c.b16 %v6479, %v6471
  %v6720 = vpack.c.b16 %v6480, %v6472
  %v6721 = vpack.c.b16 %v6481, %v6473
  %v6722 = vpack.c.b16 %v6482, %v6474
  %v6723 = vpack.c.b16 %v6483, %v6475
  %v6724 = vpack.c.b16 %v6484, %v6476
  %v6725 = vpack.c.b16 %v6493, %v6485
  %v6726 = vpack.c.b16 %v6494, %v6486
  %v6727 = vpack.c.b16 %v6495, %v6487
  %v6728 = vpack.c.b16 %v6496, %v6488
  %v6729 = vpack.c.b16 %v6497, %v6489
  %v6730 = vpack.c.b16 %v6498, %v6490
  %v6731 = vpack.c.b16 %v6499, %v6491
  %v6732 = vpack.c.b16 %v6500, %v6492
  %v6733 = vpack.c.b16 %v6509, %v6501
  %v6734 = vpack.c.b16 %v6510, %v6502
  %v6735 = vpack.c.b16 %v6511, %v6503
  %v6736 = vpack.c.b16 %v6512, %v6504
  %v6737 = vpack.c.b16 %v6513, %v6505
  %v6738 = vpack.c.b16 %v6514, %v6506
  %v6739 = vpack.c.b16 %v6515, %v6507
  %v6740 = vpack.c.b16 %v6516, %v6508
  %v6741 = vpack.c.b16 %v6525, %v6517
  %v6742 = vpack.c.b16 %v6526, %v6518
  %v6743 = vpack.c.b16 %v6527, %v6519
  %v6744 = vpack.c.b16 %v6528, %v6520
  %v6745 = vpack.c.b16 %v6529, %v6521
  %v6746 = vpack.c.b16 %v6530, %v6522
  %v6747 = vpack.c.b16 %v6531, %v6523
  %v6748 = vpack.c.b16 %v6532, %v6524
  %v6749 = vpack.c.b16 %v6541, %v6533
  %v6750 = vpack.c.b16 %v6542, %v6534
  %v6751 = vpack.c.b16 %v6543, %v6535
  %v6752 = vpack.c.b16 %v6544, %v6536
  %v6753 = vpack.c.b16 %v6545, %v6537
  %v6754 = vpack.c.b16 %v6546, %v6538
  %v6755 = vpack.c.b16 %v6547, %v6539
  %v6756 = vpack.c.b16 %v6548, %v6540
  %v6757 = vpack.c.b16 %v6557, %v6549
  %v6758 = vpack.c.b16 %v6558, %v6550
  %v6759 = vpack.c.b16 %v6559, %v6551
  %v6760 = vpack.c.b16 %v6560, %v6552
  %v6761 = vpack.c.b16 %v6561, %v6553
  %v6762 = vpack.c.b16 %v6562, %v6554
  %v6763 = vpack.c.b16 %v6563, %v6555
  %v6764 = vpack.c.b16 %v6564, %v6556
  %v6765 = vpack.c.b16 %v6573, %v6565
  %v6766 = vpack.c.b16 %v6574, %v6566
  %v6767 = vpack.c.b16 %v6575, %v6567
  %v6768 = vpack.c.b16 %v6576, %v6568
  %v6769 = vpack.c.b16 %v6577, %v6569
  %v6770 = vpack.c.b16 %v6578, %v6570
  %v6771 = vpack.c.b16 %v6579, %v6571
  %v6772 = vpack.c.b16 %v6580, %v6572
  %v6773 = vpack.c.b16 %v6589, %v6581
  %v6774 = vpack.c.b16 %v6590, %v6582
  %v6775 = vpack.c.b16 %v6591, %v6583
  %v6776 = vpack.c.b16 %v6592, %v6584
  %v6777 = vpack.c.b16 %v6593, %v6585
  %v6778 = vpack.c.b16 %v6594, %v6586
  %v6779 = vpack.c.b16 %v6595, %v6587
  %v6780 = vpack.c.b16 %v6596, %v6588
  %v6781 = vpack.c.b16 %v6605, %v6597
  %v6782 = vpack.c.b16 %v6606, %v6598
  %v6783 = vpack.c.b16 %v6607, %v6599
  %v6784 = vpack.c.b16 %v6608, %v6600
  %v6785 = vpack.c.b16 %v6609, %v6601
  %v6786 = vpack.c.b16 %v6610, %v6602
  %v6787 = vpack.c.b16 %v6611, %v6603
  %v6788 = vpack.c.b16 %v6612, %v6604
  %v6789 = vpack.c.b16 %v6621, %v6613
  %v6790 = vpack.c.b16 %v6622, %v6614
  %v6791 = vpack.c.b16 %v6623, %v6615
  %v6792 = vpack.c.b16 %v6624, %v6616
  %v6793 = vpack.c.b16 %v6625, %v6617
  %v6794 = vpack.c.b16 %v6626, %v6618
  %v6795 = vpack.c.b16 %v6627, %v6619
  %v6796 = vpack.c.b16 %v6628, %v6620
  %v6797 = vpack.c.b16 %v6637, %v6629
  %v6798 = vpack.c.b16 %v6638, %v6630
  %v6799 = vpack.c.b16 %v6639, %v6631
  %v6800 = vpack.c.b16 %v6640, %v6632
  %v6801 = vpack.c.b16 %v6641, %v6633
  %v6802 = vpack.c.b16 %v6642, %v6634
  %v6803 = vpack.c.b16 %v6643, %v6635
  %v6804 = vpack.c.b16 %v6644, %v6636
  %v6805 = vpack.c.b16 %v6653, %v6645
  %v6806 = vpack.c.b16 %v6654, %v6646
  %v6807 = vpack.c.b16 %v6655, %v6647
  %v6808 = vpack.c.b16 %v6656, %v6648
  %v6809 = vpack.c.b16 %v6657, %v6649
  %v6810 = vpack.c.b16 %v6658, %v6650
  %v6811 = vpack.c.b16 %v6659, %v6651
  %v6812 = vpack.c.b16 %v6660, %v6652
  %v6813 = vpack.c.b16 %v6669, %v6661
  %v6814 = vpack.c.b16 %v6670, %v6662
  %v6815 = vpack.c.b16 %v6671, %v6663
  %v6816 = vpack.c.b16 %v6672, %v6664
  %v6817 = vpack.c.b16 %v6673, %v6665
  %v6818 = vpack.c.b16 %v6674, %v6666
  %v6819 = vpack.c.b16 %v6675, %v6667
  %v6820 = vpack.c.b16 %v6676, %v6668
  %v6821 = vpack.c.b16 %v6685, %v6677
  %v6822 = vpack.c.b16 %v6686, %v6678
  %v6823 = vpack.c.b16 %v6687, %v6679
  %v6824 = vpack.c.b16 %v6688, %v6680
  %v6825 = vpack.c.b16 %v6689, %v6681
  %v6826 = vpack.c.b16 %v6690, %v6682
  %v6827 = vpack.c.b16 %v6691, %v6683
  %v6828 = vpack.c.b16 %v6692, %v6684
  %v6829 = vpack.c.b16 %v6701, %v6693
  %v6830 = vpack.c.b16 %v6702, %v6694
  %v6831 = vpack.c.b16 %v6703, %v6695
  %v6832 = vpack.c.b16 %v6704, %v6696
  %v6833 = vpack.c.b16 %v6705, %v6697
  %v6834 = vpack.c.b16 %v6706, %v6698
  %v6835 = vpack.c.b16 %v6707, %v6699
  %v6836 = vpack.c.b16 %v6708, %v6700
  %6965 = vmatpush.bf16.msra.mxu0 %v6765
  %6966 = vmatpush.bf16.msra.mxu0 %v6757
  %6967 = vmatpush.bf16.msra.mxu0 %v6749
  %6968 = vmatpush.bf16.msra.mxu0 %v6741
  %6969 = vmatpush.bf16.msra.mxu0 %v6733
  %6970 = vmatpush.bf16.msra.mxu0 %v6725
  %6971 = vmatpush.bf16.msra.mxu0 %v6717
  %6972 = vmatpush.bf16.msra.mxu0 %v6709
  %6973 = vmatmul.bf16.gmra.mxu0 %v6195
  %v6974 = vpop.f32.mrf.mxu0
  %v6975 = vadd.f32 0.0, %v6974
  %v6976 = vpop.f32.mrf.mxu0
  %6977 = vdwg.mxu0
  %6978 = vmatpush.bf16.msra.mxu0 %v6829
  %6979 = vmatpush.bf16.msra.mxu0 %v6821
  %6980 = vmatpush.bf16.msra.mxu0 %v6813
  %6981 = vmatpush.bf16.msra.mxu0 %v6805
  %6982 = vmatpush.bf16.msra.mxu0 %v6797
  %6983 = vmatpush.bf16.msra.mxu0 %v6789
  %6984 = vmatpush.bf16.msra.mxu0 %v6781
  %6985 = vmatpush.bf16.msra.mxu0 %v6773
  %6986 = vmatmul.bf16.gmra.mxu0 %v6196
  %v6987 = vpop.f32.mrf.mxu0
  %v6988 = vadd.f32 %v6975, %v6987
  %v6989 = vpop.f32.mrf.mxu0
  %6990 = vdwg.mxu0
  %6991 = vmatpush.bf16.msra.mxu0 %v6766
  %6992 = vmatpush.bf16.msra.mxu0 %v6758
  %6993 = vmatpush.bf16.msra.mxu0 %v6750
  %6994 = vmatpush.bf16.msra.mxu0 %v6742
  %6995 = vmatpush.bf16.msra.mxu0 %v6734
  %6996 = vmatpush.bf16.msra.mxu0 %v6726
  %6997 = vmatpush.bf16.msra.mxu0 %v6718
  %6998 = vmatpush.bf16.msra.mxu0 %v6710
  %6999 = vmatmul.bf16.gmra.mxu0 %v6195
  %v7000 = vpop.f32.mrf.mxu0
  %v7001 = vadd.f32 0.0, %v7000
  %v7002 = vpop.f32.mrf.mxu0
  %7003 = vdwg.mxu0
  %7004 = vmatpush.bf16.msra.mxu0 %v6830
  %7005 = vmatpush.bf16.msra.mxu0 %v6822
  %7006 = vmatpush.bf16.msra.mxu0 %v6814
  %7007 = vmatpush.bf16.msra.mxu0 %v6806
  %7008 = vmatpush.bf16.msra.mxu0 %v6798
  %7009 = vmatpush.bf16.msra.mxu0 %v6790
  %7010 = vmatpush.bf16.msra.mxu0 %v6782
  %7011 = vmatpush.bf16.msra.mxu0 %v6774
  %7012 = vmatmul.bf16.gmra.mxu0 %v6196
  %v7013 = vpop.f32.mrf.mxu0
  %v7014 = vadd.f32 %v7001, %v7013
  %v7015 = vpop.f32.mrf.mxu0
  %7016 = vdwg.mxu0
  %7017 = vmatpush.bf16.msra.mxu0 %v6767
  %7018 = vmatpush.bf16.msra.mxu0 %v6759
  %7019 = vmatpush.bf16.msra.mxu0 %v6751
  %7020 = vmatpush.bf16.msra.mxu0 %v6743
  %7021 = vmatpush.bf16.msra.mxu0 %v6735
  %7022 = vmatpush.bf16.msra.mxu0 %v6727
  %7023 = vmatpush.bf16.msra.mxu0 %v6719
  %7024 = vmatpush.bf16.msra.mxu0 %v6711
  %7025 = vmatmul.bf16.gmra.mxu0 %v6195
  %v7026 = vpop.f32.mrf.mxu0
  %v7027 = vadd.f32 0.0, %v7026
  %v7028 = vpop.f32.mrf.mxu0
  %7029 = vdwg.mxu0
  %7030 = vmatpush.bf16.msra.mxu0 %v6831
  %7031 = vmatpush.bf16.msra.mxu0 %v6823
  %7032 = vmatpush.bf16.msra.mxu0 %v6815
  %7033 = vmatpush.bf16.msra.mxu0 %v6807
  %7034 = vmatpush.bf16.msra.mxu0 %v6799
  %7035 = vmatpush.bf16.msra.mxu0 %v6791
  %7036 = vmatpush.bf16.msra.mxu0 %v6783
  %7037 = vmatpush.bf16.msra.mxu0 %v6775
  %7038 = vmatmul.bf16.gmra.mxu0 %v6196
  %v7039 = vpop.f32.mrf.mxu0
  %v7040 = vadd.f32 %v7027, %v7039
  %v7041 = vpop.f32.mrf.mxu0
  %7042 = vdwg.mxu0
  %7043 = vmatpush.bf16.msra.mxu0 %v6768
  %7044 = vmatpush.bf16.msra.mxu0 %v6760
  %7045 = vmatpush.bf16.msra.mxu0 %v6752
  %7046 = vmatpush.bf16.msra.mxu0 %v6744
  %7047 = vmatpush.bf16.msra.mxu0 %v6736
  %7048 = vmatpush.bf16.msra.mxu0 %v6728
  %7049 = vmatpush.bf16.msra.mxu0 %v6720
  %7050 = vmatpush.bf16.msra.mxu0 %v6712
  %7051 = vmatmul.bf16.gmra.mxu0 %v6195
  %v7052 = vpop.f32.mrf.mxu0
  %v7053 = vadd.f32 0.0, %v7052
  %v7054 = vpop.f32.mrf.mxu0
  %7055 = vdwg.mxu0
  %7056 = vmatpush.bf16.msra.mxu0 %v6832
  %7057 = vmatpush.bf16.msra.mxu0 %v6824
  %7058 = vmatpush.bf16.msra.mxu0 %v6816
  %7059 = vmatpush.bf16.msra.mxu0 %v6808
  %7060 = vmatpush.bf16.msra.mxu0 %v6800
  %7061 = vmatpush.bf16.msra.mxu0 %v6792
  %7062 = vmatpush.bf16.msra.mxu0 %v6784
  %7063 = vmatpush.bf16.msra.mxu0 %v6776
  %7064 = vmatmul.bf16.gmra.mxu0 %v6196
  %v7065 = vpop.f32.mrf.mxu0
  %v7066 = vadd.f32 %v7053, %v7065
  %v7067 = vpop.f32.mrf.mxu0
  %7068 = vdwg.mxu0
  %7069 = vmatpush.bf16.msra.mxu0 %v6769
  %7070 = vmatpush.bf16.msra.mxu0 %v6761
  %7071 = vmatpush.bf16.msra.mxu0 %v6753
  %7072 = vmatpush.bf16.msra.mxu0 %v6745
  %7073 = vmatpush.bf16.msra.mxu0 %v6737
  %7074 = vmatpush.bf16.msra.mxu0 %v6729
  %7075 = vmatpush.bf16.msra.mxu0 %v6721
  %7076 = vmatpush.bf16.msra.mxu0 %v6713
  %7077 = vmatmul.bf16.gmra.mxu0 %v6195
  %v7078 = vpop.f32.mrf.mxu0
  %v7079 = vadd.f32 0.0, %v7078
  %v7080 = vpop.f32.mrf.mxu0
  %7081 = vdwg.mxu0
  %7082 = vmatpush.bf16.msra.mxu0 %v6833
  %7083 = vmatpush.bf16.msra.mxu0 %v6825
  %7084 = vmatpush.bf16.msra.mxu0 %v6817
  %7085 = vmatpush.bf16.msra.mxu0 %v6809
  %7086 = vmatpush.bf16.msra.mxu0 %v6801
  %7087 = vmatpush.bf16.msra.mxu0 %v6793
  %7088 = vmatpush.bf16.msra.mxu0 %v6785
  %7089 = vmatpush.bf16.msra.mxu0 %v6777
  %7090 = vmatmul.bf16.gmra.mxu0 %v6196
  %v7091 = vpop.f32.mrf.mxu0
  %v7092 = vadd.f32 %v7079, %v7091
  %v7093 = vpop.f32.mrf.mxu0
  %7094 = vdwg.mxu0
  %7095 = vmatpush.bf16.msra.mxu0 %v6770
  %7096 = vmatpush.bf16.msra.mxu0 %v6762
  %7097 = vmatpush.bf16.msra.mxu0 %v6754
  %7098 = vmatpush.bf16.msra.mxu0 %v6746
  %7099 = vmatpush.bf16.msra.mxu0 %v6738
  %7100 = vmatpush.bf16.msra.mxu0 %v6730
  %7101 = vmatpush.bf16.msra.mxu0 %v6722
  %7102 = vmatpush.bf16.msra.mxu0 %v6714
  %7103 = vmatmul.bf16.gmra.mxu0 %v6195
  %v7104 = vpop.f32.mrf.mxu0
  %v7105 = vadd.f32 0.0, %v7104
  %v7106 = vpop.f32.mrf.mxu0
  %7107 = vdwg.mxu0
  %7108 = vmatpush.bf16.msra.mxu0 %v6834
  %7109 = vmatpush.bf16.msra.mxu0 %v6826
  %7110 = vmatpush.bf16.msra.mxu0 %v6818
  %7111 = vmatpush.bf16.msra.mxu0 %v6810
  %7112 = vmatpush.bf16.msra.mxu0 %v6802
  %7113 = vmatpush.bf16.msra.mxu0 %v6794
  %7114 = vmatpush.bf16.msra.mxu0 %v6786
  %7115 = vmatpush.bf16.msra.mxu0 %v6778
  %7116 = vmatmul.bf16.gmra.mxu0 %v6196
  %v7117 = vpop.f32.mrf.mxu0
  %v7118 = vadd.f32 %v7105, %v7117
  %v7119 = vpop.f32.mrf.mxu0
  %7120 = vdwg.mxu0
  %7121 = vmatpush.bf16.msra.mxu0 %v6771
  %7122 = vmatpush.bf16.msra.mxu0 %v6763
  %7123 = vmatpush.bf16.msra.mxu0 %v6755
  %7124 = vmatpush.bf16.msra.mxu0 %v6747
  %7125 = vmatpush.bf16.msra.mxu0 %v6739
  %7126 = vmatpush.bf16.msra.mxu0 %v6731
  %7127 = vmatpush.bf16.msra.mxu0 %v6723
  %7128 = vmatpush.bf16.msra.mxu0 %v6715
  %7129 = vmatmul.bf16.gmra.mxu0 %v6195
  %v7130 = vpop.f32.mrf.mxu0
  %v7131 = vadd.f32 0.0, %v7130
  %v7132 = vpop.f32.mrf.mxu0
  %7133 = vdwg.mxu0
  %7134 = vmatpush.bf16.msra.mxu0 %v6835
  %7135 = vmatpush.bf16.msra.mxu0 %v6827
  %7136 = vmatpush.bf16.msra.mxu0 %v6819
  %7137 = vmatpush.bf16.msra.mxu0 %v6811
  %7138 = vmatpush.bf16.msra.mxu0 %v6803
  %7139 = vmatpush.bf16.msra.mxu0 %v6795
  %7140 = vmatpush.bf16.msra.mxu0 %v6787
  %7141 = vmatpush.bf16.msra.mxu0 %v6779
  %7142 = vmatmul.bf16.gmra.mxu0 %v6196
  %v7143 = vpop.f32.mrf.mxu0
  %v7144 = vadd.f32 %v7131, %v7143
  %v7145 = vpop.f32.mrf.mxu0
  %7146 = vdwg.mxu0
  %7147 = vmatpush.bf16.msra.mxu0 %v6772
  %7148 = vmatpush.bf16.msra.mxu0 %v6764
  %7149 = vmatpush.bf16.msra.mxu0 %v6756
  %7150 = vmatpush.bf16.msra.mxu0 %v6748
  %7151 = vmatpush.bf16.msra.mxu0 %v6740
  %7152 = vmatpush.bf16.msra.mxu0 %v6732
  %7153 = vmatpush.bf16.msra.mxu0 %v6724
  %7154 = vmatpush.bf16.msra.mxu0 %v6716
  %7155 = vmatmul.bf16.gmra.mxu0 %v6195
  %v7156 = vpop.f32.mrf.mxu0
  %v7157 = vadd.f32 0.0, %v7156
  %v7158 = vpop.f32.mrf.mxu0
  %7159 = vdwg.mxu0
  %7160 = vmatpush.bf16.msra.mxu0 %v6836
  %7161 = vmatpush.bf16.msra.mxu0 %v6828
  %7162 = vmatpush.bf16.msra.mxu0 %v6820
  %7163 = vmatpush.bf16.msra.mxu0 %v6812
  %7164 = vmatpush.bf16.msra.mxu0 %v6804
  %7165 = vmatpush.bf16.msra.mxu0 %v6796
  %7166 = vmatpush.bf16.msra.mxu0 %v6788
  %7167 = vmatpush.bf16.msra.mxu0 %v6780
  %7168 = vmatmul.bf16.gmra.mxu0 %v6196
  %v7169 = vpop.f32.mrf.mxu0
  %v7170 = vadd.f32 %v7157, %v7169
  %v7171 = vpop.f32.mrf.mxu0
  %7172 = vdwg.mxu0
  %v7173 = vld [vmem:[%s3760] sm:$0xff]
  %v7174 = vld [vmem:[%s3760 + $0x8] sm:$0xff]
  %v7175 = vld [vmem:[%s3760 + $0x10] sm:$0xff]
  %v7176 = vld [vmem:[%s3760 + $0x18] sm:$0xff]
  %v7177 = vadd.f32 %v7173, %v6988
  %v7178 = vadd.f32 %v7174, %v7014
  %v7179 = vadd.f32 %v7175, %v7040
  %v7180 = vadd.f32 %v7176, %v7066
  %v7181 = vld [vmem:[%s3749 + $0x20] sm:$0xff]
  %v7182 = vld [vmem:[%s3749 + $0x28] sm:$0xff]
  %v7183 = vld [vmem:[%s3749 + $0x30] sm:$0xff]
  %v7184 = vld [vmem:[%s3749 + $0x38] sm:$0xff]
  %v7185 = vadd.f32 %v7181, %v7092
  %v7186 = vadd.f32 %v7182, %v7118
  %v7187 = vadd.f32 %v7183, %v7144
  %v7188 = vadd.f32 %v7184, %v7170
  %v7189 = vxor.u32 %v7177, 2147483648
  %v7190 = vmul.f32 %v7189, 1.442695
  %v7191 = vpow.pop %v7190
  %v7192 = vadd.f32 %v7191, 1.0
  %v7193 = vrcp.pop %v7192
  %v7194 = vmul.f32 %v7192, %v7193
  %v7195 = vsub.f32 1.0, %v7194
  %v7196 = vmul.f32 %v7193, %v7195
  %v7197 = vadd.f32 %v7193, %v7196
  %vm7198 = vweird.f32 %v7192
  %vm7199 = vweird.f32 %v7193
  %vm7200 = vmor %vm7198, %vm7199
  %v7201 = vsel %vm7200, %v7193, %v7197
  %v7202 = vand.u32 2147483647, %v7192
  %vm7203 = vcmp.eq.f32.partialorder %v7202, 8.507059e+37
  %v7204 = vand.u32 %v7192, 2147483648
  %v7205 = vor.u32 1.1754944e-38, %v7204
  %v7206 = vsel %vm7203, %v7205, %v7201
  %v7207 = vmul.f32 1.0, %v7206
  %v7208 = vxor.u32 %v7178, 2147483648
  %v7209 = vmul.f32 %v7208, 1.442695
  %v7210 = vpow.pop %v7209
  %v7211 = vadd.f32 %v7210, 1.0
  %v7212 = vrcp.pop %v7211
  %v7213 = vmul.f32 %v7211, %v7212
  %v7214 = vsub.f32 1.0, %v7213
  %v7215 = vmul.f32 %v7212, %v7214
  %v7216 = vadd.f32 %v7212, %v7215
  %vm7217 = vweird.f32 %v7211
  %vm7218 = vweird.f32 %v7212
  %vm7219 = vmor %vm7217, %vm7218
  %v7220 = vsel %vm7219, %v7212, %v7216
  %v7221 = vand.u32 2147483647, %v7211
  %vm7222 = vcmp.eq.f32.partialorder %v7221, 8.507059e+37
  %v7223 = vand.u32 %v7211, 2147483648
  %v7224 = vor.u32 1.1754944e-38, %v7223
  %v7225 = vsel %vm7222, %v7224, %v7220
  %v7226 = vmul.f32 1.0, %v7225
  %v7227 = vtanh.pop %v7179
  %v7228 = vxor.u32 %v7180, 2147483648
  %v7229 = vmul.f32 %v7228, 1.442695
  %v7230 = vpow.pop %v7229
  %v7231 = vadd.f32 %v7230, 1.0
  %v7232 = vrcp.pop %v7231
  %v7233 = vmul.f32 %v7231, %v7232
  %v7234 = vsub.f32 1.0, %v7233
  %v7235 = vmul.f32 %v7232, %v7234
  %v7236 = vadd.f32 %v7232, %v7235
  %vm7237 = vweird.f32 %v7231
  %vm7238 = vweird.f32 %v7232
  %vm7239 = vmor %vm7237, %vm7238
  %v7240 = vsel %vm7239, %v7232, %v7236
  %v7241 = vand.u32 2147483647, %v7231
  %vm7242 = vcmp.eq.f32.partialorder %v7241, 8.507059e+37
  %v7243 = vand.u32 %v7231, 2147483648
  %v7244 = vor.u32 1.1754944e-38, %v7243
  %v7245 = vsel %vm7242, %v7244, %v7240
  %v7246 = vmul.f32 1.0, %v7245
  %v7247 = vmul.f32 %v7226, %v6192
  %v7248 = vmul.f32 %v7207, %v7227
  %v7249 = vadd.f32 %v7247, %v7248
  %v7250 = vtanh.pop %v7249
  %v7251 = vmul.f32 %v7246, %v7250
  %v7252 = vxor.u32 %v7185, 2147483648
  %v7253 = vmul.f32 %v7252, 1.442695
  %v7254 = vpow.pop %v7253
  %v7255 = vadd.f32 %v7254, 1.0
  %v7256 = vrcp.pop %v7255
  %v7257 = vmul.f32 %v7255, %v7256
  %v7258 = vsub.f32 1.0, %v7257
  %v7259 = vmul.f32 %v7256, %v7258
  %v7260 = vadd.f32 %v7256, %v7259
  %vm7261 = vweird.f32 %v7255
  %vm7262 = vweird.f32 %v7256
  %vm7263 = vmor %vm7261, %vm7262
  %v7264 = vsel %vm7263, %v7256, %v7260
  %v7265 = vand.u32 2147483647, %v7255
  %vm7266 = vcmp.eq.f32.partialorder %v7265, 8.507059e+37
  %v7267 = vand.u32 %v7255, 2147483648
  %v7268 = vor.u32 1.1754944e-38, %v7267
  %v7269 = vsel %vm7266, %v7268, %v7264
  %v7270 = vmul.f32 1.0, %v7269
  %v7271 = vxor.u32 %v7186, 2147483648
  %v7272 = vmul.f32 %v7271, 1.442695
  %v7273 = vpow.pop %v7272
  %v7274 = vadd.f32 %v7273, 1.0
  %v7275 = vrcp.pop %v7274
  %v7276 = vmul.f32 %v7274, %v7275
  %v7277 = vsub.f32 1.0, %v7276
  %v7278 = vmul.f32 %v7275, %v7277
  %v7279 = vadd.f32 %v7275, %v7278
  %vm7280 = vweird.f32 %v7274
  %vm7281 = vweird.f32 %v7275
  %vm7282 = vmor %vm7280, %vm7281
  %v7283 = vsel %vm7282, %v7275, %v7279
  %v7284 = vand.u32 2147483647, %v7274
  %vm7285 = vcmp.eq.f32.partialorder %v7284, 8.507059e+37
  %v7286 = vand.u32 %v7274, 2147483648
  %v7287 = vor.u32 1.1754944e-38, %v7286
  %v7288 = vsel %vm7285, %v7287, %v7283
  %v7289 = vmul.f32 1.0, %v7288
  %v7290 = vtanh.pop %v7187
  %v7291 = vxor.u32 %v7188, 2147483648
  %v7292 = vmul.f32 %v7291, 1.442695
  %v7293 = vpow.pop %v7292
  %v7294 = vadd.f32 %v7293, 1.0
  %v7295 = vrcp.pop %v7294
  %v7296 = vmul.f32 %v7294, %v7295
  %v7297 = vsub.f32 1.0, %v7296
  %v7298 = vmul.f32 %v7295, %v7297
  %v7299 = vadd.f32 %v7295, %v7298
  %vm7300 = vweird.f32 %v7294
  %vm7301 = vweird.f32 %v7295
  %vm7302 = vmor %vm7300, %vm7301
  %v7303 = vsel %vm7302, %v7295, %v7299
  %v7304 = vand.u32 2147483647, %v7294
  %vm7305 = vcmp.eq.f32.partialorder %v7304, 8.507059e+37
  %v7306 = vand.u32 %v7294, 2147483648
  %v7307 = vor.u32 1.1754944e-38, %v7306
  %v7308 = vsel %vm7305, %v7307, %v7303
  %v7309 = vmul.f32 1.0, %v7308
  %v7310 = vmul.f32 %v7289, %v6194
  %v7311 = vmul.f32 %v7270, %v7290
  %v7312 = vadd.f32 %v7310, %v7311
  %v7313 = vtanh.pop %v7312
  %v7314 = vmul.f32 %v7309, %v7313
  %v7315 = vsel %vm3906, %v7251, 0.0
  %s7316 = scalar_lea.vmem %s5, 40
  %7317 = vst [vmem:[%s7316] sm:$0xff] %v7315
  %v7318 = vsel %vm3900, %v7314, 0.0
  %s7319 = scalar_lea.vmem %s6, 16
  %7320 = vst [vmem:[%s7319] sm:$0xff] %v7318
  %v7321 = vsel %vm3906, %v7251, %v6191
  %v7322 = vsel %vm3906, %v7249, %v6192
  %v7323 = vsel %vm3900, %v7314, %v6193
  %v7324 = vsel %vm3900, %v7312, %v6194
  %v7325 = vpack.c.bf16 %v7321, %v7321
  %v7326 = vpack.c.bf16 %v7323, %v7323
  %v7327 = vld [vmem:[%s3] sm:$0xff]
  %v7328 = vld [vmem:[%s3 + $0x8] sm:$0xff]
  %v7329 = vld [vmem:[%s3 + $0x10] sm:$0xff]
  %v7330 = vld [vmem:[%s3 + $0x18] sm:$0xff]
  %v7331 = vld [vmem:[%s3 + $0x20] sm:$0xff]
  %v7332 = vld [vmem:[%s3 + $0x28] sm:$0xff]
  %v7333 = vld [vmem:[%s3 + $0x30] sm:$0xff]
  %v7334 = vld [vmem:[%s3 + $0x38] sm:$0xff]
  %v7335 = vld [vmem:[%s3 + $0x40] sm:$0xff]
  %v7336 = vld [vmem:[%s3 + $0x48] sm:$0xff]
  %v7337 = vld [vmem:[%s3 + $0x50] sm:$0xff]
  %v7338 = vld [vmem:[%s3 + $0x58] sm:$0xff]
  %v7339 = vld [vmem:[%s3 + $0x60] sm:$0xff]
  %v7340 = vld [vmem:[%s3 + $0x68] sm:$0xff]
  %v7341 = vld [vmem:[%s3 + $0x70] sm:$0xff]
  %v7342 = vld [vmem:[%s3 + $0x78] sm:$0xff]
  %v7343 = vld [vmem:[%s3 + $0x80] sm:$0xff]
  %v7344 = vld [vmem:[%s3 + $0x88] sm:$0xff]
  %v7345 = vld [vmem:[%s3 + $0x90] sm:$0xff]
  %v7346 = vld [vmem:[%s3 + $0x98] sm:$0xff]
  %v7347 = vld [vmem:[%s3 + $0xa0] sm:$0xff]
  %v7348 = vld [vmem:[%s3 + $0xa8] sm:$0xff]
  %v7349 = vld [vmem:[%s3 + $0xb0] sm:$0xff]
  %v7350 = vld [vmem:[%s3 + $0xb8] sm:$0xff]
  %v7351 = vld [vmem:[%s3 + $0xc0] sm:$0xff]
  %v7352 = vld [vmem:[%s3 + $0xc8] sm:$0xff]
  %v7353 = vld [vmem:[%s3 + $0xd0] sm:$0xff]
  %v7354 = vld [vmem:[%s3 + $0xd8] sm:$0xff]
  %v7355 = vld [vmem:[%s3 + $0xe0] sm:$0xff]
  %v7356 = vld [vmem:[%s3 + $0xe8] sm:$0xff]
  %v7357 = vld [vmem:[%s3 + $0xf0] sm:$0xff]
  %v7358 = vld [vmem:[%s3 + $0xf8] sm:$0xff]
  %v7359 = vld [vmem:[%s3 + $0x100] sm:$0xff]
  %v7360 = vld [vmem:[%s3 + $0x108] sm:$0xff]
  %v7361 = vld [vmem:[%s3 + $0x110] sm:$0xff]
  %v7362 = vld [vmem:[%s3 + $0x118] sm:$0xff]
  %v7363 = vld [vmem:[%s3 + $0x120] sm:$0xff]
  %v7364 = vld [vmem:[%s3 + $0x128] sm:$0xff]
  %v7365 = vld [vmem:[%s3 + $0x130] sm:$0xff]
  %v7366 = vld [vmem:[%s3 + $0x138] sm:$0xff]
  %v7367 = vld [vmem:[%s3 + $0x140] sm:$0xff]
  %v7368 = vld [vmem:[%s3 + $0x148] sm:$0xff]
  %v7369 = vld [vmem:[%s3 + $0x150] sm:$0xff]
  %v7370 = vld [vmem:[%s3 + $0x158] sm:$0xff]
  %v7371 = vld [vmem:[%s3 + $0x160] sm:$0xff]
  %v7372 = vld [vmem:[%s3 + $0x168] sm:$0xff]
  %v7373 = vld [vmem:[%s3 + $0x170] sm:$0xff]
  %v7374 = vld [vmem:[%s3 + $0x178] sm:$0xff]
  %v7375 = vld [vmem:[%s3 + $0x180] sm:$0xff]
  %v7376 = vld [vmem:[%s3 + $0x188] sm:$0xff]
  %v7377 = vld [vmem:[%s3 + $0x190] sm:$0xff]
  %v7378 = vld [vmem:[%s3 + $0x198] sm:$0xff]
  %v7379 = vld [vmem:[%s3 + $0x1a0] sm:$0xff]
  %v7380 = vld [vmem:[%s3 + $0x1a8] sm:$0xff]
  %v7381 = vld [vmem:[%s3 + $0x1b0] sm:$0xff]
  %v7382 = vld [vmem:[%s3 + $0x1b8] sm:$0xff]
  %v7383 = vld [vmem:[%s3 + $0x1c0] sm:$0xff]
  %v7384 = vld [vmem:[%s3 + $0x1c8] sm:$0xff]
  %v7385 = vld [vmem:[%s3 + $0x1d0] sm:$0xff]
  %v7386 = vld [vmem:[%s3 + $0x1d8] sm:$0xff]
  %v7387 = vld [vmem:[%s3 + $0x1e0] sm:$0xff]
  %v7388 = vld [vmem:[%s3 + $0x1e8] sm:$0xff]
  %v7389 = vld [vmem:[%s3 + $0x1f0] sm:$0xff]
  %v7390 = vld [vmem:[%s3 + $0x1f8] sm:$0xff]
  %v7391 = vld [vmem:[%s3 + $0x200] sm:$0xff]
  %v7392 = vld [vmem:[%s3 + $0x208] sm:$0xff]
  %v7393 = vld [vmem:[%s3 + $0x210] sm:$0xff]
  %v7394 = vld [vmem:[%s3 + $0x218] sm:$0xff]
  %v7395 = vld [vmem:[%s3 + $0x220] sm:$0xff]
  %v7396 = vld [vmem:[%s3 + $0x228] sm:$0xff]
  %v7397 = vld [vmem:[%s3 + $0x230] sm:$0xff]
  %v7398 = vld [vmem:[%s3 + $0x238] sm:$0xff]
  %v7399 = vld [vmem:[%s3 + $0x240] sm:$0xff]
  %v7400 = vld [vmem:[%s3 + $0x248] sm:$0xff]
  %v7401 = vld [vmem:[%s3 + $0x250] sm:$0xff]
  %v7402 = vld [vmem:[%s3 + $0x258] sm:$0xff]
  %v7403 = vld [vmem:[%s3 + $0x260] sm:$0xff]
  %v7404 = vld [vmem:[%s3 + $0x268] sm:$0xff]
  %v7405 = vld [vmem:[%s3 + $0x270] sm:$0xff]
  %v7406 = vld [vmem:[%s3 + $0x278] sm:$0xff]
  %v7407 = vld [vmem:[%s3 + $0x280] sm:$0xff]
  %v7408 = vld [vmem:[%s3 + $0x288] sm:$0xff]
  %v7409 = vld [vmem:[%s3 + $0x290] sm:$0xff]
  %v7410 = vld [vmem:[%s3 + $0x298] sm:$0xff]
  %v7411 = vld [vmem:[%s3 + $0x2a0] sm:$0xff]
  %v7412 = vld [vmem:[%s3 + $0x2a8] sm:$0xff]
  %v7413 = vld [vmem:[%s3 + $0x2b0] sm:$0xff]
  %v7414 = vld [vmem:[%s3 + $0x2b8] sm:$0xff]
  %v7415 = vld [vmem:[%s3 + $0x2c0] sm:$0xff]
  %v7416 = vld [vmem:[%s3 + $0x2c8] sm:$0xff]
  %v7417 = vld [vmem:[%s3 + $0x2d0] sm:$0xff]
  %v7418 = vld [vmem:[%s3 + $0x2d8] sm:$0xff]
  %v7419 = vld [vmem:[%s3 + $0x2e0] sm:$0xff]
  %v7420 = vld [vmem:[%s3 + $0x2e8] sm:$0xff]
  %v7421 = vld [vmem:[%s3 + $0x2f0] sm:$0xff]
  %v7422 = vld [vmem:[%s3 + $0x2f8] sm:$0xff]
  %v7423 = vld [vmem:[%s3 + $0x300] sm:$0xff]
  %v7424 = vld [vmem:[%s3 + $0x308] sm:$0xff]
  %v7425 = vld [vmem:[%s3 + $0x310] sm:$0xff]
  %v7426 = vld [vmem:[%s3 + $0x318] sm:$0xff]
  %v7427 = vld [vmem:[%s3 + $0x320] sm:$0xff]
  %v7428 = vld [vmem:[%s3 + $0x328] sm:$0xff]
  %v7429 = vld [vmem:[%s3 + $0x330] sm:$0xff]
  %v7430 = vld [vmem:[%s3 + $0x338] sm:$0xff]
  %v7431 = vld [vmem:[%s3 + $0x340] sm:$0xff]
  %v7432 = vld [vmem:[%s3 + $0x348] sm:$0xff]
  %v7433 = vld [vmem:[%s3 + $0x350] sm:$0xff]
  %v7434 = vld [vmem:[%s3 + $0x358] sm:$0xff]
  %v7435 = vld [vmem:[%s3 + $0x360] sm:$0xff]
  %v7436 = vld [vmem:[%s3 + $0x368] sm:$0xff]
  %v7437 = vld [vmem:[%s3 + $0x370] sm:$0xff]
  %v7438 = vld [vmem:[%s3 + $0x378] sm:$0xff]
  %v7439 = vld [vmem:[%s3 + $0x380] sm:$0xff]
  %v7440 = vld [vmem:[%s3 + $0x388] sm:$0xff]
  %v7441 = vld [vmem:[%s3 + $0x390] sm:$0xff]
  %v7442 = vld [vmem:[%s3 + $0x398] sm:$0xff]
  %v7443 = vld [vmem:[%s3 + $0x3a0] sm:$0xff]
  %v7444 = vld [vmem:[%s3 + $0x3a8] sm:$0xff]
  %v7445 = vld [vmem:[%s3 + $0x3b0] sm:$0xff]
  %v7446 = vld [vmem:[%s3 + $0x3b8] sm:$0xff]
  %v7447 = vld [vmem:[%s3 + $0x3c0] sm:$0xff]
  %v7448 = vld [vmem:[%s3 + $0x3c8] sm:$0xff]
  %v7449 = vld [vmem:[%s3 + $0x3d0] sm:$0xff]
  %v7450 = vld [vmem:[%s3 + $0x3d8] sm:$0xff]
  %v7451 = vld [vmem:[%s3 + $0x3e0] sm:$0xff]
  %v7452 = vld [vmem:[%s3 + $0x3e8] sm:$0xff]
  %v7453 = vld [vmem:[%s3 + $0x3f0] sm:$0xff]
  %v7454 = vld [vmem:[%s3 + $0x3f8] sm:$0xff]
  %v7583 = vunpack.c.l.b16 %v7327
  %v7584 = vunpack.c.h.b16 %v7327
  %v7585 = vunpack.c.l.b16 %v7328
  %v7586 = vunpack.c.h.b16 %v7328
  %v7587 = vunpack.c.l.b16 %v7329
  %v7588 = vunpack.c.h.b16 %v7329
  %v7589 = vunpack.c.l.b16 %v7330
  %v7590 = vunpack.c.h.b16 %v7330
  %v7591 = vunpack.c.l.b16 %v7331
  %v7592 = vunpack.c.h.b16 %v7331
  %v7593 = vunpack.c.l.b16 %v7332
  %v7594 = vunpack.c.h.b16 %v7332
  %v7595 = vunpack.c.l.b16 %v7333
  %v7596 = vunpack.c.h.b16 %v7333
  %v7597 = vunpack.c.l.b16 %v7334
  %v7598 = vunpack.c.h.b16 %v7334
  %v7599 = vunpack.c.l.b16 %v7335
  %v7600 = vunpack.c.h.b16 %v7335
  %v7601 = vunpack.c.l.b16 %v7336
  %v7602 = vunpack.c.h.b16 %v7336
  %v7603 = vunpack.c.l.b16 %v7337
  %v7604 = vunpack.c.h.b16 %v7337
  %v7605 = vunpack.c.l.b16 %v7338
  %v7606 = vunpack.c.h.b16 %v7338
  %v7607 = vunpack.c.l.b16 %v7339
  %v7608 = vunpack.c.h.b16 %v7339
  %v7609 = vunpack.c.l.b16 %v7340
  %v7610 = vunpack.c.h.b16 %v7340
  %v7611 = vunpack.c.l.b16 %v7341
  %v7612 = vunpack.c.h.b16 %v7341
  %v7613 = vunpack.c.l.b16 %v7342
  %v7614 = vunpack.c.h.b16 %v7342
  %v7615 = vunpack.c.l.b16 %v7343
  %v7616 = vunpack.c.h.b16 %v7343
  %v7617 = vunpack.c.l.b16 %v7344
  %v7618 = vunpack.c.h.b16 %v7344
  %v7619 = vunpack.c.l.b16 %v7345
  %v7620 = vunpack.c.h.b16 %v7345
  %v7621 = vunpack.c.l.b16 %v7346
  %v7622 = vunpack.c.h.b16 %v7346
  %v7623 = vunpack.c.l.b16 %v7347
  %v7624 = vunpack.c.h.b16 %v7347
  %v7625 = vunpack.c.l.b16 %v7348
  %v7626 = vunpack.c.h.b16 %v7348
  %v7627 = vunpack.c.l.b16 %v7349
  %v7628 = vunpack.c.h.b16 %v7349
  %v7629 = vunpack.c.l.b16 %v7350
  %v7630 = vunpack.c.h.b16 %v7350
  %v7631 = vunpack.c.l.b16 %v7351
  %v7632 = vunpack.c.h.b16 %v7351
  %v7633 = vunpack.c.l.b16 %v7352
  %v7634 = vunpack.c.h.b16 %v7352
  %v7635 = vunpack.c.l.b16 %v7353
  %v7636 = vunpack.c.h.b16 %v7353
  %v7637 = vunpack.c.l.b16 %v7354
  %v7638 = vunpack.c.h.b16 %v7354
  %v7639 = vunpack.c.l.b16 %v7355
  %v7640 = vunpack.c.h.b16 %v7355
  %v7641 = vunpack.c.l.b16 %v7356
  %v7642 = vunpack.c.h.b16 %v7356
  %v7643 = vunpack.c.l.b16 %v7357
  %v7644 = vunpack.c.h.b16 %v7357
  %v7645 = vunpack.c.l.b16 %v7358
  %v7646 = vunpack.c.h.b16 %v7358
  %v7647 = vunpack.c.l.b16 %v7359
  %v7648 = vunpack.c.h.b16 %v7359
  %v7649 = vunpack.c.l.b16 %v7360
  %v7650 = vunpack.c.h.b16 %v7360
  %v7651 = vunpack.c.l.b16 %v7361
  %v7652 = vunpack.c.h.b16 %v7361
  %v7653 = vunpack.c.l.b16 %v7362
  %v7654 = vunpack.c.h.b16 %v7362
  %v7655 = vunpack.c.l.b16 %v7363
  %v7656 = vunpack.c.h.b16 %v7363
  %v7657 = vunpack.c.l.b16 %v7364
  %v7658 = vunpack.c.h.b16 %v7364
  %v7659 = vunpack.c.l.b16 %v7365
  %v7660 = vunpack.c.h.b16 %v7365
  %v7661 = vunpack.c.l.b16 %v7366
  %v7662 = vunpack.c.h.b16 %v7366
  %v7663 = vunpack.c.l.b16 %v7367
  %v7664 = vunpack.c.h.b16 %v7367
  %v7665 = vunpack.c.l.b16 %v7368
  %v7666 = vunpack.c.h.b16 %v7368
  %v7667 = vunpack.c.l.b16 %v7369
  %v7668 = vunpack.c.h.b16 %v7369
  %v7669 = vunpack.c.l.b16 %v7370
  %v7670 = vunpack.c.h.b16 %v7370
  %v7671 = vunpack.c.l.b16 %v7371
  %v7672 = vunpack.c.h.b16 %v7371
  %v7673 = vunpack.c.l.b16 %v7372
  %v7674 = vunpack.c.h.b16 %v7372
  %v7675 = vunpack.c.l.b16 %v7373
  %v7676 = vunpack.c.h.b16 %v7373
  %v7677 = vunpack.c.l.b16 %v7374
  %v7678 = vunpack.c.h.b16 %v7374
  %v7679 = vunpack.c.l.b16 %v7375
  %v7680 = vunpack.c.h.b16 %v7375
  %v7681 = vunpack.c.l.b16 %v7376
  %v7682 = vunpack.c.h.b16 %v7376
  %v7683 = vunpack.c.l.b16 %v7377
  %v7684 = vunpack.c.h.b16 %v7377
  %v7685 = vunpack.c.l.b16 %v7378
  %v7686 = vunpack.c.h.b16 %v7378
  %v7687 = vunpack.c.l.b16 %v7379
  %v7688 = vunpack.c.h.b16 %v7379
  %v7689 = vunpack.c.l.b16 %v7380
  %v7690 = vunpack.c.h.b16 %v7380
  %v7691 = vunpack.c.l.b16 %v7381
  %v7692 = vunpack.c.h.b16 %v7381
  %v7693 = vunpack.c.l.b16 %v7382
  %v7694 = vunpack.c.h.b16 %v7382
  %v7695 = vunpack.c.l.b16 %v7383
  %v7696 = vunpack.c.h.b16 %v7383
  %v7697 = vunpack.c.l.b16 %v7384
  %v7698 = vunpack.c.h.b16 %v7384
  %v7699 = vunpack.c.l.b16 %v7385
  %v7700 = vunpack.c.h.b16 %v7385
  %v7701 = vunpack.c.l.b16 %v7386
  %v7702 = vunpack.c.h.b16 %v7386
  %v7703 = vunpack.c.l.b16 %v7387
  %v7704 = vunpack.c.h.b16 %v7387
  %v7705 = vunpack.c.l.b16 %v7388
  %v7706 = vunpack.c.h.b16 %v7388
  %v7707 = vunpack.c.l.b16 %v7389
  %v7708 = vunpack.c.h.b16 %v7389
  %v7709 = vunpack.c.l.b16 %v7390
  %v7710 = vunpack.c.h.b16 %v7390
  %v7711 = vunpack.c.l.b16 %v7391
  %v7712 = vunpack.c.h.b16 %v7391
  %v7713 = vunpack.c.l.b16 %v7392
  %v7714 = vunpack.c.h.b16 %v7392
  %v7715 = vunpack.c.l.b16 %v7393
  %v7716 = vunpack.c.h.b16 %v7393
  %v7717 = vunpack.c.l.b16 %v7394
  %v7718 = vunpack.c.h.b16 %v7394
  %v7719 = vunpack.c.l.b16 %v7395
  %v7720 = vunpack.c.h.b16 %v7395
  %v7721 = vunpack.c.l.b16 %v7396
  %v7722 = vunpack.c.h.b16 %v7396
  %v7723 = vunpack.c.l.b16 %v7397
  %v7724 = vunpack.c.h.b16 %v7397
  %v7725 = vunpack.c.l.b16 %v7398
  %v7726 = vunpack.c.h.b16 %v7398
  %v7727 = vunpack.c.l.b16 %v7399
  %v7728 = vunpack.c.h.b16 %v7399
  %v7729 = vunpack.c.l.b16 %v7400
  %v7730 = vunpack.c.h.b16 %v7400
  %v7731 = vunpack.c.l.b16 %v7401
  %v7732 = vunpack.c.h.b16 %v7401
  %v7733 = vunpack.c.l.b16 %v7402
  %v7734 = vunpack.c.h.b16 %v7402
  %v7735 = vunpack.c.l.b16 %v7403
  %v7736 = vunpack.c.h.b16 %v7403
  %v7737 = vunpack.c.l.b16 %v7404
  %v7738 = vunpack.c.h.b16 %v7404
  %v7739 = vunpack.c.l.b16 %v7405
  %v7740 = vunpack.c.h.b16 %v7405
  %v7741 = vunpack.c.l.b16 %v7406
  %v7742 = vunpack.c.h.b16 %v7406
  %v7743 = vunpack.c.l.b16 %v7407
  %v7744 = vunpack.c.h.b16 %v7407
  %v7745 = vunpack.c.l.b16 %v7408
  %v7746 = vunpack.c.h.b16 %v7408
  %v7747 = vunpack.c.l.b16 %v7409
  %v7748 = vunpack.c.h.b16 %v7409
  %v7749 = vunpack.c.l.b16 %v7410
  %v7750 = vunpack.c.h.b16 %v7410
  %v7751 = vunpack.c.l.b16 %v7411
  %v7752 = vunpack.c.h.b16 %v7411
  %v7753 = vunpack.c.l.b16 %v7412
  %v7754 = vunpack.c.h.b16 %v7412
  %v7755 = vunpack.c.l.b16 %v7413
  %v7756 = vunpack.c.h.b16 %v7413
  %v7757 = vunpack.c.l.b16 %v7414
  %v7758 = vunpack.c.h.b16 %v7414
  %v7759 = vunpack.c.l.b16 %v7415
  %v7760 = vunpack.c.h.b16 %v7415
  %v7761 = vunpack.c.l.b16 %v7416
  %v7762 = vunpack.c.h.b16 %v7416
  %v7763 = vunpack.c.l.b16 %v7417
  %v7764 = vunpack.c.h.b16 %v7417
  %v7765 = vunpack.c.l.b16 %v7418
  %v7766 = vunpack.c.h.b16 %v7418
  %v7767 = vunpack.c.l.b16 %v7419
  %v7768 = vunpack.c.h.b16 %v7419
  %v7769 = vunpack.c.l.b16 %v7420
  %v7770 = vunpack.c.h.b16 %v7420
  %v7771 = vunpack.c.l.b16 %v7421
  %v7772 = vunpack.c.h.b16 %v7421
  %v7773 = vunpack.c.l.b16 %v7422
  %v7774 = vunpack.c.h.b16 %v7422
  %v7775 = vunpack.c.l.b16 %v7423
  %v7776 = vunpack.c.h.b16 %v7423
  %v7777 = vunpack.c.l.b16 %v7424
  %v7778 = vunpack.c.h.b16 %v7424
  %v7779 = vunpack.c.l.b16 %v7425
  %v7780 = vunpack.c.h.b16 %v7425
  %v7781 = vunpack.c.l.b16 %v7426
  %v7782 = vunpack.c.h.b16 %v7426
  %v7783 = vunpack.c.l.b16 %v7427
  %v7784 = vunpack.c.h.b16 %v7427
  %v7785 = vunpack.c.l.b16 %v7428
  %v7786 = vunpack.c.h.b16 %v7428
  %v7787 = vunpack.c.l.b16 %v7429
  %v7788 = vunpack.c.h.b16 %v7429
  %v7789 = vunpack.c.l.b16 %v7430
  %v7790 = vunpack.c.h.b16 %v7430
  %v7791 = vunpack.c.l.b16 %v7431
  %v7792 = vunpack.c.h.b16 %v7431
  %v7793 = vunpack.c.l.b16 %v7432
  %v7794 = vunpack.c.h.b16 %v7432
  %v7795 = vunpack.c.l.b16 %v7433
  %v7796 = vunpack.c.h.b16 %v7433
  %v7797 = vunpack.c.l.b16 %v7434
  %v7798 = vunpack.c.h.b16 %v7434
  %v7799 = vunpack.c.l.b16 %v7435
  %v7800 = vunpack.c.h.b16 %v7435
  %v7801 = vunpack.c.l.b16 %v7436
  %v7802 = vunpack.c.h.b16 %v7436
  %v7803 = vunpack.c.l.b16 %v7437
  %v7804 = vunpack.c.h.b16 %v7437
  %v7805 = vunpack.c.l.b16 %v7438
  %v7806 = vunpack.c.h.b16 %v7438
  %v7807 = vunpack.c.l.b16 %v7439
  %v7808 = vunpack.c.h.b16 %v7439
  %v7809 = vunpack.c.l.b16 %v7440
  %v7810 = vunpack.c.h.b16 %v7440
  %v7811 = vunpack.c.l.b16 %v7441
  %v7812 = vunpack.c.h.b16 %v7441
  %v7813 = vunpack.c.l.b16 %v7442
  %v7814 = vunpack.c.h.b16 %v7442
  %v7815 = vunpack.c.l.b16 %v7443
  %v7816 = vunpack.c.h.b16 %v7443
  %v7817 = vunpack.c.l.b16 %v7444
  %v7818 = vunpack.c.h.b16 %v7444
  %v7819 = vunpack.c.l.b16 %v7445
  %v7820 = vunpack.c.h.b16 %v7445
  %v7821 = vunpack.c.l.b16 %v7446
  %v7822 = vunpack.c.h.b16 %v7446
  %v7823 = vunpack.c.l.b16 %v7447
  %v7824 = vunpack.c.h.b16 %v7447
  %v7825 = vunpack.c.l.b16 %v7448
  %v7826 = vunpack.c.h.b16 %v7448
  %v7827 = vunpack.c.l.b16 %v7449
  %v7828 = vunpack.c.h.b16 %v7449
  %v7829 = vunpack.c.l.b16 %v7450
  %v7830 = vunpack.c.h.b16 %v7450
  %v7831 = vunpack.c.l.b16 %v7451
  %v7832 = vunpack.c.h.b16 %v7451
  %v7833 = vunpack.c.l.b16 %v7452
  %v7834 = vunpack.c.h.b16 %v7452
  %v7835 = vunpack.c.l.b16 %v7453
  %v7836 = vunpack.c.h.b16 %v7453
  %v7837 = vunpack.c.l.b16 %v7454
  %v7838 = vunpack.c.h.b16 %v7454
  %v7839 = vpack.c.b16 %v7591, %v7583
  %v7840 = vpack.c.b16 %v7592, %v7584
  %v7841 = vpack.c.b16 %v7593, %v7585
  %v7842 = vpack.c.b16 %v7594, %v7586
  %v7843 = vpack.c.b16 %v7595, %v7587
  %v7844 = vpack.c.b16 %v7596, %v7588
  %v7845 = vpack.c.b16 %v7597, %v7589
  %v7846 = vpack.c.b16 %v7598, %v7590
  %v7847 = vpack.c.b16 %v7607, %v7599
  %v7848 = vpack.c.b16 %v7608, %v7600
  %v7849 = vpack.c.b16 %v7609, %v7601
  %v7850 = vpack.c.b16 %v7610, %v7602
  %v7851 = vpack.c.b16 %v7611, %v7603
  %v7852 = vpack.c.b16 %v7612, %v7604
  %v7853 = vpack.c.b16 %v7613, %v7605
  %v7854 = vpack.c.b16 %v7614, %v7606
  %v7855 = vpack.c.b16 %v7623, %v7615
  %v7856 = vpack.c.b16 %v7624, %v7616
  %v7857 = vpack.c.b16 %v7625, %v7617
  %v7858 = vpack.c.b16 %v7626, %v7618
  %v7859 = vpack.c.b16 %v7627, %v7619
  %v7860 = vpack.c.b16 %v7628, %v7620
  %v7861 = vpack.c.b16 %v7629, %v7621
  %v7862 = vpack.c.b16 %v7630, %v7622
  %v7863 = vpack.c.b16 %v7639, %v7631
  %v7864 = vpack.c.b16 %v7640, %v7632
  %v7865 = vpack.c.b16 %v7641, %v7633
  %v7866 = vpack.c.b16 %v7642, %v7634
  %v7867 = vpack.c.b16 %v7643, %v7635
  %v7868 = vpack.c.b16 %v7644, %v7636
  %v7869 = vpack.c.b16 %v7645, %v7637
  %v7870 = vpack.c.b16 %v7646, %v7638
  %v7871 = vpack.c.b16 %v7655, %v7647
  %v7872 = vpack.c.b16 %v7656, %v7648
  %v7873 = vpack.c.b16 %v7657, %v7649
  %v7874 = vpack.c.b16 %v7658, %v7650
  %v7875 = vpack.c.b16 %v7659, %v7651
  %v7876 = vpack.c.b16 %v7660, %v7652
  %v7877 = vpack.c.b16 %v7661, %v7653
  %v7878 = vpack.c.b16 %v7662, %v7654
  %v7879 = vpack.c.b16 %v7671, %v7663
  %v7880 = vpack.c.b16 %v7672, %v7664
  %v7881 = vpack.c.b16 %v7673, %v7665
  %v7882 = vpack.c.b16 %v7674, %v7666
  %v7883 = vpack.c.b16 %v7675, %v7667
  %v7884 = vpack.c.b16 %v7676, %v7668
  %v7885 = vpack.c.b16 %v7677, %v7669
  %v7886 = vpack.c.b16 %v7678, %v7670
  %v7887 = vpack.c.b16 %v7687, %v7679
  %v7888 = vpack.c.b16 %v7688, %v7680
  %v7889 = vpack.c.b16 %v7689, %v7681
  %v7890 = vpack.c.b16 %v7690, %v7682
  %v7891 = vpack.c.b16 %v7691, %v7683
  %v7892 = vpack.c.b16 %v7692, %v7684
  %v7893 = vpack.c.b16 %v7693, %v7685
  %v7894 = vpack.c.b16 %v7694, %v7686
  %v7895 = vpack.c.b16 %v7703, %v7695
  %v7896 = vpack.c.b16 %v7704, %v7696
  %v7897 = vpack.c.b16 %v7705, %v7697
  %v7898 = vpack.c.b16 %v7706, %v7698
  %v7899 = vpack.c.b16 %v7707, %v7699
  %v7900 = vpack.c.b16 %v7708, %v7700
  %v7901 = vpack.c.b16 %v7709, %v7701
  %v7902 = vpack.c.b16 %v7710, %v7702
  %v7903 = vpack.c.b16 %v7719, %v7711
  %v7904 = vpack.c.b16 %v7720, %v7712
  %v7905 = vpack.c.b16 %v7721, %v7713
  %v7906 = vpack.c.b16 %v7722, %v7714
  %v7907 = vpack.c.b16 %v7723, %v7715
  %v7908 = vpack.c.b16 %v7724, %v7716
  %v7909 = vpack.c.b16 %v7725, %v7717
  %v7910 = vpack.c.b16 %v7726, %v7718
  %v7911 = vpack.c.b16 %v7735, %v7727
  %v7912 = vpack.c.b16 %v7736, %v7728
  %v7913 = vpack.c.b16 %v7737, %v7729
  %v7914 = vpack.c.b16 %v7738, %v7730
  %v7915 = vpack.c.b16 %v7739, %v7731
  %v7916 = vpack.c.b16 %v7740, %v7732
  %v7917 = vpack.c.b16 %v7741, %v7733
  %v7918 = vpack.c.b16 %v7742, %v7734
  %v7919 = vpack.c.b16 %v7751, %v7743
  %v7920 = vpack.c.b16 %v7752, %v7744
  %v7921 = vpack.c.b16 %v7753, %v7745
  %v7922 = vpack.c.b16 %v7754, %v7746
  %v7923 = vpack.c.b16 %v7755, %v7747
  %v7924 = vpack.c.b16 %v7756, %v7748
  %v7925 = vpack.c.b16 %v7757, %v7749
  %v7926 = vpack.c.b16 %v7758, %v7750
  %v7927 = vpack.c.b16 %v7767, %v7759
  %v7928 = vpack.c.b16 %v7768, %v7760
  %v7929 = vpack.c.b16 %v7769, %v7761
  %v7930 = vpack.c.b16 %v7770, %v7762
  %v7931 = vpack.c.b16 %v7771, %v7763
  %v7932 = vpack.c.b16 %v7772, %v7764
  %v7933 = vpack.c.b16 %v7773, %v7765
  %v7934 = vpack.c.b16 %v7774, %v7766
  %v7935 = vpack.c.b16 %v7783, %v7775
  %v7936 = vpack.c.b16 %v7784, %v7776
  %v7937 = vpack.c.b16 %v7785, %v7777
  %v7938 = vpack.c.b16 %v7786, %v7778
  %v7939 = vpack.c.b16 %v7787, %v7779
  %v7940 = vpack.c.b16 %v7788, %v7780
  %v7941 = vpack.c.b16 %v7789, %v7781
  %v7942 = vpack.c.b16 %v7790, %v7782
  %v7943 = vpack.c.b16 %v7799, %v7791
  %v7944 = vpack.c.b16 %v7800, %v7792
  %v7945 = vpack.c.b16 %v7801, %v7793
  %v7946 = vpack.c.b16 %v7802, %v7794
  %v7947 = vpack.c.b16 %v7803, %v7795
  %v7948 = vpack.c.b16 %v7804, %v7796
  %v7949 = vpack.c.b16 %v7805, %v7797
  %v7950 = vpack.c.b16 %v7806, %v7798
  %v7951 = vpack.c.b16 %v7815, %v7807
  %v7952 = vpack.c.b16 %v7816, %v7808
  %v7953 = vpack.c.b16 %v7817, %v7809
  %v7954 = vpack.c.b16 %v7818, %v7810
  %v7955 = vpack.c.b16 %v7819, %v7811
  %v7956 = vpack.c.b16 %v7820, %v7812
  %v7957 = vpack.c.b16 %v7821, %v7813
  %v7958 = vpack.c.b16 %v7822, %v7814
  %v7959 = vpack.c.b16 %v7831, %v7823
  %v7960 = vpack.c.b16 %v7832, %v7824
  %v7961 = vpack.c.b16 %v7833, %v7825
  %v7962 = vpack.c.b16 %v7834, %v7826
  %v7963 = vpack.c.b16 %v7835, %v7827
  %v7964 = vpack.c.b16 %v7836, %v7828
  %v7965 = vpack.c.b16 %v7837, %v7829
  %v7966 = vpack.c.b16 %v7838, %v7830
  %8095 = vmatpush.bf16.msra.mxu0 %v7895
  %8096 = vmatpush.bf16.msra.mxu0 %v7887
  %8097 = vmatpush.bf16.msra.mxu0 %v7879
  %8098 = vmatpush.bf16.msra.mxu0 %v7871
  %8099 = vmatpush.bf16.msra.mxu0 %v7863
  %8100 = vmatpush.bf16.msra.mxu0 %v7855
  %8101 = vmatpush.bf16.msra.mxu0 %v7847
  %8102 = vmatpush.bf16.msra.mxu0 %v7839
  %8103 = vmatmul.bf16.gmra.mxu0 %v7325
  %v8104 = vpop.f32.mrf.mxu0
  %v8105 = vadd.f32 0.0, %v8104
  %v8106 = vpop.f32.mrf.mxu0
  %8107 = vdwg.mxu0
  %8108 = vmatpush.bf16.msra.mxu0 %v7959
  %8109 = vmatpush.bf16.msra.mxu0 %v7951
  %8110 = vmatpush.bf16.msra.mxu0 %v7943
  %8111 = vmatpush.bf16.msra.mxu0 %v7935
  %8112 = vmatpush.bf16.msra.mxu0 %v7927
  %8113 = vmatpush.bf16.msra.mxu0 %v7919
  %8114 = vmatpush.bf16.msra.mxu0 %v7911
  %8115 = vmatpush.bf16.msra.mxu0 %v7903
  %8116 = vmatmul.bf16.gmra.mxu0 %v7326
  %v8117 = vpop.f32.mrf.mxu0
  %v8118 = vadd.f32 %v8105, %v8117
  %v8119 = vpop.f32.mrf.mxu0
  %8120 = vdwg.mxu0
  %8121 = vmatpush.bf16.msra.mxu0 %v7896
  %8122 = vmatpush.bf16.msra.mxu0 %v7888
  %8123 = vmatpush.bf16.msra.mxu0 %v7880
  %8124 = vmatpush.bf16.msra.mxu0 %v7872
  %8125 = vmatpush.bf16.msra.mxu0 %v7864
  %8126 = vmatpush.bf16.msra.mxu0 %v7856
  %8127 = vmatpush.bf16.msra.mxu0 %v7848
  %8128 = vmatpush.bf16.msra.mxu0 %v7840
  %8129 = vmatmul.bf16.gmra.mxu0 %v7325
  %v8130 = vpop.f32.mrf.mxu0
  %v8131 = vadd.f32 0.0, %v8130
  %v8132 = vpop.f32.mrf.mxu0
  %8133 = vdwg.mxu0
  %8134 = vmatpush.bf16.msra.mxu0 %v7960
  %8135 = vmatpush.bf16.msra.mxu0 %v7952
  %8136 = vmatpush.bf16.msra.mxu0 %v7944
  %8137 = vmatpush.bf16.msra.mxu0 %v7936
  %8138 = vmatpush.bf16.msra.mxu0 %v7928
  %8139 = vmatpush.bf16.msra.mxu0 %v7920
  %8140 = vmatpush.bf16.msra.mxu0 %v7912
  %8141 = vmatpush.bf16.msra.mxu0 %v7904
  %8142 = vmatmul.bf16.gmra.mxu0 %v7326
  %v8143 = vpop.f32.mrf.mxu0
  %v8144 = vadd.f32 %v8131, %v8143
  %v8145 = vpop.f32.mrf.mxu0
  %8146 = vdwg.mxu0
  %8147 = vmatpush.bf16.msra.mxu0 %v7897
  %8148 = vmatpush.bf16.msra.mxu0 %v7889
  %8149 = vmatpush.bf16.msra.mxu0 %v7881
  %8150 = vmatpush.bf16.msra.mxu0 %v7873
  %8151 = vmatpush.bf16.msra.mxu0 %v7865
  %8152 = vmatpush.bf16.msra.mxu0 %v7857
  %8153 = vmatpush.bf16.msra.mxu0 %v7849
  %8154 = vmatpush.bf16.msra.mxu0 %v7841
  %8155 = vmatmul.bf16.gmra.mxu0 %v7325
  %v8156 = vpop.f32.mrf.mxu0
  %v8157 = vadd.f32 0.0, %v8156
  %v8158 = vpop.f32.mrf.mxu0
  %8159 = vdwg.mxu0
  %8160 = vmatpush.bf16.msra.mxu0 %v7961
  %8161 = vmatpush.bf16.msra.mxu0 %v7953
  %8162 = vmatpush.bf16.msra.mxu0 %v7945
  %8163 = vmatpush.bf16.msra.mxu0 %v7937
  %8164 = vmatpush.bf16.msra.mxu0 %v7929
  %8165 = vmatpush.bf16.msra.mxu0 %v7921
  %8166 = vmatpush.bf16.msra.mxu0 %v7913
  %8167 = vmatpush.bf16.msra.mxu0 %v7905
  %8168 = vmatmul.bf16.gmra.mxu0 %v7326
  %v8169 = vpop.f32.mrf.mxu0
  %v8170 = vadd.f32 %v8157, %v8169
  %v8171 = vpop.f32.mrf.mxu0
  %8172 = vdwg.mxu0
  %8173 = vmatpush.bf16.msra.mxu0 %v7898
  %8174 = vmatpush.bf16.msra.mxu0 %v7890
  %8175 = vmatpush.bf16.msra.mxu0 %v7882
  %8176 = vmatpush.bf16.msra.mxu0 %v7874
  %8177 = vmatpush.bf16.msra.mxu0 %v7866
  %8178 = vmatpush.bf16.msra.mxu0 %v7858
  %8179 = vmatpush.bf16.msra.mxu0 %v7850
  %8180 = vmatpush.bf16.msra.mxu0 %v7842
  %8181 = vmatmul.bf16.gmra.mxu0 %v7325
  %v8182 = vpop.f32.mrf.mxu0
  %v8183 = vadd.f32 0.0, %v8182
  %v8184 = vpop.f32.mrf.mxu0
  %8185 = vdwg.mxu0
  %8186 = vmatpush.bf16.msra.mxu0 %v7962
  %8187 = vmatpush.bf16.msra.mxu0 %v7954
  %8188 = vmatpush.bf16.msra.mxu0 %v7946
  %8189 = vmatpush.bf16.msra.mxu0 %v7938
  %8190 = vmatpush.bf16.msra.mxu0 %v7930
  %8191 = vmatpush.bf16.msra.mxu0 %v7922
  %8192 = vmatpush.bf16.msra.mxu0 %v7914
  %8193 = vmatpush.bf16.msra.mxu0 %v7906
  %8194 = vmatmul.bf16.gmra.mxu0 %v7326
  %v8195 = vpop.f32.mrf.mxu0
  %v8196 = vadd.f32 %v8183, %v8195
  %v8197 = vpop.f32.mrf.mxu0
  %8198 = vdwg.mxu0
  %8199 = vmatpush.bf16.msra.mxu0 %v7899
  %8200 = vmatpush.bf16.msra.mxu0 %v7891
  %8201 = vmatpush.bf16.msra.mxu0 %v7883
  %8202 = vmatpush.bf16.msra.mxu0 %v7875
  %8203 = vmatpush.bf16.msra.mxu0 %v7867
  %8204 = vmatpush.bf16.msra.mxu0 %v7859
  %8205 = vmatpush.bf16.msra.mxu0 %v7851
  %8206 = vmatpush.bf16.msra.mxu0 %v7843
  %8207 = vmatmul.bf16.gmra.mxu0 %v7325
  %v8208 = vpop.f32.mrf.mxu0
  %v8209 = vadd.f32 0.0, %v8208
  %v8210 = vpop.f32.mrf.mxu0
  %8211 = vdwg.mxu0
  %8212 = vmatpush.bf16.msra.mxu0 %v7963
  %8213 = vmatpush.bf16.msra.mxu0 %v7955
  %8214 = vmatpush.bf16.msra.mxu0 %v7947
  %8215 = vmatpush.bf16.msra.mxu0 %v7939
  %8216 = vmatpush.bf16.msra.mxu0 %v7931
  %8217 = vmatpush.bf16.msra.mxu0 %v7923
  %8218 = vmatpush.bf16.msra.mxu0 %v7915
  %8219 = vmatpush.bf16.msra.mxu0 %v7907
  %8220 = vmatmul.bf16.gmra.mxu0 %v7326
  %v8221 = vpop.f32.mrf.mxu0
  %v8222 = vadd.f32 %v8209, %v8221
  %v8223 = vpop.f32.mrf.mxu0
  %8224 = vdwg.mxu0
  %8225 = vmatpush.bf16.msra.mxu0 %v7900
  %8226 = vmatpush.bf16.msra.mxu0 %v7892
  %8227 = vmatpush.bf16.msra.mxu0 %v7884
  %8228 = vmatpush.bf16.msra.mxu0 %v7876
  %8229 = vmatpush.bf16.msra.mxu0 %v7868
  %8230 = vmatpush.bf16.msra.mxu0 %v7860
  %8231 = vmatpush.bf16.msra.mxu0 %v7852
  %8232 = vmatpush.bf16.msra.mxu0 %v7844
  %8233 = vmatmul.bf16.gmra.mxu0 %v7325
  %v8234 = vpop.f32.mrf.mxu0
  %v8235 = vadd.f32 0.0, %v8234
  %v8236 = vpop.f32.mrf.mxu0
  %8237 = vdwg.mxu0
  %8238 = vmatpush.bf16.msra.mxu0 %v7964
  %8239 = vmatpush.bf16.msra.mxu0 %v7956
  %8240 = vmatpush.bf16.msra.mxu0 %v7948
  %8241 = vmatpush.bf16.msra.mxu0 %v7940
  %8242 = vmatpush.bf16.msra.mxu0 %v7932
  %8243 = vmatpush.bf16.msra.mxu0 %v7924
  %8244 = vmatpush.bf16.msra.mxu0 %v7916
  %8245 = vmatpush.bf16.msra.mxu0 %v7908
  %8246 = vmatmul.bf16.gmra.mxu0 %v7326
  %v8247 = vpop.f32.mrf.mxu0
  %v8248 = vadd.f32 %v8235, %v8247
  %v8249 = vpop.f32.mrf.mxu0
  %8250 = vdwg.mxu0
  %8251 = vmatpush.bf16.msra.mxu0 %v7901
  %8252 = vmatpush.bf16.msra.mxu0 %v7893
  %8253 = vmatpush.bf16.msra.mxu0 %v7885
  %8254 = vmatpush.bf16.msra.mxu0 %v7877
  %8255 = vmatpush.bf16.msra.mxu0 %v7869
  %8256 = vmatpush.bf16.msra.mxu0 %v7861
  %8257 = vmatpush.bf16.msra.mxu0 %v7853
  %8258 = vmatpush.bf16.msra.mxu0 %v7845
  %8259 = vmatmul.bf16.gmra.mxu0 %v7325
  %v8260 = vpop.f32.mrf.mxu0
  %v8261 = vadd.f32 0.0, %v8260
  %v8262 = vpop.f32.mrf.mxu0
  %8263 = vdwg.mxu0
  %8264 = vmatpush.bf16.msra.mxu0 %v7965
  %8265 = vmatpush.bf16.msra.mxu0 %v7957
  %8266 = vmatpush.bf16.msra.mxu0 %v7949
  %8267 = vmatpush.bf16.msra.mxu0 %v7941
  %8268 = vmatpush.bf16.msra.mxu0 %v7933
  %8269 = vmatpush.bf16.msra.mxu0 %v7925
  %8270 = vmatpush.bf16.msra.mxu0 %v7917
  %8271 = vmatpush.bf16.msra.mxu0 %v7909
  %8272 = vmatmul.bf16.gmra.mxu0 %v7326
  %v8273 = vpop.f32.mrf.mxu0
  %v8274 = vadd.f32 %v8261, %v8273
  %v8275 = vpop.f32.mrf.mxu0
  %8276 = vdwg.mxu0
  %8277 = vmatpush.bf16.msra.mxu0 %v7902
  %8278 = vmatpush.bf16.msra.mxu0 %v7894
  %8279 = vmatpush.bf16.msra.mxu0 %v7886
  %8280 = vmatpush.bf16.msra.mxu0 %v7878
  %8281 = vmatpush.bf16.msra.mxu0 %v7870
  %8282 = vmatpush.bf16.msra.mxu0 %v7862
  %8283 = vmatpush.bf16.msra.mxu0 %v7854
  %8284 = vmatpush.bf16.msra.mxu0 %v7846
  %8285 = vmatmul.bf16.gmra.mxu0 %v7325
  %v8286 = vpop.f32.mrf.mxu0
  %v8287 = vadd.f32 0.0, %v8286
  %v8288 = vpop.f32.mrf.mxu0
  %8289 = vdwg.mxu0
  %8290 = vmatpush.bf16.msra.mxu0 %v7966
  %8291 = vmatpush.bf16.msra.mxu0 %v7958
  %8292 = vmatpush.bf16.msra.mxu0 %v7950
  %8293 = vmatpush.bf16.msra.mxu0 %v7942
  %8294 = vmatpush.bf16.msra.mxu0 %v7934
  %8295 = vmatpush.bf16.msra.mxu0 %v7926
  %8296 = vmatpush.bf16.msra.mxu0 %v7918
  %8297 = vmatpush.bf16.msra.mxu0 %v7910
  %8298 = vmatmul.bf16.gmra.mxu0 %v7326
  %v8299 = vpop.f32.mrf.mxu0
  %v8300 = vadd.f32 %v8287, %v8299
  %v8301 = vpop.f32.mrf.mxu0
  %8302 = vdwg.mxu0
  %v8303 = vld [vmem:[%s2612] sm:$0xff]
  %v8304 = vld [vmem:[%s2612 + $0x8] sm:$0xff]
  %v8305 = vld [vmem:[%s2612 + $0x10] sm:$0xff]
  %v8306 = vld [vmem:[%s2612 + $0x18] sm:$0xff]
  %v8307 = vadd.f32 %v8303, %v8118
  %v8308 = vadd.f32 %v8304, %v8144
  %v8309 = vadd.f32 %v8305, %v8170
  %v8310 = vadd.f32 %v8306, %v8196
  %v8311 = vld [vmem:[%s2601 + $0x20] sm:$0xff]
  %v8312 = vld [vmem:[%s2601 + $0x28] sm:$0xff]
  %v8313 = vld [vmem:[%s2601 + $0x30] sm:$0xff]
  %v8314 = vld [vmem:[%s2601 + $0x38] sm:$0xff]
  %v8315 = vadd.f32 %v8311, %v8222
  %v8316 = vadd.f32 %v8312, %v8248
  %v8317 = vadd.f32 %v8313, %v8274
  %v8318 = vadd.f32 %v8314, %v8300
  %v8319 = vxor.u32 %v8307, 2147483648
  %v8320 = vmul.f32 %v8319, 1.442695
  %v8321 = vpow.pop %v8320
  %v8322 = vadd.f32 %v8321, 1.0
  %v8323 = vrcp.pop %v8322
  %v8324 = vmul.f32 %v8322, %v8323
  %v8325 = vsub.f32 1.0, %v8324
  %v8326 = vmul.f32 %v8323, %v8325
  %v8327 = vadd.f32 %v8323, %v8326
  %vm8328 = vweird.f32 %v8322
  %vm8329 = vweird.f32 %v8323
  %vm8330 = vmor %vm8328, %vm8329
  %v8331 = vsel %vm8330, %v8323, %v8327
  %v8332 = vand.u32 2147483647, %v8322
  %vm8333 = vcmp.eq.f32.partialorder %v8332, 8.507059e+37
  %v8334 = vand.u32 %v8322, 2147483648
  %v8335 = vor.u32 1.1754944e-38, %v8334
  %v8336 = vsel %vm8333, %v8335, %v8331
  %v8337 = vmul.f32 1.0, %v8336
  %v8338 = vxor.u32 %v8308, 2147483648
  %v8339 = vmul.f32 %v8338, 1.442695
  %v8340 = vpow.pop %v8339
  %v8341 = vadd.f32 %v8340, 1.0
  %v8342 = vrcp.pop %v8341
  %v8343 = vmul.f32 %v8341, %v8342
  %v8344 = vsub.f32 1.0, %v8343
  %v8345 = vmul.f32 %v8342, %v8344
  %v8346 = vadd.f32 %v8342, %v8345
  %vm8347 = vweird.f32 %v8341
  %vm8348 = vweird.f32 %v8342
  %vm8349 = vmor %vm8347, %vm8348
  %v8350 = vsel %vm8349, %v8342, %v8346
  %v8351 = vand.u32 2147483647, %v8341
  %vm8352 = vcmp.eq.f32.partialorder %v8351, 8.507059e+37
  %v8353 = vand.u32 %v8341, 2147483648
  %v8354 = vor.u32 1.1754944e-38, %v8353
  %v8355 = vsel %vm8352, %v8354, %v8350
  %v8356 = vmul.f32 1.0, %v8355
  %v8357 = vtanh.pop %v8309
  %v8358 = vxor.u32 %v8310, 2147483648
  %v8359 = vmul.f32 %v8358, 1.442695
  %v8360 = vpow.pop %v8359
  %v8361 = vadd.f32 %v8360, 1.0
  %v8362 = vrcp.pop %v8361
  %v8363 = vmul.f32 %v8361, %v8362
  %v8364 = vsub.f32 1.0, %v8363
  %v8365 = vmul.f32 %v8362, %v8364
  %v8366 = vadd.f32 %v8362, %v8365
  %vm8367 = vweird.f32 %v8361
  %vm8368 = vweird.f32 %v8362
  %vm8369 = vmor %vm8367, %vm8368
  %v8370 = vsel %vm8369, %v8362, %v8366
  %v8371 = vand.u32 2147483647, %v8361
  %vm8372 = vcmp.eq.f32.partialorder %v8371, 8.507059e+37
  %v8373 = vand.u32 %v8361, 2147483648
  %v8374 = vor.u32 1.1754944e-38, %v8373
  %v8375 = vsel %vm8372, %v8374, %v8370
  %v8376 = vmul.f32 1.0, %v8375
  %v8377 = vmul.f32 %v8356, %v7322
  %v8378 = vmul.f32 %v8337, %v8357
  %v8379 = vadd.f32 %v8377, %v8378
  %v8380 = vtanh.pop %v8379
  %v8381 = vmul.f32 %v8376, %v8380
  %v8382 = vxor.u32 %v8315, 2147483648
  %v8383 = vmul.f32 %v8382, 1.442695
  %v8384 = vpow.pop %v8383
  %v8385 = vadd.f32 %v8384, 1.0
  %v8386 = vrcp.pop %v8385
  %v8387 = vmul.f32 %v8385, %v8386
  %v8388 = vsub.f32 1.0, %v8387
  %v8389 = vmul.f32 %v8386, %v8388
  %v8390 = vadd.f32 %v8386, %v8389
  %vm8391 = vweird.f32 %v8385
  %vm8392 = vweird.f32 %v8386
  %vm8393 = vmor %vm8391, %vm8392
  %v8394 = vsel %vm8393, %v8386, %v8390
  %v8395 = vand.u32 2147483647, %v8385
  %vm8396 = vcmp.eq.f32.partialorder %v8395, 8.507059e+37
  %v8397 = vand.u32 %v8385, 2147483648
  %v8398 = vor.u32 1.1754944e-38, %v8397
  %v8399 = vsel %vm8396, %v8398, %v8394
  %v8400 = vmul.f32 1.0, %v8399
  %v8401 = vxor.u32 %v8316, 2147483648
  %v8402 = vmul.f32 %v8401, 1.442695
  %v8403 = vpow.pop %v8402
  %v8404 = vadd.f32 %v8403, 1.0
  %v8405 = vrcp.pop %v8404
  %v8406 = vmul.f32 %v8404, %v8405
  %v8407 = vsub.f32 1.0, %v8406
  %v8408 = vmul.f32 %v8405, %v8407
  %v8409 = vadd.f32 %v8405, %v8408
  %vm8410 = vweird.f32 %v8404
  %vm8411 = vweird.f32 %v8405
  %vm8412 = vmor %vm8410, %vm8411
  %v8413 = vsel %vm8412, %v8405, %v8409
  %v8414 = vand.u32 2147483647, %v8404
  %vm8415 = vcmp.eq.f32.partialorder %v8414, 8.507059e+37
  %v8416 = vand.u32 %v8404, 2147483648
  %v8417 = vor.u32 1.1754944e-38, %v8416
  %v8418 = vsel %vm8415, %v8417, %v8413
  %v8419 = vmul.f32 1.0, %v8418
  %v8420 = vtanh.pop %v8317
  %v8421 = vxor.u32 %v8318, 2147483648
  %v8422 = vmul.f32 %v8421, 1.442695
  %v8423 = vpow.pop %v8422
  %v8424 = vadd.f32 %v8423, 1.0
  %v8425 = vrcp.pop %v8424
  %v8426 = vmul.f32 %v8424, %v8425
  %v8427 = vsub.f32 1.0, %v8426
  %v8428 = vmul.f32 %v8425, %v8427
  %v8429 = vadd.f32 %v8425, %v8428
  %vm8430 = vweird.f32 %v8424
  %vm8431 = vweird.f32 %v8425
  %vm8432 = vmor %vm8430, %vm8431
  %v8433 = vsel %vm8432, %v8425, %v8429
  %v8434 = vand.u32 2147483647, %v8424
  %vm8435 = vcmp.eq.f32.partialorder %v8434, 8.507059e+37
  %v8436 = vand.u32 %v8424, 2147483648
  %v8437 = vor.u32 1.1754944e-38, %v8436
  %v8438 = vsel %vm8435, %v8437, %v8433
  %v8439 = vmul.f32 1.0, %v8438
  %v8440 = vmul.f32 %v8419, %v7324
  %v8441 = vmul.f32 %v8400, %v8420
  %v8442 = vadd.f32 %v8440, %v8441
  %v8443 = vtanh.pop %v8442
  %v8444 = vmul.f32 %v8439, %v8443
  %v8445 = vsel %vm2758, %v8381, 0.0
  %s8446 = scalar_lea.vmem %s5, 48
  %8447 = vst [vmem:[%s8446] sm:$0xff] %v8445
  %v8448 = vsel %vm2752, %v8444, 0.0
  %s8449 = scalar_lea.vmem %s6, 8
  %8450 = vst [vmem:[%s8449] sm:$0xff] %v8448
  %v8451 = vsel %vm2758, %v8381, %v7321
  %v8452 = vsel %vm2758, %v8379, %v7322
  %v8453 = vsel %vm2752, %v8444, %v7323
  %v8454 = vsel %vm2752, %v8442, %v7324
  %v8455 = vpack.c.bf16 %v8451, %v8451
  %v8456 = vpack.c.bf16 %v8453, %v8453
  %v8457 = vld [vmem:[%s3] sm:$0xff]
  %v8458 = vld [vmem:[%s3 + $0x8] sm:$0xff]
  %v8459 = vld [vmem:[%s3 + $0x10] sm:$0xff]
  %v8460 = vld [vmem:[%s3 + $0x18] sm:$0xff]
  %v8461 = vld [vmem:[%s3 + $0x20] sm:$0xff]
  %v8462 = vld [vmem:[%s3 + $0x28] sm:$0xff]
  %v8463 = vld [vmem:[%s3 + $0x30] sm:$0xff]
  %v8464 = vld [vmem:[%s3 + $0x38] sm:$0xff]
  %v8465 = vld [vmem:[%s3 + $0x40] sm:$0xff]
  %v8466 = vld [vmem:[%s3 + $0x48] sm:$0xff]
  %v8467 = vld [vmem:[%s3 + $0x50] sm:$0xff]
  %v8468 = vld [vmem:[%s3 + $0x58] sm:$0xff]
  %v8469 = vld [vmem:[%s3 + $0x60] sm:$0xff]
  %v8470 = vld [vmem:[%s3 + $0x68] sm:$0xff]
  %v8471 = vld [vmem:[%s3 + $0x70] sm:$0xff]
  %v8472 = vld [vmem:[%s3 + $0x78] sm:$0xff]
  %v8473 = vld [vmem:[%s3 + $0x80] sm:$0xff]
  %v8474 = vld [vmem:[%s3 + $0x88] sm:$0xff]
  %v8475 = vld [vmem:[%s3 + $0x90] sm:$0xff]
  %v8476 = vld [vmem:[%s3 + $0x98] sm:$0xff]
  %v8477 = vld [vmem:[%s3 + $0xa0] sm:$0xff]
  %v8478 = vld [vmem:[%s3 + $0xa8] sm:$0xff]
  %v8479 = vld [vmem:[%s3 + $0xb0] sm:$0xff]
  %v8480 = vld [vmem:[%s3 + $0xb8] sm:$0xff]
  %v8481 = vld [vmem:[%s3 + $0xc0] sm:$0xff]
  %v8482 = vld [vmem:[%s3 + $0xc8] sm:$0xff]
  %v8483 = vld [vmem:[%s3 + $0xd0] sm:$0xff]
  %v8484 = vld [vmem:[%s3 + $0xd8] sm:$0xff]
  %v8485 = vld [vmem:[%s3 + $0xe0] sm:$0xff]
  %v8486 = vld [vmem:[%s3 + $0xe8] sm:$0xff]
  %v8487 = vld [vmem:[%s3 + $0xf0] sm:$0xff]
  %v8488 = vld [vmem:[%s3 + $0xf8] sm:$0xff]
  %v8489 = vld [vmem:[%s3 + $0x100] sm:$0xff]
  %v8490 = vld [vmem:[%s3 + $0x108] sm:$0xff]
  %v8491 = vld [vmem:[%s3 + $0x110] sm:$0xff]
  %v8492 = vld [vmem:[%s3 + $0x118] sm:$0xff]
  %v8493 = vld [vmem:[%s3 + $0x120] sm:$0xff]
  %v8494 = vld [vmem:[%s3 + $0x128] sm:$0xff]
  %v8495 = vld [vmem:[%s3 + $0x130] sm:$0xff]
  %v8496 = vld [vmem:[%s3 + $0x138] sm:$0xff]
  %v8497 = vld [vmem:[%s3 + $0x140] sm:$0xff]
  %v8498 = vld [vmem:[%s3 + $0x148] sm:$0xff]
  %v8499 = vld [vmem:[%s3 + $0x150] sm:$0xff]
  %v8500 = vld [vmem:[%s3 + $0x158] sm:$0xff]
  %v8501 = vld [vmem:[%s3 + $0x160] sm:$0xff]
  %v8502 = vld [vmem:[%s3 + $0x168] sm:$0xff]
  %v8503 = vld [vmem:[%s3 + $0x170] sm:$0xff]
  %v8504 = vld [vmem:[%s3 + $0x178] sm:$0xff]
  %v8505 = vld [vmem:[%s3 + $0x180] sm:$0xff]
  %v8506 = vld [vmem:[%s3 + $0x188] sm:$0xff]
  %v8507 = vld [vmem:[%s3 + $0x190] sm:$0xff]
  %v8508 = vld [vmem:[%s3 + $0x198] sm:$0xff]
  %v8509 = vld [vmem:[%s3 + $0x1a0] sm:$0xff]
  %v8510 = vld [vmem:[%s3 + $0x1a8] sm:$0xff]
  %v8511 = vld [vmem:[%s3 + $0x1b0] sm:$0xff]
  %v8512 = vld [vmem:[%s3 + $0x1b8] sm:$0xff]
  %v8513 = vld [vmem:[%s3 + $0x1c0] sm:$0xff]
  %v8514 = vld [vmem:[%s3 + $0x1c8] sm:$0xff]
  %v8515 = vld [vmem:[%s3 + $0x1d0] sm:$0xff]
  %v8516 = vld [vmem:[%s3 + $0x1d8] sm:$0xff]
  %v8517 = vld [vmem:[%s3 + $0x1e0] sm:$0xff]
  %v8518 = vld [vmem:[%s3 + $0x1e8] sm:$0xff]
  %v8519 = vld [vmem:[%s3 + $0x1f0] sm:$0xff]
  %v8520 = vld [vmem:[%s3 + $0x1f8] sm:$0xff]
  %v8521 = vld [vmem:[%s3 + $0x200] sm:$0xff]
  %v8522 = vld [vmem:[%s3 + $0x208] sm:$0xff]
  %v8523 = vld [vmem:[%s3 + $0x210] sm:$0xff]
  %v8524 = vld [vmem:[%s3 + $0x218] sm:$0xff]
  %v8525 = vld [vmem:[%s3 + $0x220] sm:$0xff]
  %v8526 = vld [vmem:[%s3 + $0x228] sm:$0xff]
  %v8527 = vld [vmem:[%s3 + $0x230] sm:$0xff]
  %v8528 = vld [vmem:[%s3 + $0x238] sm:$0xff]
  %v8529 = vld [vmem:[%s3 + $0x240] sm:$0xff]
  %v8530 = vld [vmem:[%s3 + $0x248] sm:$0xff]
  %v8531 = vld [vmem:[%s3 + $0x250] sm:$0xff]
  %v8532 = vld [vmem:[%s3 + $0x258] sm:$0xff]
  %v8533 = vld [vmem:[%s3 + $0x260] sm:$0xff]
  %v8534 = vld [vmem:[%s3 + $0x268] sm:$0xff]
  %v8535 = vld [vmem:[%s3 + $0x270] sm:$0xff]
  %v8536 = vld [vmem:[%s3 + $0x278] sm:$0xff]
  %v8537 = vld [vmem:[%s3 + $0x280] sm:$0xff]
  %v8538 = vld [vmem:[%s3 + $0x288] sm:$0xff]
  %v8539 = vld [vmem:[%s3 + $0x290] sm:$0xff]
  %v8540 = vld [vmem:[%s3 + $0x298] sm:$0xff]
  %v8541 = vld [vmem:[%s3 + $0x2a0] sm:$0xff]
  %v8542 = vld [vmem:[%s3 + $0x2a8] sm:$0xff]
  %v8543 = vld [vmem:[%s3 + $0x2b0] sm:$0xff]
  %v8544 = vld [vmem:[%s3 + $0x2b8] sm:$0xff]
  %v8545 = vld [vmem:[%s3 + $0x2c0] sm:$0xff]
  %v8546 = vld [vmem:[%s3 + $0x2c8] sm:$0xff]
  %v8547 = vld [vmem:[%s3 + $0x2d0] sm:$0xff]
  %v8548 = vld [vmem:[%s3 + $0x2d8] sm:$0xff]
  %v8549 = vld [vmem:[%s3 + $0x2e0] sm:$0xff]
  %v8550 = vld [vmem:[%s3 + $0x2e8] sm:$0xff]
  %v8551 = vld [vmem:[%s3 + $0x2f0] sm:$0xff]
  %v8552 = vld [vmem:[%s3 + $0x2f8] sm:$0xff]
  %v8553 = vld [vmem:[%s3 + $0x300] sm:$0xff]
  %v8554 = vld [vmem:[%s3 + $0x308] sm:$0xff]
  %v8555 = vld [vmem:[%s3 + $0x310] sm:$0xff]
  %v8556 = vld [vmem:[%s3 + $0x318] sm:$0xff]
  %v8557 = vld [vmem:[%s3 + $0x320] sm:$0xff]
  %v8558 = vld [vmem:[%s3 + $0x328] sm:$0xff]
  %v8559 = vld [vmem:[%s3 + $0x330] sm:$0xff]
  %v8560 = vld [vmem:[%s3 + $0x338] sm:$0xff]
  %v8561 = vld [vmem:[%s3 + $0x340] sm:$0xff]
  %v8562 = vld [vmem:[%s3 + $0x348] sm:$0xff]
  %v8563 = vld [vmem:[%s3 + $0x350] sm:$0xff]
  %v8564 = vld [vmem:[%s3 + $0x358] sm:$0xff]
  %v8565 = vld [vmem:[%s3 + $0x360] sm:$0xff]
  %v8566 = vld [vmem:[%s3 + $0x368] sm:$0xff]
  %v8567 = vld [vmem:[%s3 + $0x370] sm:$0xff]
  %v8568 = vld [vmem:[%s3 + $0x378] sm:$0xff]
  %v8569 = vld [vmem:[%s3 + $0x380] sm:$0xff]
  %v8570 = vld [vmem:[%s3 + $0x388] sm:$0xff]
  %v8571 = vld [vmem:[%s3 + $0x390] sm:$0xff]
  %v8572 = vld [vmem:[%s3 + $0x398] sm:$0xff]
  %v8573 = vld [vmem:[%s3 + $0x3a0] sm:$0xff]
  %v8574 = vld [vmem:[%s3 + $0x3a8] sm:$0xff]
  %v8575 = vld [vmem:[%s3 + $0x3b0] sm:$0xff]
  %v8576 = vld [vmem:[%s3 + $0x3b8] sm:$0xff]
  %v8577 = vld [vmem:[%s3 + $0x3c0] sm:$0xff]
  %v8578 = vld [vmem:[%s3 + $0x3c8] sm:$0xff]
  %v8579 = vld [vmem:[%s3 + $0x3d0] sm:$0xff]
  %v8580 = vld [vmem:[%s3 + $0x3d8] sm:$0xff]
  %v8581 = vld [vmem:[%s3 + $0x3e0] sm:$0xff]
  %v8582 = vld [vmem:[%s3 + $0x3e8] sm:$0xff]
  %v8583 = vld [vmem:[%s3 + $0x3f0] sm:$0xff]
  %v8584 = vld [vmem:[%s3 + $0x3f8] sm:$0xff]
  %v8713 = vunpack.c.l.b16 %v8457
  %v8714 = vunpack.c.h.b16 %v8457
  %v8715 = vunpack.c.l.b16 %v8458
  %v8716 = vunpack.c.h.b16 %v8458
  %v8717 = vunpack.c.l.b16 %v8459
  %v8718 = vunpack.c.h.b16 %v8459
  %v8719 = vunpack.c.l.b16 %v8460
  %v8720 = vunpack.c.h.b16 %v8460
  %v8721 = vunpack.c.l.b16 %v8461
  %v8722 = vunpack.c.h.b16 %v8461
  %v8723 = vunpack.c.l.b16 %v8462
  %v8724 = vunpack.c.h.b16 %v8462
  %v8725 = vunpack.c.l.b16 %v8463
  %v8726 = vunpack.c.h.b16 %v8463
  %v8727 = vunpack.c.l.b16 %v8464
  %v8728 = vunpack.c.h.b16 %v8464
  %v8729 = vunpack.c.l.b16 %v8465
  %v8730 = vunpack.c.h.b16 %v8465
  %v8731 = vunpack.c.l.b16 %v8466
  %v8732 = vunpack.c.h.b16 %v8466
  %v8733 = vunpack.c.l.b16 %v8467
  %v8734 = vunpack.c.h.b16 %v8467
  %v8735 = vunpack.c.l.b16 %v8468
  %v8736 = vunpack.c.h.b16 %v8468
  %v8737 = vunpack.c.l.b16 %v8469
  %v8738 = vunpack.c.h.b16 %v8469
  %v8739 = vunpack.c.l.b16 %v8470
  %v8740 = vunpack.c.h.b16 %v8470
  %v8741 = vunpack.c.l.b16 %v8471
  %v8742 = vunpack.c.h.b16 %v8471
  %v8743 = vunpack.c.l.b16 %v8472
  %v8744 = vunpack.c.h.b16 %v8472
  %v8745 = vunpack.c.l.b16 %v8473
  %v8746 = vunpack.c.h.b16 %v8473
  %v8747 = vunpack.c.l.b16 %v8474
  %v8748 = vunpack.c.h.b16 %v8474
  %v8749 = vunpack.c.l.b16 %v8475
  %v8750 = vunpack.c.h.b16 %v8475
  %v8751 = vunpack.c.l.b16 %v8476
  %v8752 = vunpack.c.h.b16 %v8476
  %v8753 = vunpack.c.l.b16 %v8477
  %v8754 = vunpack.c.h.b16 %v8477
  %v8755 = vunpack.c.l.b16 %v8478
  %v8756 = vunpack.c.h.b16 %v8478
  %v8757 = vunpack.c.l.b16 %v8479
  %v8758 = vunpack.c.h.b16 %v8479
  %v8759 = vunpack.c.l.b16 %v8480
  %v8760 = vunpack.c.h.b16 %v8480
  %v8761 = vunpack.c.l.b16 %v8481
  %v8762 = vunpack.c.h.b16 %v8481
  %v8763 = vunpack.c.l.b16 %v8482
  %v8764 = vunpack.c.h.b16 %v8482
  %v8765 = vunpack.c.l.b16 %v8483
  %v8766 = vunpack.c.h.b16 %v8483
  %v8767 = vunpack.c.l.b16 %v8484
  %v8768 = vunpack.c.h.b16 %v8484
  %v8769 = vunpack.c.l.b16 %v8485
  %v8770 = vunpack.c.h.b16 %v8485
  %v8771 = vunpack.c.l.b16 %v8486
  %v8772 = vunpack.c.h.b16 %v8486
  %v8773 = vunpack.c.l.b16 %v8487
  %v8774 = vunpack.c.h.b16 %v8487
  %v8775 = vunpack.c.l.b16 %v8488
  %v8776 = vunpack.c.h.b16 %v8488
  %v8777 = vunpack.c.l.b16 %v8489
  %v8778 = vunpack.c.h.b16 %v8489
  %v8779 = vunpack.c.l.b16 %v8490
  %v8780 = vunpack.c.h.b16 %v8490
  %v8781 = vunpack.c.l.b16 %v8491
  %v8782 = vunpack.c.h.b16 %v8491
  %v8783 = vunpack.c.l.b16 %v8492
  %v8784 = vunpack.c.h.b16 %v8492
  %v8785 = vunpack.c.l.b16 %v8493
  %v8786 = vunpack.c.h.b16 %v8493
  %v8787 = vunpack.c.l.b16 %v8494
  %v8788 = vunpack.c.h.b16 %v8494
  %v8789 = vunpack.c.l.b16 %v8495
  %v8790 = vunpack.c.h.b16 %v8495
  %v8791 = vunpack.c.l.b16 %v8496
  %v8792 = vunpack.c.h.b16 %v8496
  %v8793 = vunpack.c.l.b16 %v8497
  %v8794 = vunpack.c.h.b16 %v8497
  %v8795 = vunpack.c.l.b16 %v8498
  %v8796 = vunpack.c.h.b16 %v8498
  %v8797 = vunpack.c.l.b16 %v8499
  %v8798 = vunpack.c.h.b16 %v8499
  %v8799 = vunpack.c.l.b16 %v8500
  %v8800 = vunpack.c.h.b16 %v8500
  %v8801 = vunpack.c.l.b16 %v8501
  %v8802 = vunpack.c.h.b16 %v8501
  %v8803 = vunpack.c.l.b16 %v8502
  %v8804 = vunpack.c.h.b16 %v8502
  %v8805 = vunpack.c.l.b16 %v8503
  %v8806 = vunpack.c.h.b16 %v8503
  %v8807 = vunpack.c.l.b16 %v8504
  %v8808 = vunpack.c.h.b16 %v8504
  %v8809 = vunpack.c.l.b16 %v8505
  %v8810 = vunpack.c.h.b16 %v8505
  %v8811 = vunpack.c.l.b16 %v8506
  %v8812 = vunpack.c.h.b16 %v8506
  %v8813 = vunpack.c.l.b16 %v8507
  %v8814 = vunpack.c.h.b16 %v8507
  %v8815 = vunpack.c.l.b16 %v8508
  %v8816 = vunpack.c.h.b16 %v8508
  %v8817 = vunpack.c.l.b16 %v8509
  %v8818 = vunpack.c.h.b16 %v8509
  %v8819 = vunpack.c.l.b16 %v8510
  %v8820 = vunpack.c.h.b16 %v8510
  %v8821 = vunpack.c.l.b16 %v8511
  %v8822 = vunpack.c.h.b16 %v8511
  %v8823 = vunpack.c.l.b16 %v8512
  %v8824 = vunpack.c.h.b16 %v8512
  %v8825 = vunpack.c.l.b16 %v8513
  %v8826 = vunpack.c.h.b16 %v8513
  %v8827 = vunpack.c.l.b16 %v8514
  %v8828 = vunpack.c.h.b16 %v8514
  %v8829 = vunpack.c.l.b16 %v8515
  %v8830 = vunpack.c.h.b16 %v8515
  %v8831 = vunpack.c.l.b16 %v8516
  %v8832 = vunpack.c.h.b16 %v8516
  %v8833 = vunpack.c.l.b16 %v8517
  %v8834 = vunpack.c.h.b16 %v8517
  %v8835 = vunpack.c.l.b16 %v8518
  %v8836 = vunpack.c.h.b16 %v8518
  %v8837 = vunpack.c.l.b16 %v8519
  %v8838 = vunpack.c.h.b16 %v8519
  %v8839 = vunpack.c.l.b16 %v8520
  %v8840 = vunpack.c.h.b16 %v8520
  %v8841 = vunpack.c.l.b16 %v8521
  %v8842 = vunpack.c.h.b16 %v8521
  %v8843 = vunpack.c.l.b16 %v8522
  %v8844 = vunpack.c.h.b16 %v8522
  %v8845 = vunpack.c.l.b16 %v8523
  %v8846 = vunpack.c.h.b16 %v8523
  %v8847 = vunpack.c.l.b16 %v8524
  %v8848 = vunpack.c.h.b16 %v8524
  %v8849 = vunpack.c.l.b16 %v8525
  %v8850 = vunpack.c.h.b16 %v8525
  %v8851 = vunpack.c.l.b16 %v8526
  %v8852 = vunpack.c.h.b16 %v8526
  %v8853 = vunpack.c.l.b16 %v8527
  %v8854 = vunpack.c.h.b16 %v8527
  %v8855 = vunpack.c.l.b16 %v8528
  %v8856 = vunpack.c.h.b16 %v8528
  %v8857 = vunpack.c.l.b16 %v8529
  %v8858 = vunpack.c.h.b16 %v8529
  %v8859 = vunpack.c.l.b16 %v8530
  %v8860 = vunpack.c.h.b16 %v8530
  %v8861 = vunpack.c.l.b16 %v8531
  %v8862 = vunpack.c.h.b16 %v8531
  %v8863 = vunpack.c.l.b16 %v8532
  %v8864 = vunpack.c.h.b16 %v8532
  %v8865 = vunpack.c.l.b16 %v8533
  %v8866 = vunpack.c.h.b16 %v8533
  %v8867 = vunpack.c.l.b16 %v8534
  %v8868 = vunpack.c.h.b16 %v8534
  %v8869 = vunpack.c.l.b16 %v8535
  %v8870 = vunpack.c.h.b16 %v8535
  %v8871 = vunpack.c.l.b16 %v8536
  %v8872 = vunpack.c.h.b16 %v8536
  %v8873 = vunpack.c.l.b16 %v8537
  %v8874 = vunpack.c.h.b16 %v8537
  %v8875 = vunpack.c.l.b16 %v8538
  %v8876 = vunpack.c.h.b16 %v8538
  %v8877 = vunpack.c.l.b16 %v8539
  %v8878 = vunpack.c.h.b16 %v8539
  %v8879 = vunpack.c.l.b16 %v8540
  %v8880 = vunpack.c.h.b16 %v8540
  %v8881 = vunpack.c.l.b16 %v8541
  %v8882 = vunpack.c.h.b16 %v8541
  %v8883 = vunpack.c.l.b16 %v8542
  %v8884 = vunpack.c.h.b16 %v8542
  %v8885 = vunpack.c.l.b16 %v8543
  %v8886 = vunpack.c.h.b16 %v8543
  %v8887 = vunpack.c.l.b16 %v8544
  %v8888 = vunpack.c.h.b16 %v8544
  %v8889 = vunpack.c.l.b16 %v8545
  %v8890 = vunpack.c.h.b16 %v8545
  %v8891 = vunpack.c.l.b16 %v8546
  %v8892 = vunpack.c.h.b16 %v8546
  %v8893 = vunpack.c.l.b16 %v8547
  %v8894 = vunpack.c.h.b16 %v8547
  %v8895 = vunpack.c.l.b16 %v8548
  %v8896 = vunpack.c.h.b16 %v8548
  %v8897 = vunpack.c.l.b16 %v8549
  %v8898 = vunpack.c.h.b16 %v8549
  %v8899 = vunpack.c.l.b16 %v8550
  %v8900 = vunpack.c.h.b16 %v8550
  %v8901 = vunpack.c.l.b16 %v8551
  %v8902 = vunpack.c.h.b16 %v8551
  %v8903 = vunpack.c.l.b16 %v8552
  %v8904 = vunpack.c.h.b16 %v8552
  %v8905 = vunpack.c.l.b16 %v8553
  %v8906 = vunpack.c.h.b16 %v8553
  %v8907 = vunpack.c.l.b16 %v8554
  %v8908 = vunpack.c.h.b16 %v8554
  %v8909 = vunpack.c.l.b16 %v8555
  %v8910 = vunpack.c.h.b16 %v8555
  %v8911 = vunpack.c.l.b16 %v8556
  %v8912 = vunpack.c.h.b16 %v8556
  %v8913 = vunpack.c.l.b16 %v8557
  %v8914 = vunpack.c.h.b16 %v8557
  %v8915 = vunpack.c.l.b16 %v8558
  %v8916 = vunpack.c.h.b16 %v8558
  %v8917 = vunpack.c.l.b16 %v8559
  %v8918 = vunpack.c.h.b16 %v8559
  %v8919 = vunpack.c.l.b16 %v8560
  %v8920 = vunpack.c.h.b16 %v8560
  %v8921 = vunpack.c.l.b16 %v8561
  %v8922 = vunpack.c.h.b16 %v8561
  %v8923 = vunpack.c.l.b16 %v8562
  %v8924 = vunpack.c.h.b16 %v8562
  %v8925 = vunpack.c.l.b16 %v8563
  %v8926 = vunpack.c.h.b16 %v8563
  %v8927 = vunpack.c.l.b16 %v8564
  %v8928 = vunpack.c.h.b16 %v8564
  %v8929 = vunpack.c.l.b16 %v8565
  %v8930 = vunpack.c.h.b16 %v8565
  %v8931 = vunpack.c.l.b16 %v8566
  %v8932 = vunpack.c.h.b16 %v8566
  %v8933 = vunpack.c.l.b16 %v8567
  %v8934 = vunpack.c.h.b16 %v8567
  %v8935 = vunpack.c.l.b16 %v8568
  %v8936 = vunpack.c.h.b16 %v8568
  %v8937 = vunpack.c.l.b16 %v8569
  %v8938 = vunpack.c.h.b16 %v8569
  %v8939 = vunpack.c.l.b16 %v8570
  %v8940 = vunpack.c.h.b16 %v8570
  %v8941 = vunpack.c.l.b16 %v8571
  %v8942 = vunpack.c.h.b16 %v8571
  %v8943 = vunpack.c.l.b16 %v8572
  %v8944 = vunpack.c.h.b16 %v8572
  %v8945 = vunpack.c.l.b16 %v8573
  %v8946 = vunpack.c.h.b16 %v8573
  %v8947 = vunpack.c.l.b16 %v8574
  %v8948 = vunpack.c.h.b16 %v8574
  %v8949 = vunpack.c.l.b16 %v8575
  %v8950 = vunpack.c.h.b16 %v8575
  %v8951 = vunpack.c.l.b16 %v8576
  %v8952 = vunpack.c.h.b16 %v8576
  %v8953 = vunpack.c.l.b16 %v8577
  %v8954 = vunpack.c.h.b16 %v8577
  %v8955 = vunpack.c.l.b16 %v8578
  %v8956 = vunpack.c.h.b16 %v8578
  %v8957 = vunpack.c.l.b16 %v8579
  %v8958 = vunpack.c.h.b16 %v8579
  %v8959 = vunpack.c.l.b16 %v8580
  %v8960 = vunpack.c.h.b16 %v8580
  %v8961 = vunpack.c.l.b16 %v8581
  %v8962 = vunpack.c.h.b16 %v8581
  %v8963 = vunpack.c.l.b16 %v8582
  %v8964 = vunpack.c.h.b16 %v8582
  %v8965 = vunpack.c.l.b16 %v8583
  %v8966 = vunpack.c.h.b16 %v8583
  %v8967 = vunpack.c.l.b16 %v8584
  %v8968 = vunpack.c.h.b16 %v8584
  %v8969 = vpack.c.b16 %v8721, %v8713
  %v8970 = vpack.c.b16 %v8722, %v8714
  %v8971 = vpack.c.b16 %v8723, %v8715
  %v8972 = vpack.c.b16 %v8724, %v8716
  %v8973 = vpack.c.b16 %v8725, %v8717
  %v8974 = vpack.c.b16 %v8726, %v8718
  %v8975 = vpack.c.b16 %v8727, %v8719
  %v8976 = vpack.c.b16 %v8728, %v8720
  %v8977 = vpack.c.b16 %v8737, %v8729
  %v8978 = vpack.c.b16 %v8738, %v8730
  %v8979 = vpack.c.b16 %v8739, %v8731
  %v8980 = vpack.c.b16 %v8740, %v8732
  %v8981 = vpack.c.b16 %v8741, %v8733
  %v8982 = vpack.c.b16 %v8742, %v8734
  %v8983 = vpack.c.b16 %v8743, %v8735
  %v8984 = vpack.c.b16 %v8744, %v8736
  %v8985 = vpack.c.b16 %v8753, %v8745
  %v8986 = vpack.c.b16 %v8754, %v8746
  %v8987 = vpack.c.b16 %v8755, %v8747
  %v8988 = vpack.c.b16 %v8756, %v8748
  %v8989 = vpack.c.b16 %v8757, %v8749
  %v8990 = vpack.c.b16 %v8758, %v8750
  %v8991 = vpack.c.b16 %v8759, %v8751
  %v8992 = vpack.c.b16 %v8760, %v8752
  %v8993 = vpack.c.b16 %v8769, %v8761
  %v8994 = vpack.c.b16 %v8770, %v8762
  %v8995 = vpack.c.b16 %v8771, %v8763
  %v8996 = vpack.c.b16 %v8772, %v8764
  %v8997 = vpack.c.b16 %v8773, %v8765
  %v8998 = vpack.c.b16 %v8774, %v8766
  %v8999 = vpack.c.b16 %v8775, %v8767
  %v9000 = vpack.c.b16 %v8776, %v8768
  %v9001 = vpack.c.b16 %v8785, %v8777
  %v9002 = vpack.c.b16 %v8786, %v8778
  %v9003 = vpack.c.b16 %v8787, %v8779
  %v9004 = vpack.c.b16 %v8788, %v8780
  %v9005 = vpack.c.b16 %v8789, %v8781
  %v9006 = vpack.c.b16 %v8790, %v8782
  %v9007 = vpack.c.b16 %v8791, %v8783
  %v9008 = vpack.c.b16 %v8792, %v8784
  %v9009 = vpack.c.b16 %v8801, %v8793
  %v9010 = vpack.c.b16 %v8802, %v8794
  %v9011 = vpack.c.b16 %v8803, %v8795
  %v9012 = vpack.c.b16 %v8804, %v8796
  %v9013 = vpack.c.b16 %v8805, %v8797
  %v9014 = vpack.c.b16 %v8806, %v8798
  %v9015 = vpack.c.b16 %v8807, %v8799
  %v9016 = vpack.c.b16 %v8808, %v8800
  %v9017 = vpack.c.b16 %v8817, %v8809
  %v9018 = vpack.c.b16 %v8818, %v8810
  %v9019 = vpack.c.b16 %v8819, %v8811
  %v9020 = vpack.c.b16 %v8820, %v8812
  %v9021 = vpack.c.b16 %v8821, %v8813
  %v9022 = vpack.c.b16 %v8822, %v8814
  %v9023 = vpack.c.b16 %v8823, %v8815
  %v9024 = vpack.c.b16 %v8824, %v8816
  %v9025 = vpack.c.b16 %v8833, %v8825
  %v9026 = vpack.c.b16 %v8834, %v8826
  %v9027 = vpack.c.b16 %v8835, %v8827
  %v9028 = vpack.c.b16 %v8836, %v8828
  %v9029 = vpack.c.b16 %v8837, %v8829
  %v9030 = vpack.c.b16 %v8838, %v8830
  %v9031 = vpack.c.b16 %v8839, %v8831
  %v9032 = vpack.c.b16 %v8840, %v8832
  %v9033 = vpack.c.b16 %v8849, %v8841
  %v9034 = vpack.c.b16 %v8850, %v8842
  %v9035 = vpack.c.b16 %v8851, %v8843
  %v9036 = vpack.c.b16 %v8852, %v8844
  %v9037 = vpack.c.b16 %v8853, %v8845
  %v9038 = vpack.c.b16 %v8854, %v8846
  %v9039 = vpack.c.b16 %v8855, %v8847
  %v9040 = vpack.c.b16 %v8856, %v8848
  %v9041 = vpack.c.b16 %v8865, %v8857
  %v9042 = vpack.c.b16 %v8866, %v8858
  %v9043 = vpack.c.b16 %v8867, %v8859
  %v9044 = vpack.c.b16 %v8868, %v8860
  %v9045 = vpack.c.b16 %v8869, %v8861
  %v9046 = vpack.c.b16 %v8870, %v8862
  %v9047 = vpack.c.b16 %v8871, %v8863
  %v9048 = vpack.c.b16 %v8872, %v8864
  %v9049 = vpack.c.b16 %v8881, %v8873
  %v9050 = vpack.c.b16 %v8882, %v8874
  %v9051 = vpack.c.b16 %v8883, %v8875
  %v9052 = vpack.c.b16 %v8884, %v8876
  %v9053 = vpack.c.b16 %v8885, %v8877
  %v9054 = vpack.c.b16 %v8886, %v8878
  %v9055 = vpack.c.b16 %v8887, %v8879
  %v9056 = vpack.c.b16 %v8888, %v8880
  %v9057 = vpack.c.b16 %v8897, %v8889
  %v9058 = vpack.c.b16 %v8898, %v8890
  %v9059 = vpack.c.b16 %v8899, %v8891
  %v9060 = vpack.c.b16 %v8900, %v8892
  %v9061 = vpack.c.b16 %v8901, %v8893
  %v9062 = vpack.c.b16 %v8902, %v8894
  %v9063 = vpack.c.b16 %v8903, %v8895
  %v9064 = vpack.c.b16 %v8904, %v8896
  %v9065 = vpack.c.b16 %v8913, %v8905
  %v9066 = vpack.c.b16 %v8914, %v8906
  %v9067 = vpack.c.b16 %v8915, %v8907
  %v9068 = vpack.c.b16 %v8916, %v8908
  %v9069 = vpack.c.b16 %v8917, %v8909
  %v9070 = vpack.c.b16 %v8918, %v8910
  %v9071 = vpack.c.b16 %v8919, %v8911
  %v9072 = vpack.c.b16 %v8920, %v8912
  %v9073 = vpack.c.b16 %v8929, %v8921
  %v9074 = vpack.c.b16 %v8930, %v8922
  %v9075 = vpack.c.b16 %v8931, %v8923
  %v9076 = vpack.c.b16 %v8932, %v8924
  %v9077 = vpack.c.b16 %v8933, %v8925
  %v9078 = vpack.c.b16 %v8934, %v8926
  %v9079 = vpack.c.b16 %v8935, %v8927
  %v9080 = vpack.c.b16 %v8936, %v8928
  %v9081 = vpack.c.b16 %v8945, %v8937
  %v9082 = vpack.c.b16 %v8946, %v8938
  %v9083 = vpack.c.b16 %v8947, %v8939
  %v9084 = vpack.c.b16 %v8948, %v8940
  %v9085 = vpack.c.b16 %v8949, %v8941
  %v9086 = vpack.c.b16 %v8950, %v8942
  %v9087 = vpack.c.b16 %v8951, %v8943
  %v9088 = vpack.c.b16 %v8952, %v8944
  %v9089 = vpack.c.b16 %v8961, %v8953
  %v9090 = vpack.c.b16 %v8962, %v8954
  %v9091 = vpack.c.b16 %v8963, %v8955
  %v9092 = vpack.c.b16 %v8964, %v8956
  %v9093 = vpack.c.b16 %v8965, %v8957
  %v9094 = vpack.c.b16 %v8966, %v8958
  %v9095 = vpack.c.b16 %v8967, %v8959
  %v9096 = vpack.c.b16 %v8968, %v8960
  %9225 = vmatpush.bf16.msra.mxu0 %v9025
  %9226 = vmatpush.bf16.msra.mxu0 %v9017
  %9227 = vmatpush.bf16.msra.mxu0 %v9009
  %9228 = vmatpush.bf16.msra.mxu0 %v9001
  %9229 = vmatpush.bf16.msra.mxu0 %v8993
  %9230 = vmatpush.bf16.msra.mxu0 %v8985
  %9231 = vmatpush.bf16.msra.mxu0 %v8977
  %9232 = vmatpush.bf16.msra.mxu0 %v8969
  %9233 = vmatmul.bf16.gmra.mxu0 %v8455
  %v9234 = vpop.f32.mrf.mxu0
  %v9235 = vadd.f32 0.0, %v9234
  %v9236 = vpop.f32.mrf.mxu0
  %9237 = vdwg.mxu0
  %9238 = vmatpush.bf16.msra.mxu0 %v9089
  %9239 = vmatpush.bf16.msra.mxu0 %v9081
  %9240 = vmatpush.bf16.msra.mxu0 %v9073
  %9241 = vmatpush.bf16.msra.mxu0 %v9065
  %9242 = vmatpush.bf16.msra.mxu0 %v9057
  %9243 = vmatpush.bf16.msra.mxu0 %v9049
  %9244 = vmatpush.bf16.msra.mxu0 %v9041
  %9245 = vmatpush.bf16.msra.mxu0 %v9033
  %9246 = vmatmul.bf16.gmra.mxu0 %v8456
  %v9247 = vpop.f32.mrf.mxu0
  %v9248 = vadd.f32 %v9235, %v9247
  %v9249 = vpop.f32.mrf.mxu0
  %9250 = vdwg.mxu0
  %9251 = vmatpush.bf16.msra.mxu0 %v9026
  %9252 = vmatpush.bf16.msra.mxu0 %v9018
  %9253 = vmatpush.bf16.msra.mxu0 %v9010
  %9254 = vmatpush.bf16.msra.mxu0 %v9002
  %9255 = vmatpush.bf16.msra.mxu0 %v8994
  %9256 = vmatpush.bf16.msra.mxu0 %v8986
  %9257 = vmatpush.bf16.msra.mxu0 %v8978
  %9258 = vmatpush.bf16.msra.mxu0 %v8970
  %9259 = vmatmul.bf16.gmra.mxu0 %v8455
  %v9260 = vpop.f32.mrf.mxu0
  %v9261 = vadd.f32 0.0, %v9260
  %v9262 = vpop.f32.mrf.mxu0
  %9263 = vdwg.mxu0
  %9264 = vmatpush.bf16.msra.mxu0 %v9090
  %9265 = vmatpush.bf16.msra.mxu0 %v9082
  %9266 = vmatpush.bf16.msra.mxu0 %v9074
  %9267 = vmatpush.bf16.msra.mxu0 %v9066
  %9268 = vmatpush.bf16.msra.mxu0 %v9058
  %9269 = vmatpush.bf16.msra.mxu0 %v9050
  %9270 = vmatpush.bf16.msra.mxu0 %v9042
  %9271 = vmatpush.bf16.msra.mxu0 %v9034
  %9272 = vmatmul.bf16.gmra.mxu0 %v8456
  %v9273 = vpop.f32.mrf.mxu0
  %v9274 = vadd.f32 %v9261, %v9273
  %v9275 = vpop.f32.mrf.mxu0
  %9276 = vdwg.mxu0
  %9277 = vmatpush.bf16.msra.mxu0 %v9027
  %9278 = vmatpush.bf16.msra.mxu0 %v9019
  %9279 = vmatpush.bf16.msra.mxu0 %v9011
  %9280 = vmatpush.bf16.msra.mxu0 %v9003
  %9281 = vmatpush.bf16.msra.mxu0 %v8995
  %9282 = vmatpush.bf16.msra.mxu0 %v8987
  %9283 = vmatpush.bf16.msra.mxu0 %v8979
  %9284 = vmatpush.bf16.msra.mxu0 %v8971
  %9285 = vmatmul.bf16.gmra.mxu0 %v8455
  %v9286 = vpop.f32.mrf.mxu0
  %v9287 = vadd.f32 0.0, %v9286
  %v9288 = vpop.f32.mrf.mxu0
  %9289 = vdwg.mxu0
  %9290 = vmatpush.bf16.msra.mxu0 %v9091
  %9291 = vmatpush.bf16.msra.mxu0 %v9083
  %9292 = vmatpush.bf16.msra.mxu0 %v9075
  %9293 = vmatpush.bf16.msra.mxu0 %v9067
  %9294 = vmatpush.bf16.msra.mxu0 %v9059
  %9295 = vmatpush.bf16.msra.mxu0 %v9051
  %9296 = vmatpush.bf16.msra.mxu0 %v9043
  %9297 = vmatpush.bf16.msra.mxu0 %v9035
  %9298 = vmatmul.bf16.gmra.mxu0 %v8456
  %v9299 = vpop.f32.mrf.mxu0
  %v9300 = vadd.f32 %v9287, %v9299
  %v9301 = vpop.f32.mrf.mxu0
  %9302 = vdwg.mxu0
  %9303 = vmatpush.bf16.msra.mxu0 %v9028
  %9304 = vmatpush.bf16.msra.mxu0 %v9020
  %9305 = vmatpush.bf16.msra.mxu0 %v9012
  %9306 = vmatpush.bf16.msra.mxu0 %v9004
  %9307 = vmatpush.bf16.msra.mxu0 %v8996
  %9308 = vmatpush.bf16.msra.mxu0 %v8988
  %9309 = vmatpush.bf16.msra.mxu0 %v8980
  %9310 = vmatpush.bf16.msra.mxu0 %v8972
  %9311 = vmatmul.bf16.gmra.mxu0 %v8455
  %v9312 = vpop.f32.mrf.mxu0
  %v9313 = vadd.f32 0.0, %v9312
  %v9314 = vpop.f32.mrf.mxu0
  %9315 = vdwg.mxu0
  %9316 = vmatpush.bf16.msra.mxu0 %v9092
  %9317 = vmatpush.bf16.msra.mxu0 %v9084
  %9318 = vmatpush.bf16.msra.mxu0 %v9076
  %9319 = vmatpush.bf16.msra.mxu0 %v9068
  %9320 = vmatpush.bf16.msra.mxu0 %v9060
  %9321 = vmatpush.bf16.msra.mxu0 %v9052
  %9322 = vmatpush.bf16.msra.mxu0 %v9044
  %9323 = vmatpush.bf16.msra.mxu0 %v9036
  %9324 = vmatmul.bf16.gmra.mxu0 %v8456
  %v9325 = vpop.f32.mrf.mxu0
  %v9326 = vadd.f32 %v9313, %v9325
  %v9327 = vpop.f32.mrf.mxu0
  %9328 = vdwg.mxu0
  %9329 = vmatpush.bf16.msra.mxu0 %v9029
  %9330 = vmatpush.bf16.msra.mxu0 %v9021
  %9331 = vmatpush.bf16.msra.mxu0 %v9013
  %9332 = vmatpush.bf16.msra.mxu0 %v9005
  %9333 = vmatpush.bf16.msra.mxu0 %v8997
  %9334 = vmatpush.bf16.msra.mxu0 %v8989
  %9335 = vmatpush.bf16.msra.mxu0 %v8981
  %9336 = vmatpush.bf16.msra.mxu0 %v8973
  %9337 = vmatmul.bf16.gmra.mxu0 %v8455
  %v9338 = vpop.f32.mrf.mxu0
  %v9339 = vadd.f32 0.0, %v9338
  %v9340 = vpop.f32.mrf.mxu0
  %9341 = vdwg.mxu0
  %9342 = vmatpush.bf16.msra.mxu0 %v9093
  %9343 = vmatpush.bf16.msra.mxu0 %v9085
  %9344 = vmatpush.bf16.msra.mxu0 %v9077
  %9345 = vmatpush.bf16.msra.mxu0 %v9069
  %9346 = vmatpush.bf16.msra.mxu0 %v9061
  %9347 = vmatpush.bf16.msra.mxu0 %v9053
  %9348 = vmatpush.bf16.msra.mxu0 %v9045
  %9349 = vmatpush.bf16.msra.mxu0 %v9037
  %9350 = vmatmul.bf16.gmra.mxu0 %v8456
  %v9351 = vpop.f32.mrf.mxu0
  %v9352 = vadd.f32 %v9339, %v9351
  %v9353 = vpop.f32.mrf.mxu0
  %9354 = vdwg.mxu0
  %9355 = vmatpush.bf16.msra.mxu0 %v9030
  %9356 = vmatpush.bf16.msra.mxu0 %v9022
  %9357 = vmatpush.bf16.msra.mxu0 %v9014
  %9358 = vmatpush.bf16.msra.mxu0 %v9006
  %9359 = vmatpush.bf16.msra.mxu0 %v8998
  %9360 = vmatpush.bf16.msra.mxu0 %v8990
  %9361 = vmatpush.bf16.msra.mxu0 %v8982
  %9362 = vmatpush.bf16.msra.mxu0 %v8974
  %9363 = vmatmul.bf16.gmra.mxu0 %v8455
  %v9364 = vpop.f32.mrf.mxu0
  %v9365 = vadd.f32 0.0, %v9364
  %v9366 = vpop.f32.mrf.mxu0
  %9367 = vdwg.mxu0
  %9368 = vmatpush.bf16.msra.mxu0 %v9094
  %9369 = vmatpush.bf16.msra.mxu0 %v9086
  %9370 = vmatpush.bf16.msra.mxu0 %v9078
  %9371 = vmatpush.bf16.msra.mxu0 %v9070
  %9372 = vmatpush.bf16.msra.mxu0 %v9062
  %9373 = vmatpush.bf16.msra.mxu0 %v9054
  %9374 = vmatpush.bf16.msra.mxu0 %v9046
  %9375 = vmatpush.bf16.msra.mxu0 %v9038
  %9376 = vmatmul.bf16.gmra.mxu0 %v8456
  %v9377 = vpop.f32.mrf.mxu0
  %v9378 = vadd.f32 %v9365, %v9377
  %v9379 = vpop.f32.mrf.mxu0
  %9380 = vdwg.mxu0
  %9381 = vmatpush.bf16.msra.mxu0 %v9031
  %9382 = vmatpush.bf16.msra.mxu0 %v9023
  %9383 = vmatpush.bf16.msra.mxu0 %v9015
  %9384 = vmatpush.bf16.msra.mxu0 %v9007
  %9385 = vmatpush.bf16.msra.mxu0 %v8999
  %9386 = vmatpush.bf16.msra.mxu0 %v8991
  %9387 = vmatpush.bf16.msra.mxu0 %v8983
  %9388 = vmatpush.bf16.msra.mxu0 %v8975
  %9389 = vmatmul.bf16.gmra.mxu0 %v8455
  %v9390 = vpop.f32.mrf.mxu0
  %v9391 = vadd.f32 0.0, %v9390
  %v9392 = vpop.f32.mrf.mxu0
  %9393 = vdwg.mxu0
  %9394 = vmatpush.bf16.msra.mxu0 %v9095
  %9395 = vmatpush.bf16.msra.mxu0 %v9087
  %9396 = vmatpush.bf16.msra.mxu0 %v9079
  %9397 = vmatpush.bf16.msra.mxu0 %v9071
  %9398 = vmatpush.bf16.msra.mxu0 %v9063
  %9399 = vmatpush.bf16.msra.mxu0 %v9055
  %9400 = vmatpush.bf16.msra.mxu0 %v9047
  %9401 = vmatpush.bf16.msra.mxu0 %v9039
  %9402 = vmatmul.bf16.gmra.mxu0 %v8456
  %v9403 = vpop.f32.mrf.mxu0
  %v9404 = vadd.f32 %v9391, %v9403
  %v9405 = vpop.f32.mrf.mxu0
  %9406 = vdwg.mxu0
  %9407 = vmatpush.bf16.msra.mxu0 %v9032
  %9408 = vmatpush.bf16.msra.mxu0 %v9024
  %9409 = vmatpush.bf16.msra.mxu0 %v9016
  %9410 = vmatpush.bf16.msra.mxu0 %v9008
  %9411 = vmatpush.bf16.msra.mxu0 %v9000
  %9412 = vmatpush.bf16.msra.mxu0 %v8992
  %9413 = vmatpush.bf16.msra.mxu0 %v8984
  %9414 = vmatpush.bf16.msra.mxu0 %v8976
  %9415 = vmatmul.bf16.gmra.mxu0 %v8455
  %v9416 = vpop.f32.mrf.mxu0
  %v9417 = vadd.f32 0.0, %v9416
  %v9418 = vpop.f32.mrf.mxu0
  %9419 = vdwg.mxu0
  %9420 = vmatpush.bf16.msra.mxu0 %v9096
  %9421 = vmatpush.bf16.msra.mxu0 %v9088
  %9422 = vmatpush.bf16.msra.mxu0 %v9080
  %9423 = vmatpush.bf16.msra.mxu0 %v9072
  %9424 = vmatpush.bf16.msra.mxu0 %v9064
  %9425 = vmatpush.bf16.msra.mxu0 %v9056
  %9426 = vmatpush.bf16.msra.mxu0 %v9048
  %9427 = vmatpush.bf16.msra.mxu0 %v9040
  %9428 = vmatmul.bf16.gmra.mxu0 %v8456
  %v9429 = vpop.f32.mrf.mxu0
  %v9430 = vadd.f32 %v9417, %v9429
  %v9431 = vpop.f32.mrf.mxu0
  %9432 = vdwg.mxu0
  %v9433 = vld [vmem:[%s1467] sm:$0xff]
  %v9434 = vld [vmem:[%s1467 + $0x8] sm:$0xff]
  %v9435 = vld [vmem:[%s1467 + $0x10] sm:$0xff]
  %v9436 = vld [vmem:[%s1467 + $0x18] sm:$0xff]
  %v9437 = vadd.f32 %v9433, %v9248
  %v9438 = vadd.f32 %v9434, %v9274
  %v9439 = vadd.f32 %v9435, %v9300
  %v9440 = vadd.f32 %v9436, %v9326
  %v9441 = vld [vmem:[%s1456 + $0x20] sm:$0xff]
  %v9442 = vld [vmem:[%s1456 + $0x28] sm:$0xff]
  %v9443 = vld [vmem:[%s1456 + $0x30] sm:$0xff]
  %v9444 = vld [vmem:[%s1456 + $0x38] sm:$0xff]
  %v9445 = vadd.f32 %v9441, %v9352
  %v9446 = vadd.f32 %v9442, %v9378
  %v9447 = vadd.f32 %v9443, %v9404
  %v9448 = vadd.f32 %v9444, %v9430
  %v9449 = vxor.u32 %v9437, 2147483648
  %v9450 = vmul.f32 %v9449, 1.442695
  %v9451 = vpow.pop %v9450
  %v9452 = vadd.f32 %v9451, 1.0
  %v9453 = vrcp.pop %v9452
  %v9454 = vmul.f32 %v9452, %v9453
  %v9455 = vsub.f32 1.0, %v9454
  %v9456 = vmul.f32 %v9453, %v9455
  %v9457 = vadd.f32 %v9453, %v9456
  %vm9458 = vweird.f32 %v9452
  %vm9459 = vweird.f32 %v9453
  %vm9460 = vmor %vm9458, %vm9459
  %v9461 = vsel %vm9460, %v9453, %v9457
  %v9462 = vand.u32 2147483647, %v9452
  %vm9463 = vcmp.eq.f32.partialorder %v9462, 8.507059e+37
  %v9464 = vand.u32 %v9452, 2147483648
  %v9465 = vor.u32 1.1754944e-38, %v9464
  %v9466 = vsel %vm9463, %v9465, %v9461
  %v9467 = vmul.f32 1.0, %v9466
  %v9468 = vxor.u32 %v9438, 2147483648
  %v9469 = vmul.f32 %v9468, 1.442695
  %v9470 = vpow.pop %v9469
  %v9471 = vadd.f32 %v9470, 1.0
  %v9472 = vrcp.pop %v9471
  %v9473 = vmul.f32 %v9471, %v9472
  %v9474 = vsub.f32 1.0, %v9473
  %v9475 = vmul.f32 %v9472, %v9474
  %v9476 = vadd.f32 %v9472, %v9475
  %vm9477 = vweird.f32 %v9471
  %vm9478 = vweird.f32 %v9472
  %vm9479 = vmor %vm9477, %vm9478
  %v9480 = vsel %vm9479, %v9472, %v9476
  %v9481 = vand.u32 2147483647, %v9471
  %vm9482 = vcmp.eq.f32.partialorder %v9481, 8.507059e+37
  %v9483 = vand.u32 %v9471, 2147483648
  %v9484 = vor.u32 1.1754944e-38, %v9483
  %v9485 = vsel %vm9482, %v9484, %v9480
  %v9486 = vmul.f32 1.0, %v9485
  %v9487 = vtanh.pop %v9439
  %v9488 = vxor.u32 %v9440, 2147483648
  %v9489 = vmul.f32 %v9488, 1.442695
  %v9490 = vpow.pop %v9489
  %v9491 = vadd.f32 %v9490, 1.0
  %v9492 = vrcp.pop %v9491
  %v9493 = vmul.f32 %v9491, %v9492
  %v9494 = vsub.f32 1.0, %v9493
  %v9495 = vmul.f32 %v9492, %v9494
  %v9496 = vadd.f32 %v9492, %v9495
  %vm9497 = vweird.f32 %v9491
  %vm9498 = vweird.f32 %v9492
  %vm9499 = vmor %vm9497, %vm9498
  %v9500 = vsel %vm9499, %v9492, %v9496
  %v9501 = vand.u32 2147483647, %v9491
  %vm9502 = vcmp.eq.f32.partialorder %v9501, 8.507059e+37
  %v9503 = vand.u32 %v9491, 2147483648
  %v9504 = vor.u32 1.1754944e-38, %v9503
  %v9505 = vsel %vm9502, %v9504, %v9500
  %v9506 = vmul.f32 1.0, %v9505
  %v9507 = vmul.f32 %v9486, %v8452
  %v9508 = vmul.f32 %v9467, %v9487
  %v9509 = vadd.f32 %v9507, %v9508
  %v9510 = vtanh.pop %v9509
  %v9511 = vmul.f32 %v9506, %v9510
  %v9512 = vxor.u32 %v9445, 2147483648
  %v9513 = vmul.f32 %v9512, 1.442695
  %v9514 = vpow.pop %v9513
  %v9515 = vadd.f32 %v9514, 1.0
  %v9516 = vrcp.pop %v9515
  %v9517 = vmul.f32 %v9515, %v9516
  %v9518 = vsub.f32 1.0, %v9517
  %v9519 = vmul.f32 %v9516, %v9518
  %v9520 = vadd.f32 %v9516, %v9519
  %vm9521 = vweird.f32 %v9515
  %vm9522 = vweird.f32 %v9516
  %vm9523 = vmor %vm9521, %vm9522
  %v9524 = vsel %vm9523, %v9516, %v9520
  %v9525 = vand.u32 2147483647, %v9515
  %vm9526 = vcmp.eq.f32.partialorder %v9525, 8.507059e+37
  %v9527 = vand.u32 %v9515, 2147483648
  %v9528 = vor.u32 1.1754944e-38, %v9527
  %v9529 = vsel %vm9526, %v9528, %v9524
  %v9530 = vmul.f32 1.0, %v9529
  %v9531 = vxor.u32 %v9446, 2147483648
  %v9532 = vmul.f32 %v9531, 1.442695
  %v9533 = vpow.pop %v9532
  %v9534 = vadd.f32 %v9533, 1.0
  %v9535 = vrcp.pop %v9534
  %v9536 = vmul.f32 %v9534, %v9535
  %v9537 = vsub.f32 1.0, %v9536
  %v9538 = vmul.f32 %v9535, %v9537
  %v9539 = vadd.f32 %v9535, %v9538
  %vm9540 = vweird.f32 %v9534
  %vm9541 = vweird.f32 %v9535
  %vm9542 = vmor %vm9540, %vm9541
  %v9543 = vsel %vm9542, %v9535, %v9539
  %v9544 = vand.u32 2147483647, %v9534
  %vm9545 = vcmp.eq.f32.partialorder %v9544, 8.507059e+37
  %v9546 = vand.u32 %v9534, 2147483648
  %v9547 = vor.u32 1.1754944e-38, %v9546
  %v9548 = vsel %vm9545, %v9547, %v9543
  %v9549 = vmul.f32 1.0, %v9548
  %v9550 = vtanh.pop %v9447
  %v9551 = vxor.u32 %v9448, 2147483648
  %v9552 = vmul.f32 %v9551, 1.442695
  %v9553 = vpow.pop %v9552
  %v9554 = vadd.f32 %v9553, 1.0
  %v9555 = vrcp.pop %v9554
  %v9556 = vmul.f32 %v9554, %v9555
  %v9557 = vsub.f32 1.0, %v9556
  %v9558 = vmul.f32 %v9555, %v9557
  %v9559 = vadd.f32 %v9555, %v9558
  %vm9560 = vweird.f32 %v9554
  %vm9561 = vweird.f32 %v9555
  %vm9562 = vmor %vm9560, %vm9561
  %v9563 = vsel %vm9562, %v9555, %v9559
  %v9564 = vand.u32 2147483647, %v9554
  %vm9565 = vcmp.eq.f32.partialorder %v9564, 8.507059e+37
  %v9566 = vand.u32 %v9554, 2147483648
  %v9567 = vor.u32 1.1754944e-38, %v9566
  %v9568 = vsel %vm9565, %v9567, %v9563
  %v9569 = vmul.f32 1.0, %v9568
  %v9570 = vmul.f32 %v9549, %v8454
  %v9571 = vmul.f32 %v9530, %v9550
  %v9572 = vadd.f32 %v9570, %v9571
  %v9573 = vtanh.pop %v9572
  %v9574 = vmul.f32 %v9569, %v9573
  %v9575 = vsel %vm1613, %v9511, 0.0
  %s9576 = scalar_lea.vmem %s5, 56
  %9577 = vst [vmem:[%s9576] sm:$0xff] %v9575
  %v9578 = vsel %vm1607, %v9574, 0.0
  %9579 = vst [vmem:[%s6] sm:$0xff] %v9578
  %v9580 = vsel %vm1613, %v9511, %v8451
  %v9581 = vsel %vm1613, %v9509, %v8452
  %v9582 = vsel %vm1607, %v9574, %v8453
  %v9583 = vsel %vm1607, %v9572, %v8454
  %9584 = vst [vmem:[%s7] sm:$0xff] %v9580
  %9585 = vst [vmem:[%s7 + $0x8] sm:$0xff] %v9582
  %9586 = vst [vmem:[%s8] sm:$0xff] %v9581
  %9587 = vst [vmem:[%s8 + $0x8] sm:$0xff] %v9583
  // Predicated region
  $region22: #{encoder_rnn_forward.1} parent=0 // pred_check
    _
  $region23: #{encoder_rnn_forward.1} parent=0 // pred_check_branch
    %9589 = sbr.rel (0) target = $region25
  $region24: #{encoder_rnn_forward.1} parent=0 // pred_region
    _
  $region25: #{encoder_rnn_forward.1} parent=0 // pred_fallthru
    _
  // Predicated region
  $region26: #{encoder_rnn_forward.1} parent=0 // pred_check
    _
  $region27: #{encoder_rnn_forward.1} parent=0 // pred_check_branch
    %9591 = sbr.rel (0) target = $region29
  $region28: #{encoder_rnn_forward.1} parent=0 // pred_region
    _
  $region29: #{encoder_rnn_forward.1} parent=0 // pred_fallthru
    _
  // Predicated region
  $region30: #{encoder_rnn_forward.1} parent=0 // pred_check
    _
  $region31: #{encoder_rnn_forward.1} parent=0 // pred_check_branch
    %9593 = sbr.rel (0) target = $region33
  $region32: #{encoder_rnn_forward.1} parent=0 // pred_region
    _
  $region33: #{encoder_rnn_forward.1} parent=0 // pred_fallthru
    _
  // Predicated region
  $region34: #{encoder_rnn_forward.1} parent=0 // pred_check
    _
  $region35: #{encoder_rnn_forward.1} parent=0 // pred_check_branch
    %9595 = sbr.rel (0) target = $region37
  $region36: #{encoder_rnn_forward.1} parent=0 // pred_region
    _
  $region37: #{encoder_rnn_forward.1} parent=0 // pred_fallthru
    _
  // Predicated region
  $region38: #{encoder_rnn_forward.1} parent=0 // pred_check
    _
  $region39: #{encoder_rnn_forward.1} parent=0 // pred_check_branch
    %9597 = sbr.rel (0) target = $region41
  $region40: #{encoder_rnn_forward.1} parent=0 // pred_region
    _
  $region41: #{encoder_rnn_forward.1} parent=0 // pred_fallthru
    _
  // Predicated region
  $region42: #{encoder_rnn_forward.1} parent=0 // pred_check
    _
  $region43: #{encoder_rnn_forward.1} parent=0 // pred_check_branch
    %9599 = sbr.rel (0) target = $region45
  $region44: #{encoder_rnn_forward.1} parent=0 // pred_region
    _
  $region45: #{encoder_rnn_forward.1} parent=0 // pred_fallthru
    _
  // Predicated region
  $region46: #{encoder_rnn_forward.1} parent=0 // pred_check
    _
  $region47: #{encoder_rnn_forward.1} parent=0 // pred_check_branch
    %9601 = sbr.rel (0) target = $region49
  $region48: #{encoder_rnn_forward.1} parent=0 // pred_region
    _
  $region49: #{encoder_rnn_forward.1} parent=0 // pred_fallthru
    _
  // Predicated region
  $region50: #{encoder_rnn_forward.1} parent=0 // pred_check
    _
  $region51: #{encoder_rnn_forward.1} parent=0 // pred_check_branch
    %9603 = sbr.rel (0) target = $region53
  $region52: #{encoder_rnn_forward.1} parent=0 // pred_region
    _
  $region53: #{encoder_rnn_forward.1} parent=0 // pred_fallthru
    _

</llo_original>
